<compile_context>
chip_gen: v7x
topology: tpu7x:2x2x1
jax: 0.10.0
libtpu: 0.0.40
codegen_flags: <defaults>
</compile_context>

<pallas_src>
import numpy as np
import jax
import jax.numpy as jnp
from jax import lax
from jax.experimental import pallas as pl
from jax.experimental.pallas import tpu as pltpu


# ----------------------------- model configuration (small) -----------------------------
CFG = dict(
    in_size=16, in_channels=4,
    conv_channels=(8, 16), conv_layers=(1, 2),
    fc_features=32, fc_layers=1,
    nclass=(5, 3),
)
NCLASS = CFG["nclass"]
NHEADS = sum(NCLASS)              # 8
C0, C1 = CFG["conv_channels"]     # 8, 16
FCF = CFG["fc_features"]          # 32


def get_paddings(size, num_levels):
    paddings = []
    for _ in range(num_levels - 1):
        if size % 4 == 2:
            paddings.append(1)
            size = size // 2 + 1
        else:
            paddings.append(0)
            size //= 2
    if num_levels > 0:
        paddings.append(0)
        size //= 2
    return size, paddings


TOP_SIZE, PADDINGS = get_paddings(CFG["in_size"], len(CFG["conv_channels"]))
assert TOP_SIZE == 4 and PADDINGS == [0, 0]

P0 = 8 * 8                          # pixels after conv0 (6x6 / s2 / p2: 16 -> 8)
P1 = TOP_SIZE * TOP_SIZE            # pixels after the stride-2 MiniResBlock (8 -> 4)
K0 = 6 * 6 * CFG["in_channels"]     # conv0 im2col width = 144
DOWN1_SCALE = 1.0 / 2.0             # MiniResBlock scale 1/(i+1), level i=1


# --------------------------- constant gather ("shift") matrices -------------------------
def _make_t2s():
    """Stacked 0/1 gather matrices for the 2x2/stride-2 convs: (4*P1, P0)."""
    t = np.zeros((4, P1, P0), np.float32)
    for r in range(2):
        for c in range(2):
            d = r * 2 + c
            for y in range(TOP_SIZE):
                for x in range(TOP_SIZE):
                    t[d, y * TOP_SIZE + x, (2 * y + r) * 8 + (2 * x + c)] = 1.0
    return jnp.asarray(t.reshape(4 * P1, P0))


def _make_s3s():
    """Stacked 0/1 shift matrices for 3x3/s1/p1 convs on the 4x4 map: (9*P1, P1)."""
    s = np.zeros((9, P1, P1), np.float32)
    for di in range(3):
        for dj in range(3):
            d = di * 3 + dj
            for y in range(TOP_SIZE):
                for x in range(TOP_SIZE):
                    yy, xx = y + di - 1, x + dj - 1
                    if 0 <= yy < TOP_SIZE and 0 <= xx < TOP_SIZE:
                        s[d, y * TOP_SIZE + x, yy * TOP_SIZE + xx] = 1.0
    return jnp.asarray(s.reshape(9 * P1, P1))


# ------------------------------------ fused kernel --------------------------------------
def _fused_kernel(cols0_ref, t2s_ref, s3s_ref, w0_ref, ba0_ref,
                  wsk_ref, wc1_ref, b1v_ref, wc2_ref, bc2_ref,
                  wra_ref, wrb_ref, b2v_ref,
                  wfc0r_ref, fcv_ref, wl1_ref, wl2_ref, wh_ref, bh_ref,
                  out_ref):
    """Whole ClassifierBase forward for one batch element, fully VMEM/vreg resident."""
    f32 = jnp.float32

    def prelu(z, a):
        return jnp.where(z > 0, z, a * z)

    # ---- level 0: WNConv2d(4->8, k=6, s=2, p=2) + WNPReLU (pre-built im2col) ----
    x0 = cols0_ref[0]                                                    # (64, 144)
    h0 = jnp.dot(x0, w0_ref[...], preferred_element_type=f32) + ba0_ref[0:1, :]
    h0 = prelu(h0, ba0_ref[1:2, :])                                      # (64, 8)

    # ---- level 1: MiniResBlock(8->16, stride 2, pad 0, scale 1/2) ----
    # 2x2/s2 convs: one stacked gather matmul + 4 per-tap weight matmuls each.
    sel = jnp.dot(t2s_ref[...], h0, preferred_element_type=f32)          # (4*16, 8)
    skip = jnp.zeros((P1, C1), f32)
    c1 = jnp.zeros((P1, C1), f32)
    for d in range(4):
        blk = sel[d * P1:(d + 1) * P1, :]
        skip = skip + jnp.dot(blk, wsk_ref[d], preferred_element_type=f32)
        c1 = c1 + jnp.dot(blk, wc1_ref[d], preferred_element_type=f32)
    skip = skip + b1v_ref[0:1, :]
    c1 = prelu(c1 + b1v_ref[1:2, :], b1v_ref[2:3, :])                    # (16, 16)

    def conv3x3(h, w_ref):
        # 3x3/s1/p1 conv on the 4x4 map: stacked shift-matrix gather + 9 tap matmuls.
        hstk = jnp.dot(s3s_ref[...], h, preferred_element_type=f32)      # (9*16, 16)
        acc = jnp.zeros((P1, C1), f32)
        for d in range(9):
            acc = acc + jnp.dot(hstk[d * P1:(d + 1) * P1, :], w_ref[d],
                                preferred_element_type=f32)
        return acc

    c2 = conv3x3(c1, wc2_ref) + bc2_ref[...]
    d1 = skip + DOWN1_SCALE * c2                                         # (16, 16)

    # ---- level 1: MiniResBlock(16->16, stride 1, scale 1) ----
    r = conv3x3(d1, wra_ref) + b2v_ref[0:1, :]
    r = prelu(r, b2v_ref[1:2, :])
    r = conv3x3(r, wrb_ref) + b2v_ref[2:3, :]
    feat = d1 + r                                                        # (16 pix, 16 ch)

    # ---- fc: WNLinear(256->32) with NCHW-flatten permutation folded into wfc0r[p],
    #          + WNPReLU + MiniFCResBlock ----
    base = jnp.zeros((1, FCF), f32)
    for p in range(P1):
        base = base + jnp.dot(feat[p:p + 1, :], wfc0r_ref[p],
                              preferred_element_type=f32)
    base = prelu(base + fcv_ref[0:1, :], fcv_ref[1:2, :])
    t = jnp.dot(base, wl1_ref[...], preferred_element_type=f32) + fcv_ref[2:3, :]
    t = prelu(t, fcv_ref[3:4, :])
    t = jnp.dot(t, wl2_ref[...], preferred_element_type=f32) + fcv_ref[4:5, :]
    base = base + t                                                      # (1, 32)

    # ---- all classification heads stacked into one matmul ----
    out_ref[0] = jnp.dot(base, wh_ref[...], preferred_element_type=f32) + bh_ref[...]


# -------------------------------- parameters & packing ----------------------------------
def init_canonical_params(key):
    """PyTorch-layout parameters (weight norm folded into plain weights)."""
    ks = iter(jax.random.split(key, 32))
    s = 0.1

    def nrm(shape):
        return jax.random.normal(next(ks), shape, jnp.float32) * s

    def alpha(n):
        return jnp.full((n,), 0.25, jnp.float32)

    return {
        "conv0_w": nrm((C0, CFG["in_channels"], 6, 6)), "conv0_b": nrm((C0,)),
        "prelu0_a": alpha(C0),
        "d1_skip_w": nrm((C1, C0, 2, 2)), "d1_skip_b": nrm((C1,)),
        "d1_c1_w": nrm((C1, C0, 2, 2)), "d1_c1_b": nrm((C1,)), "d1_p_a": alpha(C1),
        "d1_c2_w": nrm((C1, C1, 3, 3)), "d1_c2_b": nrm((C1,)),
        "r1_c1_w": nrm((C1, C1, 3, 3)), "r1_c1_b": nrm((C1,)), "r1_p_a": alpha(C1),
        "r1_c2_w": nrm((C1, C1, 3, 3)), "r1_c2_b": nrm((C1,)),
        "fc0_w": nrm((FCF, C1 * P1)), "fc0_b": nrm((FCF,)), "fc0_a": alpha(FCF),
        "fcr_l1_w": nrm((FCF, FCF)), "fcr_l1_b": nrm((FCF,)), "fcr_a": alpha(FCF),
        "fcr_l2_w": nrm((FCF, FCF)), "fcr_l2_b": nrm((FCF,)),
        "head0_w": nrm((NCLASS[0], FCF)), "head0_b": nrm((NCLASS[0],)),
        "head1_w": nrm((NCLASS[1], FCF)), "head1_b": nrm((NCLASS[1],)),
    }


def pack_params(p):
    """Fold layout transposes / flatten permutation / head concat into the weights."""
    k2x2 = lambda w: jnp.transpose(w, (2, 3, 1, 0)).reshape(4, C0, C1)
    k3x3 = lambda w: jnp.transpose(w, (2, 3, 1, 0)).reshape(9, C1, C1)
    return {
        "t2s": _make_t2s(),
        "s3s": _make_s3s(),
        "w0": jnp.transpose(p["conv0_w"], (2, 3, 1, 0)).reshape(K0, C0),
        "ba0": jnp.stack([p["conv0_b"], p["prelu0_a"]], 0),                    # (2, 8)
        "wsk": k2x2(p["d1_skip_w"]),
        "wc1": k2x2(p["d1_c1_w"]),
        "b1v": jnp.stack([p["d1_skip_b"], p["d1_c1_b"], p["d1_p_a"]], 0),      # (3, 16)
        "wc2": k3x3(p["d1_c2_w"]),
        "bc2": p["d1_c2_b"].reshape(1, C1),
        "wra": k3x3(p["r1_c1_w"]),
        "wrb": k3x3(p["r1_c2_w"]),
        "b2v": jnp.stack([p["r1_c1_b"], p["r1_p_a"], p["r1_c2_b"]], 0),        # (3, 16)
        # NCHW flatten order (c, y, x) folded in: wfc0r[p, c, f] = fc0_w[f, c*P1 + p]
        "wfc0r": jnp.transpose(p["fc0_w"].reshape(FCF, C1, P1), (2, 1, 0)),    # (16,16,32)
        "fcv": jnp.stack([p["fc0_b"], p["fc0_a"], p["fcr_l1_b"], p["fcr_a"],
                          p["fcr_l2_b"]], 0),                                  # (5, 32)
        "wl1": p["fcr_l1_w"].T,
        "wl2": p["fcr_l2_w"].T,
        "wh": jnp.concatenate([p["head0_w"].T, p["head1_w"].T], 1),            # (32, 8)
        "bh": jnp.concatenate([p["head0_b"], p["head1_b"]], 0).reshape(1, NHEADS),
    }


# ------------------------- first-layer im2col (plain-JAX preprocessing) ------------------
def _conv0_im2col(x):
    """im2col for the first 6x6 / stride-2 / pad-2 conv (input layer only).
    Rows ordered (y, x); columns (ky, kx, cin) to match the packed w0."""
    B = x.shape[0]
    xp = jnp.pad(x, ((0, 0), (0, 0), (2, 2), (2, 2)))                  # (B, 4, 20, 20)
    patches = []
    for ky in range(6):
        for kx in range(6):
            patches.append(lax.slice(xp, (0, 0, ky, kx),
                                     (B, CFG["in_channels"], ky + 15, kx + 15),
                                     (1, 1, 2, 2)))                    # (B, 4, 8, 8)
    cols = jnp.stack(patches, axis=1)                                  # (B, 36, 4, 8, 8)
    cols = jnp.transpose(cols, (0, 3, 4, 1, 2))                        # (B, 8, 8, 36, 4)
    return cols.reshape(B, P0, K0)


# ---------------------------------------- forward ---------------------------------------
_KP_ORDER = ("t2s", "s3s", "w0", "ba0", "wsk", "wc1", "b1v", "wc2", "bc2",
             "wra", "wrb", "b2v", "wfc0r", "fcv", "wl1", "wl2", "wh", "bh")


def _const_spec(shape):
    zeros = (0,) * len(shape)
    return pl.BlockSpec(shape, lambda b: zeros)


@jax.jit
def classifier_forward(kp, x):
    """ClassifierBase.forward(input) (paired=None) -> list of per-head logits."""
    B = x.shape[0]
    cols0 = _conv0_im2col(x)                                           # (B, 64, 144)
    operands = [cols0] + [kp[name] for name in _KP_ORDER]
    in_specs = [pl.BlockSpec((1, P0, K0), lambda b: (b, 0, 0))]
    in_specs += [_const_spec(tuple(kp[name].shape)) for name in _KP_ORDER]

    out = pl.pallas_call(
        _fused_kernel,
        out_shape=jax.ShapeDtypeStruct((B, 1, NHEADS), jnp.float32),
        grid=(B,),
        in_specs=in_specs,
        out_specs=pl.BlockSpec((1, 1, NHEADS), lambda b: (b, 0, 0)),
        compiler_params=pltpu.CompilerParams(
            dimension_semantics=("parallel",),     # both TCs on v7x take a batch each
            vmem_limit_bytes=32 * 1024 * 1024,
        ),
    )(*operands)

    logits = out[:, 0, :]                                              # (B, 8)
    outs, off = [], 0
    for m in NCLASS:
        outs.append(logits[:, off:off + m])
        off += m
    return outs


# ----------------------------- pure-JAX reference (same assumptions) ---------------------
def reference_forward(p, x):
    hp = lax.Precision.HIGHEST

    def conv(h, w, b, stride, pad):
        o = lax.conv_general_dilated(h, w, (stride, stride),
                                     [(pad, pad), (pad, pad)],
                                     dimension_numbers=("NCHW", "OIHW", "NCHW"),
                                     precision=hp)
        return o + b.reshape(1, -1, 1, 1)

    def prelu_c(h, a):
        a = a.reshape(1, -1, 1, 1)
        return jnp.where(h > 0, h, a * h)

    def prelu_f(h, a):
        return jnp.where(h > 0, h, a * h)

    h = prelu_c(conv(x, p["conv0_w"], p["conv0_b"], 2, 2), p["prelu0_a"])
    skip = conv(h, p["d1_skip_w"], p["d1_skip_b"], 2, 0)
    c1 = prelu_c(conv(h, p["d1_c1_w"], p["d1_c1_b"], 2, 0), p["d1_p_a"])
    c2 = conv(c1, p["d1_c2_w"], p["d1_c2_b"], 1, 1)
    h = skip + DOWN1_SCALE * c2
    r = prelu_c(conv(h, p["r1_c1_w"], p["r1_c1_b"], 1, 1), p["r1_p_a"])
    r = conv(r, p["r1_c2_w"], p["r1_c2_b"], 1, 1)
    h = h + r
    flat = h.reshape(h.shape[0], -1)                                   # NCHW flatten
    base = jnp.dot(flat, p["fc0_w"].T, precision=hp) + p["fc0_b"]
    base = prelu_f(base, p["fc0_a"])
    t = jnp.dot(base, p["fcr_l1_w"].T, precision=hp) + p["fcr_l1_b"]
    t = prelu_f(t, p["fcr_a"])
    t = jnp.dot(t, p["fcr_l2_w"].T, precision=hp) + p["fcr_l2_b"]
    base = base + t
    return [jnp.dot(base, p["head0_w"].T, precision=hp) + p["head0_b"],
            jnp.dot(base, p["head1_w"].T, precision=hp) + p["head1_b"]]


# ------------------------------------------ main ----------------------------------------
if __name__ == "__main__":
    key = jax.random.PRNGKey(0)
    kparam, kx = jax.random.split(key)
    canon = init_canonical_params(kparam)
    packed = pack_params(canon)

    B = 2
    x = jax.random.normal(
        kx, (B, CFG["in_channels"], CFG["in_size"], CFG["in_size"]), jnp.float32)

    outs = classifier_forward(packed, x)
    outs = [jax.block_until_ready(o) for o in outs]

    refs = reference_forward(canon, x)
    for o, r, m in zip(outs, refs, NCLASS):
        assert o.shape == (B, m), (o.shape, m)
        assert bool(jnp.all(jnp.isfinite(o)))
        assert bool(jnp.allclose(o, r, rtol=5e-2, atol=5e-2)), (
            "kernel/reference mismatch", float(jnp.max(jnp.abs(o - r))))

    print("KERNEL_OK")
</pallas_src>

<mosaic_0001>
module attributes {stable_mosaic.version = 11 : i64} {
  func.func @_fused_kernel(%arg0: i32, %arg1: memref<1x64x144xf32, #tpu.memory_space<vmem>>, %arg2: memref<64x64xf32, #tpu.memory_space<vmem>>, %arg3: memref<144x16xf32, #tpu.memory_space<vmem>>, %arg4: memref<144x8xf32, #tpu.memory_space<vmem>>, %arg5: memref<2x8xf32, #tpu.memory_space<vmem>>, %arg6: memref<4x8x16xf32, #tpu.memory_space<vmem>>, %arg7: memref<4x8x16xf32, #tpu.memory_space<vmem>>, %arg8: memref<3x16xf32, #tpu.memory_space<vmem>>, %arg9: memref<9x16x16xf32, #tpu.memory_space<vmem>>, %arg10: memref<1x16xf32, #tpu.memory_space<vmem>>, %arg11: memref<9x16x16xf32, #tpu.memory_space<vmem>>, %arg12: memref<9x16x16xf32, #tpu.memory_space<vmem>>, %arg13: memref<3x16xf32, #tpu.memory_space<vmem>>, %arg14: memref<16x16x32xf32, #tpu.memory_space<vmem>>, %arg15: memref<5x32xf32, #tpu.memory_space<vmem>>, %arg16: memref<32x32xf32, #tpu.memory_space<vmem>>, %arg17: memref<32x32xf32, #tpu.memory_space<vmem>>, %arg18: memref<32x8xf32, #tpu.memory_space<vmem>>, %arg19: memref<1x8xf32, #tpu.memory_space<vmem>>, %arg20: memref<1x1x8xf32, #tpu.memory_space<vmem>>) attributes {dimension_semantics = [#tpu.dimension_semantics<parallel>], iteration_bounds = array<i64: 2>, scalar_prefetch = 0 : i64, scratch_operands = 0 : i64, tpu.core_type = #tpu.core_type<tc>, window_params = [{transform_indices = @transform_0, window_bounds = array<i64: 1, 64, 144>}, {pipeline_mode = #tpu.pipeline_mode<synchronous>, transform_indices = @transform_1, window_bounds = array<i64: 64, 64>}, {pipeline_mode = #tpu.pipeline_mode<synchronous>, transform_indices = @transform_2, window_bounds = array<i64: 144, 16>}, {pipeline_mode = #tpu.pipeline_mode<synchronous>, transform_indices = @transform_3, window_bounds = array<i64: 144, 8>}, {pipeline_mode = #tpu.pipeline_mode<synchronous>, transform_indices = @transform_4, window_bounds = array<i64: 2, 8>}, {pipeline_mode = #tpu.pipeline_mode<synchronous>, transform_indices = @transform_5, window_bounds = array<i64: 4, 8, 16>}, {pipeline_mode = #tpu.pipeline_mode<synchronous>, transform_indices = @transform_6, window_bounds = array<i64: 4, 8, 16>}, {pipeline_mode = #tpu.pipeline_mode<synchronous>, transform_indices = @transform_7, window_bounds = array<i64: 3, 16>}, {pipeline_mode = #tpu.pipeline_mode<synchronous>, transform_indices = @transform_8, window_bounds = array<i64: 9, 16, 16>}, {pipeline_mode = #tpu.pipeline_mode<synchronous>, transform_indices = @transform_9, window_bounds = array<i64: 1, 16>}, {pipeline_mode = #tpu.pipeline_mode<synchronous>, transform_indices = @transform_10, window_bounds = array<i64: 9, 16, 16>}, {pipeline_mode = #tpu.pipeline_mode<synchronous>, transform_indices = @transform_11, window_bounds = array<i64: 9, 16, 16>}, {pipeline_mode = #tpu.pipeline_mode<synchronous>, transform_indices = @transform_12, window_bounds = array<i64: 3, 16>}, {pipeline_mode = #tpu.pipeline_mode<synchronous>, transform_indices = @transform_13, window_bounds = array<i64: 16, 16, 32>}, {pipeline_mode = #tpu.pipeline_mode<synchronous>, transform_indices = @transform_14, window_bounds = array<i64: 5, 32>}, {pipeline_mode = #tpu.pipeline_mode<synchronous>, transform_indices = @transform_15, window_bounds = array<i64: 32, 32>}, {pipeline_mode = #tpu.pipeline_mode<synchronous>, transform_indices = @transform_16, window_bounds = array<i64: 32, 32>}, {pipeline_mode = #tpu.pipeline_mode<synchronous>, transform_indices = @transform_17, window_bounds = array<i64: 32, 8>}, {pipeline_mode = #tpu.pipeline_mode<synchronous>, transform_indices = @transform_18, window_bounds = array<i64: 1, 8>}, {transform_indices = @transform_19, window_bounds = array<i64: 1, 1, 8>}]} {
    %c0 = arith.constant 0 : index
    %c0_0 = arith.constant 0 : index
    %c0_1 = arith.constant 0 : index
    %0 = vector.load %arg1[%c0, %c0_0, %c0_1] : memref<1x64x144xf32, #tpu.memory_space<vmem>>, vector<1x64x144xf32>
    %1 = vector.shape_cast %0 : vector<1x64x144xf32> to vector<64x144xf32>
    %c0_2 = arith.constant 0 : index
    %c0_3 = arith.constant 0 : index
    %2 = vector.load %arg4[%c0_2, %c0_3] : memref<144x8xf32, #tpu.memory_space<vmem>>, vector<144x8xf32>
    %cst = arith.constant dense<0.000000e+00> : vector<64x8xf32>
    %3 = tpu.matmul %1, %2, %cst {dimension_numbers = #tpu.dot_dimension_numbers<[1], [0], [0], [1], [0, 0, 1, 1], [], []>} : vector<64x144xf32>, vector<144x8xf32>, vector<64x8xf32> -> vector<64x8xf32>
    %c0_4 = arith.constant 0 : index
    %c0_5 = arith.constant 0 : index
    %4 = vector.load %arg5[%c0_4, %c0_5] : memref<2x8xf32, #tpu.memory_space<vmem>>, vector<1x8xf32>
    %5 = vector.broadcast %4 : vector<1x8xf32> to vector<64x8xf32>
    %6 = arith.addf %3, %5 : vector<64x8xf32>
    %c1 = arith.constant 1 : index
    %c0_6 = arith.constant 0 : index
    %7 = vector.load %arg5[%c1, %c0_6] : memref<2x8xf32, #tpu.memory_space<vmem>>, vector<1x8xf32>
    %cst_7 = arith.constant 0.000000e+00 : f32
    %8 = vector.broadcast %cst_7 : f32 to vector<64x8xf32>
    %9 = arith.cmpf ogt, %6, %8 : vector<64x8xf32>
    %10 = vector.broadcast %7 : vector<1x8xf32> to vector<64x8xf32>
    %11 = arith.mulf %10, %6 : vector<64x8xf32>
    %12 = arith.select %9, %6, %11 : vector<64x8xi1>, vector<64x8xf32>
    %c0_8 = arith.constant 0 : index
    %c0_9 = arith.constant 0 : index
    %13 = vector.load %arg2[%c0_8, %c0_9] : memref<64x64xf32, #tpu.memory_space<vmem>>, vector<64x64xf32>
    %cst_10 = arith.constant dense<0.000000e+00> : vector<64x8xf32>
    %14 = tpu.matmul %13, %12, %cst_10 {dimension_numbers = #tpu.dot_dimension_numbers<[1], [0], [0], [1], [0, 0, 1, 1], [], []>} : vector<64x64xf32>, vector<64x8xf32>, vector<64x8xf32> -> vector<64x8xf32>
    %cst_11 = arith.constant 0.000000e+00 : f32
    %15 = vector.broadcast %cst_11 : f32 to vector<16x16xf32>
    %cst_12 = arith.constant 0.000000e+00 : f32
    %16 = vector.broadcast %cst_12 : f32 to vector<16x16xf32>
    %17 = vector.extract_strided_slice %14 {offsets = [0, 0], sizes = [16, 8], strides = [1, 1]} : vector<64x8xf32> to vector<16x8xf32>
    %c0_13 = arith.constant 0 : index
    %c0_14 = arith.constant 0 : index
    %c0_15 = arith.constant 0 : index
    %18 = vector.load %arg6[%c0_13, %c0_14, %c0_15] : memref<4x8x16xf32, #tpu.memory_space<vmem>>, vector<1x8x16xf32>
    %19 = vector.shape_cast %18 : vector<1x8x16xf32> to vector<8x16xf32>
    %cst_16 = arith.constant dense<0.000000e+00> : vector<16x16xf32>
    %20 = tpu.matmul %17, %19, %cst_16 {dimension_numbers = #tpu.dot_dimension_numbers<[1], [0], [0], [1], [0, 0, 1, 1], [], []>} : vector<16x8xf32>, vector<8x16xf32>, vector<16x16xf32> -> vector<16x16xf32>
    %21 = arith.addf %15, %20 : vector<16x16xf32>
    %c0_17 = arith.constant 0 : index
    %c0_18 = arith.constant 0 : index
    %c0_19 = arith.constant 0 : index
    %22 = vector.load %arg7[%c0_17, %c0_18, %c0_19] : memref<4x8x16xf32, #tpu.memory_space<vmem>>, vector<1x8x16xf32>
    %23 = vector.shape_cast %22 : vector<1x8x16xf32> to vector<8x16xf32>
    %cst_20 = arith.constant dense<0.000000e+00> : vector<16x16xf32>
    %24 = tpu.matmul %17, %23, %cst_20 {dimension_numbers = #tpu.dot_dimension_numbers<[1], [0], [0], [1], [0, 0, 1, 1], [], []>} : vector<16x8xf32>, vector<8x16xf32>, vector<16x16xf32> -> vector<16x16xf32>
    %25 = arith.addf %16, %24 : vector<16x16xf32>
    %26 = vector.extract_strided_slice %14 {offsets = [16, 0], sizes = [16, 8], strides = [1, 1]} : vector<64x8xf32> to vector<16x8xf32>
    %c1_21 = arith.constant 1 : index
    %c0_22 = arith.constant 0 : index
    %c0_23 = arith.constant 0 : index
    %27 = vector.load %arg6[%c1_21, %c0_22, %c0_23] : memref<4x8x16xf32, #tpu.memory_space<vmem>>, vector<1x8x16xf32>
    %28 = vector.shape_cast %27 : vector<1x8x16xf32> to vector<8x16xf32>
    %cst_24 = arith.constant dense<0.000000e+00> : vector<16x16xf32>
    %29 = tpu.matmul %26, %28, %cst_24 {dimension_numbers = #tpu.dot_dimension_numbers<[1], [0], [0], [1], [0, 0, 1, 1], [], []>} : vector<16x8xf32>, vector<8x16xf32>, vector<16x16xf32> -> vector<16x16xf32>
    %30 = arith.addf %21, %29 : vector<16x16xf32>
    %c1_25 = arith.constant 1 : index
    %c0_26 = arith.constant 0 : index
    %c0_27 = arith.constant 0 : index
    %31 = vector.load %arg7[%c1_25, %c0_26, %c0_27] : memref<4x8x16xf32, #tpu.memory_space<vmem>>, vector<1x8x16xf32>
    %32 = vector.shape_cast %31 : vector<1x8x16xf32> to vector<8x16xf32>
    %cst_28 = arith.constant dense<0.000000e+00> : vector<16x16xf32>
    %33 = tpu.matmul %26, %32, %cst_28 {dimension_numbers = #tpu.dot_dimension_numbers<[1], [0], [0], [1], [0, 0, 1, 1], [], []>} : vector<16x8xf32>, vector<8x16xf32>, vector<16x16xf32> -> vector<16x16xf32>
    %34 = arith.addf %25, %33 : vector<16x16xf32>
    %35 = vector.extract_strided_slice %14 {offsets = [32, 0], sizes = [16, 8], strides = [1, 1]} : vector<64x8xf32> to vector<16x8xf32>
    %c2 = arith.constant 2 : index
    %c0_29 = arith.constant 0 : index
    %c0_30 = arith.constant 0 : index
    %36 = vector.load %arg6[%c2, %c0_29, %c0_30] : memref<4x8x16xf32, #tpu.memory_space<vmem>>, vector<1x8x16xf32>
    %37 = vector.shape_cast %36 : vector<1x8x16xf32> to vector<8x16xf32>
    %cst_31 = arith.constant dense<0.000000e+00> : vector<16x16xf32>
    %38 = tpu.matmul %35, %37, %cst_31 {dimension_numbers = #tpu.dot_dimension_numbers<[1], [0], [0], [1], [0, 0, 1, 1], [], []>} : vector<16x8xf32>, vector<8x16xf32>, vector<16x16xf32> -> vector<16x16xf32>
    %39 = arith.addf %30, %38 : vector<16x16xf32>
    %c2_32 = arith.constant 2 : index
    %c0_33 = arith.constant 0 : index
    %c0_34 = arith.constant 0 : index
    %40 = vector.load %arg7[%c2_32, %c0_33, %c0_34] : memref<4x8x16xf32, #tpu.memory_space<vmem>>, vector<1x8x16xf32>
    %41 = vector.shape_cast %40 : vector<1x8x16xf32> to vector<8x16xf32>
    %cst_35 = arith.constant dense<0.000000e+00> : vector<16x16xf32>
    %42 = tpu.matmul %35, %41, %cst_35 {dimension_numbers = #tpu.dot_dimension_numbers<[1], [0], [0], [1], [0, 0, 1, 1], [], []>} : vector<16x8xf32>, vector<8x16xf32>, vector<16x16xf32> -> vector<16x16xf32>
    %43 = arith.addf %34, %42 : vector<16x16xf32>
    %44 = vector.extract_strided_slice %14 {offsets = [48, 0], sizes = [16, 8], strides = [1, 1]} : vector<64x8xf32> to vector<16x8xf32>
    %c3 = arith.constant 3 : index
    %c0_36 = arith.constant 0 : index
    %c0_37 = arith.constant 0 : index
    %45 = vector.load %arg6[%c3, %c0_36, %c0_37] : memref<4x8x16xf32, #tpu.memory_space<vmem>>, vector<1x8x16xf32>
    %46 = vector.shape_cast %45 : vector<1x8x16xf32> to vector<8x16xf32>
    %cst_38 = arith.constant dense<0.000000e+00> : vector<16x16xf32>
    %47 = tpu.matmul %44, %46, %cst_38 {dimension_numbers = #tpu.dot_dimension_numbers<[1], [0], [0], [1], [0, 0, 1, 1], [], []>} : vector<16x8xf32>, vector<8x16xf32>, vector<16x16xf32> -> vector<16x16xf32>
    %48 = arith.addf %39, %47 : vector<16x16xf32>
    %c3_39 = arith.constant 3 : index
    %c0_40 = arith.constant 0 : index
    %c0_41 = arith.constant 0 : index
    %49 = vector.load %arg7[%c3_39, %c0_40, %c0_41] : memref<4x8x16xf32, #tpu.memory_space<vmem>>, vector<1x8x16xf32>
    %50 = vector.shape_cast %49 : vector<1x8x16xf32> to vector<8x16xf32>
    %cst_42 = arith.constant dense<0.000000e+00> : vector<16x16xf32>
    %51 = tpu.matmul %44, %50, %cst_42 {dimension_numbers = #tpu.dot_dimension_numbers<[1], [0], [0], [1], [0, 0, 1, 1], [], []>} : vector<16x8xf32>, vector<8x16xf32>, vector<16x16xf32> -> vector<16x16xf32>
    %52 = arith.addf %43, %51 : vector<16x16xf32>
    %c0_43 = arith.constant 0 : index
    %c0_44 = arith.constant 0 : index
    %53 = vector.load %arg8[%c0_43, %c0_44] : memref<3x16xf32, #tpu.memory_space<vmem>>, vector<1x16xf32>
    %54 = vector.broadcast %53 : vector<1x16xf32> to vector<16x16xf32>
    %55 = arith.addf %48, %54 : vector<16x16xf32>
    %c1_45 = arith.constant 1 : index
    %c0_46 = arith.constant 0 : index
    %56 = vector.load %arg8[%c1_45, %c0_46] : memref<3x16xf32, #tpu.memory_space<vmem>>, vector<1x16xf32>
    %57 = vector.broadcast %56 : vector<1x16xf32> to vector<16x16xf32>
    %58 = arith.addf %52, %57 : vector<16x16xf32>
    %c2_47 = arith.constant 2 : index
    %c0_48 = arith.constant 0 : index
    %59 = vector.load %arg8[%c2_47, %c0_48] : memref<3x16xf32, #tpu.memory_space<vmem>>, vector<1x16xf32>
    %cst_49 = arith.constant 0.000000e+00 : f32
    %60 = vector.broadcast %cst_49 : f32 to vector<16x16xf32>
    %61 = arith.cmpf ogt, %58, %60 : vector<16x16xf32>
    %62 = vector.broadcast %59 : vector<1x16xf32> to vector<16x16xf32>
    %63 = arith.mulf %62, %58 : vector<16x16xf32>
    %64 = arith.select %61, %58, %63 : vector<16x16xi1>, vector<16x16xf32>
    %c0_50 = arith.constant 0 : index
    %c0_51 = arith.constant 0 : index
    %65 = vector.load %arg3[%c0_50, %c0_51] : memref<144x16xf32, #tpu.memory_space<vmem>>, vector<144x16xf32>
    %cst_52 = arith.constant dense<0.000000e+00> : vector<144x16xf32>
    %66 = tpu.matmul %65, %64, %cst_52 {dimension_numbers = #tpu.dot_dimension_numbers<[1], [0], [0], [1], [0, 0, 1, 1], [], []>} : vector<144x16xf32>, vector<16x16xf32>, vector<144x16xf32> -> vector<144x16xf32>
    %cst_53 = arith.constant 0.000000e+00 : f32
    %67 = vector.broadcast %cst_53 : f32 to vector<16x16xf32>
    %68 = vector.extract_strided_slice %66 {offsets = [0, 0], sizes = [16, 16], strides = [1, 1]} : vector<144x16xf32> to vector<16x16xf32>
    %c0_54 = arith.constant 0 : index
    %c0_55 = arith.constant 0 : index
    %c0_56 = arith.constant 0 : index
    %69 = vector.load %arg9[%c0_54, %c0_55, %c0_56] : memref<9x16x16xf32, #tpu.memory_space<vmem>>, vector<1x16x16xf32>
    %70 = vector.shape_cast %69 : vector<1x16x16xf32> to vector<16x16xf32>
    %cst_57 = arith.constant dense<0.000000e+00> : vector<16x16xf32>
    %71 = tpu.matmul %68, %70, %cst_57 {dimension_numbers = #tpu.dot_dimension_numbers<[1], [0], [0], [1], [0, 0, 1, 1], [], []>} : vector<16x16xf32>, vector<16x16xf32>, vector<16x16xf32> -> vector<16x16xf32>
    %72 = arith.addf %67, %71 : vector<16x16xf32>
    %73 = vector.extract_strided_slice %66 {offsets = [16, 0], sizes = [16, 16], strides = [1, 1]} : vector<144x16xf32> to vector<16x16xf32>
    %c1_58 = arith.constant 1 : index
    %c0_59 = arith.constant 0 : index
    %c0_60 = arith.constant 0 : index
    %74 = vector.load %arg9[%c1_58, %c0_59, %c0_60] : memref<9x16x16xf32, #tpu.memory_space<vmem>>, vector<1x16x16xf32>
    %75 = vector.shape_cast %74 : vector<1x16x16xf32> to vector<16x16xf32>
    %cst_61 = arith.constant dense<0.000000e+00> : vector<16x16xf32>
    %76 = tpu.matmul %73, %75, %cst_61 {dimension_numbers = #tpu.dot_dimension_numbers<[1], [0], [0], [1], [0, 0, 1, 1], [], []>} : vector<16x16xf32>, vector<16x16xf32>, vector<16x16xf32> -> vector<16x16xf32>
    %77 = arith.addf %72, %76 : vector<16x16xf32>
    %78 = vector.extract_strided_slice %66 {offsets = [32, 0], sizes = [16, 16], strides = [1, 1]} : vector<144x16xf32> to vector<16x16xf32>
    %c2_62 = arith.constant 2 : index
    %c0_63 = arith.constant 0 : index
    %c0_64 = arith.constant 0 : index
    %79 = vector.load %arg9[%c2_62, %c0_63, %c0_64] : memref<9x16x16xf32, #tpu.memory_space<vmem>>, vector<1x16x16xf32>
    %80 = vector.shape_cast %79 : vector<1x16x16xf32> to vector<16x16xf32>
    %cst_65 = arith.constant dense<0.000000e+00> : vector<16x16xf32>
    %81 = tpu.matmul %78, %80, %cst_65 {dimension_numbers = #tpu.dot_dimension_numbers<[1], [0], [0], [1], [0, 0, 1, 1], [], []>} : vector<16x16xf32>, vector<16x16xf32>, vector<16x16xf32> -> vector<16x16xf32>
    %82 = arith.addf %77, %81 : vector<16x16xf32>
    %83 = vector.extract_strided_slice %66 {offsets = [48, 0], sizes = [16, 16], strides = [1, 1]} : vector<144x16xf32> to vector<16x16xf32>
    %c3_66 = arith.constant 3 : index
    %c0_67 = arith.constant 0 : index
    %c0_68 = arith.constant 0 : index
    %84 = vector.load %arg9[%c3_66, %c0_67, %c0_68] : memref<9x16x16xf32, #tpu.memory_space<vmem>>, vector<1x16x16xf32>
    %85 = vector.shape_cast %84 : vector<1x16x16xf32> to vector<16x16xf32>
    %cst_69 = arith.constant dense<0.000000e+00> : vector<16x16xf32>
    %86 = tpu.matmul %83, %85, %cst_69 {dimension_numbers = #tpu.dot_dimension_numbers<[1], [0], [0], [1], [0, 0, 1, 1], [], []>} : vector<16x16xf32>, vector<16x16xf32>, vector<16x16xf32> -> vector<16x16xf32>
    %87 = arith.addf %82, %86 : vector<16x16xf32>
    %88 = vector.extract_strided_slice %66 {offsets = [64, 0], sizes = [16, 16], strides = [1, 1]} : vector<144x16xf32> to vector<16x16xf32>
    %c4 = arith.constant 4 : index
    %c0_70 = arith.constant 0 : index
    %c0_71 = arith.constant 0 : index
    %89 = vector.load %arg9[%c4, %c0_70, %c0_71] : memref<9x16x16xf32, #tpu.memory_space<vmem>>, vector<1x16x16xf32>
    %90 = vector.shape_cast %89 : vector<1x16x16xf32> to vector<16x16xf32>
    %cst_72 = arith.constant dense<0.000000e+00> : vector<16x16xf32>
    %91 = tpu.matmul %88, %90, %cst_72 {dimension_numbers = #tpu.dot_dimension_numbers<[1], [0], [0], [1], [0, 0, 1, 1], [], []>} : vector<16x16xf32>, vector<16x16xf32>, vector<16x16xf32> -> vector<16x16xf32>
    %92 = arith.addf %87, %91 : vector<16x16xf32>
    %93 = vector.extract_strided_slice %66 {offsets = [80, 0], sizes = [16, 16], strides = [1, 1]} : vector<144x16xf32> to vector<16x16xf32>
    %c5 = arith.constant 5 : index
    %c0_73 = arith.constant 0 : index
    %c0_74 = arith.constant 0 : index
    %94 = vector.load %arg9[%c5, %c0_73, %c0_74] : memref<9x16x16xf32, #tpu.memory_space<vmem>>, vector<1x16x16xf32>
    %95 = vector.shape_cast %94 : vector<1x16x16xf32> to vector<16x16xf32>
    %cst_75 = arith.constant dense<0.000000e+00> : vector<16x16xf32>
    %96 = tpu.matmul %93, %95, %cst_75 {dimension_numbers = #tpu.dot_dimension_numbers<[1], [0], [0], [1], [0, 0, 1, 1], [], []>} : vector<16x16xf32>, vector<16x16xf32>, vector<16x16xf32> -> vector<16x16xf32>
    %97 = arith.addf %92, %96 : vector<16x16xf32>
    %98 = vector.extract_strided_slice %66 {offsets = [96, 0], sizes = [16, 16], strides = [1, 1]} : vector<144x16xf32> to vector<16x16xf32>
    %c6 = arith.constant 6 : index
    %c0_76 = arith.constant 0 : index
    %c0_77 = arith.constant 0 : index
    %99 = vector.load %arg9[%c6, %c0_76, %c0_77] : memref<9x16x16xf32, #tpu.memory_space<vmem>>, vector<1x16x16xf32>
    %100 = vector.shape_cast %99 : vector<1x16x16xf32> to vector<16x16xf32>
    %cst_78 = arith.constant dense<0.000000e+00> : vector<16x16xf32>
    %101 = tpu.matmul %98, %100, %cst_78 {dimension_numbers = #tpu.dot_dimension_numbers<[1], [0], [0], [1], [0, 0, 1, 1], [], []>} : vector<16x16xf32>, vector<16x16xf32>, vector<16x16xf32> -> vector<16x16xf32>
    %102 = arith.addf %97, %101 : vector<16x16xf32>
    %103 = vector.extract_strided_slice %66 {offsets = [112, 0], sizes = [16, 16], strides = [1, 1]} : vector<144x16xf32> to vector<16x16xf32>
    %c7 = arith.constant 7 : index
    %c0_79 = arith.constant 0 : index
    %c0_80 = arith.constant 0 : index
    %104 = vector.load %arg9[%c7, %c0_79, %c0_80] : memref<9x16x16xf32, #tpu.memory_space<vmem>>, vector<1x16x16xf32>
    %105 = vector.shape_cast %104 : vector<1x16x16xf32> to vector<16x16xf32>
    %cst_81 = arith.constant dense<0.000000e+00> : vector<16x16xf32>
    %106 = tpu.matmul %103, %105, %cst_81 {dimension_numbers = #tpu.dot_dimension_numbers<[1], [0], [0], [1], [0, 0, 1, 1], [], []>} : vector<16x16xf32>, vector<16x16xf32>, vector<16x16xf32> -> vector<16x16xf32>
    %107 = arith.addf %102, %106 : vector<16x16xf32>
    %108 = vector.extract_strided_slice %66 {offsets = [128, 0], sizes = [16, 16], strides = [1, 1]} : vector<144x16xf32> to vector<16x16xf32>
    %c8 = arith.constant 8 : index
    %c0_82 = arith.constant 0 : index
    %c0_83 = arith.constant 0 : index
    %109 = vector.load %arg9[%c8, %c0_82, %c0_83] : memref<9x16x16xf32, #tpu.memory_space<vmem>>, vector<1x16x16xf32>
    %110 = vector.shape_cast %109 : vector<1x16x16xf32> to vector<16x16xf32>
    %cst_84 = arith.constant dense<0.000000e+00> : vector<16x16xf32>
    %111 = tpu.matmul %108, %110, %cst_84 {dimension_numbers = #tpu.dot_dimension_numbers<[1], [0], [0], [1], [0, 0, 1, 1], [], []>} : vector<16x16xf32>, vector<16x16xf32>, vector<16x16xf32> -> vector<16x16xf32>
    %112 = arith.addf %107, %111 : vector<16x16xf32>
    %c0_85 = arith.constant 0 : index
    %c0_86 = arith.constant 0 : index
    %113 = vector.load %arg10[%c0_85, %c0_86] : memref<1x16xf32, #tpu.memory_space<vmem>>, vector<1x16xf32>
    %114 = vector.broadcast %113 : vector<1x16xf32> to vector<16x16xf32>
    %115 = arith.addf %112, %114 : vector<16x16xf32>
    %cst_87 = arith.constant 5.000000e-01 : f32
    %116 = vector.broadcast %cst_87 : f32 to vector<16x16xf32>
    %117 = arith.mulf %116, %115 : vector<16x16xf32>
    %118 = arith.addf %55, %117 : vector<16x16xf32>
    %c0_88 = arith.constant 0 : index
    %c0_89 = arith.constant 0 : index
    %119 = vector.load %arg3[%c0_88, %c0_89] : memref<144x16xf32, #tpu.memory_space<vmem>>, vector<144x16xf32>
    %cst_90 = arith.constant dense<0.000000e+00> : vector<144x16xf32>
    %120 = tpu.matmul %119, %118, %cst_90 {dimension_numbers = #tpu.dot_dimension_numbers<[1], [0], [0], [1], [0, 0, 1, 1], [], []>} : vector<144x16xf32>, vector<16x16xf32>, vector<144x16xf32> -> vector<144x16xf32>
    %cst_91 = arith.constant 0.000000e+00 : f32
    %121 = vector.broadcast %cst_91 : f32 to vector<16x16xf32>
    %122 = vector.extract_strided_slice %120 {offsets = [0, 0], sizes = [16, 16], strides = [1, 1]} : vector<144x16xf32> to vector<16x16xf32>
    %c0_92 = arith.constant 0 : index
    %c0_93 = arith.constant 0 : index
    %c0_94 = arith.constant 0 : index
    %123 = vector.load %arg11[%c0_92, %c0_93, %c0_94] : memref<9x16x16xf32, #tpu.memory_space<vmem>>, vector<1x16x16xf32>
    %124 = vector.shape_cast %123 : vector<1x16x16xf32> to vector<16x16xf32>
    %cst_95 = arith.constant dense<0.000000e+00> : vector<16x16xf32>
    %125 = tpu.matmul %122, %124, %cst_95 {dimension_numbers = #tpu.dot_dimension_numbers<[1], [0], [0], [1], [0, 0, 1, 1], [], []>} : vector<16x16xf32>, vector<16x16xf32>, vector<16x16xf32> -> vector<16x16xf32>
    %126 = arith.addf %121, %125 : vector<16x16xf32>
    %127 = vector.extract_strided_slice %120 {offsets = [16, 0], sizes = [16, 16], strides = [1, 1]} : vector<144x16xf32> to vector<16x16xf32>
    %c1_96 = arith.constant 1 : index
    %c0_97 = arith.constant 0 : index
    %c0_98 = arith.constant 0 : index
    %128 = vector.load %arg11[%c1_96, %c0_97, %c0_98] : memref<9x16x16xf32, #tpu.memory_space<vmem>>, vector<1x16x16xf32>
    %129 = vector.shape_cast %128 : vector<1x16x16xf32> to vector<16x16xf32>
    %cst_99 = arith.constant dense<0.000000e+00> : vector<16x16xf32>
    %130 = tpu.matmul %127, %129, %cst_99 {dimension_numbers = #tpu.dot_dimension_numbers<[1], [0], [0], [1], [0, 0, 1, 1], [], []>} : vector<16x16xf32>, vector<16x16xf32>, vector<16x16xf32> -> vector<16x16xf32>
    %131 = arith.addf %126, %130 : vector<16x16xf32>
    %132 = vector.extract_strided_slice %120 {offsets = [32, 0], sizes = [16, 16], strides = [1, 1]} : vector<144x16xf32> to vector<16x16xf32>
    %c2_100 = arith.constant 2 : index
    %c0_101 = arith.constant 0 : index
    %c0_102 = arith.constant 0 : index
    %133 = vector.load %arg11[%c2_100, %c0_101, %c0_102] : memref<9x16x16xf32, #tpu.memory_space<vmem>>, vector<1x16x16xf32>
    %134 = vector.shape_cast %133 : vector<1x16x16xf32> to vector<16x16xf32>
    %cst_103 = arith.constant dense<0.000000e+00> : vector<16x16xf32>
    %135 = tpu.matmul %132, %134, %cst_103 {dimension_numbers = #tpu.dot_dimension_numbers<[1], [0], [0], [1], [0, 0, 1, 1], [], []>} : vector<16x16xf32>, vector<16x16xf32>, vector<16x16xf32> -> vector<16x16xf32>
    %136 = arith.addf %131, %135 : vector<16x16xf32>
    %137 = vector.extract_strided_slice %120 {offsets = [48, 0], sizes = [16, 16], strides = [1, 1]} : vector<144x16xf32> to vector<16x16xf32>
    %c3_104 = arith.constant 3 : index
    %c0_105 = arith.constant 0 : index
    %c0_106 = arith.constant 0 : index
    %138 = vector.load %arg11[%c3_104, %c0_105, %c0_106] : memref<9x16x16xf32, #tpu.memory_space<vmem>>, vector<1x16x16xf32>
    %139 = vector.shape_cast %138 : vector<1x16x16xf32> to vector<16x16xf32>
    %cst_107 = arith.constant dense<0.000000e+00> : vector<16x16xf32>
    %140 = tpu.matmul %137, %139, %cst_107 {dimension_numbers = #tpu.dot_dimension_numbers<[1], [0], [0], [1], [0, 0, 1, 1], [], []>} : vector<16x16xf32>, vector<16x16xf32>, vector<16x16xf32> -> vector<16x16xf32>
    %141 = arith.addf %136, %140 : vector<16x16xf32>
    %142 = vector.extract_strided_slice %120 {offsets = [64, 0], sizes = [16, 16], strides = [1, 1]} : vector<144x16xf32> to vector<16x16xf32>
    %c4_108 = arith.constant 4 : index
    %c0_109 = arith.constant 0 : index
    %c0_110 = arith.constant 0 : index
    %143 = vector.load %arg11[%c4_108, %c0_109, %c0_110] : memref<9x16x16xf32, #tpu.memory_space<vmem>>, vector<1x16x16xf32>
    %144 = vector.shape_cast %143 : vector<1x16x16xf32> to vector<16x16xf32>
    %cst_111 = arith.constant dense<0.000000e+00> : vector<16x16xf32>
    %145 = tpu.matmul %142, %144, %cst_111 {dimension_numbers = #tpu.dot_dimension_numbers<[1], [0], [0], [1], [0, 0, 1, 1], [], []>} : vector<16x16xf32>, vector<16x16xf32>, vector<16x16xf32> -> vector<16x16xf32>
    %146 = arith.addf %141, %145 : vector<16x16xf32>
    %147 = vector.extract_strided_slice %120 {offsets = [80, 0], sizes = [16, 16], strides = [1, 1]} : vector<144x16xf32> to vector<16x16xf32>
    %c5_112 = arith.constant 5 : index
    %c0_113 = arith.constant 0 : index
    %c0_114 = arith.constant 0 : index
    %148 = vector.load %arg11[%c5_112, %c0_113, %c0_114] : memref<9x16x16xf32, #tpu.memory_space<vmem>>, vector<1x16x16xf32>
    %149 = vector.shape_cast %148 : vector<1x16x16xf32> to vector<16x16xf32>
    %cst_115 = arith.constant dense<0.000000e+00> : vector<16x16xf32>
    %150 = tpu.matmul %147, %149, %cst_115 {dimension_numbers = #tpu.dot_dimension_numbers<[1], [0], [0], [1], [0, 0, 1, 1], [], []>} : vector<16x16xf32>, vector<16x16xf32>, vector<16x16xf32> -> vector<16x16xf32>
    %151 = arith.addf %146, %150 : vector<16x16xf32>
    %152 = vector.extract_strided_slice %120 {offsets = [96, 0], sizes = [16, 16], strides = [1, 1]} : vector<144x16xf32> to vector<16x16xf32>
    %c6_116 = arith.constant 6 : index
    %c0_117 = arith.constant 0 : index
    %c0_118 = arith.constant 0 : index
    %153 = vector.load %arg11[%c6_116, %c0_117, %c0_118] : memref<9x16x16xf32, #tpu.memory_space<vmem>>, vector<1x16x16xf32>
    %154 = vector.shape_cast %153 : vector<1x16x16xf32> to vector<16x16xf32>
    %cst_119 = arith.constant dense<0.000000e+00> : vector<16x16xf32>
    %155 = tpu.matmul %152, %154, %cst_119 {dimension_numbers = #tpu.dot_dimension_numbers<[1], [0], [0], [1], [0, 0, 1, 1], [], []>} : vector<16x16xf32>, vector<16x16xf32>, vector<16x16xf32> -> vector<16x16xf32>
    %156 = arith.addf %151, %155 : vector<16x16xf32>
    %157 = vector.extract_strided_slice %120 {offsets = [112, 0], sizes = [16, 16], strides = [1, 1]} : vector<144x16xf32> to vector<16x16xf32>
    %c7_120 = arith.constant 7 : index
    %c0_121 = arith.constant 0 : index
    %c0_122 = arith.constant 0 : index
    %158 = vector.load %arg11[%c7_120, %c0_121, %c0_122] : memref<9x16x16xf32, #tpu.memory_space<vmem>>, vector<1x16x16xf32>
    %159 = vector.shape_cast %158 : vector<1x16x16xf32> to vector<16x16xf32>
    %cst_123 = arith.constant dense<0.000000e+00> : vector<16x16xf32>
    %160 = tpu.matmul %157, %159, %cst_123 {dimension_numbers = #tpu.dot_dimension_numbers<[1], [0], [0], [1], [0, 0, 1, 1], [], []>} : vector<16x16xf32>, vector<16x16xf32>, vector<16x16xf32> -> vector<16x16xf32>
    %161 = arith.addf %156, %160 : vector<16x16xf32>
    %162 = vector.extract_strided_slice %120 {offsets = [128, 0], sizes = [16, 16], strides = [1, 1]} : vector<144x16xf32> to vector<16x16xf32>
    %c8_124 = arith.constant 8 : index
    %c0_125 = arith.constant 0 : index
    %c0_126 = arith.constant 0 : index
    %163 = vector.load %arg11[%c8_124, %c0_125, %c0_126] : memref<9x16x16xf32, #tpu.memory_space<vmem>>, vector<1x16x16xf32>
    %164 = vector.shape_cast %163 : vector<1x16x16xf32> to vector<16x16xf32>
    %cst_127 = arith.constant dense<0.000000e+00> : vector<16x16xf32>
    %165 = tpu.matmul %162, %164, %cst_127 {dimension_numbers = #tpu.dot_dimension_numbers<[1], [0], [0], [1], [0, 0, 1, 1], [], []>} : vector<16x16xf32>, vector<16x16xf32>, vector<16x16xf32> -> vector<16x16xf32>
    %166 = arith.addf %161, %165 : vector<16x16xf32>
    %c0_128 = arith.constant 0 : index
    %c0_129 = arith.constant 0 : index
    %167 = vector.load %arg13[%c0_128, %c0_129] : memref<3x16xf32, #tpu.memory_space<vmem>>, vector<1x16xf32>
    %168 = vector.broadcast %167 : vector<1x16xf32> to vector<16x16xf32>
    %169 = arith.addf %166, %168 : vector<16x16xf32>
    %c1_130 = arith.constant 1 : index
    %c0_131 = arith.constant 0 : index
    %170 = vector.load %arg13[%c1_130, %c0_131] : memref<3x16xf32, #tpu.memory_space<vmem>>, vector<1x16xf32>
    %cst_132 = arith.constant 0.000000e+00 : f32
    %171 = vector.broadcast %cst_132 : f32 to vector<16x16xf32>
    %172 = arith.cmpf ogt, %169, %171 : vector<16x16xf32>
    %173 = vector.broadcast %170 : vector<1x16xf32> to vector<16x16xf32>
    %174 = arith.mulf %173, %169 : vector<16x16xf32>
    %175 = arith.select %172, %169, %174 : vector<16x16xi1>, vector<16x16xf32>
    %c0_133 = arith.constant 0 : index
    %c0_134 = arith.constant 0 : index
    %176 = vector.load %arg3[%c0_133, %c0_134] : memref<144x16xf32, #tpu.memory_space<vmem>>, vector<144x16xf32>
    %cst_135 = arith.constant dense<0.000000e+00> : vector<144x16xf32>
    %177 = tpu.matmul %176, %175, %cst_135 {dimension_numbers = #tpu.dot_dimension_numbers<[1], [0], [0], [1], [0, 0, 1, 1], [], []>} : vector<144x16xf32>, vector<16x16xf32>, vector<144x16xf32> -> vector<144x16xf32>
    %cst_136 = arith.constant 0.000000e+00 : f32
    %178 = vector.broadcast %cst_136 : f32 to vector<16x16xf32>
    %179 = vector.extract_strided_slice %177 {offsets = [0, 0], sizes = [16, 16], strides = [1, 1]} : vector<144x16xf32> to vector<16x16xf32>
    %c0_137 = arith.constant 0 : index
    %c0_138 = arith.constant 0 : index
    %c0_139 = arith.constant 0 : index
    %180 = vector.load %arg12[%c0_137, %c0_138, %c0_139] : memref<9x16x16xf32, #tpu.memory_space<vmem>>, vector<1x16x16xf32>
    %181 = vector.shape_cast %180 : vector<1x16x16xf32> to vector<16x16xf32>
    %cst_140 = arith.constant dense<0.000000e+00> : vector<16x16xf32>
    %182 = tpu.matmul %179, %181, %cst_140 {dimension_numbers = #tpu.dot_dimension_numbers<[1], [0], [0], [1], [0, 0, 1, 1], [], []>} : vector<16x16xf32>, vector<16x16xf32>, vector<16x16xf32> -> vector<16x16xf32>
    %183 = arith.addf %178, %182 : vector<16x16xf32>
    %184 = vector.extract_strided_slice %177 {offsets = [16, 0], sizes = [16, 16], strides = [1, 1]} : vector<144x16xf32> to vector<16x16xf32>
    %c1_141 = arith.constant 1 : index
    %c0_142 = arith.constant 0 : index
    %c0_143 = arith.constant 0 : index
    %185 = vector.load %arg12[%c1_141, %c0_142, %c0_143] : memref<9x16x16xf32, #tpu.memory_space<vmem>>, vector<1x16x16xf32>
    %186 = vector.shape_cast %185 : vector<1x16x16xf32> to vector<16x16xf32>
    %cst_144 = arith.constant dense<0.000000e+00> : vector<16x16xf32>
    %187 = tpu.matmul %184, %186, %cst_144 {dimension_numbers = #tpu.dot_dimension_numbers<[1], [0], [0], [1], [0, 0, 1, 1], [], []>} : vector<16x16xf32>, vector<16x16xf32>, vector<16x16xf32> -> vector<16x16xf32>
    %188 = arith.addf %183, %187 : vector<16x16xf32>
    %189 = vector.extract_strided_slice %177 {offsets = [32, 0], sizes = [16, 16], strides = [1, 1]} : vector<144x16xf32> to vector<16x16xf32>
    %c2_145 = arith.constant 2 : index
    %c0_146 = arith.constant 0 : index
    %c0_147 = arith.constant 0 : index
    %190 = vector.load %arg12[%c2_145, %c0_146, %c0_147] : memref<9x16x16xf32, #tpu.memory_space<vmem>>, vector<1x16x16xf32>
    %191 = vector.shape_cast %190 : vector<1x16x16xf32> to vector<16x16xf32>
    %cst_148 = arith.constant dense<0.000000e+00> : vector<16x16xf32>
    %192 = tpu.matmul %189, %191, %cst_148 {dimension_numbers = #tpu.dot_dimension_numbers<[1], [0], [0], [1], [0, 0, 1, 1], [], []>} : vector<16x16xf32>, vector<16x16xf32>, vector<16x16xf32> -> vector<16x16xf32>
    %193 = arith.addf %188, %192 : vector<16x16xf32>
    %194 = vector.extract_strided_slice %177 {offsets = [48, 0], sizes = [16, 16], strides = [1, 1]} : vector<144x16xf32> to vector<16x16xf32>
    %c3_149 = arith.constant 3 : index
    %c0_150 = arith.constant 0 : index
    %c0_151 = arith.constant 0 : index
    %195 = vector.load %arg12[%c3_149, %c0_150, %c0_151] : memref<9x16x16xf32, #tpu.memory_space<vmem>>, vector<1x16x16xf32>
    %196 = vector.shape_cast %195 : vector<1x16x16xf32> to vector<16x16xf32>
    %cst_152 = arith.constant dense<0.000000e+00> : vector<16x16xf32>
    %197 = tpu.matmul %194, %196, %cst_152 {dimension_numbers = #tpu.dot_dimension_numbers<[1], [0], [0], [1], [0, 0, 1, 1], [], []>} : vector<16x16xf32>, vector<16x16xf32>, vector<16x16xf32> -> vector<16x16xf32>
    %198 = arith.addf %193, %197 : vector<16x16xf32>
    %199 = vector.extract_strided_slice %177 {offsets = [64, 0], sizes = [16, 16], strides = [1, 1]} : vector<144x16xf32> to vector<16x16xf32>
    %c4_153 = arith.constant 4 : index
    %c0_154 = arith.constant 0 : index
    %c0_155 = arith.constant 0 : index
    %200 = vector.load %arg12[%c4_153, %c0_154, %c0_155] : memref<9x16x16xf32, #tpu.memory_space<vmem>>, vector<1x16x16xf32>
    %201 = vector.shape_cast %200 : vector<1x16x16xf32> to vector<16x16xf32>
    %cst_156 = arith.constant dense<0.000000e+00> : vector<16x16xf32>
    %202 = tpu.matmul %199, %201, %cst_156 {dimension_numbers = #tpu.dot_dimension_numbers<[1], [0], [0], [1], [0, 0, 1, 1], [], []>} : vector<16x16xf32>, vector<16x16xf32>, vector<16x16xf32> -> vector<16x16xf32>
    %203 = arith.addf %198, %202 : vector<16x16xf32>
    %204 = vector.extract_strided_slice %177 {offsets = [80, 0], sizes = [16, 16], strides = [1, 1]} : vector<144x16xf32> to vector<16x16xf32>
    %c5_157 = arith.constant 5 : index
    %c0_158 = arith.constant 0 : index
    %c0_159 = arith.constant 0 : index
    %205 = vector.load %arg12[%c5_157, %c0_158, %c0_159] : memref<9x16x16xf32, #tpu.memory_space<vmem>>, vector<1x16x16xf32>
    %206 = vector.shape_cast %205 : vector<1x16x16xf32> to vector<16x16xf32>
    %cst_160 = arith.constant dense<0.000000e+00> : vector<16x16xf32>
    %207 = tpu.matmul %204, %206, %cst_160 {dimension_numbers = #tpu.dot_dimension_numbers<[1], [0], [0], [1], [0, 0, 1, 1], [], []>} : vector<16x16xf32>, vector<16x16xf32>, vector<16x16xf32> -> vector<16x16xf32>
    %208 = arith.addf %203, %207 : vector<16x16xf32>
    %209 = vector.extract_strided_slice %177 {offsets = [96, 0], sizes = [16, 16], strides = [1, 1]} : vector<144x16xf32> to vector<16x16xf32>
    %c6_161 = arith.constant 6 : index
    %c0_162 = arith.constant 0 : index
    %c0_163 = arith.constant 0 : index
    %210 = vector.load %arg12[%c6_161, %c0_162, %c0_163] : memref<9x16x16xf32, #tpu.memory_space<vmem>>, vector<1x16x16xf32>
    %211 = vector.shape_cast %210 : vector<1x16x16xf32> to vector<16x16xf32>
    %cst_164 = arith.constant dense<0.000000e+00> : vector<16x16xf32>
    %212 = tpu.matmul %209, %211, %cst_164 {dimension_numbers = #tpu.dot_dimension_numbers<[1], [0], [0], [1], [0, 0, 1, 1], [], []>} : vector<16x16xf32>, vector<16x16xf32>, vector<16x16xf32> -> vector<16x16xf32>
    %213 = arith.addf %208, %212 : vector<16x16xf32>
    %214 = vector.extract_strided_slice %177 {offsets = [112, 0], sizes = [16, 16], strides = [1, 1]} : vector<144x16xf32> to vector<16x16xf32>
    %c7_165 = arith.constant 7 : index
    %c0_166 = arith.constant 0 : index
    %c0_167 = arith.constant 0 : index
    %215 = vector.load %arg12[%c7_165, %c0_166, %c0_167] : memref<9x16x16xf32, #tpu.memory_space<vmem>>, vector<1x16x16xf32>
    %216 = vector.shape_cast %215 : vector<1x16x16xf32> to vector<16x16xf32>
    %cst_168 = arith.constant dense<0.000000e+00> : vector<16x16xf32>
    %217 = tpu.matmul %214, %216, %cst_168 {dimension_numbers = #tpu.dot_dimension_numbers<[1], [0], [0], [1], [0, 0, 1, 1], [], []>} : vector<16x16xf32>, vector<16x16xf32>, vector<16x16xf32> -> vector<16x16xf32>
    %218 = arith.addf %213, %217 : vector<16x16xf32>
    %219 = vector.extract_strided_slice %177 {offsets = [128, 0], sizes = [16, 16], strides = [1, 1]} : vector<144x16xf32> to vector<16x16xf32>
    %c8_169 = arith.constant 8 : index
    %c0_170 = arith.constant 0 : index
    %c0_171 = arith.constant 0 : index
    %220 = vector.load %arg12[%c8_169, %c0_170, %c0_171] : memref<9x16x16xf32, #tpu.memory_space<vmem>>, vector<1x16x16xf32>
    %221 = vector.shape_cast %220 : vector<1x16x16xf32> to vector<16x16xf32>
    %cst_172 = arith.constant dense<0.000000e+00> : vector<16x16xf32>
    %222 = tpu.matmul %219, %221, %cst_172 {dimension_numbers = #tpu.dot_dimension_numbers<[1], [0], [0], [1], [0, 0, 1, 1], [], []>} : vector<16x16xf32>, vector<16x16xf32>, vector<16x16xf32> -> vector<16x16xf32>
    %223 = arith.addf %218, %222 : vector<16x16xf32>
    %c2_173 = arith.constant 2 : index
    %c0_174 = arith.constant 0 : index
    %224 = vector.load %arg13[%c2_173, %c0_174] : memref<3x16xf32, #tpu.memory_space<vmem>>, vector<1x16xf32>
    %225 = vector.broadcast %224 : vector<1x16xf32> to vector<16x16xf32>
    %226 = arith.addf %223, %225 : vector<16x16xf32>
    %227 = arith.addf %118, %226 : vector<16x16xf32>
    %cst_175 = arith.constant 0.000000e+00 : f32
    %228 = vector.broadcast %cst_175 : f32 to vector<1x32xf32>
    %229 = vector.extract_strided_slice %227 {offsets = [0, 0], sizes = [1, 16], strides = [1, 1]} : vector<16x16xf32> to vector<1x16xf32>
    %c0_176 = arith.constant 0 : index
    %c0_177 = arith.constant 0 : index
    %c0_178 = arith.constant 0 : index
    %230 = vector.load %arg14[%c0_176, %c0_177, %c0_178] : memref<16x16x32xf32, #tpu.memory_space<vmem>>, vector<1x16x32xf32>
    %231 = vector.shape_cast %230 : vector<1x16x32xf32> to vector<16x32xf32>
    %cst_179 = arith.constant dense<0.000000e+00> : vector<1x32xf32>
    %232 = tpu.matmul %229, %231, %cst_179 {dimension_numbers = #tpu.dot_dimension_numbers<[1], [0], [0], [1], [0, 0, 1, 1], [], []>} : vector<1x16xf32>, vector<16x32xf32>, vector<1x32xf32> -> vector<1x32xf32>
    %233 = arith.addf %228, %232 : vector<1x32xf32>
    %234 = vector.extract_strided_slice %227 {offsets = [1, 0], sizes = [1, 16], strides = [1, 1]} : vector<16x16xf32> to vector<1x16xf32>
    %c1_180 = arith.constant 1 : index
    %c0_181 = arith.constant 0 : index
    %c0_182 = arith.constant 0 : index
    %235 = vector.load %arg14[%c1_180, %c0_181, %c0_182] : memref<16x16x32xf32, #tpu.memory_space<vmem>>, vector<1x16x32xf32>
    %236 = vector.shape_cast %235 : vector<1x16x32xf32> to vector<16x32xf32>
    %cst_183 = arith.constant dense<0.000000e+00> : vector<1x32xf32>
    %237 = tpu.matmul %234, %236, %cst_183 {dimension_numbers = #tpu.dot_dimension_numbers<[1], [0], [0], [1], [0, 0, 1, 1], [], []>} : vector<1x16xf32>, vector<16x32xf32>, vector<1x32xf32> -> vector<1x32xf32>
    %238 = arith.addf %233, %237 : vector<1x32xf32>
    %239 = vector.extract_strided_slice %227 {offsets = [2, 0], sizes = [1, 16], strides = [1, 1]} : vector<16x16xf32> to vector<1x16xf32>
    %c2_184 = arith.constant 2 : index
    %c0_185 = arith.constant 0 : index
    %c0_186 = arith.constant 0 : index
    %240 = vector.load %arg14[%c2_184, %c0_185, %c0_186] : memref<16x16x32xf32, #tpu.memory_space<vmem>>, vector<1x16x32xf32>
    %241 = vector.shape_cast %240 : vector<1x16x32xf32> to vector<16x32xf32>
    %cst_187 = arith.constant dense<0.000000e+00> : vector<1x32xf32>
    %242 = tpu.matmul %239, %241, %cst_187 {dimension_numbers = #tpu.dot_dimension_numbers<[1], [0], [0], [1], [0, 0, 1, 1], [], []>} : vector<1x16xf32>, vector<16x32xf32>, vector<1x32xf32> -> vector<1x32xf32>
    %243 = arith.addf %238, %242 : vector<1x32xf32>
    %244 = vector.extract_strided_slice %227 {offsets = [3, 0], sizes = [1, 16], strides = [1, 1]} : vector<16x16xf32> to vector<1x16xf32>
    %c3_188 = arith.constant 3 : index
    %c0_189 = arith.constant 0 : index
    %c0_190 = arith.constant 0 : index
    %245 = vector.load %arg14[%c3_188, %c0_189, %c0_190] : memref<16x16x32xf32, #tpu.memory_space<vmem>>, vector<1x16x32xf32>
    %246 = vector.shape_cast %245 : vector<1x16x32xf32> to vector<16x32xf32>
    %cst_191 = arith.constant dense<0.000000e+00> : vector<1x32xf32>
    %247 = tpu.matmul %244, %246, %cst_191 {dimension_numbers = #tpu.dot_dimension_numbers<[1], [0], [0], [1], [0, 0, 1, 1], [], []>} : vector<1x16xf32>, vector<16x32xf32>, vector<1x32xf32> -> vector<1x32xf32>
    %248 = arith.addf %243, %247 : vector<1x32xf32>
    %249 = vector.extract_strided_slice %227 {offsets = [4, 0], sizes = [1, 16], strides = [1, 1]} : vector<16x16xf32> to vector<1x16xf32>
    %c4_192 = arith.constant 4 : index
    %c0_193 = arith.constant 0 : index
    %c0_194 = arith.constant 0 : index
    %250 = vector.load %arg14[%c4_192, %c0_193, %c0_194] : memref<16x16x32xf32, #tpu.memory_space<vmem>>, vector<1x16x32xf32>
    %251 = vector.shape_cast %250 : vector<1x16x32xf32> to vector<16x32xf32>
    %cst_195 = arith.constant dense<0.000000e+00> : vector<1x32xf32>
    %252 = tpu.matmul %249, %251, %cst_195 {dimension_numbers = #tpu.dot_dimension_numbers<[1], [0], [0], [1], [0, 0, 1, 1], [], []>} : vector<1x16xf32>, vector<16x32xf32>, vector<1x32xf32> -> vector<1x32xf32>
    %253 = arith.addf %248, %252 : vector<1x32xf32>
    %254 = vector.extract_strided_slice %227 {offsets = [5, 0], sizes = [1, 16], strides = [1, 1]} : vector<16x16xf32> to vector<1x16xf32>
    %c5_196 = arith.constant 5 : index
    %c0_197 = arith.constant 0 : index
    %c0_198 = arith.constant 0 : index
    %255 = vector.load %arg14[%c5_196, %c0_197, %c0_198] : memref<16x16x32xf32, #tpu.memory_space<vmem>>, vector<1x16x32xf32>
    %256 = vector.shape_cast %255 : vector<1x16x32xf32> to vector<16x32xf32>
    %cst_199 = arith.constant dense<0.000000e+00> : vector<1x32xf32>
    %257 = tpu.matmul %254, %256, %cst_199 {dimension_numbers = #tpu.dot_dimension_numbers<[1], [0], [0], [1], [0, 0, 1, 1], [], []>} : vector<1x16xf32>, vector<16x32xf32>, vector<1x32xf32> -> vector<1x32xf32>
    %258 = arith.addf %253, %257 : vector<1x32xf32>
    %259 = vector.extract_strided_slice %227 {offsets = [6, 0], sizes = [1, 16], strides = [1, 1]} : vector<16x16xf32> to vector<1x16xf32>
    %c6_200 = arith.constant 6 : index
    %c0_201 = arith.constant 0 : index
    %c0_202 = arith.constant 0 : index
    %260 = vector.load %arg14[%c6_200, %c0_201, %c0_202] : memref<16x16x32xf32, #tpu.memory_space<vmem>>, vector<1x16x32xf32>
    %261 = vector.shape_cast %260 : vector<1x16x32xf32> to vector<16x32xf32>
    %cst_203 = arith.constant dense<0.000000e+00> : vector<1x32xf32>
    %262 = tpu.matmul %259, %261, %cst_203 {dimension_numbers = #tpu.dot_dimension_numbers<[1], [0], [0], [1], [0, 0, 1, 1], [], []>} : vector<1x16xf32>, vector<16x32xf32>, vector<1x32xf32> -> vector<1x32xf32>
    %263 = arith.addf %258, %262 : vector<1x32xf32>
    %264 = vector.extract_strided_slice %227 {offsets = [7, 0], sizes = [1, 16], strides = [1, 1]} : vector<16x16xf32> to vector<1x16xf32>
    %c7_204 = arith.constant 7 : index
    %c0_205 = arith.constant 0 : index
    %c0_206 = arith.constant 0 : index
    %265 = vector.load %arg14[%c7_204, %c0_205, %c0_206] : memref<16x16x32xf32, #tpu.memory_space<vmem>>, vector<1x16x32xf32>
    %266 = vector.shape_cast %265 : vector<1x16x32xf32> to vector<16x32xf32>
    %cst_207 = arith.constant dense<0.000000e+00> : vector<1x32xf32>
    %267 = tpu.matmul %264, %266, %cst_207 {dimension_numbers = #tpu.dot_dimension_numbers<[1], [0], [0], [1], [0, 0, 1, 1], [], []>} : vector<1x16xf32>, vector<16x32xf32>, vector<1x32xf32> -> vector<1x32xf32>
    %268 = arith.addf %263, %267 : vector<1x32xf32>
    %269 = vector.extract_strided_slice %227 {offsets = [8, 0], sizes = [1, 16], strides = [1, 1]} : vector<16x16xf32> to vector<1x16xf32>
    %c8_208 = arith.constant 8 : index
    %c0_209 = arith.constant 0 : index
    %c0_210 = arith.constant 0 : index
    %270 = vector.load %arg14[%c8_208, %c0_209, %c0_210] : memref<16x16x32xf32, #tpu.memory_space<vmem>>, vector<1x16x32xf32>
    %271 = vector.shape_cast %270 : vector<1x16x32xf32> to vector<16x32xf32>
    %cst_211 = arith.constant dense<0.000000e+00> : vector<1x32xf32>
    %272 = tpu.matmul %269, %271, %cst_211 {dimension_numbers = #tpu.dot_dimension_numbers<[1], [0], [0], [1], [0, 0, 1, 1], [], []>} : vector<1x16xf32>, vector<16x32xf32>, vector<1x32xf32> -> vector<1x32xf32>
    %273 = arith.addf %268, %272 : vector<1x32xf32>
    %274 = vector.extract_strided_slice %227 {offsets = [9, 0], sizes = [1, 16], strides = [1, 1]} : vector<16x16xf32> to vector<1x16xf32>
    %c9 = arith.constant 9 : index
    %c0_212 = arith.constant 0 : index
    %c0_213 = arith.constant 0 : index
    %275 = vector.load %arg14[%c9, %c0_212, %c0_213] : memref<16x16x32xf32, #tpu.memory_space<vmem>>, vector<1x16x32xf32>
    %276 = vector.shape_cast %275 : vector<1x16x32xf32> to vector<16x32xf32>
    %cst_214 = arith.constant dense<0.000000e+00> : vector<1x32xf32>
    %277 = tpu.matmul %274, %276, %cst_214 {dimension_numbers = #tpu.dot_dimension_numbers<[1], [0], [0], [1], [0, 0, 1, 1], [], []>} : vector<1x16xf32>, vector<16x32xf32>, vector<1x32xf32> -> vector<1x32xf32>
    %278 = arith.addf %273, %277 : vector<1x32xf32>
    %279 = vector.extract_strided_slice %227 {offsets = [10, 0], sizes = [1, 16], strides = [1, 1]} : vector<16x16xf32> to vector<1x16xf32>
    %c10 = arith.constant 10 : index
    %c0_215 = arith.constant 0 : index
    %c0_216 = arith.constant 0 : index
    %280 = vector.load %arg14[%c10, %c0_215, %c0_216] : memref<16x16x32xf32, #tpu.memory_space<vmem>>, vector<1x16x32xf32>
    %281 = vector.shape_cast %280 : vector<1x16x32xf32> to vector<16x32xf32>
    %cst_217 = arith.constant dense<0.000000e+00> : vector<1x32xf32>
    %282 = tpu.matmul %279, %281, %cst_217 {dimension_numbers = #tpu.dot_dimension_numbers<[1], [0], [0], [1], [0, 0, 1, 1], [], []>} : vector<1x16xf32>, vector<16x32xf32>, vector<1x32xf32> -> vector<1x32xf32>
    %283 = arith.addf %278, %282 : vector<1x32xf32>
    %284 = vector.extract_strided_slice %227 {offsets = [11, 0], sizes = [1, 16], strides = [1, 1]} : vector<16x16xf32> to vector<1x16xf32>
    %c11 = arith.constant 11 : index
    %c0_218 = arith.constant 0 : index
    %c0_219 = arith.constant 0 : index
    %285 = vector.load %arg14[%c11, %c0_218, %c0_219] : memref<16x16x32xf32, #tpu.memory_space<vmem>>, vector<1x16x32xf32>
    %286 = vector.shape_cast %285 : vector<1x16x32xf32> to vector<16x32xf32>
    %cst_220 = arith.constant dense<0.000000e+00> : vector<1x32xf32>
    %287 = tpu.matmul %284, %286, %cst_220 {dimension_numbers = #tpu.dot_dimension_numbers<[1], [0], [0], [1], [0, 0, 1, 1], [], []>} : vector<1x16xf32>, vector<16x32xf32>, vector<1x32xf32> -> vector<1x32xf32>
    %288 = arith.addf %283, %287 : vector<1x32xf32>
    %289 = vector.extract_strided_slice %227 {offsets = [12, 0], sizes = [1, 16], strides = [1, 1]} : vector<16x16xf32> to vector<1x16xf32>
    %c12 = arith.constant 12 : index
    %c0_221 = arith.constant 0 : index
    %c0_222 = arith.constant 0 : index
    %290 = vector.load %arg14[%c12, %c0_221, %c0_222] : memref<16x16x32xf32, #tpu.memory_space<vmem>>, vector<1x16x32xf32>
    %291 = vector.shape_cast %290 : vector<1x16x32xf32> to vector<16x32xf32>
    %cst_223 = arith.constant dense<0.000000e+00> : vector<1x32xf32>
    %292 = tpu.matmul %289, %291, %cst_223 {dimension_numbers = #tpu.dot_dimension_numbers<[1], [0], [0], [1], [0, 0, 1, 1], [], []>} : vector<1x16xf32>, vector<16x32xf32>, vector<1x32xf32> -> vector<1x32xf32>
    %293 = arith.addf %288, %292 : vector<1x32xf32>
    %294 = vector.extract_strided_slice %227 {offsets = [13, 0], sizes = [1, 16], strides = [1, 1]} : vector<16x16xf32> to vector<1x16xf32>
    %c13 = arith.constant 13 : index
    %c0_224 = arith.constant 0 : index
    %c0_225 = arith.constant 0 : index
    %295 = vector.load %arg14[%c13, %c0_224, %c0_225] : memref<16x16x32xf32, #tpu.memory_space<vmem>>, vector<1x16x32xf32>
    %296 = vector.shape_cast %295 : vector<1x16x32xf32> to vector<16x32xf32>
    %cst_226 = arith.constant dense<0.000000e+00> : vector<1x32xf32>
    %297 = tpu.matmul %294, %296, %cst_226 {dimension_numbers = #tpu.dot_dimension_numbers<[1], [0], [0], [1], [0, 0, 1, 1], [], []>} : vector<1x16xf32>, vector<16x32xf32>, vector<1x32xf32> -> vector<1x32xf32>
    %298 = arith.addf %293, %297 : vector<1x32xf32>
    %299 = vector.extract_strided_slice %227 {offsets = [14, 0], sizes = [1, 16], strides = [1, 1]} : vector<16x16xf32> to vector<1x16xf32>
    %c14 = arith.constant 14 : index
    %c0_227 = arith.constant 0 : index
    %c0_228 = arith.constant 0 : index
    %300 = vector.load %arg14[%c14, %c0_227, %c0_228] : memref<16x16x32xf32, #tpu.memory_space<vmem>>, vector<1x16x32xf32>
    %301 = vector.shape_cast %300 : vector<1x16x32xf32> to vector<16x32xf32>
    %cst_229 = arith.constant dense<0.000000e+00> : vector<1x32xf32>
    %302 = tpu.matmul %299, %301, %cst_229 {dimension_numbers = #tpu.dot_dimension_numbers<[1], [0], [0], [1], [0, 0, 1, 1], [], []>} : vector<1x16xf32>, vector<16x32xf32>, vector<1x32xf32> -> vector<1x32xf32>
    %303 = arith.addf %298, %302 : vector<1x32xf32>
    %304 = vector.extract_strided_slice %227 {offsets = [15, 0], sizes = [1, 16], strides = [1, 1]} : vector<16x16xf32> to vector<1x16xf32>
    %c15 = arith.constant 15 : index
    %c0_230 = arith.constant 0 : index
    %c0_231 = arith.constant 0 : index
    %305 = vector.load %arg14[%c15, %c0_230, %c0_231] : memref<16x16x32xf32, #tpu.memory_space<vmem>>, vector<1x16x32xf32>
    %306 = vector.shape_cast %305 : vector<1x16x32xf32> to vector<16x32xf32>
    %cst_232 = arith.constant dense<0.000000e+00> : vector<1x32xf32>
    %307 = tpu.matmul %304, %306, %cst_232 {dimension_numbers = #tpu.dot_dimension_numbers<[1], [0], [0], [1], [0, 0, 1, 1], [], []>} : vector<1x16xf32>, vector<16x32xf32>, vector<1x32xf32> -> vector<1x32xf32>
    %308 = arith.addf %303, %307 : vector<1x32xf32>
    %c0_233 = arith.constant 0 : index
    %c0_234 = arith.constant 0 : index
    %309 = vector.load %arg15[%c0_233, %c0_234] : memref<5x32xf32, #tpu.memory_space<vmem>>, vector<1x32xf32>
    %310 = arith.addf %308, %309 : vector<1x32xf32>
    %c1_235 = arith.constant 1 : index
    %c0_236 = arith.constant 0 : index
    %311 = vector.load %arg15[%c1_235, %c0_236] : memref<5x32xf32, #tpu.memory_space<vmem>>, vector<1x32xf32>
    %cst_237 = arith.constant 0.000000e+00 : f32
    %312 = vector.broadcast %cst_237 : f32 to vector<1x32xf32>
    %313 = arith.cmpf ogt, %310, %312 : vector<1x32xf32>
    %314 = arith.mulf %311, %310 : vector<1x32xf32>
    %315 = arith.select %313, %310, %314 : vector<1x32xi1>, vector<1x32xf32>
    %c0_238 = arith.constant 0 : index
    %c0_239 = arith.constant 0 : index
    %316 = vector.load %arg16[%c0_238, %c0_239] : memref<32x32xf32, #tpu.memory_space<vmem>>, vector<32x32xf32>
    %cst_240 = arith.constant dense<0.000000e+00> : vector<1x32xf32>
    %317 = tpu.matmul %315, %316, %cst_240 {dimension_numbers = #tpu.dot_dimension_numbers<[1], [0], [0], [1], [0, 0, 1, 1], [], []>} : vector<1x32xf32>, vector<32x32xf32>, vector<1x32xf32> -> vector<1x32xf32>
    %c2_241 = arith.constant 2 : index
    %c0_242 = arith.constant 0 : index
    %318 = vector.load %arg15[%c2_241, %c0_242] : memref<5x32xf32, #tpu.memory_space<vmem>>, vector<1x32xf32>
    %319 = arith.addf %317, %318 : vector<1x32xf32>
    %c3_243 = arith.constant 3 : index
    %c0_244 = arith.constant 0 : index
    %320 = vector.load %arg15[%c3_243, %c0_244] : memref<5x32xf32, #tpu.memory_space<vmem>>, vector<1x32xf32>
    %cst_245 = arith.constant 0.000000e+00 : f32
    %321 = vector.broadcast %cst_245 : f32 to vector<1x32xf32>
    %322 = arith.cmpf ogt, %319, %321 : vector<1x32xf32>
    %323 = arith.mulf %320, %319 : vector<1x32xf32>
    %324 = arith.select %322, %319, %323 : vector<1x32xi1>, vector<1x32xf32>
    %c0_246 = arith.constant 0 : index
    %c0_247 = arith.constant 0 : index
    %325 = vector.load %arg17[%c0_246, %c0_247] : memref<32x32xf32, #tpu.memory_space<vmem>>, vector<32x32xf32>
    %cst_248 = arith.constant dense<0.000000e+00> : vector<1x32xf32>
    %326 = tpu.matmul %324, %325, %cst_248 {dimension_numbers = #tpu.dot_dimension_numbers<[1], [0], [0], [1], [0, 0, 1, 1], [], []>} : vector<1x32xf32>, vector<32x32xf32>, vector<1x32xf32> -> vector<1x32xf32>
    %c4_249 = arith.constant 4 : index
    %c0_250 = arith.constant 0 : index
    %327 = vector.load %arg15[%c4_249, %c0_250] : memref<5x32xf32, #tpu.memory_space<vmem>>, vector<1x32xf32>
    %328 = arith.addf %326, %327 : vector<1x32xf32>
    %329 = arith.addf %315, %328 : vector<1x32xf32>
    %c0_251 = arith.constant 0 : index
    %c0_252 = arith.constant 0 : index
    %330 = vector.load %arg18[%c0_251, %c0_252] : memref<32x8xf32, #tpu.memory_space<vmem>>, vector<32x8xf32>
    %cst_253 = arith.constant dense<0.000000e+00> : vector<1x8xf32>
    %331 = tpu.matmul %329, %330, %cst_253 {dimension_numbers = #tpu.dot_dimension_numbers<[1], [0], [0], [1], [0, 0, 1, 1], [], []>} : vector<1x32xf32>, vector<32x8xf32>, vector<1x8xf32> -> vector<1x8xf32>
    %c0_254 = arith.constant 0 : index
    %c0_255 = arith.constant 0 : index
    %332 = vector.load %arg19[%c0_254, %c0_255] : memref<1x8xf32, #tpu.memory_space<vmem>>, vector<1x8xf32>
    %333 = arith.addf %331, %332 : vector<1x8xf32>
    %c0_256 = arith.constant 0 : index
    %c0_257 = arith.constant 0 : index
    %c0_258 = arith.constant 0 : index
    %334 = vector.load %arg20[%c0_256, %c0_257, %c0_258] : memref<1x1x8xf32, #tpu.memory_space<vmem>>, vector<1x1x8xf32>
    %335 = vector.shape_cast %334 : vector<1x1x8xf32> to vector<1x8xf32>
    %336 = vector.shape_cast %333 : vector<1x8xf32> to vector<1x1x8xf32>
    tpu.vector_store %arg20[%c0_256, %c0_257, %c0_258], %336 {strides = array<i32>} : memref<1x1x8xf32, #tpu.memory_space<vmem>>, vector<1x1x8xf32>,
    return
  }
  func.func @transform_0(%arg0: i32) -> (i32, i32, i32) {
    %c0_i32 = arith.constant 0 : i32
    %c0_i32_0 = arith.constant 0 : i32
    %c0_i32_1 = arith.constant 0 : i32
    return %arg0, %c0_i32, %c0_i32_0 : i32, i32, i32
  }
  func.func @transform_1(%arg0: i32) -> (i32, i32) {
    %c0_i32 = arith.constant 0 : i32
    %c0_i32_0 = arith.constant 0 : i32
    %c0_i32_1 = arith.constant 0 : i32
    return %c0_i32, %c0_i32_0 : i32, i32
  }
  func.func @transform_2(%arg0: i32) -> (i32, i32) {
    %c0_i32 = arith.constant 0 : i32
    %c0_i32_0 = arith.constant 0 : i32
    %c0_i32_1 = arith.constant 0 : i32
    return %c0_i32, %c0_i32_0 : i32, i32
  }
  func.func @transform_3(%arg0: i32) -> (i32, i32) {
    %c0_i32 = arith.constant 0 : i32
    %c0_i32_0 = arith.constant 0 : i32
    %c0_i32_1 = arith.constant 0 : i32
    return %c0_i32, %c0_i32_0 : i32, i32
  }
  func.func @transform_4(%arg0: i32) -> (i32, i32) {
    %c0_i32 = arith.constant 0 : i32
    %c0_i32_0 = arith.constant 0 : i32
    %c0_i32_1 = arith.constant 0 : i32
    return %c0_i32, %c0_i32_0 : i32, i32
  }
  func.func @transform_5(%arg0: i32) -> (i32, i32, i32) {
    %c0_i32 = arith.constant 0 : i32
    %c0_i32_0 = arith.constant 0 : i32
    %c0_i32_1 = arith.constant 0 : i32
    %c0_i32_2 = arith.constant 0 : i32
    return %c0_i32, %c0_i32_0, %c0_i32_1 : i32, i32, i32
  }
  func.func @transform_6(%arg0: i32) -> (i32, i32, i32) {
    %c0_i32 = arith.constant 0 : i32
    %c0_i32_0 = arith.constant 0 : i32
    %c0_i32_1 = arith.constant 0 : i32
    %c0_i32_2 = arith.constant 0 : i32
    return %c0_i32, %c0_i32_0, %c0_i32_1 : i32, i32, i32
  }
  func.func @transform_7(%arg0: i32) -> (i32, i32) {
    %c0_i32 = arith.constant 0 : i32
    %c0_i32_0 = arith.constant 0 : i32
    %c0_i32_1 = arith.constant 0 : i32
    return %c0_i32, %c0_i32_0 : i32, i32
  }
  func.func @transform_8(%arg0: i32) -> (i32, i32, i32) {
    %c0_i32 = arith.constant 0 : i32
    %c0_i32_0 = arith.constant 0 : i32
    %c0_i32_1 = arith.constant 0 : i32
    %c0_i32_2 = arith.constant 0 : i32
    return %c0_i32, %c0_i32_0, %c0_i32_1 : i32, i32, i32
  }
  func.func @transform_9(%arg0: i32) -> (i32, i32) {
    %c0_i32 = arith.constant 0 : i32
    %c0_i32_0 = arith.constant 0 : i32
    %c0_i32_1 = arith.constant 0 : i32
    return %c0_i32, %c0_i32_0 : i32, i32
  }
  func.func @transform_10(%arg0: i32) -> (i32, i32, i32) {
    %c0_i32 = arith.constant 0 : i32
    %c0_i32_0 = arith.constant 0 : i32
    %c0_i32_1 = arith.constant 0 : i32
    %c0_i32_2 = arith.constant 0 : i32
    return %c0_i32, %c0_i32_0, %c0_i32_1 : i32, i32, i32
  }
  func.func @transform_11(%arg0: i32) -> (i32, i32, i32) {
    %c0_i32 = arith.constant 0 : i32
    %c0_i32_0 = arith.constant 0 : i32
    %c0_i32_1 = arith.constant 0 : i32
    %c0_i32_2 = arith.constant 0 : i32
    return %c0_i32, %c0_i32_0, %c0_i32_1 : i32, i32, i32
  }
  func.func @transform_12(%arg0: i32) -> (i32, i32) {
    %c0_i32 = arith.constant 0 : i32
    %c0_i32_0 = arith.constant 0 : i32
    %c0_i32_1 = arith.constant 0 : i32
    return %c0_i32, %c0_i32_0 : i32, i32
  }
  func.func @transform_13(%arg0: i32) -> (i32, i32, i32) {
    %c0_i32 = arith.constant 0 : i32
    %c0_i32_0 = arith.constant 0 : i32
    %c0_i32_1 = arith.constant 0 : i32
    %c0_i32_2 = arith.constant 0 : i32
    return %c0_i32, %c0_i32_0, %c0_i32_1 : i32, i32, i32
  }
  func.func @transform_14(%arg0: i32) -> (i32, i32) {
    %c0_i32 = arith.constant 0 : i32
    %c0_i32_0 = arith.constant 0 : i32
    %c0_i32_1 = arith.constant 0 : i32
    return %c0_i32, %c0_i32_0 : i32, i32
  }
  func.func @transform_15(%arg0: i32) -> (i32, i32) {
    %c0_i32 = arith.constant 0 : i32
    %c0_i32_0 = arith.constant 0 : i32
    %c0_i32_1 = arith.constant 0 : i32
    return %c0_i32, %c0_i32_0 : i32, i32
  }
  func.func @transform_16(%arg0: i32) -> (i32, i32) {
    %c0_i32 = arith.constant 0 : i32
    %c0_i32_0 = arith.constant 0 : i32
    %c0_i32_1 = arith.constant 0 : i32
    return %c0_i32, %c0_i32_0 : i32, i32
  }
  func.func @transform_17(%arg0: i32) -> (i32, i32) {
    %c0_i32 = arith.constant 0 : i32
    %c0_i32_0 = arith.constant 0 : i32
    %c0_i32_1 = arith.constant 0 : i32
    return %c0_i32, %c0_i32_0 : i32, i32
  }
  func.func @transform_18(%arg0: i32) -> (i32, i32) {
    %c0_i32 = arith.constant 0 : i32
    %c0_i32_0 = arith.constant 0 : i32
    %c0_i32_1 = arith.constant 0 : i32
    return %c0_i32, %c0_i32_0 : i32, i32
  }
  func.func @transform_19(%arg0: i32) -> (i32, i32, i32) {
    %c0_i32 = arith.constant 0 : i32
    %c0_i32_0 = arith.constant 0 : i32
    %c0_i32_1 = arith.constant 0 : i32
    return %arg0, %c0_i32, %c0_i32_0 : i32, i32, i32
  }
}

</mosaic_0001>

<llo_original>
// kernel: classifier_forward.1
$region0: #{classifier_forward.1}
  #allocation0 [shape = 'u32[]', space=smem, size = 0x4, offset = 0x4, fixed_abs, tag = 'smem constant byte address 0x4 - core index']
  #allocation1 [shape = 'u32[144,128]{1,0:T(1,128)}', space=vmem, size = 0x12000, scoped, tag = 'internal scratch']
  %s0 = inlined_call_operand.vmem [shape: f32[2,64,144], index: 0, kind: input, shape index: {}]
  %s1 = inlined_call_operand.vmem [shape: f32[64,64], index: 1, kind: input, shape index: {}]
  %s2 = inlined_call_operand.vmem [shape: f32[144,16], index: 2, kind: input, shape index: {}]
  %s3 = inlined_call_operand.vmem [shape: f32[144,8], index: 3, kind: input, shape index: {}]
  %s4 = inlined_call_operand.vmem [shape: f32[2,8], index: 4, kind: input, shape index: {}]
  %s5 = inlined_call_operand.vmem [shape: f32[4,8,16], index: 5, kind: input, shape index: {}]
  %s6 = inlined_call_operand.vmem [shape: f32[4,8,16], index: 6, kind: input, shape index: {}]
  %s7 = inlined_call_operand.vmem [shape: f32[3,16], index: 7, kind: input, shape index: {}]
  %s8 = inlined_call_operand.vmem [shape: f32[9,16,16], index: 8, kind: input, shape index: {}]
  %s9 = inlined_call_operand.vmem [shape: f32[1,16], index: 9, kind: input, shape index: {}]
  %s10 = inlined_call_operand.vmem [shape: f32[9,16,16], index: 10, kind: input, shape index: {}]
  %s11 = inlined_call_operand.vmem [shape: f32[9,16,16], index: 11, kind: input, shape index: {}]
  %s12 = inlined_call_operand.vmem [shape: f32[3,16], index: 12, kind: input, shape index: {}]
  %s13 = inlined_call_operand.vmem [shape: f32[16,16,32], index: 13, kind: input, shape index: {}]
  %s14 = inlined_call_operand.vmem [shape: f32[5,32], index: 14, kind: input, shape index: {}]
  %s15 = inlined_call_operand.vmem [shape: f32[32,32], index: 15, kind: input, shape index: {}]
  %s16 = inlined_call_operand.vmem [shape: f32[32,32], index: 16, kind: input, shape index: {}]
  %s17 = inlined_call_operand.vmem [shape: f32[32,8], index: 17, kind: input, shape index: {}]
  %s18 = inlined_call_operand.vmem [shape: f32[1,8], index: 18, kind: input, shape index: {}]
  %s19 = inlined_call_operand.vmem [shape: f32[2,1,8], index: 19, kind: output, shape index: {}]
  %s20 = sld [smem:[#allocation0]]
  $region109: #{classifier_forward.1} parent=0
    _
  %s22 = ssub.s32 1, %s20
  %s23 = scalar_select 0, %s22, %s20
  loop: start=0, step=1, limit=4
  $region2: #{classifier_forward.1} parent=0 // loop_pre_header
    _
  $region3: #{classifier_forward.1} parent=0 // loop_header
    %s25 = sphi 0, %s29
    %p26 = scmp.ge.s32.totalorder %s25, 4
    %s35 = sphi 0, %s37
    %s38 = sphi 0, %s35
    %s39 = sphi 0, %s38
    %s55 = sphi 0, %s39
    %s59 = sphi 0, %s59
    %s61 = sphi 0, %s59
    %s62 = sphi 0, %s61
    %s76 = sphi 0, %s62
    %s80 = sphi 0, %s80
    %s82 = sphi 0, %s80
    %s83 = sphi 0, %s82
    %s97 = sphi 0, %s83
    %s101 = sphi 0, %s101
    %s103 = sphi 0, %s101
    %s104 = sphi 0, %s103
    %s118 = sphi 0, %s104
    %s122 = sphi 0, %s122
    %s124 = sphi 0, %s122
    %s125 = sphi 0, %s124
    %s139 = sphi 0, %s125
    %s143 = sphi 0, %s143
    %s145 = sphi 0, %s143
    %s146 = sphi 0, %s145
    %s160 = sphi 0, %s146
    %s164 = sphi 0, %s164
    %s166 = sphi 0, %s164
    %s167 = sphi 0, %s166
    %s181 = sphi 0, %s167
    %s185 = sphi 0, %s185
    %s187 = sphi 0, %s185
    %s188 = sphi 0, %s187
    %s202 = sphi 0, %s188
    %s206 = sphi 0, %s206
    %s208 = sphi 0, %s206
    %s209 = sphi 0, %s208
    %s223 = sphi 0, %s209
    %s227 = sphi 0, %s227
    %s229 = sphi 0, %s227
    %s230 = sphi 0, %s229
    %s244 = sphi 0, %s230
    %s248 = sphi 0, %s248
    %s250 = sphi 0, %s248
    %s251 = sphi 0, %s250
    %s265 = sphi 0, %s251
    %s269 = sphi 0, %s269
    %s271 = sphi 0, %s269
    %s272 = sphi 0, %s271
    %s286 = sphi 0, %s272
    %s290 = sphi 0, %s290
    %s292 = sphi 0, %s290
    %s293 = sphi 0, %s292
    %s307 = sphi 0, %s293
    %s311 = sphi 0, %s311
    %s313 = sphi 0, %s311
    %s314 = sphi 0, %s313
    %s328 = sphi 0, %s314
    %s332 = sphi 0, %s332
    %s334 = sphi 0, %s332
    %s335 = sphi 0, %s334
    %s349 = sphi 0, %s335
    %s353 = sphi 0, %s353
    %s355 = sphi 0, %s353
    %s356 = sphi 0, %s355
    %s370 = sphi 0, %s356
    %s374 = sphi 0, %s374
    %s376 = sphi 0, %s374
    %s377 = sphi 0, %s376
    %s391 = sphi 0, %s377
    %s395 = sphi 0, %s395
    %s397 = sphi 0, %s395
    %s398 = sphi 0, %s397
    %s412 = sphi 0, %s398
    %s416 = sphi 0, %s416
    %s418 = sphi 0, %s416
    %s419 = sphi 0, %s418
    %s433 = sphi 0, %s419
    %s439 = sphi 0, %s441
    %s442 = sphi 0, %s439
    %s443 = sphi 0, %s442
    %s459 = sphi 0, %s443
  $region4: #{classifier_forward.1} parent=0 // loop_header_branch
    %28 = sbr.rel (%p26) target = $region8
  $region5: #{classifier_forward.1} parent=0 // loop_body
    %s30 = ssub.s32 %s25, 1
    %s31 = ssub.s32 %s25, 2
    %s32 = sadd.s32 %s25, 1
    %s33 = ssub.s32 %s25, %s32
    %p34 = scmp.eq.s32.totalorder %s33, 0
    %s36 = sadd.s32 %s35, 1
    %s37 = scalar_select %p34, %s35, %s36
    %p40 = pneg %p34
    %p41 = scmp.eq.s32.totalorder %s25, 1
    %p42 = por %p40, %p41
    %p43 = scmp.ne.s32.totalorder %s35, %s38
    %p44 = scmp.eq.s32.totalorder %s25, 0
    %p45 = por %p43, %p44
    %p46 = scmp.ne.s32.totalorder %s35, %s38
    %p47 = scmp.eq.s32.totalorder %s30, 1
    %p48 = por %p46, %p47
    %p49 = scmp.ne.s32.totalorder %s38, %s39
    %p50 = scmp.eq.s32.totalorder %s30, 0
    %p51 = por %p49, %p50
    %p52 = scmp.ne.s32.totalorder %s38, %s39
    %p53 = scmp.eq.s32.totalorder %s31, 1
    %p54 = por %p52, %p53
    %p56 = scmp.ne.s32.totalorder %s39, %s55
    %p57 = scmp.eq.s32.totalorder %s31, 0
    %p58 = por %p56, %p57
    %s60 = sadd.s32 %s59, 1
    %p63 = scmp.eq.s32.totalorder %s25, 1
    %p64 = scmp.ne.s32.totalorder %s59, %s61
    %p65 = scmp.eq.s32.totalorder %s25, 0
    %p66 = por %p64, %p65
    %p67 = scmp.ne.s32.totalorder %s59, %s61
    %p68 = scmp.eq.s32.totalorder %s30, 1
    %p69 = por %p67, %p68
    %p70 = scmp.ne.s32.totalorder %s61, %s62
    %p71 = scmp.eq.s32.totalorder %s30, 0
    %p72 = por %p70, %p71
    %p73 = scmp.ne.s32.totalorder %s61, %s62
    %p74 = scmp.eq.s32.totalorder %s31, 1
    %p75 = por %p73, %p74
    %p77 = scmp.ne.s32.totalorder %s62, %s76
    %p78 = scmp.eq.s32.totalorder %s31, 0
    %p79 = por %p77, %p78
    %s81 = sadd.s32 %s80, 1
    %p84 = scmp.eq.s32.totalorder %s25, 1
    %p85 = scmp.ne.s32.totalorder %s80, %s82
    %p86 = scmp.eq.s32.totalorder %s25, 0
    %p87 = por %p85, %p86
    %p88 = scmp.ne.s32.totalorder %s80, %s82
    %p89 = scmp.eq.s32.totalorder %s30, 1
    %p90 = por %p88, %p89
    %p91 = scmp.ne.s32.totalorder %s82, %s83
    %p92 = scmp.eq.s32.totalorder %s30, 0
    %p93 = por %p91, %p92
    %p94 = scmp.ne.s32.totalorder %s82, %s83
    %p95 = scmp.eq.s32.totalorder %s31, 1
    %p96 = por %p94, %p95
    %p98 = scmp.ne.s32.totalorder %s83, %s97
    %p99 = scmp.eq.s32.totalorder %s31, 0
    %p100 = por %p98, %p99
    %s102 = sadd.s32 %s101, 1
    %p105 = scmp.eq.s32.totalorder %s25, 1
    %p106 = scmp.ne.s32.totalorder %s101, %s103
    %p107 = scmp.eq.s32.totalorder %s25, 0
    %p108 = por %p106, %p107
    %p109 = scmp.ne.s32.totalorder %s101, %s103
    %p110 = scmp.eq.s32.totalorder %s30, 1
    %p111 = por %p109, %p110
    %p112 = scmp.ne.s32.totalorder %s103, %s104
    %p113 = scmp.eq.s32.totalorder %s30, 0
    %p114 = por %p112, %p113
    %p115 = scmp.ne.s32.totalorder %s103, %s104
    %p116 = scmp.eq.s32.totalorder %s31, 1
    %p117 = por %p115, %p116
    %p119 = scmp.ne.s32.totalorder %s104, %s118
    %p120 = scmp.eq.s32.totalorder %s31, 0
    %p121 = por %p119, %p120
    %s123 = sadd.s32 %s122, 1
    %p126 = scmp.eq.s32.totalorder %s25, 1
    %p127 = scmp.ne.s32.totalorder %s122, %s124
    %p128 = scmp.eq.s32.totalorder %s25, 0
    %p129 = por %p127, %p128
    %p130 = scmp.ne.s32.totalorder %s122, %s124
    %p131 = scmp.eq.s32.totalorder %s30, 1
    %p132 = por %p130, %p131
    %p133 = scmp.ne.s32.totalorder %s124, %s125
    %p134 = scmp.eq.s32.totalorder %s30, 0
    %p135 = por %p133, %p134
    %p136 = scmp.ne.s32.totalorder %s124, %s125
    %p137 = scmp.eq.s32.totalorder %s31, 1
    %p138 = por %p136, %p137
    %p140 = scmp.ne.s32.totalorder %s125, %s139
    %p141 = scmp.eq.s32.totalorder %s31, 0
    %p142 = por %p140, %p141
    %s144 = sadd.s32 %s143, 1
    %p147 = scmp.eq.s32.totalorder %s25, 1
    %p148 = scmp.ne.s32.totalorder %s143, %s145
    %p149 = scmp.eq.s32.totalorder %s25, 0
    %p150 = por %p148, %p149
    %p151 = scmp.ne.s32.totalorder %s143, %s145
    %p152 = scmp.eq.s32.totalorder %s30, 1
    %p153 = por %p151, %p152
    %p154 = scmp.ne.s32.totalorder %s145, %s146
    %p155 = scmp.eq.s32.totalorder %s30, 0
    %p156 = por %p154, %p155
    %p157 = scmp.ne.s32.totalorder %s145, %s146
    %p158 = scmp.eq.s32.totalorder %s31, 1
    %p159 = por %p157, %p158
    %p161 = scmp.ne.s32.totalorder %s146, %s160
    %p162 = scmp.eq.s32.totalorder %s31, 0
    %p163 = por %p161, %p162
    %s165 = sadd.s32 %s164, 1
    %p168 = scmp.eq.s32.totalorder %s25, 1
    %p169 = scmp.ne.s32.totalorder %s164, %s166
    %p170 = scmp.eq.s32.totalorder %s25, 0
    %p171 = por %p169, %p170
    %p172 = scmp.ne.s32.totalorder %s164, %s166
    %p173 = scmp.eq.s32.totalorder %s30, 1
    %p174 = por %p172, %p173
    %p175 = scmp.ne.s32.totalorder %s166, %s167
    %p176 = scmp.eq.s32.totalorder %s30, 0
    %p177 = por %p175, %p176
    %p178 = scmp.ne.s32.totalorder %s166, %s167
    %p179 = scmp.eq.s32.totalorder %s31, 1
    %p180 = por %p178, %p179
    %p182 = scmp.ne.s32.totalorder %s167, %s181
    %p183 = scmp.eq.s32.totalorder %s31, 0
    %p184 = por %p182, %p183
    %s186 = sadd.s32 %s185, 1
    %p189 = scmp.eq.s32.totalorder %s25, 1
    %p190 = scmp.ne.s32.totalorder %s185, %s187
    %p191 = scmp.eq.s32.totalorder %s25, 0
    %p192 = por %p190, %p191
    %p193 = scmp.ne.s32.totalorder %s185, %s187
    %p194 = scmp.eq.s32.totalorder %s30, 1
    %p195 = por %p193, %p194
    %p196 = scmp.ne.s32.totalorder %s187, %s188
    %p197 = scmp.eq.s32.totalorder %s30, 0
    %p198 = por %p196, %p197
    %p199 = scmp.ne.s32.totalorder %s187, %s188
    %p200 = scmp.eq.s32.totalorder %s31, 1
    %p201 = por %p199, %p200
    %p203 = scmp.ne.s32.totalorder %s188, %s202
    %p204 = scmp.eq.s32.totalorder %s31, 0
    %p205 = por %p203, %p204
    %s207 = sadd.s32 %s206, 1
    %p210 = scmp.eq.s32.totalorder %s25, 1
    %p211 = scmp.ne.s32.totalorder %s206, %s208
    %p212 = scmp.eq.s32.totalorder %s25, 0
    %p213 = por %p211, %p212
    %p214 = scmp.ne.s32.totalorder %s206, %s208
    %p215 = scmp.eq.s32.totalorder %s30, 1
    %p216 = por %p214, %p215
    %p217 = scmp.ne.s32.totalorder %s208, %s209
    %p218 = scmp.eq.s32.totalorder %s30, 0
    %p219 = por %p217, %p218
    %p220 = scmp.ne.s32.totalorder %s208, %s209
    %p221 = scmp.eq.s32.totalorder %s31, 1
    %p222 = por %p220, %p221
    %p224 = scmp.ne.s32.totalorder %s209, %s223
    %p225 = scmp.eq.s32.totalorder %s31, 0
    %p226 = por %p224, %p225
    %s228 = sadd.s32 %s227, 1
    %p231 = scmp.eq.s32.totalorder %s25, 1
    %p232 = scmp.ne.s32.totalorder %s227, %s229
    %p233 = scmp.eq.s32.totalorder %s25, 0
    %p234 = por %p232, %p233
    %p235 = scmp.ne.s32.totalorder %s227, %s229
    %p236 = scmp.eq.s32.totalorder %s30, 1
    %p237 = por %p235, %p236
    %p238 = scmp.ne.s32.totalorder %s229, %s230
    %p239 = scmp.eq.s32.totalorder %s30, 0
    %p240 = por %p238, %p239
    %p241 = scmp.ne.s32.totalorder %s229, %s230
    %p242 = scmp.eq.s32.totalorder %s31, 1
    %p243 = por %p241, %p242
    %p245 = scmp.ne.s32.totalorder %s230, %s244
    %p246 = scmp.eq.s32.totalorder %s31, 0
    %p247 = por %p245, %p246
    %s249 = sadd.s32 %s248, 1
    %p252 = scmp.eq.s32.totalorder %s25, 1
    %p253 = scmp.ne.s32.totalorder %s248, %s250
    %p254 = scmp.eq.s32.totalorder %s25, 0
    %p255 = por %p253, %p254
    %p256 = scmp.ne.s32.totalorder %s248, %s250
    %p257 = scmp.eq.s32.totalorder %s30, 1
    %p258 = por %p256, %p257
    %p259 = scmp.ne.s32.totalorder %s250, %s251
    %p260 = scmp.eq.s32.totalorder %s30, 0
    %p261 = por %p259, %p260
    %p262 = scmp.ne.s32.totalorder %s250, %s251
    %p263 = scmp.eq.s32.totalorder %s31, 1
    %p264 = por %p262, %p263
    %p266 = scmp.ne.s32.totalorder %s251, %s265
    %p267 = scmp.eq.s32.totalorder %s31, 0
    %p268 = por %p266, %p267
    %s270 = sadd.s32 %s269, 1
    %p273 = scmp.eq.s32.totalorder %s25, 1
    %p274 = scmp.ne.s32.totalorder %s269, %s271
    %p275 = scmp.eq.s32.totalorder %s25, 0
    %p276 = por %p274, %p275
    %p277 = scmp.ne.s32.totalorder %s269, %s271
    %p278 = scmp.eq.s32.totalorder %s30, 1
    %p279 = por %p277, %p278
    %p280 = scmp.ne.s32.totalorder %s271, %s272
    %p281 = scmp.eq.s32.totalorder %s30, 0
    %p282 = por %p280, %p281
    %p283 = scmp.ne.s32.totalorder %s271, %s272
    %p284 = scmp.eq.s32.totalorder %s31, 1
    %p285 = por %p283, %p284
    %p287 = scmp.ne.s32.totalorder %s272, %s286
    %p288 = scmp.eq.s32.totalorder %s31, 0
    %p289 = por %p287, %p288
    %s291 = sadd.s32 %s290, 1
    %p294 = scmp.eq.s32.totalorder %s25, 1
    %p295 = scmp.ne.s32.totalorder %s290, %s292
    %p296 = scmp.eq.s32.totalorder %s25, 0
    %p297 = por %p295, %p296
    %p298 = scmp.ne.s32.totalorder %s290, %s292
    %p299 = scmp.eq.s32.totalorder %s30, 1
    %p300 = por %p298, %p299
    %p301 = scmp.ne.s32.totalorder %s292, %s293
    %p302 = scmp.eq.s32.totalorder %s30, 0
    %p303 = por %p301, %p302
    %p304 = scmp.ne.s32.totalorder %s292, %s293
    %p305 = scmp.eq.s32.totalorder %s31, 1
    %p306 = por %p304, %p305
    %p308 = scmp.ne.s32.totalorder %s293, %s307
    %p309 = scmp.eq.s32.totalorder %s31, 0
    %p310 = por %p308, %p309
    %s312 = sadd.s32 %s311, 1
    %p315 = scmp.eq.s32.totalorder %s25, 1
    %p316 = scmp.ne.s32.totalorder %s311, %s313
    %p317 = scmp.eq.s32.totalorder %s25, 0
    %p318 = por %p316, %p317
    %p319 = scmp.ne.s32.totalorder %s311, %s313
    %p320 = scmp.eq.s32.totalorder %s30, 1
    %p321 = por %p319, %p320
    %p322 = scmp.ne.s32.totalorder %s313, %s314
    %p323 = scmp.eq.s32.totalorder %s30, 0
    %p324 = por %p322, %p323
    %p325 = scmp.ne.s32.totalorder %s313, %s314
    %p326 = scmp.eq.s32.totalorder %s31, 1
    %p327 = por %p325, %p326
    %p329 = scmp.ne.s32.totalorder %s314, %s328
    %p330 = scmp.eq.s32.totalorder %s31, 0
    %p331 = por %p329, %p330
    %s333 = sadd.s32 %s332, 1
    %p336 = scmp.eq.s32.totalorder %s25, 1
    %p337 = scmp.ne.s32.totalorder %s332, %s334
    %p338 = scmp.eq.s32.totalorder %s25, 0
    %p339 = por %p337, %p338
    %p340 = scmp.ne.s32.totalorder %s332, %s334
    %p341 = scmp.eq.s32.totalorder %s30, 1
    %p342 = por %p340, %p341
    %p343 = scmp.ne.s32.totalorder %s334, %s335
    %p344 = scmp.eq.s32.totalorder %s30, 0
    %p345 = por %p343, %p344
    %p346 = scmp.ne.s32.totalorder %s334, %s335
    %p347 = scmp.eq.s32.totalorder %s31, 1
    %p348 = por %p346, %p347
    %p350 = scmp.ne.s32.totalorder %s335, %s349
    %p351 = scmp.eq.s32.totalorder %s31, 0
    %p352 = por %p350, %p351
    %s354 = sadd.s32 %s353, 1
    %p357 = scmp.eq.s32.totalorder %s25, 1
    %p358 = scmp.ne.s32.totalorder %s353, %s355
    %p359 = scmp.eq.s32.totalorder %s25, 0
    %p360 = por %p358, %p359
    %p361 = scmp.ne.s32.totalorder %s353, %s355
    %p362 = scmp.eq.s32.totalorder %s30, 1
    %p363 = por %p361, %p362
    %p364 = scmp.ne.s32.totalorder %s355, %s356
    %p365 = scmp.eq.s32.totalorder %s30, 0
    %p366 = por %p364, %p365
    %p367 = scmp.ne.s32.totalorder %s355, %s356
    %p368 = scmp.eq.s32.totalorder %s31, 1
    %p369 = por %p367, %p368
    %p371 = scmp.ne.s32.totalorder %s356, %s370
    %p372 = scmp.eq.s32.totalorder %s31, 0
    %p373 = por %p371, %p372
    %s375 = sadd.s32 %s374, 1
    %p378 = scmp.eq.s32.totalorder %s25, 1
    %p379 = scmp.ne.s32.totalorder %s374, %s376
    %p380 = scmp.eq.s32.totalorder %s25, 0
    %p381 = por %p379, %p380
    %p382 = scmp.ne.s32.totalorder %s374, %s376
    %p383 = scmp.eq.s32.totalorder %s30, 1
    %p384 = por %p382, %p383
    %p385 = scmp.ne.s32.totalorder %s376, %s377
    %p386 = scmp.eq.s32.totalorder %s30, 0
    %p387 = por %p385, %p386
    %p388 = scmp.ne.s32.totalorder %s376, %s377
    %p389 = scmp.eq.s32.totalorder %s31, 1
    %p390 = por %p388, %p389
    %p392 = scmp.ne.s32.totalorder %s377, %s391
    %p393 = scmp.eq.s32.totalorder %s31, 0
    %p394 = por %p392, %p393
    %s396 = sadd.s32 %s395, 1
    %p399 = scmp.eq.s32.totalorder %s25, 1
    %p400 = scmp.ne.s32.totalorder %s395, %s397
    %p401 = scmp.eq.s32.totalorder %s25, 0
    %p402 = por %p400, %p401
    %p403 = scmp.ne.s32.totalorder %s395, %s397
    %p404 = scmp.eq.s32.totalorder %s30, 1
    %p405 = por %p403, %p404
    %p406 = scmp.ne.s32.totalorder %s397, %s398
    %p407 = scmp.eq.s32.totalorder %s30, 0
    %p408 = por %p406, %p407
    %p409 = scmp.ne.s32.totalorder %s397, %s398
    %p410 = scmp.eq.s32.totalorder %s31, 1
    %p411 = por %p409, %p410
    %p413 = scmp.ne.s32.totalorder %s398, %s412
    %p414 = scmp.eq.s32.totalorder %s31, 0
    %p415 = por %p413, %p414
    %s417 = sadd.s32 %s416, 1
    %p420 = scmp.eq.s32.totalorder %s25, 1
    %p421 = scmp.ne.s32.totalorder %s416, %s418
    %p422 = scmp.eq.s32.totalorder %s25, 0
    %p423 = por %p421, %p422
    %p424 = scmp.ne.s32.totalorder %s416, %s418
    %p425 = scmp.eq.s32.totalorder %s30, 1
    %p426 = por %p424, %p425
    %p427 = scmp.ne.s32.totalorder %s418, %s419
    %p428 = scmp.eq.s32.totalorder %s30, 0
    %p429 = por %p427, %p428
    %p430 = scmp.ne.s32.totalorder %s418, %s419
    %p431 = scmp.eq.s32.totalorder %s31, 1
    %p432 = por %p430, %p431
    %p434 = scmp.ne.s32.totalorder %s419, %s433
    %p435 = scmp.eq.s32.totalorder %s31, 0
    %p436 = por %p434, %p435
    %s437 = ssub.s32 %s25, %s32
    %p438 = scmp.eq.s32.totalorder %s437, 0
    %s440 = sadd.s32 %s439, 1
    %s441 = scalar_select %p438, %s439, %s440
    %p444 = pneg %p438
    %p445 = scmp.eq.s32.totalorder %s25, 1
    %p446 = por %p444, %p445
    %p447 = scmp.ne.s32.totalorder %s439, %s442
    %p448 = scmp.eq.s32.totalorder %s25, 0
    %p449 = por %p447, %p448
    %p450 = scmp.ne.s32.totalorder %s439, %s442
    %p451 = scmp.eq.s32.totalorder %s30, 1
    %p452 = por %p450, %p451
    %p453 = scmp.ne.s32.totalorder %s442, %s443
    %p454 = scmp.eq.s32.totalorder %s30, 0
    %p455 = por %p453, %p454
    %p456 = scmp.ne.s32.totalorder %s442, %s443
    %p457 = scmp.eq.s32.totalorder %s31, 1
    %p458 = por %p456, %p457
    %p460 = scmp.ne.s32.totalorder %s443, %s459
    %p461 = scmp.eq.s32.totalorder %s31, 0
    %p462 = por %p460, %p461
    %p463 = scmp.le.s32.totalorder 1, %s25
    %p464 = scmp.lt.s32.totalorder %s25, 3
    %p465 = pnand %p463, %p464
    %p466 = pneg %p465
    // Predicated region
    $region9: #{classifier_forward.1} parent=5 // pred_check
      _
    $region10: #{classifier_forward.1} parent=5 // pred_check_branch
      %468 = sbr.rel (%p465) target = $region12
    $region11: #{classifier_forward.1} parent=5 // pred_region
      %s469 = ssub.s32 %s25, 1
      // Predicated region
      $region13: #{classifier_forward.1} parent=11 // pred_check
        %p470 = pneg %p72
      $region14: #{classifier_forward.1} parent=11 // pred_check_branch
        %472 = sbr.rel (%p470) target = $region16
      $region15: #{classifier_forward.1} parent=11 // pred_region
        _
      $region16: #{classifier_forward.1} parent=11 // pred_fallthru
        _
      // Predicated region
      $region17: #{classifier_forward.1} parent=11 // pred_check
        %p473 = pneg %p93
      $region18: #{classifier_forward.1} parent=11 // pred_check_branch
        %475 = sbr.rel (%p473) target = $region20
      $region19: #{classifier_forward.1} parent=11 // pred_region
        _
      $region20: #{classifier_forward.1} parent=11 // pred_fallthru
        _
      // Predicated region
      $region21: #{classifier_forward.1} parent=11 // pred_check
        %p476 = pneg %p114
      $region22: #{classifier_forward.1} parent=11 // pred_check_branch
        %478 = sbr.rel (%p476) target = $region24
      $region23: #{classifier_forward.1} parent=11 // pred_region
        _
      $region24: #{classifier_forward.1} parent=11 // pred_fallthru
        _
      // Predicated region
      $region25: #{classifier_forward.1} parent=11 // pred_check
        %p479 = pneg %p135
      $region26: #{classifier_forward.1} parent=11 // pred_check_branch
        %481 = sbr.rel (%p479) target = $region28
      $region27: #{classifier_forward.1} parent=11 // pred_region
        _
      $region28: #{classifier_forward.1} parent=11 // pred_fallthru
        _
      // Predicated region
      $region29: #{classifier_forward.1} parent=11 // pred_check
        %p482 = pneg %p156
      $region30: #{classifier_forward.1} parent=11 // pred_check_branch
        %484 = sbr.rel (%p482) target = $region32
      $region31: #{classifier_forward.1} parent=11 // pred_region
        _
      $region32: #{classifier_forward.1} parent=11 // pred_fallthru
        _
      // Predicated region
      $region33: #{classifier_forward.1} parent=11 // pred_check
        %p485 = pneg %p177
      $region34: #{classifier_forward.1} parent=11 // pred_check_branch
        %487 = sbr.rel (%p485) target = $region36
      $region35: #{classifier_forward.1} parent=11 // pred_region
        _
      $region36: #{classifier_forward.1} parent=11 // pred_fallthru
        _
      // Predicated region
      $region37: #{classifier_forward.1} parent=11 // pred_check
        %p488 = pneg %p198
      $region38: #{classifier_forward.1} parent=11 // pred_check_branch
        %490 = sbr.rel (%p488) target = $region40
      $region39: #{classifier_forward.1} parent=11 // pred_region
        _
      $region40: #{classifier_forward.1} parent=11 // pred_fallthru
        _
      // Predicated region
      $region41: #{classifier_forward.1} parent=11 // pred_check
        %p491 = pneg %p219
      $region42: #{classifier_forward.1} parent=11 // pred_check_branch
        %493 = sbr.rel (%p491) target = $region44
      $region43: #{classifier_forward.1} parent=11 // pred_region
        _
      $region44: #{classifier_forward.1} parent=11 // pred_fallthru
        _
      // Predicated region
      $region45: #{classifier_forward.1} parent=11 // pred_check
        %p494 = pneg %p240
      $region46: #{classifier_forward.1} parent=11 // pred_check_branch
        %496 = sbr.rel (%p494) target = $region48
      $region47: #{classifier_forward.1} parent=11 // pred_region
        _
      $region48: #{classifier_forward.1} parent=11 // pred_fallthru
        _
      // Predicated region
      $region49: #{classifier_forward.1} parent=11 // pred_check
        %p497 = pneg %p261
      $region50: #{classifier_forward.1} parent=11 // pred_check_branch
        %499 = sbr.rel (%p497) target = $region52
      $region51: #{classifier_forward.1} parent=11 // pred_region
        _
      $region52: #{classifier_forward.1} parent=11 // pred_fallthru
        _
      // Predicated region
      $region53: #{classifier_forward.1} parent=11 // pred_check
        %p500 = pneg %p282
      $region54: #{classifier_forward.1} parent=11 // pred_check_branch
        %502 = sbr.rel (%p500) target = $region56
      $region55: #{classifier_forward.1} parent=11 // pred_region
        _
      $region56: #{classifier_forward.1} parent=11 // pred_fallthru
        _
      // Predicated region
      $region57: #{classifier_forward.1} parent=11 // pred_check
        %p503 = pneg %p303
      $region58: #{classifier_forward.1} parent=11 // pred_check_branch
        %505 = sbr.rel (%p503) target = $region60
      $region59: #{classifier_forward.1} parent=11 // pred_region
        _
      $region60: #{classifier_forward.1} parent=11 // pred_fallthru
        _
      // Predicated region
      $region61: #{classifier_forward.1} parent=11 // pred_check
        %p506 = pneg %p324
      $region62: #{classifier_forward.1} parent=11 // pred_check_branch
        %508 = sbr.rel (%p506) target = $region64
      $region63: #{classifier_forward.1} parent=11 // pred_region
        _
      $region64: #{classifier_forward.1} parent=11 // pred_fallthru
        _
      // Predicated region
      $region65: #{classifier_forward.1} parent=11 // pred_check
        %p509 = pneg %p345
      $region66: #{classifier_forward.1} parent=11 // pred_check_branch
        %511 = sbr.rel (%p509) target = $region68
      $region67: #{classifier_forward.1} parent=11 // pred_region
        _
      $region68: #{classifier_forward.1} parent=11 // pred_fallthru
        _
      // Predicated region
      $region69: #{classifier_forward.1} parent=11 // pred_check
        %p512 = pneg %p366
      $region70: #{classifier_forward.1} parent=11 // pred_check_branch
        %514 = sbr.rel (%p512) target = $region72
      $region71: #{classifier_forward.1} parent=11 // pred_region
        _
      $region72: #{classifier_forward.1} parent=11 // pred_fallthru
        _
      // Predicated region
      $region73: #{classifier_forward.1} parent=11 // pred_check
        %p515 = pneg %p387
      $region74: #{classifier_forward.1} parent=11 // pred_check_branch
        %517 = sbr.rel (%p515) target = $region76
      $region75: #{classifier_forward.1} parent=11 // pred_region
        _
      $region76: #{classifier_forward.1} parent=11 // pred_fallthru
        _
      // Predicated region
      $region77: #{classifier_forward.1} parent=11 // pred_check
        %p518 = pneg %p408
      $region78: #{classifier_forward.1} parent=11 // pred_check_branch
        %520 = sbr.rel (%p518) target = $region80
      $region79: #{classifier_forward.1} parent=11 // pred_region
        _
      $region80: #{classifier_forward.1} parent=11 // pred_fallthru
        _
      // Predicated region
      $region81: #{classifier_forward.1} parent=11 // pred_check
        %p521 = pneg %p429
      $region82: #{classifier_forward.1} parent=11 // pred_check_branch
        %523 = sbr.rel (%p521) target = $region84
      $region83: #{classifier_forward.1} parent=11 // pred_region
        _
      $region84: #{classifier_forward.1} parent=11 // pred_fallthru
        _
    $region12: #{classifier_forward.1} parent=5 // pred_fallthru
      _
    %p524 = scmp.lt.s32.totalorder %s25, 2
    // Predicated region
    $region85: #{classifier_forward.1} parent=5 // pred_check
      %p525 = pneg %p524
    $region86: #{classifier_forward.1} parent=5 // pred_check_branch
      %527 = sbr.rel (%p525) target = $region88
    $region87: #{classifier_forward.1} parent=5 // pred_region
      // Predicated region
      $region89: #{classifier_forward.1} parent=87 // pred_check
        %p528 = pneg %p45
      $region90: #{classifier_forward.1} parent=87 // pred_check_branch
        %530 = sbr.rel (%p528) target = $region92
      $region91: #{classifier_forward.1} parent=87 // pred_region
        %p531 = scmp.lt.s32.totalorder %s25, 1
        %s532 = scalar_select %p531, %s25, 1
        %s533 = smul.addr %s532, 16
        %s534 = smul.addr %s533, 8
        %s535 = scalar_lea.vmem %s0, %s534
      $region92: #{classifier_forward.1} parent=87 // pred_fallthru
        _
    $region88: #{classifier_forward.1} parent=5 // pred_fallthru
      _
    %p536 = scmp.le.s32.totalorder 1, %s25
    %p537 = scmp.lt.s32.totalorder %s25, 3
    %p538 = pnand %p536, %p537
    %p539 = pneg %p538
    // Predicated region
    $region93: #{classifier_forward.1} parent=5 // pred_check
      _
    $region94: #{classifier_forward.1} parent=5 // pred_check_branch
      %541 = sbr.rel (%p538) target = $region96
    $region95: #{classifier_forward.1} parent=5 // pred_region
      %s542 = ssub.s32 %s25, 1
      %p543 = scmp.lt.s32.totalorder %s30, 1
      %s544 = scalar_select %p543, %s30, 1
      %s545 = smul.addr %s544, 16
      %s546 = smul.addr %s545, 8
      %s547 = scalar_lea.vmem %s0, %s546
      %p548 = pneg %p51
      %p549 = pneg %p48
      %p550 = pneg %p72
      %p551 = pneg %p69
      %p552 = pneg %p93
      %p553 = pneg %p90
      %p554 = pneg %p114
      %p555 = pneg %p111
      %p556 = pneg %p135
      %p557 = pneg %p132
      %p558 = pneg %p156
      %p559 = pneg %p153
      %p560 = pneg %p177
      %p561 = pneg %p174
      %p562 = pneg %p198
      %p563 = pneg %p195
      %p564 = pneg %p219
      %p565 = pneg %p216
      %p566 = pneg %p240
      %p567 = pneg %p237
      %p568 = pneg %p261
      %p569 = pneg %p258
      %p570 = pneg %p282
      %p571 = pneg %p279
      %p572 = pneg %p303
      %p573 = pneg %p300
      %p574 = pneg %p324
      %p575 = pneg %p321
      %p576 = pneg %p345
      %p577 = pneg %p342
      %p578 = pneg %p366
      %p579 = pneg %p363
      %p580 = pneg %p387
      %p581 = pneg %p384
      %p582 = pneg %p408
      %p583 = pneg %p405
      %p584 = pneg %p429
      %p585 = pneg %p426
      %p586 = pneg %p455
      %p587 = pneg %p452
      %p588 = scmp.lt.s32.totalorder %s30, 1
      %s589 = scalar_select %p588, %s30, 1
      %s590 = scalar_lea.vmem %s19, %s589
      %p591 = scmp.lt.s32.totalorder %s30, 1
      %s592 = scalar_select %p591, %s30, 1
      %s593 = smul.addr %s592, 16
      %s594 = smul.addr %s593, 8
      %s595 = scalar_lea.vmem %s0, %s594
      %p596 = scmp.lt.s32.totalorder %s30, 1
      %s597 = scalar_select %p596, %s30, 1
      %s598 = scalar_lea.vmem %s19, %s597
      %v599 = vld [vmem:[%s595] sm:$0xff]
      %v600 = vld [vmem:[%s595 + $0x8] sm:$0xff]
      %v601 = vld [vmem:[%s595 + $0x10] sm:$0xff]
      %v602 = vld [vmem:[%s595 + $0x18] sm:$0xff]
      %v603 = vld [vmem:[%s595 + $0x20] sm:$0xff]
      %v604 = vld [vmem:[%s595 + $0x28] sm:$0xff]
      %v605 = vld [vmem:[%s595 + $0x30] sm:$0xff]
      %v606 = vld [vmem:[%s595 + $0x38] sm:$0xff]
      %v607 = vld [vmem:[%s595 + $0x40] sm:$0xff]
      %v608 = vld [vmem:[%s595 + $0x48] sm:$0xff]
      %v609 = vld [vmem:[%s595 + $0x50] sm:$0xff]
      %v610 = vld [vmem:[%s595 + $0x58] sm:$0xff]
      %v611 = vld [vmem:[%s595 + $0x60] sm:$0xff]
      %v612 = vld [vmem:[%s595 + $0x68] sm:$0xff]
      %v613 = vld [vmem:[%s595 + $0x70] sm:$0xff]
      %v614 = vld [vmem:[%s595 + $0x78] sm:$0xff]
      %v615 = vld [vmem:[%s3] sm:$0xff]
      %v616 = vld [vmem:[%s3 + $0x8] sm:$0xff]
      %v617 = vld [vmem:[%s3 + $0x10] sm:$0xff]
      %v618 = vld [vmem:[%s3 + $0x18] sm:$0xff]
      %v619 = vld [vmem:[%s3 + $0x20] sm:$0xff]
      %v620 = vld [vmem:[%s3 + $0x28] sm:$0xff]
      %v621 = vld [vmem:[%s3 + $0x30] sm:$0xff]
      %v622 = vld [vmem:[%s3 + $0x38] sm:$0xff]
      %v623 = vld [vmem:[%s3 + $0x40] sm:$0xff]
      %v624 = vld [vmem:[%s3 + $0x48] sm:$0xff]
      %v625 = vld [vmem:[%s3 + $0x50] sm:$0xff]
      %v626 = vld [vmem:[%s3 + $0x58] sm:$0xff]
      %v627 = vld [vmem:[%s3 + $0x60] sm:$0xff]
      %v628 = vld [vmem:[%s3 + $0x68] sm:$0xff]
      %v629 = vld [vmem:[%s3 + $0x70] sm:$0xff]
      %v630 = vld [vmem:[%s3 + $0x78] sm:$0xff]
      %v631 = vld [vmem:[%s3 + $0x80] sm:$0xff]
      %v632 = vld [vmem:[%s3 + $0x88] sm:$0xff]
      %v633 = vld [vmem:[%s4] sm:$0x1]
      %v634 = vlaneseq
      %v635 = vshrl.u32 %v634, 7
      %v636 = vsub.s32 0, %v635
      %v637 = vrot.slane %v633, %v636
      %vm638 = vcmask 130048
      %v640 = vsel %vm638, %v600, 0
      %v643 = vsel %vm638, %v602, 0
      %v646 = vsel %vm638, %v604, 0
      %v649 = vsel %vm638, %v606, 0
      %v652 = vsel %vm638, %v608, 0
      %v655 = vsel %vm638, %v610, 0
      %v658 = vsel %vm638, %v612, 0
      %v661 = vsel %vm638, %v614, 0
      %663 = vmatprep.subr.mxu0 0.0
      %664 = vmatpush1.msra.mxu0 %v615
      %665 = vmatprep.subr.mxu0 0.0
      %666 = vmatpush1.msra.mxu0 %v616
      %667 = vmatprep.subr.mxu0 0.0
      %668 = vmatpush1.msra.mxu0 %v617
      %669 = vmatprep.subr.mxu0 0.0
      %670 = vmatpush1.msra.mxu0 %v618
      %671 = vmatprep.subr.mxu0 0.0
      %672 = vmatpush1.msra.mxu0 %v619
      %673 = vmatprep.subr.mxu0 0.0
      %674 = vmatpush1.msra.mxu0 %v620
      %675 = vmatprep.subr.mxu0 0.0
      %676 = vmatpush1.msra.mxu0 %v621
      %677 = vmatprep.subr.mxu0 0.0
      %678 = vmatpush1.msra.mxu0 %v622
      %679 = vmatprep.subr.mxu0 0.0
      %680 = vmatpush1.msra.mxu0 %v623
      %681 = vmatprep.subr.mxu0 0.0
      %682 = vmatpush1.msra.mxu0 %v624
      %683 = vmatprep.subr.mxu0 0.0
      %684 = vmatpush1.msra.mxu0 %v625
      %685 = vmatprep.subr.mxu0 0.0
      %686 = vmatpush1.msra.mxu0 %v626
      %687 = vmatprep.subr.mxu0 0.0
      %688 = vmatpush1.msra.mxu0 %v627
      %689 = vmatprep.subr.mxu0 0.0
      %690 = vmatpush1.msra.mxu0 %v628
      %691 = vmatprep.subr.mxu0 0.0
      %692 = vmatpush1.msra.mxu0 %v629
      %693 = vmatprep.subr.mxu0 0.0
      %694 = vmatpush1.msra.mxu0 %v630
      %695 = vmatprep.subr.mxu0 0.0
      %696 = vmatpush1.msra.mxu0 %v631
      %697 = vmatprep.subr.mxu0 0.0
      %698 = vmatpush1.msra.mxu0 %v632
      %699 = vmatprep.subr.mxu0 0.0
      %700 = vmatpush1.msra.mxu0 0.0
      %701 = vmatprep.subr.mxu0 0.0
      %702 = vmatpush1.msra.mxu0 0.0
      %703 = vmatprep.subr.mxu0 0.0
      %704 = vmatpush1.msra.mxu0 0.0
      %705 = vmatprep.subr.mxu0 0.0
      %706 = vmatpush1.msra.mxu0 0.0
      %707 = vmatprep.subr.mxu0 0.0
      %708 = vmatpush1.msra.mxu0 0.0
      %709 = vmatprep.subr.mxu0 0.0
      %710 = vmatpush1.msra.mxu0 0.0
      %711 = vmatprep.subr.mxu0 0.0
      %712 = vmatpush1.msra.mxu0 0.0
      %713 = vmatprep.subr.mxu0 0.0
      %714 = vmatpush1.msra.mxu0 0.0
      %715 = vmatprep.subr.mxu0 0.0
      %716 = vmatpush1.msra.mxu0 0.0
      %717 = vmatprep.subr.mxu0 0.0
      %718 = vmatpush1.msra.mxu0 0.0
      %719 = vmatprep.subr.mxu0 0.0
      %720 = vmatpush1.msra.mxu0 0.0
      %721 = vmatprep.subr.mxu0 0.0
      %722 = vmatpush1.msra.mxu0 0.0
      %723 = vmatprep.subr.mxu0 0.0
      %724 = vmatpush1.msra.mxu0 0.0
      %725 = vmatprep.subr.mxu0 0.0
      %726 = vmatpush1.msra.mxu0 0.0
      %727 = vmatprep.mubr.f32.mxu0 %v640
      %728 = vmatmul.mubr.f32.gmra.mrb[0].mxu0 %v599
      %v729 = vpop.f32.mrb[0].mxu0
      %v730 = vadd.f32 %v637, %v729
      %v731 = vpop.f32.mrb[0].mxu0
      %732 = vmatprep.mubr.f32.mxu0 %v643
      %733 = vmatmul.mubr.f32.gmra.mrb[0].mxu0 %v601
      %v734 = vpop.f32.mrb[0].mxu0
      %v735 = vadd.f32 %v637, %v734
      %v736 = vpop.f32.mrb[0].mxu0
      %737 = vmatprep.mubr.f32.mxu0 %v646
      %738 = vmatmul.mubr.f32.gmra.mrb[0].mxu0 %v603
      %v739 = vpop.f32.mrb[0].mxu0
      %v740 = vadd.f32 %v637, %v739
      %v741 = vpop.f32.mrb[0].mxu0
      %742 = vmatprep.mubr.f32.mxu0 %v649
      %743 = vmatmul.mubr.f32.gmra.mrb[0].mxu0 %v605
      %v744 = vpop.f32.mrb[0].mxu0
      %v745 = vadd.f32 %v637, %v744
      %v746 = vpop.f32.mrb[0].mxu0
      %747 = vmatprep.mubr.f32.mxu0 %v652
      %748 = vmatmul.mubr.f32.gmra.mrb[0].mxu0 %v607
      %v749 = vpop.f32.mrb[0].mxu0
      %v750 = vadd.f32 %v637, %v749
      %v751 = vpop.f32.mrb[0].mxu0
      %752 = vmatprep.mubr.f32.mxu0 %v655
      %753 = vmatmul.mubr.f32.gmra.mrb[0].mxu0 %v609
      %v754 = vpop.f32.mrb[0].mxu0
      %v755 = vadd.f32 %v637, %v754
      %v756 = vpop.f32.mrb[0].mxu0
      %757 = vmatprep.mubr.f32.mxu0 %v658
      %758 = vmatmul.mubr.f32.gmra.mrb[0].mxu0 %v611
      %v759 = vpop.f32.mrb[0].mxu0
      %v760 = vadd.f32 %v637, %v759
      %v761 = vpop.f32.mrb[0].mxu0
      %762 = vmatprep.mubr.f32.mxu0 %v661
      %763 = vmatmul.mubr.f32.gmra.mrb[0].mxu0 %v613
      %v764 = vpop.f32.mrb[0].mxu0
      %v765 = vadd.f32 %v637, %v764
      %v766 = vpop.f32.mrb[0].mxu0
      %767 = vdwg.mxu0
      %v768 = vld [vmem:[%s4 + $0x1] sm:$0x1]
      %vm769 = vcmp.gt.f32.partialorder %v730, 0.0
      %vm770 = vcmp.gt.f32.partialorder %v735, 0.0
      %vm771 = vcmp.gt.f32.partialorder %v740, 0.0
      %vm772 = vcmp.gt.f32.partialorder %v745, 0.0
      %vm773 = vcmp.gt.f32.partialorder %v750, 0.0
      %vm774 = vcmp.gt.f32.partialorder %v755, 0.0
      %vm775 = vcmp.gt.f32.partialorder %v760, 0.0
      %vm776 = vcmp.gt.f32.partialorder %v765, 0.0
      %v777 = vlaneseq
      %v778 = vshrl.u32 %v777, 7
      %v779 = vsub.s32 0, %v778
      %v780 = vrot.slane %v768, %v779
      %v781 = vmul.f32 %v780, %v730
      %v782 = vmul.f32 %v780, %v735
      %v783 = vmul.f32 %v780, %v740
      %v784 = vmul.f32 %v780, %v745
      %v785 = vmul.f32 %v780, %v750
      %v786 = vmul.f32 %v780, %v755
      %v787 = vmul.f32 %v780, %v760
      %v788 = vmul.f32 %v780, %v765
      %v789 = vsel %vm769, %v730, %v781
      %v790 = vsel %vm770, %v735, %v782
      %v791 = vsel %vm771, %v740, %v783
      %v792 = vsel %vm772, %v745, %v784
      %v793 = vsel %vm773, %v750, %v785
      %v794 = vsel %vm774, %v755, %v786
      %v795 = vsel %vm775, %v760, %v787
      %v796 = vsel %vm776, %v765, %v788
      %v797 = vld [vmem:[%s1] sm:$0xff]
      %v798 = vld [vmem:[%s1 + $0x8] sm:$0xff]
      %v799 = vld [vmem:[%s1 + $0x10] sm:$0xff]
      %v800 = vld [vmem:[%s1 + $0x18] sm:$0xff]
      %v801 = vld [vmem:[%s1 + $0x20] sm:$0xff]
      %v802 = vld [vmem:[%s1 + $0x28] sm:$0xff]
      %v803 = vld [vmem:[%s1 + $0x30] sm:$0xff]
      %v804 = vld [vmem:[%s1 + $0x38] sm:$0xff]
      %vm805 = vcmask 523264
      %v807 = vsel %vm805, %v797, 0
      %v810 = vsel %vm805, %v798, 0
      %v813 = vsel %vm805, %v799, 0
      %v816 = vsel %vm805, %v800, 0
      %v819 = vsel %vm805, %v801, 0
      %v822 = vsel %vm805, %v802, 0
      %v825 = vsel %vm805, %v803, 0
      %v828 = vsel %vm805, %v804, 0
      %830 = vmatprep.subr.mxu0 0.0
      %831 = vmatpush1.msra.mxu0 %v789
      %832 = vmatprep.subr.mxu0 0.0
      %833 = vmatpush1.msra.mxu0 %v790
      %834 = vmatprep.subr.mxu0 0.0
      %835 = vmatpush1.msra.mxu0 %v791
      %836 = vmatprep.subr.mxu0 0.0
      %837 = vmatpush1.msra.mxu0 %v792
      %838 = vmatprep.subr.mxu0 0.0
      %839 = vmatpush1.msra.mxu0 %v793
      %840 = vmatprep.subr.mxu0 0.0
      %841 = vmatpush1.msra.mxu0 %v794
      %842 = vmatprep.subr.mxu0 0.0
      %843 = vmatpush1.msra.mxu0 %v795
      %844 = vmatprep.subr.mxu0 0.0
      %845 = vmatpush1.msra.mxu0 %v796
      %846 = vmatprep.subr.mxu0 0.0
      %847 = vmatpush1.msra.mxu0 0.0
      %848 = vmatprep.subr.mxu0 0.0
      %849 = vmatpush1.msra.mxu0 0.0
      %850 = vmatprep.subr.mxu0 0.0
      %851 = vmatpush1.msra.mxu0 0.0
      %852 = vmatprep.subr.mxu0 0.0
      %853 = vmatpush1.msra.mxu0 0.0
      %854 = vmatprep.subr.mxu0 0.0
      %855 = vmatpush1.msra.mxu0 0.0
      %856 = vmatprep.subr.mxu0 0.0
      %857 = vmatpush1.msra.mxu0 0.0
      %858 = vmatprep.subr.mxu0 0.0
      %859 = vmatpush1.msra.mxu0 0.0
      %860 = vmatprep.subr.mxu0 0.0
      %861 = vmatpush1.msra.mxu0 0.0
      %862 = vmatprep.subr.mxu0 0.0
      %863 = vmatpush1.msra.mxu0 0.0
      %864 = vmatprep.subr.mxu0 0.0
      %865 = vmatpush1.msra.mxu0 0.0
      %866 = vmatprep.subr.mxu0 0.0
      %867 = vmatpush1.msra.mxu0 0.0
      %868 = vmatprep.subr.mxu0 0.0
      %869 = vmatpush1.msra.mxu0 0.0
      %870 = vmatprep.subr.mxu0 0.0
      %871 = vmatpush1.msra.mxu0 0.0
      %872 = vmatprep.subr.mxu0 0.0
      %873 = vmatpush1.msra.mxu0 0.0
      %874 = vmatprep.subr.mxu0 0.0
      %875 = vmatpush1.msra.mxu0 0.0
      %876 = vmatprep.subr.mxu0 0.0
      %877 = vmatpush1.msra.mxu0 0.0
      %878 = vmatprep.subr.mxu0 0.0
      %879 = vmatpush1.msra.mxu0 0.0
      %880 = vmatprep.subr.mxu0 0.0
      %881 = vmatpush1.msra.mxu0 0.0
      %882 = vmatprep.subr.mxu0 0.0
      %883 = vmatpush1.msra.mxu0 0.0
      %884 = vmatprep.subr.mxu0 0.0
      %885 = vmatpush1.msra.mxu0 0.0
      %886 = vmatprep.subr.mxu0 0.0
      %887 = vmatpush1.msra.mxu0 0.0
      %888 = vmatprep.subr.mxu0 0.0
      %889 = vmatpush1.msra.mxu0 0.0
      %890 = vmatprep.subr.mxu0 0.0
      %891 = vmatpush1.msra.mxu0 0.0
      %892 = vmatprep.subr.mxu0 0.0
      %893 = vmatpush1.msra.mxu0 0.0
      %894 = vmatprep.mubr.f32.mxu0 0.0
      %895 = vmatmul.mubr.f32.gmra.mrb[0].mxu0 %v807
      %v896 = vpop.f32.mrb[0].mxu0
      %v897 = vadd.f32 0.0, %v896
      %v898 = vpop.f32.mrb[0].mxu0
      %899 = vmatprep.mubr.f32.mxu0 0.0
      %900 = vmatmul.mubr.f32.gmra.mrb[0].mxu0 %v810
      %v901 = vpop.f32.mrb[0].mxu0
      %v902 = vadd.f32 0.0, %v901
      %v903 = vpop.f32.mrb[0].mxu0
      %904 = vmatprep.mubr.f32.mxu0 0.0
      %905 = vmatmul.mubr.f32.gmra.mrb[0].mxu0 %v813
      %v906 = vpop.f32.mrb[0].mxu0
      %v907 = vadd.f32 0.0, %v906
      %v908 = vpop.f32.mrb[0].mxu0
      %909 = vmatprep.mubr.f32.mxu0 0.0
      %910 = vmatmul.mubr.f32.gmra.mrb[0].mxu0 %v816
      %v911 = vpop.f32.mrb[0].mxu0
      %v912 = vadd.f32 0.0, %v911
      %v913 = vpop.f32.mrb[0].mxu0
      %914 = vmatprep.mubr.f32.mxu0 0.0
      %915 = vmatmul.mubr.f32.gmra.mrb[0].mxu0 %v819
      %v916 = vpop.f32.mrb[0].mxu0
      %v917 = vadd.f32 0.0, %v916
      %v918 = vpop.f32.mrb[0].mxu0
      %919 = vmatprep.mubr.f32.mxu0 0.0
      %920 = vmatmul.mubr.f32.gmra.mrb[0].mxu0 %v822
      %v921 = vpop.f32.mrb[0].mxu0
      %v922 = vadd.f32 0.0, %v921
      %v923 = vpop.f32.mrb[0].mxu0
      %924 = vmatprep.mubr.f32.mxu0 0.0
      %925 = vmatmul.mubr.f32.gmra.mrb[0].mxu0 %v825
      %v926 = vpop.f32.mrb[0].mxu0
      %v927 = vadd.f32 0.0, %v926
      %v928 = vpop.f32.mrb[0].mxu0
      %929 = vmatprep.mubr.f32.mxu0 0.0
      %930 = vmatmul.mubr.f32.gmra.mrb[0].mxu0 %v828
      %v931 = vpop.f32.mrb[0].mxu0
      %v932 = vadd.f32 0.0, %v931
      %v933 = vpop.f32.mrb[0].mxu0
      %934 = vdwg.mxu0
      %v935 = vld [vmem:[%s5] sm:$0xff]
      %v936 = vld [vmem:[%s6] sm:$0xff]
      %s937 = scalar_lea.vmem %s5, 8
      %v938 = vld [vmem:[%s937] sm:$0xff]
      %vm939 = vcmask 64512
      %v941 = vsel %vm939, %v907, 0
      %v944 = vsel %vm939, %v912, 0
      %946 = vmatprep.subr.mxu0 0.0
      %947 = vmatpush1.msra.mxu0 %v938
      %948 = vmatprep.subr.mxu0 0.0
      %949 = vmatpush1.msra.mxu0 0.0
      %950 = vmatprep.subr.mxu0 0.0
      %951 = vmatpush1.msra.mxu0 0.0
      %952 = vmatprep.subr.mxu0 0.0
      %953 = vmatpush1.msra.mxu0 0.0
      %954 = vmatprep.subr.mxu0 0.0
      %955 = vmatpush1.msra.mxu0 0.0
      %956 = vmatprep.subr.mxu0 0.0
      %957 = vmatpush1.msra.mxu0 0.0
      %958 = vmatprep.subr.mxu0 0.0
      %959 = vmatpush1.msra.mxu0 0.0
      %960 = vmatprep.subr.mxu0 0.0
      %961 = vmatpush1.msra.mxu0 0.0
      %962 = vmatprep.subr.mxu0 0.0
      %963 = vmatpush1.msra.mxu0 0.0
      %964 = vmatprep.subr.mxu0 0.0
      %965 = vmatpush1.msra.mxu0 0.0
      %966 = vmatprep.subr.mxu0 0.0
      %967 = vmatpush1.msra.mxu0 0.0
      %968 = vmatprep.subr.mxu0 0.0
      %969 = vmatpush1.msra.mxu0 0.0
      %970 = vmatprep.subr.mxu0 0.0
      %971 = vmatpush1.msra.mxu0 0.0
      %972 = vmatprep.subr.mxu0 0.0
      %973 = vmatpush1.msra.mxu0 0.0
      %974 = vmatprep.subr.mxu0 0.0
      %975 = vmatpush1.msra.mxu0 0.0
      %976 = vmatprep.subr.mxu0 0.0
      %977 = vmatpush1.msra.mxu0 0.0
      %978 = vmatprep.subr.mxu0 0.0
      %979 = vmatpush1.msra.mxu0 0.0
      %980 = vmatprep.subr.mxu0 0.0
      %981 = vmatpush1.msra.mxu0 0.0
      %982 = vmatprep.subr.mxu0 0.0
      %983 = vmatpush1.msra.mxu0 0.0
      %984 = vmatprep.subr.mxu0 0.0
      %985 = vmatpush1.msra.mxu0 0.0
      %986 = vmatprep.subr.mxu0 0.0
      %987 = vmatpush1.msra.mxu0 0.0
      %988 = vmatprep.subr.mxu0 0.0
      %989 = vmatpush1.msra.mxu0 0.0
      %990 = vmatprep.subr.mxu0 0.0
      %991 = vmatpush1.msra.mxu0 0.0
      %992 = vmatprep.subr.mxu0 0.0
      %993 = vmatpush1.msra.mxu0 0.0
      %994 = vmatprep.subr.mxu0 0.0
      %995 = vmatpush1.msra.mxu0 0.0
      %996 = vmatprep.subr.mxu0 0.0
      %997 = vmatpush1.msra.mxu0 0.0
      %998 = vmatprep.subr.mxu0 0.0
      %999 = vmatpush1.msra.mxu0 0.0
      %1000 = vmatprep.subr.mxu0 0.0
      %1001 = vmatpush1.msra.mxu0 0.0
      %1002 = vmatprep.subr.mxu0 0.0
      %1003 = vmatpush1.msra.mxu0 0.0
      %1004 = vmatprep.subr.mxu0 0.0
      %1005 = vmatpush1.msra.mxu0 0.0
      %1006 = vmatprep.subr.mxu0 0.0
      %1007 = vmatpush1.msra.mxu0 0.0
      %1008 = vmatprep.subr.mxu0 0.0
      %1009 = vmatpush1.msra.mxu0 0.0
      %1010 = vmatprep.mubr.f32.mxu0 0.0
      %1011 = vmatmul.mubr.f32.gmra.mrb[0].mxu0 %v941
      %v1012 = vpop.f32.mrb[0].mxu0
      %v1013 = vadd.f32 0.0, %v1012
      %v1014 = vpop.f32.mrb[0].mxu0
      %1015 = vmatprep.mubr.f32.mxu0 0.0
      %1016 = vmatmul.mubr.f32.gmra.mrb[0].mxu0 %v944
      %v1017 = vpop.f32.mrb[0].mxu0
      %v1018 = vadd.f32 0.0, %v1017
      %v1019 = vpop.f32.mrb[0].mxu0
      %1020 = vdwg.mxu0
      %v1022 = vsel %vm939, %v897, 0
      %v1025 = vsel %vm939, %v902, 0
      %1027 = vmatprep.subr.mxu0 0.0
      %1028 = vmatpush1.msra.mxu0 %v935
      %1029 = vmatprep.subr.mxu0 0.0
      %1030 = vmatpush1.msra.mxu0 0.0
      %1031 = vmatprep.subr.mxu0 0.0
      %1032 = vmatpush1.msra.mxu0 0.0
      %1033 = vmatprep.subr.mxu0 0.0
      %1034 = vmatpush1.msra.mxu0 0.0
      %1035 = vmatprep.subr.mxu0 0.0
      %1036 = vmatpush1.msra.mxu0 0.0
      %1037 = vmatprep.subr.mxu0 0.0
      %1038 = vmatpush1.msra.mxu0 0.0
      %1039 = vmatprep.subr.mxu0 0.0
      %1040 = vmatpush1.msra.mxu0 0.0
      %1041 = vmatprep.subr.mxu0 0.0
      %1042 = vmatpush1.msra.mxu0 0.0
      %1043 = vmatprep.subr.mxu0 0.0
      %1044 = vmatpush1.msra.mxu0 0.0
      %1045 = vmatprep.subr.mxu0 0.0
      %1046 = vmatpush1.msra.mxu0 0.0
      %1047 = vmatprep.subr.mxu0 0.0
      %1048 = vmatpush1.msra.mxu0 0.0
      %1049 = vmatprep.subr.mxu0 0.0
      %1050 = vmatpush1.msra.mxu0 0.0
      %1051 = vmatprep.subr.mxu0 0.0
      %1052 = vmatpush1.msra.mxu0 0.0
      %1053 = vmatprep.subr.mxu0 0.0
      %1054 = vmatpush1.msra.mxu0 0.0
      %1055 = vmatprep.subr.mxu0 0.0
      %1056 = vmatpush1.msra.mxu0 0.0
      %1057 = vmatprep.subr.mxu0 0.0
      %1058 = vmatpush1.msra.mxu0 0.0
      %1059 = vmatprep.subr.mxu0 0.0
      %1060 = vmatpush1.msra.mxu0 0.0
      %1061 = vmatprep.subr.mxu0 0.0
      %1062 = vmatpush1.msra.mxu0 0.0
      %1063 = vmatprep.subr.mxu0 0.0
      %1064 = vmatpush1.msra.mxu0 0.0
      %1065 = vmatprep.subr.mxu0 0.0
      %1066 = vmatpush1.msra.mxu0 0.0
      %1067 = vmatprep.subr.mxu0 0.0
      %1068 = vmatpush1.msra.mxu0 0.0
      %1069 = vmatprep.subr.mxu0 0.0
      %1070 = vmatpush1.msra.mxu0 0.0
      %1071 = vmatprep.subr.mxu0 0.0
      %1072 = vmatpush1.msra.mxu0 0.0
      %1073 = vmatprep.subr.mxu0 0.0
      %1074 = vmatpush1.msra.mxu0 0.0
      %1075 = vmatprep.subr.mxu0 0.0
      %1076 = vmatpush1.msra.mxu0 0.0
      %1077 = vmatprep.subr.mxu0 0.0
      %1078 = vmatpush1.msra.mxu0 0.0
      %1079 = vmatprep.subr.mxu0 0.0
      %1080 = vmatpush1.msra.mxu0 0.0
      %1081 = vmatprep.subr.mxu0 0.0
      %1082 = vmatpush1.msra.mxu0 0.0
      %1083 = vmatprep.subr.mxu0 0.0
      %1084 = vmatpush1.msra.mxu0 0.0
      %1085 = vmatprep.subr.mxu0 0.0
      %1086 = vmatpush1.msra.mxu0 0.0
      %1087 = vmatprep.subr.mxu0 0.0
      %1088 = vmatpush1.msra.mxu0 0.0
      %1089 = vmatprep.subr.mxu0 0.0
      %1090 = vmatpush1.msra.mxu0 0.0
      %1091 = vmatprep.mubr.f32.mxu0 0.0
      %1092 = vmatmul.mubr.f32.gmra.mrb[0].mxu0 %v1022
      %v1093 = vpop.f32.mrb[0].mxu0
      %v1094 = vadd.f32 %v1013, %v1093
      %v1095 = vpop.f32.mrb[0].mxu0
      %1096 = vmatprep.mubr.f32.mxu0 0.0
      %1097 = vmatmul.mubr.f32.gmra.mrb[0].mxu0 %v1025
      %v1098 = vpop.f32.mrb[0].mxu0
      %v1099 = vadd.f32 %v1018, %v1098
      %v1100 = vpop.f32.mrb[0].mxu0
      %1101 = vdwg.mxu0
      %s1102 = scalar_lea.vmem %s6, 8
      %v1103 = vld [vmem:[%s1102] sm:$0xff]
      %1104 = vmatprep.subr.mxu0 0.0
      %1105 = vmatpush1.msra.mxu0 %v1103
      %1106 = vmatprep.subr.mxu0 0.0
      %1107 = vmatpush1.msra.mxu0 0.0
      %1108 = vmatprep.subr.mxu0 0.0
      %1109 = vmatpush1.msra.mxu0 0.0
      %1110 = vmatprep.subr.mxu0 0.0
      %1111 = vmatpush1.msra.mxu0 0.0
      %1112 = vmatprep.subr.mxu0 0.0
      %1113 = vmatpush1.msra.mxu0 0.0
      %1114 = vmatprep.subr.mxu0 0.0
      %1115 = vmatpush1.msra.mxu0 0.0
      %1116 = vmatprep.subr.mxu0 0.0
      %1117 = vmatpush1.msra.mxu0 0.0
      %1118 = vmatprep.subr.mxu0 0.0
      %1119 = vmatpush1.msra.mxu0 0.0
      %1120 = vmatprep.subr.mxu0 0.0
      %1121 = vmatpush1.msra.mxu0 0.0
      %1122 = vmatprep.subr.mxu0 0.0
      %1123 = vmatpush1.msra.mxu0 0.0
      %1124 = vmatprep.subr.mxu0 0.0
      %1125 = vmatpush1.msra.mxu0 0.0
      %1126 = vmatprep.subr.mxu0 0.0
      %1127 = vmatpush1.msra.mxu0 0.0
      %1128 = vmatprep.subr.mxu0 0.0
      %1129 = vmatpush1.msra.mxu0 0.0
      %1130 = vmatprep.subr.mxu0 0.0
      %1131 = vmatpush1.msra.mxu0 0.0
      %1132 = vmatprep.subr.mxu0 0.0
      %1133 = vmatpush1.msra.mxu0 0.0
      %1134 = vmatprep.subr.mxu0 0.0
      %1135 = vmatpush1.msra.mxu0 0.0
      %1136 = vmatprep.subr.mxu0 0.0
      %1137 = vmatpush1.msra.mxu0 0.0
      %1138 = vmatprep.subr.mxu0 0.0
      %1139 = vmatpush1.msra.mxu0 0.0
      %1140 = vmatprep.subr.mxu0 0.0
      %1141 = vmatpush1.msra.mxu0 0.0
      %1142 = vmatprep.subr.mxu0 0.0
      %1143 = vmatpush1.msra.mxu0 0.0
      %1144 = vmatprep.subr.mxu0 0.0
      %1145 = vmatpush1.msra.mxu0 0.0
      %1146 = vmatprep.subr.mxu0 0.0
      %1147 = vmatpush1.msra.mxu0 0.0
      %1148 = vmatprep.subr.mxu0 0.0
      %1149 = vmatpush1.msra.mxu0 0.0
      %1150 = vmatprep.subr.mxu0 0.0
      %1151 = vmatpush1.msra.mxu0 0.0
      %1152 = vmatprep.subr.mxu0 0.0
      %1153 = vmatpush1.msra.mxu0 0.0
      %1154 = vmatprep.subr.mxu0 0.0
      %1155 = vmatpush1.msra.mxu0 0.0
      %1156 = vmatprep.subr.mxu0 0.0
      %1157 = vmatpush1.msra.mxu0 0.0
      %1158 = vmatprep.subr.mxu0 0.0
      %1159 = vmatpush1.msra.mxu0 0.0
      %1160 = vmatprep.subr.mxu0 0.0
      %1161 = vmatpush1.msra.mxu0 0.0
      %1162 = vmatprep.subr.mxu0 0.0
      %1163 = vmatpush1.msra.mxu0 0.0
      %1164 = vmatprep.subr.mxu0 0.0
      %1165 = vmatpush1.msra.mxu0 0.0
      %1166 = vmatprep.subr.mxu0 0.0
      %1167 = vmatpush1.msra.mxu0 0.0
      %1168 = vmatprep.mubr.f32.mxu0 0.0
      %1169 = vmatmul.mubr.f32.gmra.mrb[0].mxu0 %v941
      %v1170 = vpop.f32.mrb[0].mxu0
      %v1171 = vadd.f32 0.0, %v1170
      %v1172 = vpop.f32.mrb[0].mxu0
      %1173 = vmatprep.mubr.f32.mxu0 0.0
      %1174 = vmatmul.mubr.f32.gmra.mrb[0].mxu0 %v944
      %v1175 = vpop.f32.mrb[0].mxu0
      %v1176 = vadd.f32 0.0, %v1175
      %v1177 = vpop.f32.mrb[0].mxu0
      %1178 = vdwg.mxu0
      %1179 = vmatprep.subr.mxu0 0.0
      %1180 = vmatpush1.msra.mxu0 %v936
      %1181 = vmatprep.subr.mxu0 0.0
      %1182 = vmatpush1.msra.mxu0 0.0
      %1183 = vmatprep.subr.mxu0 0.0
      %1184 = vmatpush1.msra.mxu0 0.0
      %1185 = vmatprep.subr.mxu0 0.0
      %1186 = vmatpush1.msra.mxu0 0.0
      %1187 = vmatprep.subr.mxu0 0.0
      %1188 = vmatpush1.msra.mxu0 0.0
      %1189 = vmatprep.subr.mxu0 0.0
      %1190 = vmatpush1.msra.mxu0 0.0
      %1191 = vmatprep.subr.mxu0 0.0
      %1192 = vmatpush1.msra.mxu0 0.0
      %1193 = vmatprep.subr.mxu0 0.0
      %1194 = vmatpush1.msra.mxu0 0.0
      %1195 = vmatprep.subr.mxu0 0.0
      %1196 = vmatpush1.msra.mxu0 0.0
      %1197 = vmatprep.subr.mxu0 0.0
      %1198 = vmatpush1.msra.mxu0 0.0
      %1199 = vmatprep.subr.mxu0 0.0
      %1200 = vmatpush1.msra.mxu0 0.0
      %1201 = vmatprep.subr.mxu0 0.0
      %1202 = vmatpush1.msra.mxu0 0.0
      %1203 = vmatprep.subr.mxu0 0.0
      %1204 = vmatpush1.msra.mxu0 0.0
      %1205 = vmatprep.subr.mxu0 0.0
      %1206 = vmatpush1.msra.mxu0 0.0
      %1207 = vmatprep.subr.mxu0 0.0
      %1208 = vmatpush1.msra.mxu0 0.0
      %1209 = vmatprep.subr.mxu0 0.0
      %1210 = vmatpush1.msra.mxu0 0.0
      %1211 = vmatprep.subr.mxu0 0.0
      %1212 = vmatpush1.msra.mxu0 0.0
      %1213 = vmatprep.subr.mxu0 0.0
      %1214 = vmatpush1.msra.mxu0 0.0
      %1215 = vmatprep.subr.mxu0 0.0
      %1216 = vmatpush1.msra.mxu0 0.0
      %1217 = vmatprep.subr.mxu0 0.0
      %1218 = vmatpush1.msra.mxu0 0.0
      %1219 = vmatprep.subr.mxu0 0.0
      %1220 = vmatpush1.msra.mxu0 0.0
      %1221 = vmatprep.subr.mxu0 0.0
      %1222 = vmatpush1.msra.mxu0 0.0
      %1223 = vmatprep.subr.mxu0 0.0
      %1224 = vmatpush1.msra.mxu0 0.0
      %1225 = vmatprep.subr.mxu0 0.0
      %1226 = vmatpush1.msra.mxu0 0.0
      %1227 = vmatprep.subr.mxu0 0.0
      %1228 = vmatpush1.msra.mxu0 0.0
      %1229 = vmatprep.subr.mxu0 0.0
      %1230 = vmatpush1.msra.mxu0 0.0
      %1231 = vmatprep.subr.mxu0 0.0
      %1232 = vmatpush1.msra.mxu0 0.0
      %1233 = vmatprep.subr.mxu0 0.0
      %1234 = vmatpush1.msra.mxu0 0.0
      %1235 = vmatprep.subr.mxu0 0.0
      %1236 = vmatpush1.msra.mxu0 0.0
      %1237 = vmatprep.subr.mxu0 0.0
      %1238 = vmatpush1.msra.mxu0 0.0
      %1239 = vmatprep.subr.mxu0 0.0
      %1240 = vmatpush1.msra.mxu0 0.0
      %1241 = vmatprep.subr.mxu0 0.0
      %1242 = vmatpush1.msra.mxu0 0.0
      %1243 = vmatprep.mubr.f32.mxu0 0.0
      %1244 = vmatmul.mubr.f32.gmra.mrb[0].mxu0 %v1022
      %v1245 = vpop.f32.mrb[0].mxu0
      %v1246 = vadd.f32 %v1171, %v1245
      %v1247 = vpop.f32.mrb[0].mxu0
      %1248 = vmatprep.mubr.f32.mxu0 0.0
      %1249 = vmatmul.mubr.f32.gmra.mrb[0].mxu0 %v1025
      %v1250 = vpop.f32.mrb[0].mxu0
      %v1251 = vadd.f32 %v1176, %v1250
      %v1252 = vpop.f32.mrb[0].mxu0
      %1253 = vdwg.mxu0
      %s1254 = scalar_lea.vmem %s5, 16
      %v1255 = vld [vmem:[%s1254] sm:$0xff]
      %v1257 = vsel %vm939, %v917, 0
      %v1260 = vsel %vm939, %v922, 0
      %1262 = vmatprep.subr.mxu0 0.0
      %1263 = vmatpush1.msra.mxu0 %v1255
      %1264 = vmatprep.subr.mxu0 0.0
      %1265 = vmatpush1.msra.mxu0 0.0
      %1266 = vmatprep.subr.mxu0 0.0
      %1267 = vmatpush1.msra.mxu0 0.0
      %1268 = vmatprep.subr.mxu0 0.0
      %1269 = vmatpush1.msra.mxu0 0.0
      %1270 = vmatprep.subr.mxu0 0.0
      %1271 = vmatpush1.msra.mxu0 0.0
      %1272 = vmatprep.subr.mxu0 0.0
      %1273 = vmatpush1.msra.mxu0 0.0
      %1274 = vmatprep.subr.mxu0 0.0
      %1275 = vmatpush1.msra.mxu0 0.0
      %1276 = vmatprep.subr.mxu0 0.0
      %1277 = vmatpush1.msra.mxu0 0.0
      %1278 = vmatprep.subr.mxu0 0.0
      %1279 = vmatpush1.msra.mxu0 0.0
      %1280 = vmatprep.subr.mxu0 0.0
      %1281 = vmatpush1.msra.mxu0 0.0
      %1282 = vmatprep.subr.mxu0 0.0
      %1283 = vmatpush1.msra.mxu0 0.0
      %1284 = vmatprep.subr.mxu0 0.0
      %1285 = vmatpush1.msra.mxu0 0.0
      %1286 = vmatprep.subr.mxu0 0.0
      %1287 = vmatpush1.msra.mxu0 0.0
      %1288 = vmatprep.subr.mxu0 0.0
      %1289 = vmatpush1.msra.mxu0 0.0
      %1290 = vmatprep.subr.mxu0 0.0
      %1291 = vmatpush1.msra.mxu0 0.0
      %1292 = vmatprep.subr.mxu0 0.0
      %1293 = vmatpush1.msra.mxu0 0.0
      %1294 = vmatprep.subr.mxu0 0.0
      %1295 = vmatpush1.msra.mxu0 0.0
      %1296 = vmatprep.subr.mxu0 0.0
      %1297 = vmatpush1.msra.mxu0 0.0
      %1298 = vmatprep.subr.mxu0 0.0
      %1299 = vmatpush1.msra.mxu0 0.0
      %1300 = vmatprep.subr.mxu0 0.0
      %1301 = vmatpush1.msra.mxu0 0.0
      %1302 = vmatprep.subr.mxu0 0.0
      %1303 = vmatpush1.msra.mxu0 0.0
      %1304 = vmatprep.subr.mxu0 0.0
      %1305 = vmatpush1.msra.mxu0 0.0
      %1306 = vmatprep.subr.mxu0 0.0
      %1307 = vmatpush1.msra.mxu0 0.0
      %1308 = vmatprep.subr.mxu0 0.0
      %1309 = vmatpush1.msra.mxu0 0.0
      %1310 = vmatprep.subr.mxu0 0.0
      %1311 = vmatpush1.msra.mxu0 0.0
      %1312 = vmatprep.subr.mxu0 0.0
      %1313 = vmatpush1.msra.mxu0 0.0
      %1314 = vmatprep.subr.mxu0 0.0
      %1315 = vmatpush1.msra.mxu0 0.0
      %1316 = vmatprep.subr.mxu0 0.0
      %1317 = vmatpush1.msra.mxu0 0.0
      %1318 = vmatprep.subr.mxu0 0.0
      %1319 = vmatpush1.msra.mxu0 0.0
      %1320 = vmatprep.subr.mxu0 0.0
      %1321 = vmatpush1.msra.mxu0 0.0
      %1322 = vmatprep.subr.mxu0 0.0
      %1323 = vmatpush1.msra.mxu0 0.0
      %1324 = vmatprep.subr.mxu0 0.0
      %1325 = vmatpush1.msra.mxu0 0.0
      %1326 = vmatprep.mubr.f32.mxu0 0.0
      %1327 = vmatmul.mubr.f32.gmra.mrb[0].mxu0 %v1257
      %v1328 = vpop.f32.mrb[0].mxu0
      %v1329 = vadd.f32 0.0, %v1328
      %v1330 = vpop.f32.mrb[0].mxu0
      %1331 = vmatprep.mubr.f32.mxu0 0.0
      %1332 = vmatmul.mubr.f32.gmra.mrb[0].mxu0 %v1260
      %v1333 = vpop.f32.mrb[0].mxu0
      %v1334 = vadd.f32 0.0, %v1333
      %v1335 = vpop.f32.mrb[0].mxu0
      %1336 = vdwg.mxu0
      %v1337 = vadd.f32 %v1094, %v1329
      %v1338 = vadd.f32 %v1099, %v1334
      %s1339 = scalar_lea.vmem %s6, 16
      %v1340 = vld [vmem:[%s1339] sm:$0xff]
      %1341 = vmatprep.subr.mxu0 0.0
      %1342 = vmatpush1.msra.mxu0 %v1340
      %1343 = vmatprep.subr.mxu0 0.0
      %1344 = vmatpush1.msra.mxu0 0.0
      %1345 = vmatprep.subr.mxu0 0.0
      %1346 = vmatpush1.msra.mxu0 0.0
      %1347 = vmatprep.subr.mxu0 0.0
      %1348 = vmatpush1.msra.mxu0 0.0
      %1349 = vmatprep.subr.mxu0 0.0
      %1350 = vmatpush1.msra.mxu0 0.0
      %1351 = vmatprep.subr.mxu0 0.0
      %1352 = vmatpush1.msra.mxu0 0.0
      %1353 = vmatprep.subr.mxu0 0.0
      %1354 = vmatpush1.msra.mxu0 0.0
      %1355 = vmatprep.subr.mxu0 0.0
      %1356 = vmatpush1.msra.mxu0 0.0
      %1357 = vmatprep.subr.mxu0 0.0
      %1358 = vmatpush1.msra.mxu0 0.0
      %1359 = vmatprep.subr.mxu0 0.0
      %1360 = vmatpush1.msra.mxu0 0.0
      %1361 = vmatprep.subr.mxu0 0.0
      %1362 = vmatpush1.msra.mxu0 0.0
      %1363 = vmatprep.subr.mxu0 0.0
      %1364 = vmatpush1.msra.mxu0 0.0
      %1365 = vmatprep.subr.mxu0 0.0
      %1366 = vmatpush1.msra.mxu0 0.0
      %1367 = vmatprep.subr.mxu0 0.0
      %1368 = vmatpush1.msra.mxu0 0.0
      %1369 = vmatprep.subr.mxu0 0.0
      %1370 = vmatpush1.msra.mxu0 0.0
      %1371 = vmatprep.subr.mxu0 0.0
      %1372 = vmatpush1.msra.mxu0 0.0
      %1373 = vmatprep.subr.mxu0 0.0
      %1374 = vmatpush1.msra.mxu0 0.0
      %1375 = vmatprep.subr.mxu0 0.0
      %1376 = vmatpush1.msra.mxu0 0.0
      %1377 = vmatprep.subr.mxu0 0.0
      %1378 = vmatpush1.msra.mxu0 0.0
      %1379 = vmatprep.subr.mxu0 0.0
      %1380 = vmatpush1.msra.mxu0 0.0
      %1381 = vmatprep.subr.mxu0 0.0
      %1382 = vmatpush1.msra.mxu0 0.0
      %1383 = vmatprep.subr.mxu0 0.0
      %1384 = vmatpush1.msra.mxu0 0.0
      %1385 = vmatprep.subr.mxu0 0.0
      %1386 = vmatpush1.msra.mxu0 0.0
      %1387 = vmatprep.subr.mxu0 0.0
      %1388 = vmatpush1.msra.mxu0 0.0
      %1389 = vmatprep.subr.mxu0 0.0
      %1390 = vmatpush1.msra.mxu0 0.0
      %1391 = vmatprep.subr.mxu0 0.0
      %1392 = vmatpush1.msra.mxu0 0.0
      %1393 = vmatprep.subr.mxu0 0.0
      %1394 = vmatpush1.msra.mxu0 0.0
      %1395 = vmatprep.subr.mxu0 0.0
      %1396 = vmatpush1.msra.mxu0 0.0
      %1397 = vmatprep.subr.mxu0 0.0
      %1398 = vmatpush1.msra.mxu0 0.0
      %1399 = vmatprep.subr.mxu0 0.0
      %1400 = vmatpush1.msra.mxu0 0.0
      %1401 = vmatprep.subr.mxu0 0.0
      %1402 = vmatpush1.msra.mxu0 0.0
      %1403 = vmatprep.subr.mxu0 0.0
      %1404 = vmatpush1.msra.mxu0 0.0
      %1405 = vmatprep.mubr.f32.mxu0 0.0
      %1406 = vmatmul.mubr.f32.gmra.mrb[0].mxu0 %v1257
      %v1407 = vpop.f32.mrb[0].mxu0
      %v1408 = vadd.f32 0.0, %v1407
      %v1409 = vpop.f32.mrb[0].mxu0
      %1410 = vmatprep.mubr.f32.mxu0 0.0
      %1411 = vmatmul.mubr.f32.gmra.mrb[0].mxu0 %v1260
      %v1412 = vpop.f32.mrb[0].mxu0
      %v1413 = vadd.f32 0.0, %v1412
      %v1414 = vpop.f32.mrb[0].mxu0
      %1415 = vdwg.mxu0
      %v1416 = vadd.f32 %v1246, %v1408
      %v1417 = vadd.f32 %v1251, %v1413
      %s1418 = scalar_lea.vmem %s5, 24
      %v1419 = vld [vmem:[%s1418] sm:$0xff]
      %v1421 = vsel %vm939, %v927, 0
      %v1424 = vsel %vm939, %v932, 0
      %1426 = vmatprep.subr.mxu0 0.0
      %1427 = vmatpush1.msra.mxu0 %v1419
      %1428 = vmatprep.subr.mxu0 0.0
      %1429 = vmatpush1.msra.mxu0 0.0
      %1430 = vmatprep.subr.mxu0 0.0
      %1431 = vmatpush1.msra.mxu0 0.0
      %1432 = vmatprep.subr.mxu0 0.0
      %1433 = vmatpush1.msra.mxu0 0.0
      %1434 = vmatprep.subr.mxu0 0.0
      %1435 = vmatpush1.msra.mxu0 0.0
      %1436 = vmatprep.subr.mxu0 0.0
      %1437 = vmatpush1.msra.mxu0 0.0
      %1438 = vmatprep.subr.mxu0 0.0
      %1439 = vmatpush1.msra.mxu0 0.0
      %1440 = vmatprep.subr.mxu0 0.0
      %1441 = vmatpush1.msra.mxu0 0.0
      %1442 = vmatprep.subr.mxu0 0.0
      %1443 = vmatpush1.msra.mxu0 0.0
      %1444 = vmatprep.subr.mxu0 0.0
      %1445 = vmatpush1.msra.mxu0 0.0
      %1446 = vmatprep.subr.mxu0 0.0
      %1447 = vmatpush1.msra.mxu0 0.0
      %1448 = vmatprep.subr.mxu0 0.0
      %1449 = vmatpush1.msra.mxu0 0.0
      %1450 = vmatprep.subr.mxu0 0.0
      %1451 = vmatpush1.msra.mxu0 0.0
      %1452 = vmatprep.subr.mxu0 0.0
      %1453 = vmatpush1.msra.mxu0 0.0
      %1454 = vmatprep.subr.mxu0 0.0
      %1455 = vmatpush1.msra.mxu0 0.0
      %1456 = vmatprep.subr.mxu0 0.0
      %1457 = vmatpush1.msra.mxu0 0.0
      %1458 = vmatprep.subr.mxu0 0.0
      %1459 = vmatpush1.msra.mxu0 0.0
      %1460 = vmatprep.subr.mxu0 0.0
      %1461 = vmatpush1.msra.mxu0 0.0
      %1462 = vmatprep.subr.mxu0 0.0
      %1463 = vmatpush1.msra.mxu0 0.0
      %1464 = vmatprep.subr.mxu0 0.0
      %1465 = vmatpush1.msra.mxu0 0.0
      %1466 = vmatprep.subr.mxu0 0.0
      %1467 = vmatpush1.msra.mxu0 0.0
      %1468 = vmatprep.subr.mxu0 0.0
      %1469 = vmatpush1.msra.mxu0 0.0
      %1470 = vmatprep.subr.mxu0 0.0
      %1471 = vmatpush1.msra.mxu0 0.0
      %1472 = vmatprep.subr.mxu0 0.0
      %1473 = vmatpush1.msra.mxu0 0.0
      %1474 = vmatprep.subr.mxu0 0.0
      %1475 = vmatpush1.msra.mxu0 0.0
      %1476 = vmatprep.subr.mxu0 0.0
      %1477 = vmatpush1.msra.mxu0 0.0
      %1478 = vmatprep.subr.mxu0 0.0
      %1479 = vmatpush1.msra.mxu0 0.0
      %1480 = vmatprep.subr.mxu0 0.0
      %1481 = vmatpush1.msra.mxu0 0.0
      %1482 = vmatprep.subr.mxu0 0.0
      %1483 = vmatpush1.msra.mxu0 0.0
      %1484 = vmatprep.subr.mxu0 0.0
      %1485 = vmatpush1.msra.mxu0 0.0
      %1486 = vmatprep.subr.mxu0 0.0
      %1487 = vmatpush1.msra.mxu0 0.0
      %1488 = vmatprep.subr.mxu0 0.0
      %1489 = vmatpush1.msra.mxu0 0.0
      %1490 = vmatprep.mubr.f32.mxu0 0.0
      %1491 = vmatmul.mubr.f32.gmra.mrb[0].mxu0 %v1421
      %v1492 = vpop.f32.mrb[0].mxu0
      %v1493 = vadd.f32 0.0, %v1492
      %v1494 = vpop.f32.mrb[0].mxu0
      %1495 = vmatprep.mubr.f32.mxu0 0.0
      %1496 = vmatmul.mubr.f32.gmra.mrb[0].mxu0 %v1424
      %v1497 = vpop.f32.mrb[0].mxu0
      %v1498 = vadd.f32 0.0, %v1497
      %v1499 = vpop.f32.mrb[0].mxu0
      %1500 = vdwg.mxu0
      %v1501 = vadd.f32 %v1337, %v1493
      %v1502 = vadd.f32 %v1338, %v1498
      %s1503 = scalar_lea.vmem %s6, 24
      %v1504 = vld [vmem:[%s1503] sm:$0xff]
      %1505 = vmatprep.subr.mxu0 0.0
      %1506 = vmatpush1.msra.mxu0 %v1504
      %1507 = vmatprep.subr.mxu0 0.0
      %1508 = vmatpush1.msra.mxu0 0.0
      %1509 = vmatprep.subr.mxu0 0.0
      %1510 = vmatpush1.msra.mxu0 0.0
      %1511 = vmatprep.subr.mxu0 0.0
      %1512 = vmatpush1.msra.mxu0 0.0
      %1513 = vmatprep.subr.mxu0 0.0
      %1514 = vmatpush1.msra.mxu0 0.0
      %1515 = vmatprep.subr.mxu0 0.0
      %1516 = vmatpush1.msra.mxu0 0.0
      %1517 = vmatprep.subr.mxu0 0.0
      %1518 = vmatpush1.msra.mxu0 0.0
      %1519 = vmatprep.subr.mxu0 0.0
      %1520 = vmatpush1.msra.mxu0 0.0
      %1521 = vmatprep.subr.mxu0 0.0
      %1522 = vmatpush1.msra.mxu0 0.0
      %1523 = vmatprep.subr.mxu0 0.0
      %1524 = vmatpush1.msra.mxu0 0.0
      %1525 = vmatprep.subr.mxu0 0.0
      %1526 = vmatpush1.msra.mxu0 0.0
      %1527 = vmatprep.subr.mxu0 0.0
      %1528 = vmatpush1.msra.mxu0 0.0
      %1529 = vmatprep.subr.mxu0 0.0
      %1530 = vmatpush1.msra.mxu0 0.0
      %1531 = vmatprep.subr.mxu0 0.0
      %1532 = vmatpush1.msra.mxu0 0.0
      %1533 = vmatprep.subr.mxu0 0.0
      %1534 = vmatpush1.msra.mxu0 0.0
      %1535 = vmatprep.subr.mxu0 0.0
      %1536 = vmatpush1.msra.mxu0 0.0
      %1537 = vmatprep.subr.mxu0 0.0
      %1538 = vmatpush1.msra.mxu0 0.0
      %1539 = vmatprep.subr.mxu0 0.0
      %1540 = vmatpush1.msra.mxu0 0.0
      %1541 = vmatprep.subr.mxu0 0.0
      %1542 = vmatpush1.msra.mxu0 0.0
      %1543 = vmatprep.subr.mxu0 0.0
      %1544 = vmatpush1.msra.mxu0 0.0
      %1545 = vmatprep.subr.mxu0 0.0
      %1546 = vmatpush1.msra.mxu0 0.0
      %1547 = vmatprep.subr.mxu0 0.0
      %1548 = vmatpush1.msra.mxu0 0.0
      %1549 = vmatprep.subr.mxu0 0.0
      %1550 = vmatpush1.msra.mxu0 0.0
      %1551 = vmatprep.subr.mxu0 0.0
      %1552 = vmatpush1.msra.mxu0 0.0
      %1553 = vmatprep.subr.mxu0 0.0
      %1554 = vmatpush1.msra.mxu0 0.0
      %1555 = vmatprep.subr.mxu0 0.0
      %1556 = vmatpush1.msra.mxu0 0.0
      %1557 = vmatprep.subr.mxu0 0.0
      %1558 = vmatpush1.msra.mxu0 0.0
      %1559 = vmatprep.subr.mxu0 0.0
      %1560 = vmatpush1.msra.mxu0 0.0
      %1561 = vmatprep.subr.mxu0 0.0
      %1562 = vmatpush1.msra.mxu0 0.0
      %1563 = vmatprep.subr.mxu0 0.0
      %1564 = vmatpush1.msra.mxu0 0.0
      %1565 = vmatprep.subr.mxu0 0.0
      %1566 = vmatpush1.msra.mxu0 0.0
      %1567 = vmatprep.subr.mxu0 0.0
      %1568 = vmatpush1.msra.mxu0 0.0
      %1569 = vmatprep.mubr.f32.mxu0 0.0
      %1570 = vmatmul.mubr.f32.gmra.mrb[0].mxu0 %v1421
      %v1571 = vpop.f32.mrb[0].mxu0
      %v1572 = vadd.f32 0.0, %v1571
      %v1573 = vpop.f32.mrb[0].mxu0
      %1574 = vmatprep.mubr.f32.mxu0 0.0
      %1575 = vmatmul.mubr.f32.gmra.mrb[0].mxu0 %v1424
      %v1576 = vpop.f32.mrb[0].mxu0
      %v1577 = vadd.f32 0.0, %v1576
      %v1578 = vpop.f32.mrb[0].mxu0
      %1579 = vdwg.mxu0
      %v1580 = vadd.f32 %v1416, %v1572
      %v1581 = vadd.f32 %v1417, %v1577
      %v1582 = vld [vmem:[%s7] sm:$0x1]
      %v1583 = vlaneseq
      %v1584 = vshrl.u32 %v1583, 7
      %v1585 = vsub.s32 0, %v1584
      %v1586 = vrot.slane %v1582, %v1585
      %v1587 = vadd.f32 %v1501, %v1586
      %v1588 = vadd.f32 %v1502, %v1586
      %v1589 = vld [vmem:[%s7 + $0x1] sm:$0x1]
      %v1590 = vlaneseq
      %v1591 = vshrl.u32 %v1590, 7
      %v1592 = vsub.s32 0, %v1591
      %v1593 = vrot.slane %v1589, %v1592
      %v1594 = vadd.f32 %v1580, %v1593
      %v1595 = vadd.f32 %v1581, %v1593
      %v1596 = vld [vmem:[%s7 + $0x2] sm:$0x1]
      %vm1597 = vcmp.gt.f32.partialorder %v1594, 0.0
      %vm1598 = vcmp.gt.f32.partialorder %v1595, 0.0
      %v1599 = vlaneseq
      %v1600 = vshrl.u32 %v1599, 7
      %v1601 = vsub.s32 0, %v1600
      %v1602 = vrot.slane %v1596, %v1601
      %v1603 = vmul.f32 %v1602, %v1594
      %v1604 = vmul.f32 %v1602, %v1595
      %v1605 = vsel %vm1597, %v1594, %v1603
      %v1606 = vsel %vm1598, %v1595, %v1604
      %v1607 = vld [vmem:[%s2] sm:$0xff]
      %v1608 = vld [vmem:[%s2 + $0x8] sm:$0xff]
      %v1609 = vld [vmem:[%s2 + $0x10] sm:$0xff]
      %v1610 = vld [vmem:[%s2 + $0x18] sm:$0xff]
      %v1611 = vld [vmem:[%s2 + $0x20] sm:$0xff]
      %v1612 = vld [vmem:[%s2 + $0x28] sm:$0xff]
      %v1613 = vld [vmem:[%s2 + $0x30] sm:$0xff]
      %v1614 = vld [vmem:[%s2 + $0x38] sm:$0xff]
      %v1615 = vld [vmem:[%s2 + $0x40] sm:$0xff]
      %v1616 = vld [vmem:[%s2 + $0x48] sm:$0xff]
      %v1617 = vld [vmem:[%s2 + $0x50] sm:$0xff]
      %v1618 = vld [vmem:[%s2 + $0x58] sm:$0xff]
      %v1619 = vld [vmem:[%s2 + $0x60] sm:$0xff]
      %v1620 = vld [vmem:[%s2 + $0x68] sm:$0xff]
      %v1621 = vld [vmem:[%s2 + $0x70] sm:$0xff]
      %v1622 = vld [vmem:[%s2 + $0x78] sm:$0xff]
      %v1623 = vld [vmem:[%s2 + $0x80] sm:$0xff]
      %v1624 = vld [vmem:[%s2 + $0x88] sm:$0xff]
      %v1626 = vsel %vm638, %v1607, 0
      %v1629 = vsel %vm638, %v1608, 0
      %v1632 = vsel %vm638, %v1609, 0
      %v1635 = vsel %vm638, %v1610, 0
      %v1638 = vsel %vm638, %v1611, 0
      %v1641 = vsel %vm638, %v1612, 0
      %v1644 = vsel %vm638, %v1613, 0
      %v1647 = vsel %vm638, %v1614, 0
      %v1650 = vsel %vm638, %v1615, 0
      %v1653 = vsel %vm638, %v1616, 0
      %v1656 = vsel %vm638, %v1617, 0
      %v1659 = vsel %vm638, %v1618, 0
      %v1662 = vsel %vm638, %v1619, 0
      %v1665 = vsel %vm638, %v1620, 0
      %v1668 = vsel %vm638, %v1621, 0
      %v1671 = vsel %vm638, %v1622, 0
      %v1674 = vsel %vm638, %v1623, 0
      %v1677 = vsel %vm638, %v1624, 0
      %1679 = vmatprep.subr.mxu0 0.0
      %1680 = vmatpush1.msra.mxu0 %v1605
      %1681 = vmatprep.subr.mxu0 0.0
      %1682 = vmatpush1.msra.mxu0 %v1606
      %1683 = vmatprep.subr.mxu0 0.0
      %1684 = vmatpush1.msra.mxu0 0.0
      %1685 = vmatprep.subr.mxu0 0.0
      %1686 = vmatpush1.msra.mxu0 0.0
      %1687 = vmatprep.subr.mxu0 0.0
      %1688 = vmatpush1.msra.mxu0 0.0
      %1689 = vmatprep.subr.mxu0 0.0
      %1690 = vmatpush1.msra.mxu0 0.0
      %1691 = vmatprep.subr.mxu0 0.0
      %1692 = vmatpush1.msra.mxu0 0.0
      %1693 = vmatprep.subr.mxu0 0.0
      %1694 = vmatpush1.msra.mxu0 0.0
      %1695 = vmatprep.subr.mxu0 0.0
      %1696 = vmatpush1.msra.mxu0 0.0
      %1697 = vmatprep.subr.mxu0 0.0
      %1698 = vmatpush1.msra.mxu0 0.0
      %1699 = vmatprep.subr.mxu0 0.0
      %1700 = vmatpush1.msra.mxu0 0.0
      %1701 = vmatprep.subr.mxu0 0.0
      %1702 = vmatpush1.msra.mxu0 0.0
      %1703 = vmatprep.subr.mxu0 0.0
      %1704 = vmatpush1.msra.mxu0 0.0
      %1705 = vmatprep.subr.mxu0 0.0
      %1706 = vmatpush1.msra.mxu0 0.0
      %1707 = vmatprep.subr.mxu0 0.0
      %1708 = vmatpush1.msra.mxu0 0.0
      %1709 = vmatprep.subr.mxu0 0.0
      %1710 = vmatpush1.msra.mxu0 0.0
      %1711 = vmatprep.subr.mxu0 0.0
      %1712 = vmatpush1.msra.mxu0 0.0
      %1713 = vmatprep.subr.mxu0 0.0
      %1714 = vmatpush1.msra.mxu0 0.0
      %1715 = vmatprep.subr.mxu0 0.0
      %1716 = vmatpush1.msra.mxu0 0.0
      %1717 = vmatprep.subr.mxu0 0.0
      %1718 = vmatpush1.msra.mxu0 0.0
      %1719 = vmatprep.subr.mxu0 0.0
      %1720 = vmatpush1.msra.mxu0 0.0
      %1721 = vmatprep.subr.mxu0 0.0
      %1722 = vmatpush1.msra.mxu0 0.0
      %1723 = vmatprep.subr.mxu0 0.0
      %1724 = vmatpush1.msra.mxu0 0.0
      %1725 = vmatprep.subr.mxu0 0.0
      %1726 = vmatpush1.msra.mxu0 0.0
      %1727 = vmatprep.subr.mxu0 0.0
      %1728 = vmatpush1.msra.mxu0 0.0
      %1729 = vmatprep.subr.mxu0 0.0
      %1730 = vmatpush1.msra.mxu0 0.0
      %1731 = vmatprep.subr.mxu0 0.0
      %1732 = vmatpush1.msra.mxu0 0.0
      %1733 = vmatprep.subr.mxu0 0.0
      %1734 = vmatpush1.msra.mxu0 0.0
      %1735 = vmatprep.subr.mxu0 0.0
      %1736 = vmatpush1.msra.mxu0 0.0
      %1737 = vmatprep.subr.mxu0 0.0
      %1738 = vmatpush1.msra.mxu0 0.0
      %1739 = vmatprep.subr.mxu0 0.0
      %1740 = vmatpush1.msra.mxu0 0.0
      %1741 = vmatprep.subr.mxu0 0.0
      %1742 = vmatpush1.msra.mxu0 0.0
      %1743 = vmatprep.mubr.f32.mxu0 0.0
      %1744 = vmatmul.mubr.f32.gmra.mrb[0].mxu0 %v1626
      %v1745 = vpop.f32.mrb[0].mxu0
      %v1746 = vadd.f32 0.0, %v1745
      %v1747 = vpop.f32.mrb[0].mxu0
      %1748 = vmatprep.mubr.f32.mxu0 0.0
      %1749 = vmatmul.mubr.f32.gmra.mrb[0].mxu0 %v1629
      %v1750 = vpop.f32.mrb[0].mxu0
      %v1751 = vadd.f32 0.0, %v1750
      %v1752 = vpop.f32.mrb[0].mxu0
      %1753 = vmatprep.mubr.f32.mxu0 0.0
      %1754 = vmatmul.mubr.f32.gmra.mrb[0].mxu0 %v1632
      %v1755 = vpop.f32.mrb[0].mxu0
      %v1756 = vadd.f32 0.0, %v1755
      %v1757 = vpop.f32.mrb[0].mxu0
      %1758 = vmatprep.mubr.f32.mxu0 0.0
      %1759 = vmatmul.mubr.f32.gmra.mrb[0].mxu0 %v1635
      %v1760 = vpop.f32.mrb[0].mxu0
      %v1761 = vadd.f32 0.0, %v1760
      %v1762 = vpop.f32.mrb[0].mxu0
      %1763 = vmatprep.mubr.f32.mxu0 0.0
      %1764 = vmatmul.mubr.f32.gmra.mrb[0].mxu0 %v1638
      %v1765 = vpop.f32.mrb[0].mxu0
      %v1766 = vadd.f32 0.0, %v1765
      %v1767 = vpop.f32.mrb[0].mxu0
      %1768 = vmatprep.mubr.f32.mxu0 0.0
      %1769 = vmatmul.mubr.f32.gmra.mrb[0].mxu0 %v1641
      %v1770 = vpop.f32.mrb[0].mxu0
      %v1771 = vadd.f32 0.0, %v1770
      %v1772 = vpop.f32.mrb[0].mxu0
      %1773 = vmatprep.mubr.f32.mxu0 0.0
      %1774 = vmatmul.mubr.f32.gmra.mrb[0].mxu0 %v1644
      %v1775 = vpop.f32.mrb[0].mxu0
      %v1776 = vadd.f32 0.0, %v1775
      %v1777 = vpop.f32.mrb[0].mxu0
      %1778 = vmatprep.mubr.f32.mxu0 0.0
      %1779 = vmatmul.mubr.f32.gmra.mrb[0].mxu0 %v1647
      %v1780 = vpop.f32.mrb[0].mxu0
      %v1781 = vadd.f32 0.0, %v1780
      %v1782 = vpop.f32.mrb[0].mxu0
      %1783 = vmatprep.mubr.f32.mxu0 0.0
      %1784 = vmatmul.mubr.f32.gmra.mrb[0].mxu0 %v1650
      %v1785 = vpop.f32.mrb[0].mxu0
      %v1786 = vadd.f32 0.0, %v1785
      %v1787 = vpop.f32.mrb[0].mxu0
      %1788 = vmatprep.mubr.f32.mxu0 0.0
      %1789 = vmatmul.mubr.f32.gmra.mrb[0].mxu0 %v1653
      %v1790 = vpop.f32.mrb[0].mxu0
      %v1791 = vadd.f32 0.0, %v1790
      %v1792 = vpop.f32.mrb[0].mxu0
      %1793 = vmatprep.mubr.f32.mxu0 0.0
      %1794 = vmatmul.mubr.f32.gmra.mrb[0].mxu0 %v1656
      %v1795 = vpop.f32.mrb[0].mxu0
      %v1796 = vadd.f32 0.0, %v1795
      %v1797 = vpop.f32.mrb[0].mxu0
      %1798 = vmatprep.mubr.f32.mxu0 0.0
      %1799 = vmatmul.mubr.f32.gmra.mrb[0].mxu0 %v1659
      %v1800 = vpop.f32.mrb[0].mxu0
      %v1801 = vadd.f32 0.0, %v1800
      %v1802 = vpop.f32.mrb[0].mxu0
      %1803 = vmatprep.mubr.f32.mxu0 0.0
      %1804 = vmatmul.mubr.f32.gmra.mrb[0].mxu0 %v1662
      %v1805 = vpop.f32.mrb[0].mxu0
      %v1806 = vadd.f32 0.0, %v1805
      %v1807 = vpop.f32.mrb[0].mxu0
      %1808 = vmatprep.mubr.f32.mxu0 0.0
      %1809 = vmatmul.mubr.f32.gmra.mrb[0].mxu0 %v1665
      %v1810 = vpop.f32.mrb[0].mxu0
      %v1811 = vadd.f32 0.0, %v1810
      %v1812 = vpop.f32.mrb[0].mxu0
      %1813 = vmatprep.mubr.f32.mxu0 0.0
      %1814 = vmatmul.mubr.f32.gmra.mrb[0].mxu0 %v1668
      %v1815 = vpop.f32.mrb[0].mxu0
      %v1816 = vadd.f32 0.0, %v1815
      %v1817 = vpop.f32.mrb[0].mxu0
      %1818 = vmatprep.mubr.f32.mxu0 0.0
      %1819 = vmatmul.mubr.f32.gmra.mrb[0].mxu0 %v1671
      %v1820 = vpop.f32.mrb[0].mxu0
      %v1821 = vadd.f32 0.0, %v1820
      %v1822 = vpop.f32.mrb[0].mxu0
      %1823 = vmatprep.mubr.f32.mxu0 0.0
      %1824 = vmatmul.mubr.f32.gmra.mrb[0].mxu0 %v1674
      %v1825 = vpop.f32.mrb[0].mxu0
      %v1826 = vadd.f32 0.0, %v1825
      %v1827 = vpop.f32.mrb[0].mxu0
      %1828 = vmatprep.mubr.f32.mxu0 0.0
      %1829 = vmatmul.mubr.f32.gmra.mrb[0].mxu0 %v1677
      %v1830 = vpop.f32.mrb[0].mxu0
      %v1831 = vadd.f32 0.0, %v1830
      %v1832 = vpop.f32.mrb[0].mxu0
      %1833 = vdwg.mxu0
      %v1834 = vld [vmem:[%s8] sm:$0xff]
      %v1835 = vld [vmem:[%s8 + $0x8] sm:$0xff]
      %s1836 = scalar_lea.vmem %s8, 16
      %v1837 = vld [vmem:[%s1836] sm:$0xff]
      %v1838 = vld [vmem:[%s1836 + $0x8] sm:$0xff]
      %v1840 = vsel %vm638, %v1756, 0
      %v1843 = vsel %vm638, %v1761, 0
      %1845 = vmatprep.subr.mxu0 0.0
      %1846 = vmatpush1.msra.mxu0 %v1837
      %1847 = vmatprep.subr.mxu0 0.0
      %1848 = vmatpush1.msra.mxu0 %v1838
      %1849 = vmatprep.subr.mxu0 0.0
      %1850 = vmatpush1.msra.mxu0 0.0
      %1851 = vmatprep.subr.mxu0 0.0
      %1852 = vmatpush1.msra.mxu0 0.0
      %1853 = vmatprep.subr.mxu0 0.0
      %1854 = vmatpush1.msra.mxu0 0.0
      %1855 = vmatprep.subr.mxu0 0.0
      %1856 = vmatpush1.msra.mxu0 0.0
      %1857 = vmatprep.subr.mxu0 0.0
      %1858 = vmatpush1.msra.mxu0 0.0
      %1859 = vmatprep.subr.mxu0 0.0
      %1860 = vmatpush1.msra.mxu0 0.0
      %1861 = vmatprep.subr.mxu0 0.0
      %1862 = vmatpush1.msra.mxu0 0.0
      %1863 = vmatprep.subr.mxu0 0.0
      %1864 = vmatpush1.msra.mxu0 0.0
      %1865 = vmatprep.subr.mxu0 0.0
      %1866 = vmatpush1.msra.mxu0 0.0
      %1867 = vmatprep.subr.mxu0 0.0
      %1868 = vmatpush1.msra.mxu0 0.0
      %1869 = vmatprep.subr.mxu0 0.0
      %1870 = vmatpush1.msra.mxu0 0.0
      %1871 = vmatprep.subr.mxu0 0.0
      %1872 = vmatpush1.msra.mxu0 0.0
      %1873 = vmatprep.subr.mxu0 0.0
      %1874 = vmatpush1.msra.mxu0 0.0
      %1875 = vmatprep.subr.mxu0 0.0
      %1876 = vmatpush1.msra.mxu0 0.0
      %1877 = vmatprep.subr.mxu0 0.0
      %1878 = vmatpush1.msra.mxu0 0.0
      %1879 = vmatprep.subr.mxu0 0.0
      %1880 = vmatpush1.msra.mxu0 0.0
      %1881 = vmatprep.subr.mxu0 0.0
      %1882 = vmatpush1.msra.mxu0 0.0
      %1883 = vmatprep.subr.mxu0 0.0
      %1884 = vmatpush1.msra.mxu0 0.0
      %1885 = vmatprep.subr.mxu0 0.0
      %1886 = vmatpush1.msra.mxu0 0.0
      %1887 = vmatprep.subr.mxu0 0.0
      %1888 = vmatpush1.msra.mxu0 0.0
      %1889 = vmatprep.subr.mxu0 0.0
      %1890 = vmatpush1.msra.mxu0 0.0
      %1891 = vmatprep.subr.mxu0 0.0
      %1892 = vmatpush1.msra.mxu0 0.0
      %1893 = vmatprep.subr.mxu0 0.0
      %1894 = vmatpush1.msra.mxu0 0.0
      %1895 = vmatprep.subr.mxu0 0.0
      %1896 = vmatpush1.msra.mxu0 0.0
      %1897 = vmatprep.subr.mxu0 0.0
      %1898 = vmatpush1.msra.mxu0 0.0
      %1899 = vmatprep.subr.mxu0 0.0
      %1900 = vmatpush1.msra.mxu0 0.0
      %1901 = vmatprep.subr.mxu0 0.0
      %1902 = vmatpush1.msra.mxu0 0.0
      %1903 = vmatprep.subr.mxu0 0.0
      %1904 = vmatpush1.msra.mxu0 0.0
      %1905 = vmatprep.subr.mxu0 0.0
      %1906 = vmatpush1.msra.mxu0 0.0
      %1907 = vmatprep.subr.mxu0 0.0
      %1908 = vmatpush1.msra.mxu0 0.0
      %1909 = vmatprep.mubr.f32.mxu0 0.0
      %1910 = vmatmul.mubr.f32.gmra.mrb[0].mxu0 %v1840
      %v1911 = vpop.f32.mrb[0].mxu0
      %v1912 = vadd.f32 0.0, %v1911
      %v1913 = vpop.f32.mrb[0].mxu0
      %1914 = vmatprep.mubr.f32.mxu0 0.0
      %1915 = vmatmul.mubr.f32.gmra.mrb[0].mxu0 %v1843
      %v1916 = vpop.f32.mrb[0].mxu0
      %v1917 = vadd.f32 0.0, %v1916
      %v1918 = vpop.f32.mrb[0].mxu0
      %1919 = vdwg.mxu0
      %v1921 = vsel %vm638, %v1746, 0
      %v1924 = vsel %vm638, %v1751, 0
      %1926 = vmatprep.subr.mxu0 0.0
      %1927 = vmatpush1.msra.mxu0 %v1834
      %1928 = vmatprep.subr.mxu0 0.0
      %1929 = vmatpush1.msra.mxu0 %v1835
      %1930 = vmatprep.subr.mxu0 0.0
      %1931 = vmatpush1.msra.mxu0 0.0
      %1932 = vmatprep.subr.mxu0 0.0
      %1933 = vmatpush1.msra.mxu0 0.0
      %1934 = vmatprep.subr.mxu0 0.0
      %1935 = vmatpush1.msra.mxu0 0.0
      %1936 = vmatprep.subr.mxu0 0.0
      %1937 = vmatpush1.msra.mxu0 0.0
      %1938 = vmatprep.subr.mxu0 0.0
      %1939 = vmatpush1.msra.mxu0 0.0
      %1940 = vmatprep.subr.mxu0 0.0
      %1941 = vmatpush1.msra.mxu0 0.0
      %1942 = vmatprep.subr.mxu0 0.0
      %1943 = vmatpush1.msra.mxu0 0.0
      %1944 = vmatprep.subr.mxu0 0.0
      %1945 = vmatpush1.msra.mxu0 0.0
      %1946 = vmatprep.subr.mxu0 0.0
      %1947 = vmatpush1.msra.mxu0 0.0
      %1948 = vmatprep.subr.mxu0 0.0
      %1949 = vmatpush1.msra.mxu0 0.0
      %1950 = vmatprep.subr.mxu0 0.0
      %1951 = vmatpush1.msra.mxu0 0.0
      %1952 = vmatprep.subr.mxu0 0.0
      %1953 = vmatpush1.msra.mxu0 0.0
      %1954 = vmatprep.subr.mxu0 0.0
      %1955 = vmatpush1.msra.mxu0 0.0
      %1956 = vmatprep.subr.mxu0 0.0
      %1957 = vmatpush1.msra.mxu0 0.0
      %1958 = vmatprep.subr.mxu0 0.0
      %1959 = vmatpush1.msra.mxu0 0.0
      %1960 = vmatprep.subr.mxu0 0.0
      %1961 = vmatpush1.msra.mxu0 0.0
      %1962 = vmatprep.subr.mxu0 0.0
      %1963 = vmatpush1.msra.mxu0 0.0
      %1964 = vmatprep.subr.mxu0 0.0
      %1965 = vmatpush1.msra.mxu0 0.0
      %1966 = vmatprep.subr.mxu0 0.0
      %1967 = vmatpush1.msra.mxu0 0.0
      %1968 = vmatprep.subr.mxu0 0.0
      %1969 = vmatpush1.msra.mxu0 0.0
      %1970 = vmatprep.subr.mxu0 0.0
      %1971 = vmatpush1.msra.mxu0 0.0
      %1972 = vmatprep.subr.mxu0 0.0
      %1973 = vmatpush1.msra.mxu0 0.0
      %1974 = vmatprep.subr.mxu0 0.0
      %1975 = vmatpush1.msra.mxu0 0.0
      %1976 = vmatprep.subr.mxu0 0.0
      %1977 = vmatpush1.msra.mxu0 0.0
      %1978 = vmatprep.subr.mxu0 0.0
      %1979 = vmatpush1.msra.mxu0 0.0
      %1980 = vmatprep.subr.mxu0 0.0
      %1981 = vmatpush1.msra.mxu0 0.0
      %1982 = vmatprep.subr.mxu0 0.0
      %1983 = vmatpush1.msra.mxu0 0.0
      %1984 = vmatprep.subr.mxu0 0.0
      %1985 = vmatpush1.msra.mxu0 0.0
      %1986 = vmatprep.subr.mxu0 0.0
      %1987 = vmatpush1.msra.mxu0 0.0
      %1988 = vmatprep.subr.mxu0 0.0
      %1989 = vmatpush1.msra.mxu0 0.0
      %1990 = vmatprep.mubr.f32.mxu0 0.0
      %1991 = vmatmul.mubr.f32.gmra.mrb[0].mxu0 %v1921
      %v1992 = vpop.f32.mrb[0].mxu0
      %v1993 = vadd.f32 %v1912, %v1992
      %v1994 = vpop.f32.mrb[0].mxu0
      %1995 = vmatprep.mubr.f32.mxu0 0.0
      %1996 = vmatmul.mubr.f32.gmra.mrb[0].mxu0 %v1924
      %v1997 = vpop.f32.mrb[0].mxu0
      %v1998 = vadd.f32 %v1917, %v1997
      %v1999 = vpop.f32.mrb[0].mxu0
      %2000 = vdwg.mxu0
      %s2001 = scalar_lea.vmem %s8, 32
      %v2002 = vld [vmem:[%s2001] sm:$0xff]
      %v2003 = vld [vmem:[%s2001 + $0x8] sm:$0xff]
      %v2005 = vsel %vm638, %v1766, 0
      %v2008 = vsel %vm638, %v1771, 0
      %2010 = vmatprep.subr.mxu0 0.0
      %2011 = vmatpush1.msra.mxu0 %v2002
      %2012 = vmatprep.subr.mxu0 0.0
      %2013 = vmatpush1.msra.mxu0 %v2003
      %2014 = vmatprep.subr.mxu0 0.0
      %2015 = vmatpush1.msra.mxu0 0.0
      %2016 = vmatprep.subr.mxu0 0.0
      %2017 = vmatpush1.msra.mxu0 0.0
      %2018 = vmatprep.subr.mxu0 0.0
      %2019 = vmatpush1.msra.mxu0 0.0
      %2020 = vmatprep.subr.mxu0 0.0
      %2021 = vmatpush1.msra.mxu0 0.0
      %2022 = vmatprep.subr.mxu0 0.0
      %2023 = vmatpush1.msra.mxu0 0.0
      %2024 = vmatprep.subr.mxu0 0.0
      %2025 = vmatpush1.msra.mxu0 0.0
      %2026 = vmatprep.subr.mxu0 0.0
      %2027 = vmatpush1.msra.mxu0 0.0
      %2028 = vmatprep.subr.mxu0 0.0
      %2029 = vmatpush1.msra.mxu0 0.0
      %2030 = vmatprep.subr.mxu0 0.0
      %2031 = vmatpush1.msra.mxu0 0.0
      %2032 = vmatprep.subr.mxu0 0.0
      %2033 = vmatpush1.msra.mxu0 0.0
      %2034 = vmatprep.subr.mxu0 0.0
      %2035 = vmatpush1.msra.mxu0 0.0
      %2036 = vmatprep.subr.mxu0 0.0
      %2037 = vmatpush1.msra.mxu0 0.0
      %2038 = vmatprep.subr.mxu0 0.0
      %2039 = vmatpush1.msra.mxu0 0.0
      %2040 = vmatprep.subr.mxu0 0.0
      %2041 = vmatpush1.msra.mxu0 0.0
      %2042 = vmatprep.subr.mxu0 0.0
      %2043 = vmatpush1.msra.mxu0 0.0
      %2044 = vmatprep.subr.mxu0 0.0
      %2045 = vmatpush1.msra.mxu0 0.0
      %2046 = vmatprep.subr.mxu0 0.0
      %2047 = vmatpush1.msra.mxu0 0.0
      %2048 = vmatprep.subr.mxu0 0.0
      %2049 = vmatpush1.msra.mxu0 0.0
      %2050 = vmatprep.subr.mxu0 0.0
      %2051 = vmatpush1.msra.mxu0 0.0
      %2052 = vmatprep.subr.mxu0 0.0
      %2053 = vmatpush1.msra.mxu0 0.0
      %2054 = vmatprep.subr.mxu0 0.0
      %2055 = vmatpush1.msra.mxu0 0.0
      %2056 = vmatprep.subr.mxu0 0.0
      %2057 = vmatpush1.msra.mxu0 0.0
      %2058 = vmatprep.subr.mxu0 0.0
      %2059 = vmatpush1.msra.mxu0 0.0
      %2060 = vmatprep.subr.mxu0 0.0
      %2061 = vmatpush1.msra.mxu0 0.0
      %2062 = vmatprep.subr.mxu0 0.0
      %2063 = vmatpush1.msra.mxu0 0.0
      %2064 = vmatprep.subr.mxu0 0.0
      %2065 = vmatpush1.msra.mxu0 0.0
      %2066 = vmatprep.subr.mxu0 0.0
      %2067 = vmatpush1.msra.mxu0 0.0
      %2068 = vmatprep.subr.mxu0 0.0
      %2069 = vmatpush1.msra.mxu0 0.0
      %2070 = vmatprep.subr.mxu0 0.0
      %2071 = vmatpush1.msra.mxu0 0.0
      %2072 = vmatprep.subr.mxu0 0.0
      %2073 = vmatpush1.msra.mxu0 0.0
      %2074 = vmatprep.mubr.f32.mxu0 0.0
      %2075 = vmatmul.mubr.f32.gmra.mrb[0].mxu0 %v2005
      %v2076 = vpop.f32.mrb[0].mxu0
      %v2077 = vadd.f32 0.0, %v2076
      %v2078 = vpop.f32.mrb[0].mxu0
      %2079 = vmatprep.mubr.f32.mxu0 0.0
      %2080 = vmatmul.mubr.f32.gmra.mrb[0].mxu0 %v2008
      %v2081 = vpop.f32.mrb[0].mxu0
      %v2082 = vadd.f32 0.0, %v2081
      %v2083 = vpop.f32.mrb[0].mxu0
      %2084 = vdwg.mxu0
      %v2085 = vadd.f32 %v1993, %v2077
      %v2086 = vadd.f32 %v1998, %v2082
      %s2087 = scalar_lea.vmem %s8, 48
      %v2088 = vld [vmem:[%s2087] sm:$0xff]
      %v2089 = vld [vmem:[%s2087 + $0x8] sm:$0xff]
      %v2091 = vsel %vm638, %v1776, 0
      %v2094 = vsel %vm638, %v1781, 0
      %2096 = vmatprep.subr.mxu0 0.0
      %2097 = vmatpush1.msra.mxu0 %v2088
      %2098 = vmatprep.subr.mxu0 0.0
      %2099 = vmatpush1.msra.mxu0 %v2089
      %2100 = vmatprep.subr.mxu0 0.0
      %2101 = vmatpush1.msra.mxu0 0.0
      %2102 = vmatprep.subr.mxu0 0.0
      %2103 = vmatpush1.msra.mxu0 0.0
      %2104 = vmatprep.subr.mxu0 0.0
      %2105 = vmatpush1.msra.mxu0 0.0
      %2106 = vmatprep.subr.mxu0 0.0
      %2107 = vmatpush1.msra.mxu0 0.0
      %2108 = vmatprep.subr.mxu0 0.0
      %2109 = vmatpush1.msra.mxu0 0.0
      %2110 = vmatprep.subr.mxu0 0.0
      %2111 = vmatpush1.msra.mxu0 0.0
      %2112 = vmatprep.subr.mxu0 0.0
      %2113 = vmatpush1.msra.mxu0 0.0
      %2114 = vmatprep.subr.mxu0 0.0
      %2115 = vmatpush1.msra.mxu0 0.0
      %2116 = vmatprep.subr.mxu0 0.0
      %2117 = vmatpush1.msra.mxu0 0.0
      %2118 = vmatprep.subr.mxu0 0.0
      %2119 = vmatpush1.msra.mxu0 0.0
      %2120 = vmatprep.subr.mxu0 0.0
      %2121 = vmatpush1.msra.mxu0 0.0
      %2122 = vmatprep.subr.mxu0 0.0
      %2123 = vmatpush1.msra.mxu0 0.0
      %2124 = vmatprep.subr.mxu0 0.0
      %2125 = vmatpush1.msra.mxu0 0.0
      %2126 = vmatprep.subr.mxu0 0.0
      %2127 = vmatpush1.msra.mxu0 0.0
      %2128 = vmatprep.subr.mxu0 0.0
      %2129 = vmatpush1.msra.mxu0 0.0
      %2130 = vmatprep.subr.mxu0 0.0
      %2131 = vmatpush1.msra.mxu0 0.0
      %2132 = vmatprep.subr.mxu0 0.0
      %2133 = vmatpush1.msra.mxu0 0.0
      %2134 = vmatprep.subr.mxu0 0.0
      %2135 = vmatpush1.msra.mxu0 0.0
      %2136 = vmatprep.subr.mxu0 0.0
      %2137 = vmatpush1.msra.mxu0 0.0
      %2138 = vmatprep.subr.mxu0 0.0
      %2139 = vmatpush1.msra.mxu0 0.0
      %2140 = vmatprep.subr.mxu0 0.0
      %2141 = vmatpush1.msra.mxu0 0.0
      %2142 = vmatprep.subr.mxu0 0.0
      %2143 = vmatpush1.msra.mxu0 0.0
      %2144 = vmatprep.subr.mxu0 0.0
      %2145 = vmatpush1.msra.mxu0 0.0
      %2146 = vmatprep.subr.mxu0 0.0
      %2147 = vmatpush1.msra.mxu0 0.0
      %2148 = vmatprep.subr.mxu0 0.0
      %2149 = vmatpush1.msra.mxu0 0.0
      %2150 = vmatprep.subr.mxu0 0.0
      %2151 = vmatpush1.msra.mxu0 0.0
      %2152 = vmatprep.subr.mxu0 0.0
      %2153 = vmatpush1.msra.mxu0 0.0
      %2154 = vmatprep.subr.mxu0 0.0
      %2155 = vmatpush1.msra.mxu0 0.0
      %2156 = vmatprep.subr.mxu0 0.0
      %2157 = vmatpush1.msra.mxu0 0.0
      %2158 = vmatprep.subr.mxu0 0.0
      %2159 = vmatpush1.msra.mxu0 0.0
      %2160 = vmatprep.mubr.f32.mxu0 0.0
      %2161 = vmatmul.mubr.f32.gmra.mrb[0].mxu0 %v2091
      %v2162 = vpop.f32.mrb[0].mxu0
      %v2163 = vadd.f32 0.0, %v2162
      %v2164 = vpop.f32.mrb[0].mxu0
      %2165 = vmatprep.mubr.f32.mxu0 0.0
      %2166 = vmatmul.mubr.f32.gmra.mrb[0].mxu0 %v2094
      %v2167 = vpop.f32.mrb[0].mxu0
      %v2168 = vadd.f32 0.0, %v2167
      %v2169 = vpop.f32.mrb[0].mxu0
      %2170 = vdwg.mxu0
      %v2171 = vadd.f32 %v2085, %v2163
      %v2172 = vadd.f32 %v2086, %v2168
      %s2173 = scalar_lea.vmem %s8, 64
      %v2174 = vld [vmem:[%s2173] sm:$0xff]
      %v2175 = vld [vmem:[%s2173 + $0x8] sm:$0xff]
      %v2177 = vsel %vm638, %v1786, 0
      %v2180 = vsel %vm638, %v1791, 0
      %2182 = vmatprep.subr.mxu0 0.0
      %2183 = vmatpush1.msra.mxu0 %v2174
      %2184 = vmatprep.subr.mxu0 0.0
      %2185 = vmatpush1.msra.mxu0 %v2175
      %2186 = vmatprep.subr.mxu0 0.0
      %2187 = vmatpush1.msra.mxu0 0.0
      %2188 = vmatprep.subr.mxu0 0.0
      %2189 = vmatpush1.msra.mxu0 0.0
      %2190 = vmatprep.subr.mxu0 0.0
      %2191 = vmatpush1.msra.mxu0 0.0
      %2192 = vmatprep.subr.mxu0 0.0
      %2193 = vmatpush1.msra.mxu0 0.0
      %2194 = vmatprep.subr.mxu0 0.0
      %2195 = vmatpush1.msra.mxu0 0.0
      %2196 = vmatprep.subr.mxu0 0.0
      %2197 = vmatpush1.msra.mxu0 0.0
      %2198 = vmatprep.subr.mxu0 0.0
      %2199 = vmatpush1.msra.mxu0 0.0
      %2200 = vmatprep.subr.mxu0 0.0
      %2201 = vmatpush1.msra.mxu0 0.0
      %2202 = vmatprep.subr.mxu0 0.0
      %2203 = vmatpush1.msra.mxu0 0.0
      %2204 = vmatprep.subr.mxu0 0.0
      %2205 = vmatpush1.msra.mxu0 0.0
      %2206 = vmatprep.subr.mxu0 0.0
      %2207 = vmatpush1.msra.mxu0 0.0
      %2208 = vmatprep.subr.mxu0 0.0
      %2209 = vmatpush1.msra.mxu0 0.0
      %2210 = vmatprep.subr.mxu0 0.0
      %2211 = vmatpush1.msra.mxu0 0.0
      %2212 = vmatprep.subr.mxu0 0.0
      %2213 = vmatpush1.msra.mxu0 0.0
      %2214 = vmatprep.subr.mxu0 0.0
      %2215 = vmatpush1.msra.mxu0 0.0
      %2216 = vmatprep.subr.mxu0 0.0
      %2217 = vmatpush1.msra.mxu0 0.0
      %2218 = vmatprep.subr.mxu0 0.0
      %2219 = vmatpush1.msra.mxu0 0.0
      %2220 = vmatprep.subr.mxu0 0.0
      %2221 = vmatpush1.msra.mxu0 0.0
      %2222 = vmatprep.subr.mxu0 0.0
      %2223 = vmatpush1.msra.mxu0 0.0
      %2224 = vmatprep.subr.mxu0 0.0
      %2225 = vmatpush1.msra.mxu0 0.0
      %2226 = vmatprep.subr.mxu0 0.0
      %2227 = vmatpush1.msra.mxu0 0.0
      %2228 = vmatprep.subr.mxu0 0.0
      %2229 = vmatpush1.msra.mxu0 0.0
      %2230 = vmatprep.subr.mxu0 0.0
      %2231 = vmatpush1.msra.mxu0 0.0
      %2232 = vmatprep.subr.mxu0 0.0
      %2233 = vmatpush1.msra.mxu0 0.0
      %2234 = vmatprep.subr.mxu0 0.0
      %2235 = vmatpush1.msra.mxu0 0.0
      %2236 = vmatprep.subr.mxu0 0.0
      %2237 = vmatpush1.msra.mxu0 0.0
      %2238 = vmatprep.subr.mxu0 0.0
      %2239 = vmatpush1.msra.mxu0 0.0
      %2240 = vmatprep.subr.mxu0 0.0
      %2241 = vmatpush1.msra.mxu0 0.0
      %2242 = vmatprep.subr.mxu0 0.0
      %2243 = vmatpush1.msra.mxu0 0.0
      %2244 = vmatprep.subr.mxu0 0.0
      %2245 = vmatpush1.msra.mxu0 0.0
      %2246 = vmatprep.mubr.f32.mxu0 0.0
      %2247 = vmatmul.mubr.f32.gmra.mrb[0].mxu0 %v2177
      %v2248 = vpop.f32.mrb[0].mxu0
      %v2249 = vadd.f32 0.0, %v2248
      %v2250 = vpop.f32.mrb[0].mxu0
      %2251 = vmatprep.mubr.f32.mxu0 0.0
      %2252 = vmatmul.mubr.f32.gmra.mrb[0].mxu0 %v2180
      %v2253 = vpop.f32.mrb[0].mxu0
      %v2254 = vadd.f32 0.0, %v2253
      %v2255 = vpop.f32.mrb[0].mxu0
      %2256 = vdwg.mxu0
      %v2257 = vadd.f32 %v2171, %v2249
      %v2258 = vadd.f32 %v2172, %v2254
      %s2259 = scalar_lea.vmem %s8, 80
      %v2260 = vld [vmem:[%s2259] sm:$0xff]
      %v2261 = vld [vmem:[%s2259 + $0x8] sm:$0xff]
      %v2263 = vsel %vm638, %v1796, 0
      %v2266 = vsel %vm638, %v1801, 0
      %2268 = vmatprep.subr.mxu0 0.0
      %2269 = vmatpush1.msra.mxu0 %v2260
      %2270 = vmatprep.subr.mxu0 0.0
      %2271 = vmatpush1.msra.mxu0 %v2261
      %2272 = vmatprep.subr.mxu0 0.0
      %2273 = vmatpush1.msra.mxu0 0.0
      %2274 = vmatprep.subr.mxu0 0.0
      %2275 = vmatpush1.msra.mxu0 0.0
      %2276 = vmatprep.subr.mxu0 0.0
      %2277 = vmatpush1.msra.mxu0 0.0
      %2278 = vmatprep.subr.mxu0 0.0
      %2279 = vmatpush1.msra.mxu0 0.0
      %2280 = vmatprep.subr.mxu0 0.0
      %2281 = vmatpush1.msra.mxu0 0.0
      %2282 = vmatprep.subr.mxu0 0.0
      %2283 = vmatpush1.msra.mxu0 0.0
      %2284 = vmatprep.subr.mxu0 0.0
      %2285 = vmatpush1.msra.mxu0 0.0
      %2286 = vmatprep.subr.mxu0 0.0
      %2287 = vmatpush1.msra.mxu0 0.0
      %2288 = vmatprep.subr.mxu0 0.0
      %2289 = vmatpush1.msra.mxu0 0.0
      %2290 = vmatprep.subr.mxu0 0.0
      %2291 = vmatpush1.msra.mxu0 0.0
      %2292 = vmatprep.subr.mxu0 0.0
      %2293 = vmatpush1.msra.mxu0 0.0
      %2294 = vmatprep.subr.mxu0 0.0
      %2295 = vmatpush1.msra.mxu0 0.0
      %2296 = vmatprep.subr.mxu0 0.0
      %2297 = vmatpush1.msra.mxu0 0.0
      %2298 = vmatprep.subr.mxu0 0.0
      %2299 = vmatpush1.msra.mxu0 0.0
      %2300 = vmatprep.subr.mxu0 0.0
      %2301 = vmatpush1.msra.mxu0 0.0
      %2302 = vmatprep.subr.mxu0 0.0
      %2303 = vmatpush1.msra.mxu0 0.0
      %2304 = vmatprep.subr.mxu0 0.0
      %2305 = vmatpush1.msra.mxu0 0.0
      %2306 = vmatprep.subr.mxu0 0.0
      %2307 = vmatpush1.msra.mxu0 0.0
      %2308 = vmatprep.subr.mxu0 0.0
      %2309 = vmatpush1.msra.mxu0 0.0
      %2310 = vmatprep.subr.mxu0 0.0
      %2311 = vmatpush1.msra.mxu0 0.0
      %2312 = vmatprep.subr.mxu0 0.0
      %2313 = vmatpush1.msra.mxu0 0.0
      %2314 = vmatprep.subr.mxu0 0.0
      %2315 = vmatpush1.msra.mxu0 0.0
      %2316 = vmatprep.subr.mxu0 0.0
      %2317 = vmatpush1.msra.mxu0 0.0
      %2318 = vmatprep.subr.mxu0 0.0
      %2319 = vmatpush1.msra.mxu0 0.0
      %2320 = vmatprep.subr.mxu0 0.0
      %2321 = vmatpush1.msra.mxu0 0.0
      %2322 = vmatprep.subr.mxu0 0.0
      %2323 = vmatpush1.msra.mxu0 0.0
      %2324 = vmatprep.subr.mxu0 0.0
      %2325 = vmatpush1.msra.mxu0 0.0
      %2326 = vmatprep.subr.mxu0 0.0
      %2327 = vmatpush1.msra.mxu0 0.0
      %2328 = vmatprep.subr.mxu0 0.0
      %2329 = vmatpush1.msra.mxu0 0.0
      %2330 = vmatprep.subr.mxu0 0.0
      %2331 = vmatpush1.msra.mxu0 0.0
      %2332 = vmatprep.mubr.f32.mxu0 0.0
      %2333 = vmatmul.mubr.f32.gmra.mrb[0].mxu0 %v2263
      %v2334 = vpop.f32.mrb[0].mxu0
      %v2335 = vadd.f32 0.0, %v2334
      %v2336 = vpop.f32.mrb[0].mxu0
      %2337 = vmatprep.mubr.f32.mxu0 0.0
      %2338 = vmatmul.mubr.f32.gmra.mrb[0].mxu0 %v2266
      %v2339 = vpop.f32.mrb[0].mxu0
      %v2340 = vadd.f32 0.0, %v2339
      %v2341 = vpop.f32.mrb[0].mxu0
      %2342 = vdwg.mxu0
      %v2343 = vadd.f32 %v2257, %v2335
      %v2344 = vadd.f32 %v2258, %v2340
      %s2345 = scalar_lea.vmem %s8, 96
      %v2346 = vld [vmem:[%s2345] sm:$0xff]
      %v2347 = vld [vmem:[%s2345 + $0x8] sm:$0xff]
      %v2349 = vsel %vm638, %v1806, 0
      %v2352 = vsel %vm638, %v1811, 0
      %2354 = vmatprep.subr.mxu0 0.0
      %2355 = vmatpush1.msra.mxu0 %v2346
      %2356 = vmatprep.subr.mxu0 0.0
      %2357 = vmatpush1.msra.mxu0 %v2347
      %2358 = vmatprep.subr.mxu0 0.0
      %2359 = vmatpush1.msra.mxu0 0.0
      %2360 = vmatprep.subr.mxu0 0.0
      %2361 = vmatpush1.msra.mxu0 0.0
      %2362 = vmatprep.subr.mxu0 0.0
      %2363 = vmatpush1.msra.mxu0 0.0
      %2364 = vmatprep.subr.mxu0 0.0
      %2365 = vmatpush1.msra.mxu0 0.0
      %2366 = vmatprep.subr.mxu0 0.0
      %2367 = vmatpush1.msra.mxu0 0.0
      %2368 = vmatprep.subr.mxu0 0.0
      %2369 = vmatpush1.msra.mxu0 0.0
      %2370 = vmatprep.subr.mxu0 0.0
      %2371 = vmatpush1.msra.mxu0 0.0
      %2372 = vmatprep.subr.mxu0 0.0
      %2373 = vmatpush1.msra.mxu0 0.0
      %2374 = vmatprep.subr.mxu0 0.0
      %2375 = vmatpush1.msra.mxu0 0.0
      %2376 = vmatprep.subr.mxu0 0.0
      %2377 = vmatpush1.msra.mxu0 0.0
      %2378 = vmatprep.subr.mxu0 0.0
      %2379 = vmatpush1.msra.mxu0 0.0
      %2380 = vmatprep.subr.mxu0 0.0
      %2381 = vmatpush1.msra.mxu0 0.0
      %2382 = vmatprep.subr.mxu0 0.0
      %2383 = vmatpush1.msra.mxu0 0.0
      %2384 = vmatprep.subr.mxu0 0.0
      %2385 = vmatpush1.msra.mxu0 0.0
      %2386 = vmatprep.subr.mxu0 0.0
      %2387 = vmatpush1.msra.mxu0 0.0
      %2388 = vmatprep.subr.mxu0 0.0
      %2389 = vmatpush1.msra.mxu0 0.0
      %2390 = vmatprep.subr.mxu0 0.0
      %2391 = vmatpush1.msra.mxu0 0.0
      %2392 = vmatprep.subr.mxu0 0.0
      %2393 = vmatpush1.msra.mxu0 0.0
      %2394 = vmatprep.subr.mxu0 0.0
      %2395 = vmatpush1.msra.mxu0 0.0
      %2396 = vmatprep.subr.mxu0 0.0
      %2397 = vmatpush1.msra.mxu0 0.0
      %2398 = vmatprep.subr.mxu0 0.0
      %2399 = vmatpush1.msra.mxu0 0.0
      %2400 = vmatprep.subr.mxu0 0.0
      %2401 = vmatpush1.msra.mxu0 0.0
      %2402 = vmatprep.subr.mxu0 0.0
      %2403 = vmatpush1.msra.mxu0 0.0
      %2404 = vmatprep.subr.mxu0 0.0
      %2405 = vmatpush1.msra.mxu0 0.0
      %2406 = vmatprep.subr.mxu0 0.0
      %2407 = vmatpush1.msra.mxu0 0.0
      %2408 = vmatprep.subr.mxu0 0.0
      %2409 = vmatpush1.msra.mxu0 0.0
      %2410 = vmatprep.subr.mxu0 0.0
      %2411 = vmatpush1.msra.mxu0 0.0
      %2412 = vmatprep.subr.mxu0 0.0
      %2413 = vmatpush1.msra.mxu0 0.0
      %2414 = vmatprep.subr.mxu0 0.0
      %2415 = vmatpush1.msra.mxu0 0.0
      %2416 = vmatprep.subr.mxu0 0.0
      %2417 = vmatpush1.msra.mxu0 0.0
      %2418 = vmatprep.mubr.f32.mxu0 0.0
      %2419 = vmatmul.mubr.f32.gmra.mrb[0].mxu0 %v2349
      %v2420 = vpop.f32.mrb[0].mxu0
      %v2421 = vadd.f32 0.0, %v2420
      %v2422 = vpop.f32.mrb[0].mxu0
      %2423 = vmatprep.mubr.f32.mxu0 0.0
      %2424 = vmatmul.mubr.f32.gmra.mrb[0].mxu0 %v2352
      %v2425 = vpop.f32.mrb[0].mxu0
      %v2426 = vadd.f32 0.0, %v2425
      %v2427 = vpop.f32.mrb[0].mxu0
      %2428 = vdwg.mxu0
      %v2429 = vadd.f32 %v2343, %v2421
      %v2430 = vadd.f32 %v2344, %v2426
      %s2431 = scalar_lea.vmem %s8, 112
      %v2432 = vld [vmem:[%s2431] sm:$0xff]
      %v2433 = vld [vmem:[%s2431 + $0x8] sm:$0xff]
      %v2435 = vsel %vm638, %v1816, 0
      %v2438 = vsel %vm638, %v1821, 0
      %2440 = vmatprep.subr.mxu0 0.0
      %2441 = vmatpush1.msra.mxu0 %v2432
      %2442 = vmatprep.subr.mxu0 0.0
      %2443 = vmatpush1.msra.mxu0 %v2433
      %2444 = vmatprep.subr.mxu0 0.0
      %2445 = vmatpush1.msra.mxu0 0.0
      %2446 = vmatprep.subr.mxu0 0.0
      %2447 = vmatpush1.msra.mxu0 0.0
      %2448 = vmatprep.subr.mxu0 0.0
      %2449 = vmatpush1.msra.mxu0 0.0
      %2450 = vmatprep.subr.mxu0 0.0
      %2451 = vmatpush1.msra.mxu0 0.0
      %2452 = vmatprep.subr.mxu0 0.0
      %2453 = vmatpush1.msra.mxu0 0.0
      %2454 = vmatprep.subr.mxu0 0.0
      %2455 = vmatpush1.msra.mxu0 0.0
      %2456 = vmatprep.subr.mxu0 0.0
      %2457 = vmatpush1.msra.mxu0 0.0
      %2458 = vmatprep.subr.mxu0 0.0
      %2459 = vmatpush1.msra.mxu0 0.0
      %2460 = vmatprep.subr.mxu0 0.0
      %2461 = vmatpush1.msra.mxu0 0.0
      %2462 = vmatprep.subr.mxu0 0.0
      %2463 = vmatpush1.msra.mxu0 0.0
      %2464 = vmatprep.subr.mxu0 0.0
      %2465 = vmatpush1.msra.mxu0 0.0
      %2466 = vmatprep.subr.mxu0 0.0
      %2467 = vmatpush1.msra.mxu0 0.0
      %2468 = vmatprep.subr.mxu0 0.0
      %2469 = vmatpush1.msra.mxu0 0.0
      %2470 = vmatprep.subr.mxu0 0.0
      %2471 = vmatpush1.msra.mxu0 0.0
      %2472 = vmatprep.subr.mxu0 0.0
      %2473 = vmatpush1.msra.mxu0 0.0
      %2474 = vmatprep.subr.mxu0 0.0
      %2475 = vmatpush1.msra.mxu0 0.0
      %2476 = vmatprep.subr.mxu0 0.0
      %2477 = vmatpush1.msra.mxu0 0.0
      %2478 = vmatprep.subr.mxu0 0.0
      %2479 = vmatpush1.msra.mxu0 0.0
      %2480 = vmatprep.subr.mxu0 0.0
      %2481 = vmatpush1.msra.mxu0 0.0
      %2482 = vmatprep.subr.mxu0 0.0
      %2483 = vmatpush1.msra.mxu0 0.0
      %2484 = vmatprep.subr.mxu0 0.0
      %2485 = vmatpush1.msra.mxu0 0.0
      %2486 = vmatprep.subr.mxu0 0.0
      %2487 = vmatpush1.msra.mxu0 0.0
      %2488 = vmatprep.subr.mxu0 0.0
      %2489 = vmatpush1.msra.mxu0 0.0
      %2490 = vmatprep.subr.mxu0 0.0
      %2491 = vmatpush1.msra.mxu0 0.0
      %2492 = vmatprep.subr.mxu0 0.0
      %2493 = vmatpush1.msra.mxu0 0.0
      %2494 = vmatprep.subr.mxu0 0.0
      %2495 = vmatpush1.msra.mxu0 0.0
      %2496 = vmatprep.subr.mxu0 0.0
      %2497 = vmatpush1.msra.mxu0 0.0
      %2498 = vmatprep.subr.mxu0 0.0
      %2499 = vmatpush1.msra.mxu0 0.0
      %2500 = vmatprep.subr.mxu0 0.0
      %2501 = vmatpush1.msra.mxu0 0.0
      %2502 = vmatprep.subr.mxu0 0.0
      %2503 = vmatpush1.msra.mxu0 0.0
      %2504 = vmatprep.mubr.f32.mxu0 0.0
      %2505 = vmatmul.mubr.f32.gmra.mrb[0].mxu0 %v2435
      %v2506 = vpop.f32.mrb[0].mxu0
      %v2507 = vadd.f32 0.0, %v2506
      %v2508 = vpop.f32.mrb[0].mxu0
      %2509 = vmatprep.mubr.f32.mxu0 0.0
      %2510 = vmatmul.mubr.f32.gmra.mrb[0].mxu0 %v2438
      %v2511 = vpop.f32.mrb[0].mxu0
      %v2512 = vadd.f32 0.0, %v2511
      %v2513 = vpop.f32.mrb[0].mxu0
      %2514 = vdwg.mxu0
      %v2515 = vadd.f32 %v2429, %v2507
      %v2516 = vadd.f32 %v2430, %v2512
      %s2517 = scalar_lea.vmem %s8, 128
      %v2518 = vld [vmem:[%s2517] sm:$0xff]
      %v2519 = vld [vmem:[%s2517 + $0x8] sm:$0xff]
      %v2521 = vsel %vm638, %v1826, 0
      %v2524 = vsel %vm638, %v1831, 0
      %2526 = vmatprep.subr.mxu0 0.0
      %2527 = vmatpush1.msra.mxu0 %v2518
      %2528 = vmatprep.subr.mxu0 0.0
      %2529 = vmatpush1.msra.mxu0 %v2519
      %2530 = vmatprep.subr.mxu0 0.0
      %2531 = vmatpush1.msra.mxu0 0.0
      %2532 = vmatprep.subr.mxu0 0.0
      %2533 = vmatpush1.msra.mxu0 0.0
      %2534 = vmatprep.subr.mxu0 0.0
      %2535 = vmatpush1.msra.mxu0 0.0
      %2536 = vmatprep.subr.mxu0 0.0
      %2537 = vmatpush1.msra.mxu0 0.0
      %2538 = vmatprep.subr.mxu0 0.0
      %2539 = vmatpush1.msra.mxu0 0.0
      %2540 = vmatprep.subr.mxu0 0.0
      %2541 = vmatpush1.msra.mxu0 0.0
      %2542 = vmatprep.subr.mxu0 0.0
      %2543 = vmatpush1.msra.mxu0 0.0
      %2544 = vmatprep.subr.mxu0 0.0
      %2545 = vmatpush1.msra.mxu0 0.0
      %2546 = vmatprep.subr.mxu0 0.0
      %2547 = vmatpush1.msra.mxu0 0.0
      %2548 = vmatprep.subr.mxu0 0.0
      %2549 = vmatpush1.msra.mxu0 0.0
      %2550 = vmatprep.subr.mxu0 0.0
      %2551 = vmatpush1.msra.mxu0 0.0
      %2552 = vmatprep.subr.mxu0 0.0
      %2553 = vmatpush1.msra.mxu0 0.0
      %2554 = vmatprep.subr.mxu0 0.0
      %2555 = vmatpush1.msra.mxu0 0.0
      %2556 = vmatprep.subr.mxu0 0.0
      %2557 = vmatpush1.msra.mxu0 0.0
      %2558 = vmatprep.subr.mxu0 0.0
      %2559 = vmatpush1.msra.mxu0 0.0
      %2560 = vmatprep.subr.mxu0 0.0
      %2561 = vmatpush1.msra.mxu0 0.0
      %2562 = vmatprep.subr.mxu0 0.0
      %2563 = vmatpush1.msra.mxu0 0.0
      %2564 = vmatprep.subr.mxu0 0.0
      %2565 = vmatpush1.msra.mxu0 0.0
      %2566 = vmatprep.subr.mxu0 0.0
      %2567 = vmatpush1.msra.mxu0 0.0
      %2568 = vmatprep.subr.mxu0 0.0
      %2569 = vmatpush1.msra.mxu0 0.0
      %2570 = vmatprep.subr.mxu0 0.0
      %2571 = vmatpush1.msra.mxu0 0.0
      %2572 = vmatprep.subr.mxu0 0.0
      %2573 = vmatpush1.msra.mxu0 0.0
      %2574 = vmatprep.subr.mxu0 0.0
      %2575 = vmatpush1.msra.mxu0 0.0
      %2576 = vmatprep.subr.mxu0 0.0
      %2577 = vmatpush1.msra.mxu0 0.0
      %2578 = vmatprep.subr.mxu0 0.0
      %2579 = vmatpush1.msra.mxu0 0.0
      %2580 = vmatprep.subr.mxu0 0.0
      %2581 = vmatpush1.msra.mxu0 0.0
      %2582 = vmatprep.subr.mxu0 0.0
      %2583 = vmatpush1.msra.mxu0 0.0
      %2584 = vmatprep.subr.mxu0 0.0
      %2585 = vmatpush1.msra.mxu0 0.0
      %2586 = vmatprep.subr.mxu0 0.0
      %2587 = vmatpush1.msra.mxu0 0.0
      %2588 = vmatprep.subr.mxu0 0.0
      %2589 = vmatpush1.msra.mxu0 0.0
      %2590 = vmatprep.mubr.f32.mxu0 0.0
      %2591 = vmatmul.mubr.f32.gmra.mrb[0].mxu0 %v2521
      %v2592 = vpop.f32.mrb[0].mxu0
      %v2593 = vadd.f32 0.0, %v2592
      %v2594 = vpop.f32.mrb[0].mxu0
      %2595 = vmatprep.mubr.f32.mxu0 0.0
      %2596 = vmatmul.mubr.f32.gmra.mrb[0].mxu0 %v2524
      %v2597 = vpop.f32.mrb[0].mxu0
      %v2598 = vadd.f32 0.0, %v2597
      %v2599 = vpop.f32.mrb[0].mxu0
      %2600 = vdwg.mxu0
      %v2601 = vadd.f32 %v2515, %v2593
      %v2602 = vadd.f32 %v2516, %v2598
      %v2603 = vld [vmem:[%s9] sm:$0x1]
      %v2605 = vlaneseq
      %v2606 = vshrl.u32 %v2605, 7
      %v2607 = vsub.s32 0, %v2606
      %v2608 = vrot.slane %v2603, %v2607
      %v2610 = vadd.f32 %v2601, %v2608
      %v2611 = vadd.f32 %v2602, %v2608
      %v2612 = vmul.f32 %v2610, 0.5
      %v2613 = vmul.f32 %v2611, 0.5
      %v2614 = vadd.f32 %v1587, %v2612
      %v2615 = vadd.f32 %v1588, %v2613
      %2616 = vmatprep.subr.mxu0 0.0
      %2617 = vmatpush1.msra.mxu0 %v2614
      %2618 = vmatprep.subr.mxu0 0.0
      %2619 = vmatpush1.msra.mxu0 %v2615
      %2620 = vmatprep.subr.mxu0 0.0
      %2621 = vmatpush1.msra.mxu0 0.0
      %2622 = vmatprep.subr.mxu0 0.0
      %2623 = vmatpush1.msra.mxu0 0.0
      %2624 = vmatprep.subr.mxu0 0.0
      %2625 = vmatpush1.msra.mxu0 0.0
      %2626 = vmatprep.subr.mxu0 0.0
      %2627 = vmatpush1.msra.mxu0 0.0
      %2628 = vmatprep.subr.mxu0 0.0
      %2629 = vmatpush1.msra.mxu0 0.0
      %2630 = vmatprep.subr.mxu0 0.0
      %2631 = vmatpush1.msra.mxu0 0.0
      %2632 = vmatprep.subr.mxu0 0.0
      %2633 = vmatpush1.msra.mxu0 0.0
      %2634 = vmatprep.subr.mxu0 0.0
      %2635 = vmatpush1.msra.mxu0 0.0
      %2636 = vmatprep.subr.mxu0 0.0
      %2637 = vmatpush1.msra.mxu0 0.0
      %2638 = vmatprep.subr.mxu0 0.0
      %2639 = vmatpush1.msra.mxu0 0.0
      %2640 = vmatprep.subr.mxu0 0.0
      %2641 = vmatpush1.msra.mxu0 0.0
      %2642 = vmatprep.subr.mxu0 0.0
      %2643 = vmatpush1.msra.mxu0 0.0
      %2644 = vmatprep.subr.mxu0 0.0
      %2645 = vmatpush1.msra.mxu0 0.0
      %2646 = vmatprep.subr.mxu0 0.0
      %2647 = vmatpush1.msra.mxu0 0.0
      %2648 = vmatprep.subr.mxu0 0.0
      %2649 = vmatpush1.msra.mxu0 0.0
      %2650 = vmatprep.subr.mxu0 0.0
      %2651 = vmatpush1.msra.mxu0 0.0
      %2652 = vmatprep.subr.mxu0 0.0
      %2653 = vmatpush1.msra.mxu0 0.0
      %2654 = vmatprep.subr.mxu0 0.0
      %2655 = vmatpush1.msra.mxu0 0.0
      %2656 = vmatprep.subr.mxu0 0.0
      %2657 = vmatpush1.msra.mxu0 0.0
      %2658 = vmatprep.subr.mxu0 0.0
      %2659 = vmatpush1.msra.mxu0 0.0
      %2660 = vmatprep.subr.mxu0 0.0
      %2661 = vmatpush1.msra.mxu0 0.0
      %2662 = vmatprep.subr.mxu0 0.0
      %2663 = vmatpush1.msra.mxu0 0.0
      %2664 = vmatprep.subr.mxu0 0.0
      %2665 = vmatpush1.msra.mxu0 0.0
      %2666 = vmatprep.subr.mxu0 0.0
      %2667 = vmatpush1.msra.mxu0 0.0
      %2668 = vmatprep.subr.mxu0 0.0
      %2669 = vmatpush1.msra.mxu0 0.0
      %2670 = vmatprep.subr.mxu0 0.0
      %2671 = vmatpush1.msra.mxu0 0.0
      %2672 = vmatprep.subr.mxu0 0.0
      %2673 = vmatpush1.msra.mxu0 0.0
      %2674 = vmatprep.subr.mxu0 0.0
      %2675 = vmatpush1.msra.mxu0 0.0
      %2676 = vmatprep.subr.mxu0 0.0
      %2677 = vmatpush1.msra.mxu0 0.0
      %2678 = vmatprep.subr.mxu0 0.0
      %2679 = vmatpush1.msra.mxu0 0.0
      %2680 = vmatprep.mubr.f32.mxu0 0.0
      %2681 = vmatmul.mubr.f32.gmra.mrb[0].mxu0 %v1626
      %v2682 = vpop.f32.mrb[0].mxu0
      %v2683 = vadd.f32 0.0, %v2682
      %v2684 = vpop.f32.mrb[0].mxu0
      %2685 = vmatprep.mubr.f32.mxu0 0.0
      %2686 = vmatmul.mubr.f32.gmra.mrb[0].mxu0 %v1629
      %v2687 = vpop.f32.mrb[0].mxu0
      %v2688 = vadd.f32 0.0, %v2687
      %v2689 = vpop.f32.mrb[0].mxu0
      %2690 = vmatprep.mubr.f32.mxu0 0.0
      %2691 = vmatmul.mubr.f32.gmra.mrb[0].mxu0 %v1632
      %v2692 = vpop.f32.mrb[0].mxu0
      %v2693 = vadd.f32 0.0, %v2692
      %v2694 = vpop.f32.mrb[0].mxu0
      %2695 = vmatprep.mubr.f32.mxu0 0.0
      %2696 = vmatmul.mubr.f32.gmra.mrb[0].mxu0 %v1635
      %v2697 = vpop.f32.mrb[0].mxu0
      %v2698 = vadd.f32 0.0, %v2697
      %v2699 = vpop.f32.mrb[0].mxu0
      %2700 = vmatprep.mubr.f32.mxu0 0.0
      %2701 = vmatmul.mubr.f32.gmra.mrb[0].mxu0 %v1638
      %v2702 = vpop.f32.mrb[0].mxu0
      %v2703 = vadd.f32 0.0, %v2702
      %v2704 = vpop.f32.mrb[0].mxu0
      %2705 = vmatprep.mubr.f32.mxu0 0.0
      %2706 = vmatmul.mubr.f32.gmra.mrb[0].mxu0 %v1641
      %v2707 = vpop.f32.mrb[0].mxu0
      %v2708 = vadd.f32 0.0, %v2707
      %v2709 = vpop.f32.mrb[0].mxu0
      %2710 = vmatprep.mubr.f32.mxu0 0.0
      %2711 = vmatmul.mubr.f32.gmra.mrb[0].mxu0 %v1644
      %v2712 = vpop.f32.mrb[0].mxu0
      %v2713 = vadd.f32 0.0, %v2712
      %v2714 = vpop.f32.mrb[0].mxu0
      %2715 = vmatprep.mubr.f32.mxu0 0.0
      %2716 = vmatmul.mubr.f32.gmra.mrb[0].mxu0 %v1647
      %v2717 = vpop.f32.mrb[0].mxu0
      %v2718 = vadd.f32 0.0, %v2717
      %v2719 = vpop.f32.mrb[0].mxu0
      %2720 = vmatprep.mubr.f32.mxu0 0.0
      %2721 = vmatmul.mubr.f32.gmra.mrb[0].mxu0 %v1650
      %v2722 = vpop.f32.mrb[0].mxu0
      %v2723 = vadd.f32 0.0, %v2722
      %v2724 = vpop.f32.mrb[0].mxu0
      %2725 = vmatprep.mubr.f32.mxu0 0.0
      %2726 = vmatmul.mubr.f32.gmra.mrb[0].mxu0 %v1653
      %v2727 = vpop.f32.mrb[0].mxu0
      %v2728 = vadd.f32 0.0, %v2727
      %v2729 = vpop.f32.mrb[0].mxu0
      %2730 = vmatprep.mubr.f32.mxu0 0.0
      %2731 = vmatmul.mubr.f32.gmra.mrb[0].mxu0 %v1656
      %v2732 = vpop.f32.mrb[0].mxu0
      %v2733 = vadd.f32 0.0, %v2732
      %v2734 = vpop.f32.mrb[0].mxu0
      %2735 = vmatprep.mubr.f32.mxu0 0.0
      %2736 = vmatmul.mubr.f32.gmra.mrb[0].mxu0 %v1659
      %v2737 = vpop.f32.mrb[0].mxu0
      %v2738 = vadd.f32 0.0, %v2737
      %v2739 = vpop.f32.mrb[0].mxu0
      %2740 = vmatprep.mubr.f32.mxu0 0.0
      %2741 = vmatmul.mubr.f32.gmra.mrb[0].mxu0 %v1662
      %v2742 = vpop.f32.mrb[0].mxu0
      %v2743 = vadd.f32 0.0, %v2742
      %v2744 = vpop.f32.mrb[0].mxu0
      %2745 = vmatprep.mubr.f32.mxu0 0.0
      %2746 = vmatmul.mubr.f32.gmra.mrb[0].mxu0 %v1665
      %v2747 = vpop.f32.mrb[0].mxu0
      %v2748 = vadd.f32 0.0, %v2747
      %v2749 = vpop.f32.mrb[0].mxu0
      %2750 = vmatprep.mubr.f32.mxu0 0.0
      %2751 = vmatmul.mubr.f32.gmra.mrb[0].mxu0 %v1668
      %v2752 = vpop.f32.mrb[0].mxu0
      %v2753 = vadd.f32 0.0, %v2752
      %v2754 = vpop.f32.mrb[0].mxu0
      %2755 = vmatprep.mubr.f32.mxu0 0.0
      %2756 = vmatmul.mubr.f32.gmra.mrb[0].mxu0 %v1671
      %v2757 = vpop.f32.mrb[0].mxu0
      %v2758 = vadd.f32 0.0, %v2757
      %v2759 = vpop.f32.mrb[0].mxu0
      %2760 = vmatprep.mubr.f32.mxu0 0.0
      %2761 = vmatmul.mubr.f32.gmra.mrb[0].mxu0 %v1674
      %v2762 = vpop.f32.mrb[0].mxu0
      %v2763 = vadd.f32 0.0, %v2762
      %v2764 = vpop.f32.mrb[0].mxu0
      %2765 = vmatprep.mubr.f32.mxu0 0.0
      %2766 = vmatmul.mubr.f32.gmra.mrb[0].mxu0 %v1677
      %v2767 = vpop.f32.mrb[0].mxu0
      %v2768 = vadd.f32 0.0, %v2767
      %v2769 = vpop.f32.mrb[0].mxu0
      %2770 = vdwg.mxu0
      %v2771 = vld [vmem:[%s10] sm:$0xff]
      %v2772 = vld [vmem:[%s10 + $0x8] sm:$0xff]
      %s2773 = scalar_lea.vmem %s10, 16
      %v2774 = vld [vmem:[%s2773] sm:$0xff]
      %v2775 = vld [vmem:[%s2773 + $0x8] sm:$0xff]
      %v2777 = vsel %vm638, %v2693, 0
      %v2780 = vsel %vm638, %v2698, 0
      %2782 = vmatprep.subr.mxu0 0.0
      %2783 = vmatpush1.msra.mxu0 %v2774
      %2784 = vmatprep.subr.mxu0 0.0
      %2785 = vmatpush1.msra.mxu0 %v2775
      %2786 = vmatprep.subr.mxu0 0.0
      %2787 = vmatpush1.msra.mxu0 0.0
      %2788 = vmatprep.subr.mxu0 0.0
      %2789 = vmatpush1.msra.mxu0 0.0
      %2790 = vmatprep.subr.mxu0 0.0
      %2791 = vmatpush1.msra.mxu0 0.0
      %2792 = vmatprep.subr.mxu0 0.0
      %2793 = vmatpush1.msra.mxu0 0.0
      %2794 = vmatprep.subr.mxu0 0.0
      %2795 = vmatpush1.msra.mxu0 0.0
      %2796 = vmatprep.subr.mxu0 0.0
      %2797 = vmatpush1.msra.mxu0 0.0
      %2798 = vmatprep.subr.mxu0 0.0
      %2799 = vmatpush1.msra.mxu0 0.0
      %2800 = vmatprep.subr.mxu0 0.0
      %2801 = vmatpush1.msra.mxu0 0.0
      %2802 = vmatprep.subr.mxu0 0.0
      %2803 = vmatpush1.msra.mxu0 0.0
      %2804 = vmatprep.subr.mxu0 0.0
      %2805 = vmatpush1.msra.mxu0 0.0
      %2806 = vmatprep.subr.mxu0 0.0
      %2807 = vmatpush1.msra.mxu0 0.0
      %2808 = vmatprep.subr.mxu0 0.0
      %2809 = vmatpush1.msra.mxu0 0.0
      %2810 = vmatprep.subr.mxu0 0.0
      %2811 = vmatpush1.msra.mxu0 0.0
      %2812 = vmatprep.subr.mxu0 0.0
      %2813 = vmatpush1.msra.mxu0 0.0
      %2814 = vmatprep.subr.mxu0 0.0
      %2815 = vmatpush1.msra.mxu0 0.0
      %2816 = vmatprep.subr.mxu0 0.0
      %2817 = vmatpush1.msra.mxu0 0.0
      %2818 = vmatprep.subr.mxu0 0.0
      %2819 = vmatpush1.msra.mxu0 0.0
      %2820 = vmatprep.subr.mxu0 0.0
      %2821 = vmatpush1.msra.mxu0 0.0
      %2822 = vmatprep.subr.mxu0 0.0
      %2823 = vmatpush1.msra.mxu0 0.0
      %2824 = vmatprep.subr.mxu0 0.0
      %2825 = vmatpush1.msra.mxu0 0.0
      %2826 = vmatprep.subr.mxu0 0.0
      %2827 = vmatpush1.msra.mxu0 0.0
      %2828 = vmatprep.subr.mxu0 0.0
      %2829 = vmatpush1.msra.mxu0 0.0
      %2830 = vmatprep.subr.mxu0 0.0
      %2831 = vmatpush1.msra.mxu0 0.0
      %2832 = vmatprep.subr.mxu0 0.0
      %2833 = vmatpush1.msra.mxu0 0.0
      %2834 = vmatprep.subr.mxu0 0.0
      %2835 = vmatpush1.msra.mxu0 0.0
      %2836 = vmatprep.subr.mxu0 0.0
      %2837 = vmatpush1.msra.mxu0 0.0
      %2838 = vmatprep.subr.mxu0 0.0
      %2839 = vmatpush1.msra.mxu0 0.0
      %2840 = vmatprep.subr.mxu0 0.0
      %2841 = vmatpush1.msra.mxu0 0.0
      %2842 = vmatprep.subr.mxu0 0.0
      %2843 = vmatpush1.msra.mxu0 0.0
      %2844 = vmatprep.subr.mxu0 0.0
      %2845 = vmatpush1.msra.mxu0 0.0
      %2846 = vmatprep.mubr.f32.mxu0 0.0
      %2847 = vmatmul.mubr.f32.gmra.mrb[0].mxu0 %v2777
      %v2848 = vpop.f32.mrb[0].mxu0
      %v2849 = vadd.f32 0.0, %v2848
      %v2850 = vpop.f32.mrb[0].mxu0
      %2851 = vmatprep.mubr.f32.mxu0 0.0
      %2852 = vmatmul.mubr.f32.gmra.mrb[0].mxu0 %v2780
      %v2853 = vpop.f32.mrb[0].mxu0
      %v2854 = vadd.f32 0.0, %v2853
      %v2855 = vpop.f32.mrb[0].mxu0
      %2856 = vdwg.mxu0
      %v2858 = vsel %vm638, %v2683, 0
      %v2861 = vsel %vm638, %v2688, 0
      %2863 = vmatprep.subr.mxu0 0.0
      %2864 = vmatpush1.msra.mxu0 %v2771
      %2865 = vmatprep.subr.mxu0 0.0
      %2866 = vmatpush1.msra.mxu0 %v2772
      %2867 = vmatprep.subr.mxu0 0.0
      %2868 = vmatpush1.msra.mxu0 0.0
      %2869 = vmatprep.subr.mxu0 0.0
      %2870 = vmatpush1.msra.mxu0 0.0
      %2871 = vmatprep.subr.mxu0 0.0
      %2872 = vmatpush1.msra.mxu0 0.0
      %2873 = vmatprep.subr.mxu0 0.0
      %2874 = vmatpush1.msra.mxu0 0.0
      %2875 = vmatprep.subr.mxu0 0.0
      %2876 = vmatpush1.msra.mxu0 0.0
      %2877 = vmatprep.subr.mxu0 0.0
      %2878 = vmatpush1.msra.mxu0 0.0
      %2879 = vmatprep.subr.mxu0 0.0
      %2880 = vmatpush1.msra.mxu0 0.0
      %2881 = vmatprep.subr.mxu0 0.0
      %2882 = vmatpush1.msra.mxu0 0.0
      %2883 = vmatprep.subr.mxu0 0.0
      %2884 = vmatpush1.msra.mxu0 0.0
      %2885 = vmatprep.subr.mxu0 0.0
      %2886 = vmatpush1.msra.mxu0 0.0
      %2887 = vmatprep.subr.mxu0 0.0
      %2888 = vmatpush1.msra.mxu0 0.0
      %2889 = vmatprep.subr.mxu0 0.0
      %2890 = vmatpush1.msra.mxu0 0.0
      %2891 = vmatprep.subr.mxu0 0.0
      %2892 = vmatpush1.msra.mxu0 0.0
      %2893 = vmatprep.subr.mxu0 0.0
      %2894 = vmatpush1.msra.mxu0 0.0
      %2895 = vmatprep.subr.mxu0 0.0
      %2896 = vmatpush1.msra.mxu0 0.0
      %2897 = vmatprep.subr.mxu0 0.0
      %2898 = vmatpush1.msra.mxu0 0.0
      %2899 = vmatprep.subr.mxu0 0.0
      %2900 = vmatpush1.msra.mxu0 0.0
      %2901 = vmatprep.subr.mxu0 0.0
      %2902 = vmatpush1.msra.mxu0 0.0
      %2903 = vmatprep.subr.mxu0 0.0
      %2904 = vmatpush1.msra.mxu0 0.0
      %2905 = vmatprep.subr.mxu0 0.0
      %2906 = vmatpush1.msra.mxu0 0.0
      %2907 = vmatprep.subr.mxu0 0.0
      %2908 = vmatpush1.msra.mxu0 0.0
      %2909 = vmatprep.subr.mxu0 0.0
      %2910 = vmatpush1.msra.mxu0 0.0
      %2911 = vmatprep.subr.mxu0 0.0
      %2912 = vmatpush1.msra.mxu0 0.0
      %2913 = vmatprep.subr.mxu0 0.0
      %2914 = vmatpush1.msra.mxu0 0.0
      %2915 = vmatprep.subr.mxu0 0.0
      %2916 = vmatpush1.msra.mxu0 0.0
      %2917 = vmatprep.subr.mxu0 0.0
      %2918 = vmatpush1.msra.mxu0 0.0
      %2919 = vmatprep.subr.mxu0 0.0
      %2920 = vmatpush1.msra.mxu0 0.0
      %2921 = vmatprep.subr.mxu0 0.0
      %2922 = vmatpush1.msra.mxu0 0.0
      %2923 = vmatprep.subr.mxu0 0.0
      %2924 = vmatpush1.msra.mxu0 0.0
      %2925 = vmatprep.subr.mxu0 0.0
      %2926 = vmatpush1.msra.mxu0 0.0
      %2927 = vmatprep.mubr.f32.mxu0 0.0
      %2928 = vmatmul.mubr.f32.gmra.mrb[0].mxu0 %v2858
      %v2929 = vpop.f32.mrb[0].mxu0
      %v2930 = vadd.f32 %v2849, %v2929
      %v2931 = vpop.f32.mrb[0].mxu0
      %2932 = vmatprep.mubr.f32.mxu0 0.0
      %2933 = vmatmul.mubr.f32.gmra.mrb[0].mxu0 %v2861
      %v2934 = vpop.f32.mrb[0].mxu0
      %v2935 = vadd.f32 %v2854, %v2934
      %v2936 = vpop.f32.mrb[0].mxu0
      %2937 = vdwg.mxu0
      %s2938 = scalar_lea.vmem %s10, 32
      %v2939 = vld [vmem:[%s2938] sm:$0xff]
      %v2940 = vld [vmem:[%s2938 + $0x8] sm:$0xff]
      %v2942 = vsel %vm638, %v2703, 0
      %v2945 = vsel %vm638, %v2708, 0
      %2947 = vmatprep.subr.mxu0 0.0
      %2948 = vmatpush1.msra.mxu0 %v2939
      %2949 = vmatprep.subr.mxu0 0.0
      %2950 = vmatpush1.msra.mxu0 %v2940
      %2951 = vmatprep.subr.mxu0 0.0
      %2952 = vmatpush1.msra.mxu0 0.0
      %2953 = vmatprep.subr.mxu0 0.0
      %2954 = vmatpush1.msra.mxu0 0.0
      %2955 = vmatprep.subr.mxu0 0.0
      %2956 = vmatpush1.msra.mxu0 0.0
      %2957 = vmatprep.subr.mxu0 0.0
      %2958 = vmatpush1.msra.mxu0 0.0
      %2959 = vmatprep.subr.mxu0 0.0
      %2960 = vmatpush1.msra.mxu0 0.0
      %2961 = vmatprep.subr.mxu0 0.0
      %2962 = vmatpush1.msra.mxu0 0.0
      %2963 = vmatprep.subr.mxu0 0.0
      %2964 = vmatpush1.msra.mxu0 0.0
      %2965 = vmatprep.subr.mxu0 0.0
      %2966 = vmatpush1.msra.mxu0 0.0
      %2967 = vmatprep.subr.mxu0 0.0
      %2968 = vmatpush1.msra.mxu0 0.0
      %2969 = vmatprep.subr.mxu0 0.0
      %2970 = vmatpush1.msra.mxu0 0.0
      %2971 = vmatprep.subr.mxu0 0.0
      %2972 = vmatpush1.msra.mxu0 0.0
      %2973 = vmatprep.subr.mxu0 0.0
      %2974 = vmatpush1.msra.mxu0 0.0
      %2975 = vmatprep.subr.mxu0 0.0
      %2976 = vmatpush1.msra.mxu0 0.0
      %2977 = vmatprep.subr.mxu0 0.0
      %2978 = vmatpush1.msra.mxu0 0.0
      %2979 = vmatprep.subr.mxu0 0.0
      %2980 = vmatpush1.msra.mxu0 0.0
      %2981 = vmatprep.subr.mxu0 0.0
      %2982 = vmatpush1.msra.mxu0 0.0
      %2983 = vmatprep.subr.mxu0 0.0
      %2984 = vmatpush1.msra.mxu0 0.0
      %2985 = vmatprep.subr.mxu0 0.0
      %2986 = vmatpush1.msra.mxu0 0.0
      %2987 = vmatprep.subr.mxu0 0.0
      %2988 = vmatpush1.msra.mxu0 0.0
      %2989 = vmatprep.subr.mxu0 0.0
      %2990 = vmatpush1.msra.mxu0 0.0
      %2991 = vmatprep.subr.mxu0 0.0
      %2992 = vmatpush1.msra.mxu0 0.0
      %2993 = vmatprep.subr.mxu0 0.0
      %2994 = vmatpush1.msra.mxu0 0.0
      %2995 = vmatprep.subr.mxu0 0.0
      %2996 = vmatpush1.msra.mxu0 0.0
      %2997 = vmatprep.subr.mxu0 0.0
      %2998 = vmatpush1.msra.mxu0 0.0
      %2999 = vmatprep.subr.mxu0 0.0
      %3000 = vmatpush1.msra.mxu0 0.0
      %3001 = vmatprep.subr.mxu0 0.0
      %3002 = vmatpush1.msra.mxu0 0.0
      %3003 = vmatprep.subr.mxu0 0.0
      %3004 = vmatpush1.msra.mxu0 0.0
      %3005 = vmatprep.subr.mxu0 0.0
      %3006 = vmatpush1.msra.mxu0 0.0
      %3007 = vmatprep.subr.mxu0 0.0
      %3008 = vmatpush1.msra.mxu0 0.0
      %3009 = vmatprep.subr.mxu0 0.0
      %3010 = vmatpush1.msra.mxu0 0.0
      %3011 = vmatprep.mubr.f32.mxu0 0.0
      %3012 = vmatmul.mubr.f32.gmra.mrb[0].mxu0 %v2942
      %v3013 = vpop.f32.mrb[0].mxu0
      %v3014 = vadd.f32 0.0, %v3013
      %v3015 = vpop.f32.mrb[0].mxu0
      %3016 = vmatprep.mubr.f32.mxu0 0.0
      %3017 = vmatmul.mubr.f32.gmra.mrb[0].mxu0 %v2945
      %v3018 = vpop.f32.mrb[0].mxu0
      %v3019 = vadd.f32 0.0, %v3018
      %v3020 = vpop.f32.mrb[0].mxu0
      %3021 = vdwg.mxu0
      %v3022 = vadd.f32 %v2930, %v3014
      %v3023 = vadd.f32 %v2935, %v3019
      %s3024 = scalar_lea.vmem %s10, 48
      %v3025 = vld [vmem:[%s3024] sm:$0xff]
      %v3026 = vld [vmem:[%s3024 + $0x8] sm:$0xff]
      %v3028 = vsel %vm638, %v2713, 0
      %v3031 = vsel %vm638, %v2718, 0
      %3033 = vmatprep.subr.mxu0 0.0
      %3034 = vmatpush1.msra.mxu0 %v3025
      %3035 = vmatprep.subr.mxu0 0.0
      %3036 = vmatpush1.msra.mxu0 %v3026
      %3037 = vmatprep.subr.mxu0 0.0
      %3038 = vmatpush1.msra.mxu0 0.0
      %3039 = vmatprep.subr.mxu0 0.0
      %3040 = vmatpush1.msra.mxu0 0.0
      %3041 = vmatprep.subr.mxu0 0.0
      %3042 = vmatpush1.msra.mxu0 0.0
      %3043 = vmatprep.subr.mxu0 0.0
      %3044 = vmatpush1.msra.mxu0 0.0
      %3045 = vmatprep.subr.mxu0 0.0
      %3046 = vmatpush1.msra.mxu0 0.0
      %3047 = vmatprep.subr.mxu0 0.0
      %3048 = vmatpush1.msra.mxu0 0.0
      %3049 = vmatprep.subr.mxu0 0.0
      %3050 = vmatpush1.msra.mxu0 0.0
      %3051 = vmatprep.subr.mxu0 0.0
      %3052 = vmatpush1.msra.mxu0 0.0
      %3053 = vmatprep.subr.mxu0 0.0
      %3054 = vmatpush1.msra.mxu0 0.0
      %3055 = vmatprep.subr.mxu0 0.0
      %3056 = vmatpush1.msra.mxu0 0.0
      %3057 = vmatprep.subr.mxu0 0.0
      %3058 = vmatpush1.msra.mxu0 0.0
      %3059 = vmatprep.subr.mxu0 0.0
      %3060 = vmatpush1.msra.mxu0 0.0
      %3061 = vmatprep.subr.mxu0 0.0
      %3062 = vmatpush1.msra.mxu0 0.0
      %3063 = vmatprep.subr.mxu0 0.0
      %3064 = vmatpush1.msra.mxu0 0.0
      %3065 = vmatprep.subr.mxu0 0.0
      %3066 = vmatpush1.msra.mxu0 0.0
      %3067 = vmatprep.subr.mxu0 0.0
      %3068 = vmatpush1.msra.mxu0 0.0
      %3069 = vmatprep.subr.mxu0 0.0
      %3070 = vmatpush1.msra.mxu0 0.0
      %3071 = vmatprep.subr.mxu0 0.0
      %3072 = vmatpush1.msra.mxu0 0.0
      %3073 = vmatprep.subr.mxu0 0.0
      %3074 = vmatpush1.msra.mxu0 0.0
      %3075 = vmatprep.subr.mxu0 0.0
      %3076 = vmatpush1.msra.mxu0 0.0
      %3077 = vmatprep.subr.mxu0 0.0
      %3078 = vmatpush1.msra.mxu0 0.0
      %3079 = vmatprep.subr.mxu0 0.0
      %3080 = vmatpush1.msra.mxu0 0.0
      %3081 = vmatprep.subr.mxu0 0.0
      %3082 = vmatpush1.msra.mxu0 0.0
      %3083 = vmatprep.subr.mxu0 0.0
      %3084 = vmatpush1.msra.mxu0 0.0
      %3085 = vmatprep.subr.mxu0 0.0
      %3086 = vmatpush1.msra.mxu0 0.0
      %3087 = vmatprep.subr.mxu0 0.0
      %3088 = vmatpush1.msra.mxu0 0.0
      %3089 = vmatprep.subr.mxu0 0.0
      %3090 = vmatpush1.msra.mxu0 0.0
      %3091 = vmatprep.subr.mxu0 0.0
      %3092 = vmatpush1.msra.mxu0 0.0
      %3093 = vmatprep.subr.mxu0 0.0
      %3094 = vmatpush1.msra.mxu0 0.0
      %3095 = vmatprep.subr.mxu0 0.0
      %3096 = vmatpush1.msra.mxu0 0.0
      %3097 = vmatprep.mubr.f32.mxu0 0.0
      %3098 = vmatmul.mubr.f32.gmra.mrb[0].mxu0 %v3028
      %v3099 = vpop.f32.mrb[0].mxu0
      %v3100 = vadd.f32 0.0, %v3099
      %v3101 = vpop.f32.mrb[0].mxu0
      %3102 = vmatprep.mubr.f32.mxu0 0.0
      %3103 = vmatmul.mubr.f32.gmra.mrb[0].mxu0 %v3031
      %v3104 = vpop.f32.mrb[0].mxu0
      %v3105 = vadd.f32 0.0, %v3104
      %v3106 = vpop.f32.mrb[0].mxu0
      %3107 = vdwg.mxu0
      %v3108 = vadd.f32 %v3022, %v3100
      %v3109 = vadd.f32 %v3023, %v3105
      %s3110 = scalar_lea.vmem %s10, 64
      %v3111 = vld [vmem:[%s3110] sm:$0xff]
      %v3112 = vld [vmem:[%s3110 + $0x8] sm:$0xff]
      %v3114 = vsel %vm638, %v2723, 0
      %v3117 = vsel %vm638, %v2728, 0
      %3119 = vmatprep.subr.mxu0 0.0
      %3120 = vmatpush1.msra.mxu0 %v3111
      %3121 = vmatprep.subr.mxu0 0.0
      %3122 = vmatpush1.msra.mxu0 %v3112
      %3123 = vmatprep.subr.mxu0 0.0
      %3124 = vmatpush1.msra.mxu0 0.0
      %3125 = vmatprep.subr.mxu0 0.0
      %3126 = vmatpush1.msra.mxu0 0.0
      %3127 = vmatprep.subr.mxu0 0.0
      %3128 = vmatpush1.msra.mxu0 0.0
      %3129 = vmatprep.subr.mxu0 0.0
      %3130 = vmatpush1.msra.mxu0 0.0
      %3131 = vmatprep.subr.mxu0 0.0
      %3132 = vmatpush1.msra.mxu0 0.0
      %3133 = vmatprep.subr.mxu0 0.0
      %3134 = vmatpush1.msra.mxu0 0.0
      %3135 = vmatprep.subr.mxu0 0.0
      %3136 = vmatpush1.msra.mxu0 0.0
      %3137 = vmatprep.subr.mxu0 0.0
      %3138 = vmatpush1.msra.mxu0 0.0
      %3139 = vmatprep.subr.mxu0 0.0
      %3140 = vmatpush1.msra.mxu0 0.0
      %3141 = vmatprep.subr.mxu0 0.0
      %3142 = vmatpush1.msra.mxu0 0.0
      %3143 = vmatprep.subr.mxu0 0.0
      %3144 = vmatpush1.msra.mxu0 0.0
      %3145 = vmatprep.subr.mxu0 0.0
      %3146 = vmatpush1.msra.mxu0 0.0
      %3147 = vmatprep.subr.mxu0 0.0
      %3148 = vmatpush1.msra.mxu0 0.0
      %3149 = vmatprep.subr.mxu0 0.0
      %3150 = vmatpush1.msra.mxu0 0.0
      %3151 = vmatprep.subr.mxu0 0.0
      %3152 = vmatpush1.msra.mxu0 0.0
      %3153 = vmatprep.subr.mxu0 0.0
      %3154 = vmatpush1.msra.mxu0 0.0
      %3155 = vmatprep.subr.mxu0 0.0
      %3156 = vmatpush1.msra.mxu0 0.0
      %3157 = vmatprep.subr.mxu0 0.0
      %3158 = vmatpush1.msra.mxu0 0.0
      %3159 = vmatprep.subr.mxu0 0.0
      %3160 = vmatpush1.msra.mxu0 0.0
      %3161 = vmatprep.subr.mxu0 0.0
      %3162 = vmatpush1.msra.mxu0 0.0
      %3163 = vmatprep.subr.mxu0 0.0
      %3164 = vmatpush1.msra.mxu0 0.0
      %3165 = vmatprep.subr.mxu0 0.0
      %3166 = vmatpush1.msra.mxu0 0.0
      %3167 = vmatprep.subr.mxu0 0.0
      %3168 = vmatpush1.msra.mxu0 0.0
      %3169 = vmatprep.subr.mxu0 0.0
      %3170 = vmatpush1.msra.mxu0 0.0
      %3171 = vmatprep.subr.mxu0 0.0
      %3172 = vmatpush1.msra.mxu0 0.0
      %3173 = vmatprep.subr.mxu0 0.0
      %3174 = vmatpush1.msra.mxu0 0.0
      %3175 = vmatprep.subr.mxu0 0.0
      %3176 = vmatpush1.msra.mxu0 0.0
      %3177 = vmatprep.subr.mxu0 0.0
      %3178 = vmatpush1.msra.mxu0 0.0
      %3179 = vmatprep.subr.mxu0 0.0
      %3180 = vmatpush1.msra.mxu0 0.0
      %3181 = vmatprep.subr.mxu0 0.0
      %3182 = vmatpush1.msra.mxu0 0.0
      %3183 = vmatprep.mubr.f32.mxu0 0.0
      %3184 = vmatmul.mubr.f32.gmra.mrb[0].mxu0 %v3114
      %v3185 = vpop.f32.mrb[0].mxu0
      %v3186 = vadd.f32 0.0, %v3185
      %v3187 = vpop.f32.mrb[0].mxu0
      %3188 = vmatprep.mubr.f32.mxu0 0.0
      %3189 = vmatmul.mubr.f32.gmra.mrb[0].mxu0 %v3117
      %v3190 = vpop.f32.mrb[0].mxu0
      %v3191 = vadd.f32 0.0, %v3190
      %v3192 = vpop.f32.mrb[0].mxu0
      %3193 = vdwg.mxu0
      %v3194 = vadd.f32 %v3108, %v3186
      %v3195 = vadd.f32 %v3109, %v3191
      %s3196 = scalar_lea.vmem %s10, 80
      %v3197 = vld [vmem:[%s3196] sm:$0xff]
      %v3198 = vld [vmem:[%s3196 + $0x8] sm:$0xff]
      %v3200 = vsel %vm638, %v2733, 0
      %v3203 = vsel %vm638, %v2738, 0
      %3205 = vmatprep.subr.mxu0 0.0
      %3206 = vmatpush1.msra.mxu0 %v3197
      %3207 = vmatprep.subr.mxu0 0.0
      %3208 = vmatpush1.msra.mxu0 %v3198
      %3209 = vmatprep.subr.mxu0 0.0
      %3210 = vmatpush1.msra.mxu0 0.0
      %3211 = vmatprep.subr.mxu0 0.0
      %3212 = vmatpush1.msra.mxu0 0.0
      %3213 = vmatprep.subr.mxu0 0.0
      %3214 = vmatpush1.msra.mxu0 0.0
      %3215 = vmatprep.subr.mxu0 0.0
      %3216 = vmatpush1.msra.mxu0 0.0
      %3217 = vmatprep.subr.mxu0 0.0
      %3218 = vmatpush1.msra.mxu0 0.0
      %3219 = vmatprep.subr.mxu0 0.0
      %3220 = vmatpush1.msra.mxu0 0.0
      %3221 = vmatprep.subr.mxu0 0.0
      %3222 = vmatpush1.msra.mxu0 0.0
      %3223 = vmatprep.subr.mxu0 0.0
      %3224 = vmatpush1.msra.mxu0 0.0
      %3225 = vmatprep.subr.mxu0 0.0
      %3226 = vmatpush1.msra.mxu0 0.0
      %3227 = vmatprep.subr.mxu0 0.0
      %3228 = vmatpush1.msra.mxu0 0.0
      %3229 = vmatprep.subr.mxu0 0.0
      %3230 = vmatpush1.msra.mxu0 0.0
      %3231 = vmatprep.subr.mxu0 0.0
      %3232 = vmatpush1.msra.mxu0 0.0
      %3233 = vmatprep.subr.mxu0 0.0
      %3234 = vmatpush1.msra.mxu0 0.0
      %3235 = vmatprep.subr.mxu0 0.0
      %3236 = vmatpush1.msra.mxu0 0.0
      %3237 = vmatprep.subr.mxu0 0.0
      %3238 = vmatpush1.msra.mxu0 0.0
      %3239 = vmatprep.subr.mxu0 0.0
      %3240 = vmatpush1.msra.mxu0 0.0
      %3241 = vmatprep.subr.mxu0 0.0
      %3242 = vmatpush1.msra.mxu0 0.0
      %3243 = vmatprep.subr.mxu0 0.0
      %3244 = vmatpush1.msra.mxu0 0.0
      %3245 = vmatprep.subr.mxu0 0.0
      %3246 = vmatpush1.msra.mxu0 0.0
      %3247 = vmatprep.subr.mxu0 0.0
      %3248 = vmatpush1.msra.mxu0 0.0
      %3249 = vmatprep.subr.mxu0 0.0
      %3250 = vmatpush1.msra.mxu0 0.0
      %3251 = vmatprep.subr.mxu0 0.0
      %3252 = vmatpush1.msra.mxu0 0.0
      %3253 = vmatprep.subr.mxu0 0.0
      %3254 = vmatpush1.msra.mxu0 0.0
      %3255 = vmatprep.subr.mxu0 0.0
      %3256 = vmatpush1.msra.mxu0 0.0
      %3257 = vmatprep.subr.mxu0 0.0
      %3258 = vmatpush1.msra.mxu0 0.0
      %3259 = vmatprep.subr.mxu0 0.0
      %3260 = vmatpush1.msra.mxu0 0.0
      %3261 = vmatprep.subr.mxu0 0.0
      %3262 = vmatpush1.msra.mxu0 0.0
      %3263 = vmatprep.subr.mxu0 0.0
      %3264 = vmatpush1.msra.mxu0 0.0
      %3265 = vmatprep.subr.mxu0 0.0
      %3266 = vmatpush1.msra.mxu0 0.0
      %3267 = vmatprep.subr.mxu0 0.0
      %3268 = vmatpush1.msra.mxu0 0.0
      %3269 = vmatprep.mubr.f32.mxu0 0.0
      %3270 = vmatmul.mubr.f32.gmra.mrb[0].mxu0 %v3200
      %v3271 = vpop.f32.mrb[0].mxu0
      %v3272 = vadd.f32 0.0, %v3271
      %v3273 = vpop.f32.mrb[0].mxu0
      %3274 = vmatprep.mubr.f32.mxu0 0.0
      %3275 = vmatmul.mubr.f32.gmra.mrb[0].mxu0 %v3203
      %v3276 = vpop.f32.mrb[0].mxu0
      %v3277 = vadd.f32 0.0, %v3276
      %v3278 = vpop.f32.mrb[0].mxu0
      %3279 = vdwg.mxu0
      %v3280 = vadd.f32 %v3194, %v3272
      %v3281 = vadd.f32 %v3195, %v3277
      %s3282 = scalar_lea.vmem %s10, 96
      %v3283 = vld [vmem:[%s3282] sm:$0xff]
      %v3284 = vld [vmem:[%s3282 + $0x8] sm:$0xff]
      %v3286 = vsel %vm638, %v2743, 0
      %v3289 = vsel %vm638, %v2748, 0
      %3291 = vmatprep.subr.mxu0 0.0
      %3292 = vmatpush1.msra.mxu0 %v3283
      %3293 = vmatprep.subr.mxu0 0.0
      %3294 = vmatpush1.msra.mxu0 %v3284
      %3295 = vmatprep.subr.mxu0 0.0
      %3296 = vmatpush1.msra.mxu0 0.0
      %3297 = vmatprep.subr.mxu0 0.0
      %3298 = vmatpush1.msra.mxu0 0.0
      %3299 = vmatprep.subr.mxu0 0.0
      %3300 = vmatpush1.msra.mxu0 0.0
      %3301 = vmatprep.subr.mxu0 0.0
      %3302 = vmatpush1.msra.mxu0 0.0
      %3303 = vmatprep.subr.mxu0 0.0
      %3304 = vmatpush1.msra.mxu0 0.0
      %3305 = vmatprep.subr.mxu0 0.0
      %3306 = vmatpush1.msra.mxu0 0.0
      %3307 = vmatprep.subr.mxu0 0.0
      %3308 = vmatpush1.msra.mxu0 0.0
      %3309 = vmatprep.subr.mxu0 0.0
      %3310 = vmatpush1.msra.mxu0 0.0
      %3311 = vmatprep.subr.mxu0 0.0
      %3312 = vmatpush1.msra.mxu0 0.0
      %3313 = vmatprep.subr.mxu0 0.0
      %3314 = vmatpush1.msra.mxu0 0.0
      %3315 = vmatprep.subr.mxu0 0.0
      %3316 = vmatpush1.msra.mxu0 0.0
      %3317 = vmatprep.subr.mxu0 0.0
      %3318 = vmatpush1.msra.mxu0 0.0
      %3319 = vmatprep.subr.mxu0 0.0
      %3320 = vmatpush1.msra.mxu0 0.0
      %3321 = vmatprep.subr.mxu0 0.0
      %3322 = vmatpush1.msra.mxu0 0.0
      %3323 = vmatprep.subr.mxu0 0.0
      %3324 = vmatpush1.msra.mxu0 0.0
      %3325 = vmatprep.subr.mxu0 0.0
      %3326 = vmatpush1.msra.mxu0 0.0
      %3327 = vmatprep.subr.mxu0 0.0
      %3328 = vmatpush1.msra.mxu0 0.0
      %3329 = vmatprep.subr.mxu0 0.0
      %3330 = vmatpush1.msra.mxu0 0.0
      %3331 = vmatprep.subr.mxu0 0.0
      %3332 = vmatpush1.msra.mxu0 0.0
      %3333 = vmatprep.subr.mxu0 0.0
      %3334 = vmatpush1.msra.mxu0 0.0
      %3335 = vmatprep.subr.mxu0 0.0
      %3336 = vmatpush1.msra.mxu0 0.0
      %3337 = vmatprep.subr.mxu0 0.0
      %3338 = vmatpush1.msra.mxu0 0.0
      %3339 = vmatprep.subr.mxu0 0.0
      %3340 = vmatpush1.msra.mxu0 0.0
      %3341 = vmatprep.subr.mxu0 0.0
      %3342 = vmatpush1.msra.mxu0 0.0
      %3343 = vmatprep.subr.mxu0 0.0
      %3344 = vmatpush1.msra.mxu0 0.0
      %3345 = vmatprep.subr.mxu0 0.0
      %3346 = vmatpush1.msra.mxu0 0.0
      %3347 = vmatprep.subr.mxu0 0.0
      %3348 = vmatpush1.msra.mxu0 0.0
      %3349 = vmatprep.subr.mxu0 0.0
      %3350 = vmatpush1.msra.mxu0 0.0
      %3351 = vmatprep.subr.mxu0 0.0
      %3352 = vmatpush1.msra.mxu0 0.0
      %3353 = vmatprep.subr.mxu0 0.0
      %3354 = vmatpush1.msra.mxu0 0.0
      %3355 = vmatprep.mubr.f32.mxu0 0.0
      %3356 = vmatmul.mubr.f32.gmra.mrb[0].mxu0 %v3286
      %v3357 = vpop.f32.mrb[0].mxu0
      %v3358 = vadd.f32 0.0, %v3357
      %v3359 = vpop.f32.mrb[0].mxu0
      %3360 = vmatprep.mubr.f32.mxu0 0.0
      %3361 = vmatmul.mubr.f32.gmra.mrb[0].mxu0 %v3289
      %v3362 = vpop.f32.mrb[0].mxu0
      %v3363 = vadd.f32 0.0, %v3362
      %v3364 = vpop.f32.mrb[0].mxu0
      %3365 = vdwg.mxu0
      %v3366 = vadd.f32 %v3280, %v3358
      %v3367 = vadd.f32 %v3281, %v3363
      %s3368 = scalar_lea.vmem %s10, 112
      %v3369 = vld [vmem:[%s3368] sm:$0xff]
      %v3370 = vld [vmem:[%s3368 + $0x8] sm:$0xff]
      %v3372 = vsel %vm638, %v2753, 0
      %v3375 = vsel %vm638, %v2758, 0
      %3377 = vmatprep.subr.mxu0 0.0
      %3378 = vmatpush1.msra.mxu0 %v3369
      %3379 = vmatprep.subr.mxu0 0.0
      %3380 = vmatpush1.msra.mxu0 %v3370
      %3381 = vmatprep.subr.mxu0 0.0
      %3382 = vmatpush1.msra.mxu0 0.0
      %3383 = vmatprep.subr.mxu0 0.0
      %3384 = vmatpush1.msra.mxu0 0.0
      %3385 = vmatprep.subr.mxu0 0.0
      %3386 = vmatpush1.msra.mxu0 0.0
      %3387 = vmatprep.subr.mxu0 0.0
      %3388 = vmatpush1.msra.mxu0 0.0
      %3389 = vmatprep.subr.mxu0 0.0
      %3390 = vmatpush1.msra.mxu0 0.0
      %3391 = vmatprep.subr.mxu0 0.0
      %3392 = vmatpush1.msra.mxu0 0.0
      %3393 = vmatprep.subr.mxu0 0.0
      %3394 = vmatpush1.msra.mxu0 0.0
      %3395 = vmatprep.subr.mxu0 0.0
      %3396 = vmatpush1.msra.mxu0 0.0
      %3397 = vmatprep.subr.mxu0 0.0
      %3398 = vmatpush1.msra.mxu0 0.0
      %3399 = vmatprep.subr.mxu0 0.0
      %3400 = vmatpush1.msra.mxu0 0.0
      %3401 = vmatprep.subr.mxu0 0.0
      %3402 = vmatpush1.msra.mxu0 0.0
      %3403 = vmatprep.subr.mxu0 0.0
      %3404 = vmatpush1.msra.mxu0 0.0
      %3405 = vmatprep.subr.mxu0 0.0
      %3406 = vmatpush1.msra.mxu0 0.0
      %3407 = vmatprep.subr.mxu0 0.0
      %3408 = vmatpush1.msra.mxu0 0.0
      %3409 = vmatprep.subr.mxu0 0.0
      %3410 = vmatpush1.msra.mxu0 0.0
      %3411 = vmatprep.subr.mxu0 0.0
      %3412 = vmatpush1.msra.mxu0 0.0
      %3413 = vmatprep.subr.mxu0 0.0
      %3414 = vmatpush1.msra.mxu0 0.0
      %3415 = vmatprep.subr.mxu0 0.0
      %3416 = vmatpush1.msra.mxu0 0.0
      %3417 = vmatprep.subr.mxu0 0.0
      %3418 = vmatpush1.msra.mxu0 0.0
      %3419 = vmatprep.subr.mxu0 0.0
      %3420 = vmatpush1.msra.mxu0 0.0
      %3421 = vmatprep.subr.mxu0 0.0
      %3422 = vmatpush1.msra.mxu0 0.0
      %3423 = vmatprep.subr.mxu0 0.0
      %3424 = vmatpush1.msra.mxu0 0.0
      %3425 = vmatprep.subr.mxu0 0.0
      %3426 = vmatpush1.msra.mxu0 0.0
      %3427 = vmatprep.subr.mxu0 0.0
      %3428 = vmatpush1.msra.mxu0 0.0
      %3429 = vmatprep.subr.mxu0 0.0
      %3430 = vmatpush1.msra.mxu0 0.0
      %3431 = vmatprep.subr.mxu0 0.0
      %3432 = vmatpush1.msra.mxu0 0.0
      %3433 = vmatprep.subr.mxu0 0.0
      %3434 = vmatpush1.msra.mxu0 0.0
      %3435 = vmatprep.subr.mxu0 0.0
      %3436 = vmatpush1.msra.mxu0 0.0
      %3437 = vmatprep.subr.mxu0 0.0
      %3438 = vmatpush1.msra.mxu0 0.0
      %3439 = vmatprep.subr.mxu0 0.0
      %3440 = vmatpush1.msra.mxu0 0.0
      %3441 = vmatprep.mubr.f32.mxu0 0.0
      %3442 = vmatmul.mubr.f32.gmra.mrb[0].mxu0 %v3372
      %v3443 = vpop.f32.mrb[0].mxu0
      %v3444 = vadd.f32 0.0, %v3443
      %v3445 = vpop.f32.mrb[0].mxu0
      %3446 = vmatprep.mubr.f32.mxu0 0.0
      %3447 = vmatmul.mubr.f32.gmra.mrb[0].mxu0 %v3375
      %v3448 = vpop.f32.mrb[0].mxu0
      %v3449 = vadd.f32 0.0, %v3448
      %v3450 = vpop.f32.mrb[0].mxu0
      %3451 = vdwg.mxu0
      %v3452 = vadd.f32 %v3366, %v3444
      %v3453 = vadd.f32 %v3367, %v3449
      %s3454 = scalar_lea.vmem %s10, 128
      %v3455 = vld [vmem:[%s3454] sm:$0xff]
      %v3456 = vld [vmem:[%s3454 + $0x8] sm:$0xff]
      %v3458 = vsel %vm638, %v2763, 0
      %v3461 = vsel %vm638, %v2768, 0
      %3463 = vmatprep.subr.mxu0 0.0
      %3464 = vmatpush1.msra.mxu0 %v3455
      %3465 = vmatprep.subr.mxu0 0.0
      %3466 = vmatpush1.msra.mxu0 %v3456
      %3467 = vmatprep.subr.mxu0 0.0
      %3468 = vmatpush1.msra.mxu0 0.0
      %3469 = vmatprep.subr.mxu0 0.0
      %3470 = vmatpush1.msra.mxu0 0.0
      %3471 = vmatprep.subr.mxu0 0.0
      %3472 = vmatpush1.msra.mxu0 0.0
      %3473 = vmatprep.subr.mxu0 0.0
      %3474 = vmatpush1.msra.mxu0 0.0
      %3475 = vmatprep.subr.mxu0 0.0
      %3476 = vmatpush1.msra.mxu0 0.0
      %3477 = vmatprep.subr.mxu0 0.0
      %3478 = vmatpush1.msra.mxu0 0.0
      %3479 = vmatprep.subr.mxu0 0.0
      %3480 = vmatpush1.msra.mxu0 0.0
      %3481 = vmatprep.subr.mxu0 0.0
      %3482 = vmatpush1.msra.mxu0 0.0
      %3483 = vmatprep.subr.mxu0 0.0
      %3484 = vmatpush1.msra.mxu0 0.0
      %3485 = vmatprep.subr.mxu0 0.0
      %3486 = vmatpush1.msra.mxu0 0.0
      %3487 = vmatprep.subr.mxu0 0.0
      %3488 = vmatpush1.msra.mxu0 0.0
      %3489 = vmatprep.subr.mxu0 0.0
      %3490 = vmatpush1.msra.mxu0 0.0
      %3491 = vmatprep.subr.mxu0 0.0
      %3492 = vmatpush1.msra.mxu0 0.0
      %3493 = vmatprep.subr.mxu0 0.0
      %3494 = vmatpush1.msra.mxu0 0.0
      %3495 = vmatprep.subr.mxu0 0.0
      %3496 = vmatpush1.msra.mxu0 0.0
      %3497 = vmatprep.subr.mxu0 0.0
      %3498 = vmatpush1.msra.mxu0 0.0
      %3499 = vmatprep.subr.mxu0 0.0
      %3500 = vmatpush1.msra.mxu0 0.0
      %3501 = vmatprep.subr.mxu0 0.0
      %3502 = vmatpush1.msra.mxu0 0.0
      %3503 = vmatprep.subr.mxu0 0.0
      %3504 = vmatpush1.msra.mxu0 0.0
      %3505 = vmatprep.subr.mxu0 0.0
      %3506 = vmatpush1.msra.mxu0 0.0
      %3507 = vmatprep.subr.mxu0 0.0
      %3508 = vmatpush1.msra.mxu0 0.0
      %3509 = vmatprep.subr.mxu0 0.0
      %3510 = vmatpush1.msra.mxu0 0.0
      %3511 = vmatprep.subr.mxu0 0.0
      %3512 = vmatpush1.msra.mxu0 0.0
      %3513 = vmatprep.subr.mxu0 0.0
      %3514 = vmatpush1.msra.mxu0 0.0
      %3515 = vmatprep.subr.mxu0 0.0
      %3516 = vmatpush1.msra.mxu0 0.0
      %3517 = vmatprep.subr.mxu0 0.0
      %3518 = vmatpush1.msra.mxu0 0.0
      %3519 = vmatprep.subr.mxu0 0.0
      %3520 = vmatpush1.msra.mxu0 0.0
      %3521 = vmatprep.subr.mxu0 0.0
      %3522 = vmatpush1.msra.mxu0 0.0
      %3523 = vmatprep.subr.mxu0 0.0
      %3524 = vmatpush1.msra.mxu0 0.0
      %3525 = vmatprep.subr.mxu0 0.0
      %3526 = vmatpush1.msra.mxu0 0.0
      %3527 = vmatprep.mubr.f32.mxu0 0.0
      %3528 = vmatmul.mubr.f32.gmra.mrb[0].mxu0 %v3458
      %v3529 = vpop.f32.mrb[0].mxu0
      %v3530 = vadd.f32 0.0, %v3529
      %v3531 = vpop.f32.mrb[0].mxu0
      %3532 = vmatprep.mubr.f32.mxu0 0.0
      %3533 = vmatmul.mubr.f32.gmra.mrb[0].mxu0 %v3461
      %v3534 = vpop.f32.mrb[0].mxu0
      %v3535 = vadd.f32 0.0, %v3534
      %v3536 = vpop.f32.mrb[0].mxu0
      %3537 = vdwg.mxu0
      %v3538 = vadd.f32 %v3452, %v3530
      %v3539 = vadd.f32 %v3453, %v3535
      %v3540 = vld [vmem:[%s12] sm:$0x1]
      %v3541 = vlaneseq
      %v3542 = vshrl.u32 %v3541, 7
      %v3543 = vsub.s32 0, %v3542
      %v3544 = vrot.slane %v3540, %v3543
      %v3545 = vadd.f32 %v3538, %v3544
      %v3546 = vadd.f32 %v3539, %v3544
      %v3547 = vld [vmem:[%s12 + $0x1] sm:$0x1]
      %vm3548 = vcmp.gt.f32.partialorder %v3545, 0.0
      %vm3549 = vcmp.gt.f32.partialorder %v3546, 0.0
      %v3550 = vlaneseq
      %v3551 = vshrl.u32 %v3550, 7
      %v3552 = vsub.s32 0, %v3551
      %v3553 = vrot.slane %v3547, %v3552
      %v3554 = vmul.f32 %v3553, %v3545
      %v3555 = vmul.f32 %v3553, %v3546
      %v3556 = vsel %vm3548, %v3545, %v3554
      %v3557 = vsel %vm3549, %v3546, %v3555
      %3558 = vmatprep.subr.mxu0 0.0
      %3559 = vmatpush1.msra.mxu0 %v3556
      %3560 = vmatprep.subr.mxu0 0.0
      %3561 = vmatpush1.msra.mxu0 %v3557
      %3562 = vmatprep.subr.mxu0 0.0
      %3563 = vmatpush1.msra.mxu0 0.0
      %3564 = vmatprep.subr.mxu0 0.0
      %3565 = vmatpush1.msra.mxu0 0.0
      %3566 = vmatprep.subr.mxu0 0.0
      %3567 = vmatpush1.msra.mxu0 0.0
      %3568 = vmatprep.subr.mxu0 0.0
      %3569 = vmatpush1.msra.mxu0 0.0
      %3570 = vmatprep.subr.mxu0 0.0
      %3571 = vmatpush1.msra.mxu0 0.0
      %3572 = vmatprep.subr.mxu0 0.0
      %3573 = vmatpush1.msra.mxu0 0.0
      %3574 = vmatprep.subr.mxu0 0.0
      %3575 = vmatpush1.msra.mxu0 0.0
      %3576 = vmatprep.subr.mxu0 0.0
      %3577 = vmatpush1.msra.mxu0 0.0
      %3578 = vmatprep.subr.mxu0 0.0
      %3579 = vmatpush1.msra.mxu0 0.0
      %3580 = vmatprep.subr.mxu0 0.0
      %3581 = vmatpush1.msra.mxu0 0.0
      %3582 = vmatprep.subr.mxu0 0.0
      %3583 = vmatpush1.msra.mxu0 0.0
      %3584 = vmatprep.subr.mxu0 0.0
      %3585 = vmatpush1.msra.mxu0 0.0
      %3586 = vmatprep.subr.mxu0 0.0
      %3587 = vmatpush1.msra.mxu0 0.0
      %3588 = vmatprep.subr.mxu0 0.0
      %3589 = vmatpush1.msra.mxu0 0.0
      %3590 = vmatprep.subr.mxu0 0.0
      %3591 = vmatpush1.msra.mxu0 0.0
      %3592 = vmatprep.subr.mxu0 0.0
      %3593 = vmatpush1.msra.mxu0 0.0
      %3594 = vmatprep.subr.mxu0 0.0
      %3595 = vmatpush1.msra.mxu0 0.0
      %3596 = vmatprep.subr.mxu0 0.0
      %3597 = vmatpush1.msra.mxu0 0.0
      %3598 = vmatprep.subr.mxu0 0.0
      %3599 = vmatpush1.msra.mxu0 0.0
      %3600 = vmatprep.subr.mxu0 0.0
      %3601 = vmatpush1.msra.mxu0 0.0
      %3602 = vmatprep.subr.mxu0 0.0
      %3603 = vmatpush1.msra.mxu0 0.0
      %3604 = vmatprep.subr.mxu0 0.0
      %3605 = vmatpush1.msra.mxu0 0.0
      %3606 = vmatprep.subr.mxu0 0.0
      %3607 = vmatpush1.msra.mxu0 0.0
      %3608 = vmatprep.subr.mxu0 0.0
      %3609 = vmatpush1.msra.mxu0 0.0
      %3610 = vmatprep.subr.mxu0 0.0
      %3611 = vmatpush1.msra.mxu0 0.0
      %3612 = vmatprep.subr.mxu0 0.0
      %3613 = vmatpush1.msra.mxu0 0.0
      %3614 = vmatprep.subr.mxu0 0.0
      %3615 = vmatpush1.msra.mxu0 0.0
      %3616 = vmatprep.subr.mxu0 0.0
      %3617 = vmatpush1.msra.mxu0 0.0
      %3618 = vmatprep.subr.mxu0 0.0
      %3619 = vmatpush1.msra.mxu0 0.0
      %3620 = vmatprep.subr.mxu0 0.0
      %3621 = vmatpush1.msra.mxu0 0.0
      %3622 = vmatprep.mubr.f32.mxu0 0.0
      %3623 = vmatmul.mubr.f32.gmra.mrb[0].mxu0 %v1626
      %v3624 = vpop.f32.mrb[0].mxu0
      %v3625 = vadd.f32 0.0, %v3624
      %v3626 = vpop.f32.mrb[0].mxu0
      %3627 = vmatprep.mubr.f32.mxu0 0.0
      %3628 = vmatmul.mubr.f32.gmra.mrb[0].mxu0 %v1629
      %v3629 = vpop.f32.mrb[0].mxu0
      %v3630 = vadd.f32 0.0, %v3629
      %v3631 = vpop.f32.mrb[0].mxu0
      %3632 = vmatprep.mubr.f32.mxu0 0.0
      %3633 = vmatmul.mubr.f32.gmra.mrb[0].mxu0 %v1632
      %v3634 = vpop.f32.mrb[0].mxu0
      %v3635 = vadd.f32 0.0, %v3634
      %v3636 = vpop.f32.mrb[0].mxu0
      %3637 = vmatprep.mubr.f32.mxu0 0.0
      %3638 = vmatmul.mubr.f32.gmra.mrb[0].mxu0 %v1635
      %v3639 = vpop.f32.mrb[0].mxu0
      %v3640 = vadd.f32 0.0, %v3639
      %v3641 = vpop.f32.mrb[0].mxu0
      %3642 = vmatprep.mubr.f32.mxu0 0.0
      %3643 = vmatmul.mubr.f32.gmra.mrb[0].mxu0 %v1638
      %v3644 = vpop.f32.mrb[0].mxu0
      %v3645 = vadd.f32 0.0, %v3644
      %v3646 = vpop.f32.mrb[0].mxu0
      %3647 = vmatprep.mubr.f32.mxu0 0.0
      %3648 = vmatmul.mubr.f32.gmra.mrb[0].mxu0 %v1641
      %v3649 = vpop.f32.mrb[0].mxu0
      %v3650 = vadd.f32 0.0, %v3649
      %v3651 = vpop.f32.mrb[0].mxu0
      %3652 = vmatprep.mubr.f32.mxu0 0.0
      %3653 = vmatmul.mubr.f32.gmra.mrb[0].mxu0 %v1644
      %v3654 = vpop.f32.mrb[0].mxu0
      %v3655 = vadd.f32 0.0, %v3654
      %v3656 = vpop.f32.mrb[0].mxu0
      %3657 = vmatprep.mubr.f32.mxu0 0.0
      %3658 = vmatmul.mubr.f32.gmra.mrb[0].mxu0 %v1647
      %v3659 = vpop.f32.mrb[0].mxu0
      %v3660 = vadd.f32 0.0, %v3659
      %v3661 = vpop.f32.mrb[0].mxu0
      %3662 = vmatprep.mubr.f32.mxu0 0.0
      %3663 = vmatmul.mubr.f32.gmra.mrb[0].mxu0 %v1650
      %v3664 = vpop.f32.mrb[0].mxu0
      %v3665 = vadd.f32 0.0, %v3664
      %v3666 = vpop.f32.mrb[0].mxu0
      %3667 = vmatprep.mubr.f32.mxu0 0.0
      %3668 = vmatmul.mubr.f32.gmra.mrb[0].mxu0 %v1653
      %v3669 = vpop.f32.mrb[0].mxu0
      %v3670 = vadd.f32 0.0, %v3669
      %v3671 = vpop.f32.mrb[0].mxu0
      %3672 = vmatprep.mubr.f32.mxu0 0.0
      %3673 = vmatmul.mubr.f32.gmra.mrb[0].mxu0 %v1656
      %v3674 = vpop.f32.mrb[0].mxu0
      %v3675 = vadd.f32 0.0, %v3674
      %v3676 = vpop.f32.mrb[0].mxu0
      %3677 = vmatprep.mubr.f32.mxu0 0.0
      %3678 = vmatmul.mubr.f32.gmra.mrb[0].mxu0 %v1659
      %v3679 = vpop.f32.mrb[0].mxu0
      %v3680 = vadd.f32 0.0, %v3679
      %v3681 = vpop.f32.mrb[0].mxu0
      %3682 = vmatprep.mubr.f32.mxu0 0.0
      %3683 = vmatmul.mubr.f32.gmra.mrb[0].mxu0 %v1662
      %v3684 = vpop.f32.mrb[0].mxu0
      %v3685 = vadd.f32 0.0, %v3684
      %v3686 = vpop.f32.mrb[0].mxu0
      %3687 = vmatprep.mubr.f32.mxu0 0.0
      %3688 = vmatmul.mubr.f32.gmra.mrb[0].mxu0 %v1665
      %v3689 = vpop.f32.mrb[0].mxu0
      %v3690 = vadd.f32 0.0, %v3689
      %v3691 = vpop.f32.mrb[0].mxu0
      %3692 = vmatprep.mubr.f32.mxu0 0.0
      %3693 = vmatmul.mubr.f32.gmra.mrb[0].mxu0 %v1668
      %v3694 = vpop.f32.mrb[0].mxu0
      %v3695 = vadd.f32 0.0, %v3694
      %v3696 = vpop.f32.mrb[0].mxu0
      %3697 = vmatprep.mubr.f32.mxu0 0.0
      %3698 = vmatmul.mubr.f32.gmra.mrb[0].mxu0 %v1671
      %v3699 = vpop.f32.mrb[0].mxu0
      %v3700 = vadd.f32 0.0, %v3699
      %v3701 = vpop.f32.mrb[0].mxu0
      %3702 = vmatprep.mubr.f32.mxu0 0.0
      %3703 = vmatmul.mubr.f32.gmra.mrb[0].mxu0 %v1674
      %v3704 = vpop.f32.mrb[0].mxu0
      %v3705 = vadd.f32 0.0, %v3704
      %v3706 = vpop.f32.mrb[0].mxu0
      %3707 = vmatprep.mubr.f32.mxu0 0.0
      %3708 = vmatmul.mubr.f32.gmra.mrb[0].mxu0 %v1677
      %v3709 = vpop.f32.mrb[0].mxu0
      %v3710 = vadd.f32 0.0, %v3709
      %v3711 = vpop.f32.mrb[0].mxu0
      %3712 = vdwg.mxu0
      %v3713 = vld [vmem:[%s11] sm:$0xff]
      %v3714 = vld [vmem:[%s11 + $0x8] sm:$0xff]
      %s3715 = scalar_lea.vmem %s11, 16
      %v3716 = vld [vmem:[%s3715] sm:$0xff]
      %v3717 = vld [vmem:[%s3715 + $0x8] sm:$0xff]
      %v3719 = vsel %vm638, %v3635, 0
      %v3722 = vsel %vm638, %v3640, 0
      %3724 = vmatprep.subr.mxu0 0.0
      %3725 = vmatpush1.msra.mxu0 %v3716
      %3726 = vmatprep.subr.mxu0 0.0
      %3727 = vmatpush1.msra.mxu0 %v3717
      %3728 = vmatprep.subr.mxu0 0.0
      %3729 = vmatpush1.msra.mxu0 0.0
      %3730 = vmatprep.subr.mxu0 0.0
      %3731 = vmatpush1.msra.mxu0 0.0
      %3732 = vmatprep.subr.mxu0 0.0
      %3733 = vmatpush1.msra.mxu0 0.0
      %3734 = vmatprep.subr.mxu0 0.0
      %3735 = vmatpush1.msra.mxu0 0.0
      %3736 = vmatprep.subr.mxu0 0.0
      %3737 = vmatpush1.msra.mxu0 0.0
      %3738 = vmatprep.subr.mxu0 0.0
      %3739 = vmatpush1.msra.mxu0 0.0
      %3740 = vmatprep.subr.mxu0 0.0
      %3741 = vmatpush1.msra.mxu0 0.0
      %3742 = vmatprep.subr.mxu0 0.0
      %3743 = vmatpush1.msra.mxu0 0.0
      %3744 = vmatprep.subr.mxu0 0.0
      %3745 = vmatpush1.msra.mxu0 0.0
      %3746 = vmatprep.subr.mxu0 0.0
      %3747 = vmatpush1.msra.mxu0 0.0
      %3748 = vmatprep.subr.mxu0 0.0
      %3749 = vmatpush1.msra.mxu0 0.0
      %3750 = vmatprep.subr.mxu0 0.0
      %3751 = vmatpush1.msra.mxu0 0.0
      %3752 = vmatprep.subr.mxu0 0.0
      %3753 = vmatpush1.msra.mxu0 0.0
      %3754 = vmatprep.subr.mxu0 0.0
      %3755 = vmatpush1.msra.mxu0 0.0
      %3756 = vmatprep.subr.mxu0 0.0
      %3757 = vmatpush1.msra.mxu0 0.0
      %3758 = vmatprep.subr.mxu0 0.0
      %3759 = vmatpush1.msra.mxu0 0.0
      %3760 = vmatprep.subr.mxu0 0.0
      %3761 = vmatpush1.msra.mxu0 0.0
      %3762 = vmatprep.subr.mxu0 0.0
      %3763 = vmatpush1.msra.mxu0 0.0
      %3764 = vmatprep.subr.mxu0 0.0
      %3765 = vmatpush1.msra.mxu0 0.0
      %3766 = vmatprep.subr.mxu0 0.0
      %3767 = vmatpush1.msra.mxu0 0.0
      %3768 = vmatprep.subr.mxu0 0.0
      %3769 = vmatpush1.msra.mxu0 0.0
      %3770 = vmatprep.subr.mxu0 0.0
      %3771 = vmatpush1.msra.mxu0 0.0
      %3772 = vmatprep.subr.mxu0 0.0
      %3773 = vmatpush1.msra.mxu0 0.0
      %3774 = vmatprep.subr.mxu0 0.0
      %3775 = vmatpush1.msra.mxu0 0.0
      %3776 = vmatprep.subr.mxu0 0.0
      %3777 = vmatpush1.msra.mxu0 0.0
      %3778 = vmatprep.subr.mxu0 0.0
      %3779 = vmatpush1.msra.mxu0 0.0
      %3780 = vmatprep.subr.mxu0 0.0
      %3781 = vmatpush1.msra.mxu0 0.0
      %3782 = vmatprep.subr.mxu0 0.0
      %3783 = vmatpush1.msra.mxu0 0.0
      %3784 = vmatprep.subr.mxu0 0.0
      %3785 = vmatpush1.msra.mxu0 0.0
      %3786 = vmatprep.subr.mxu0 0.0
      %3787 = vmatpush1.msra.mxu0 0.0
      %3788 = vmatprep.mubr.f32.mxu0 0.0
      %3789 = vmatmul.mubr.f32.gmra.mrb[0].mxu0 %v3719
      %v3790 = vpop.f32.mrb[0].mxu0
      %v3791 = vadd.f32 0.0, %v3790
      %v3792 = vpop.f32.mrb[0].mxu0
      %3793 = vmatprep.mubr.f32.mxu0 0.0
      %3794 = vmatmul.mubr.f32.gmra.mrb[0].mxu0 %v3722
      %v3795 = vpop.f32.mrb[0].mxu0
      %v3796 = vadd.f32 0.0, %v3795
      %v3797 = vpop.f32.mrb[0].mxu0
      %3798 = vdwg.mxu0
      %v3800 = vsel %vm638, %v3625, 0
      %v3803 = vsel %vm638, %v3630, 0
      %3805 = vmatprep.subr.mxu0 0.0
      %3806 = vmatpush1.msra.mxu0 %v3713
      %3807 = vmatprep.subr.mxu0 0.0
      %3808 = vmatpush1.msra.mxu0 %v3714
      %3809 = vmatprep.subr.mxu0 0.0
      %3810 = vmatpush1.msra.mxu0 0.0
      %3811 = vmatprep.subr.mxu0 0.0
      %3812 = vmatpush1.msra.mxu0 0.0
      %3813 = vmatprep.subr.mxu0 0.0
      %3814 = vmatpush1.msra.mxu0 0.0
      %3815 = vmatprep.subr.mxu0 0.0
      %3816 = vmatpush1.msra.mxu0 0.0
      %3817 = vmatprep.subr.mxu0 0.0
      %3818 = vmatpush1.msra.mxu0 0.0
      %3819 = vmatprep.subr.mxu0 0.0
      %3820 = vmatpush1.msra.mxu0 0.0
      %3821 = vmatprep.subr.mxu0 0.0
      %3822 = vmatpush1.msra.mxu0 0.0
      %3823 = vmatprep.subr.mxu0 0.0
      %3824 = vmatpush1.msra.mxu0 0.0
      %3825 = vmatprep.subr.mxu0 0.0
      %3826 = vmatpush1.msra.mxu0 0.0
      %3827 = vmatprep.subr.mxu0 0.0
      %3828 = vmatpush1.msra.mxu0 0.0
      %3829 = vmatprep.subr.mxu0 0.0
      %3830 = vmatpush1.msra.mxu0 0.0
      %3831 = vmatprep.subr.mxu0 0.0
      %3832 = vmatpush1.msra.mxu0 0.0
      %3833 = vmatprep.subr.mxu0 0.0
      %3834 = vmatpush1.msra.mxu0 0.0
      %3835 = vmatprep.subr.mxu0 0.0
      %3836 = vmatpush1.msra.mxu0 0.0
      %3837 = vmatprep.subr.mxu0 0.0
      %3838 = vmatpush1.msra.mxu0 0.0
      %3839 = vmatprep.subr.mxu0 0.0
      %3840 = vmatpush1.msra.mxu0 0.0
      %3841 = vmatprep.subr.mxu0 0.0
      %3842 = vmatpush1.msra.mxu0 0.0
      %3843 = vmatprep.subr.mxu0 0.0
      %3844 = vmatpush1.msra.mxu0 0.0
      %3845 = vmatprep.subr.mxu0 0.0
      %3846 = vmatpush1.msra.mxu0 0.0
      %3847 = vmatprep.subr.mxu0 0.0
      %3848 = vmatpush1.msra.mxu0 0.0
      %3849 = vmatprep.subr.mxu0 0.0
      %3850 = vmatpush1.msra.mxu0 0.0
      %3851 = vmatprep.subr.mxu0 0.0
      %3852 = vmatpush1.msra.mxu0 0.0
      %3853 = vmatprep.subr.mxu0 0.0
      %3854 = vmatpush1.msra.mxu0 0.0
      %3855 = vmatprep.subr.mxu0 0.0
      %3856 = vmatpush1.msra.mxu0 0.0
      %3857 = vmatprep.subr.mxu0 0.0
      %3858 = vmatpush1.msra.mxu0 0.0
      %3859 = vmatprep.subr.mxu0 0.0
      %3860 = vmatpush1.msra.mxu0 0.0
      %3861 = vmatprep.subr.mxu0 0.0
      %3862 = vmatpush1.msra.mxu0 0.0
      %3863 = vmatprep.subr.mxu0 0.0
      %3864 = vmatpush1.msra.mxu0 0.0
      %3865 = vmatprep.subr.mxu0 0.0
      %3866 = vmatpush1.msra.mxu0 0.0
      %3867 = vmatprep.subr.mxu0 0.0
      %3868 = vmatpush1.msra.mxu0 0.0
      %3869 = vmatprep.mubr.f32.mxu0 0.0
      %3870 = vmatmul.mubr.f32.gmra.mrb[0].mxu0 %v3800
      %v3871 = vpop.f32.mrb[0].mxu0
      %v3872 = vadd.f32 %v3791, %v3871
      %v3873 = vpop.f32.mrb[0].mxu0
      %3874 = vmatprep.mubr.f32.mxu0 0.0
      %3875 = vmatmul.mubr.f32.gmra.mrb[0].mxu0 %v3803
      %v3876 = vpop.f32.mrb[0].mxu0
      %v3877 = vadd.f32 %v3796, %v3876
      %v3878 = vpop.f32.mrb[0].mxu0
      %3879 = vdwg.mxu0
      %s3880 = scalar_lea.vmem %s11, 32
      %v3881 = vld [vmem:[%s3880] sm:$0xff]
      %v3882 = vld [vmem:[%s3880 + $0x8] sm:$0xff]
      %v3884 = vsel %vm638, %v3645, 0
      %v3887 = vsel %vm638, %v3650, 0
      %3889 = vmatprep.subr.mxu0 0.0
      %3890 = vmatpush1.msra.mxu0 %v3881
      %3891 = vmatprep.subr.mxu0 0.0
      %3892 = vmatpush1.msra.mxu0 %v3882
      %3893 = vmatprep.subr.mxu0 0.0
      %3894 = vmatpush1.msra.mxu0 0.0
      %3895 = vmatprep.subr.mxu0 0.0
      %3896 = vmatpush1.msra.mxu0 0.0
      %3897 = vmatprep.subr.mxu0 0.0
      %3898 = vmatpush1.msra.mxu0 0.0
      %3899 = vmatprep.subr.mxu0 0.0
      %3900 = vmatpush1.msra.mxu0 0.0
      %3901 = vmatprep.subr.mxu0 0.0
      %3902 = vmatpush1.msra.mxu0 0.0
      %3903 = vmatprep.subr.mxu0 0.0
      %3904 = vmatpush1.msra.mxu0 0.0
      %3905 = vmatprep.subr.mxu0 0.0
      %3906 = vmatpush1.msra.mxu0 0.0
      %3907 = vmatprep.subr.mxu0 0.0
      %3908 = vmatpush1.msra.mxu0 0.0
      %3909 = vmatprep.subr.mxu0 0.0
      %3910 = vmatpush1.msra.mxu0 0.0
      %3911 = vmatprep.subr.mxu0 0.0
      %3912 = vmatpush1.msra.mxu0 0.0
      %3913 = vmatprep.subr.mxu0 0.0
      %3914 = vmatpush1.msra.mxu0 0.0
      %3915 = vmatprep.subr.mxu0 0.0
      %3916 = vmatpush1.msra.mxu0 0.0
      %3917 = vmatprep.subr.mxu0 0.0
      %3918 = vmatpush1.msra.mxu0 0.0
      %3919 = vmatprep.subr.mxu0 0.0
      %3920 = vmatpush1.msra.mxu0 0.0
      %3921 = vmatprep.subr.mxu0 0.0
      %3922 = vmatpush1.msra.mxu0 0.0
      %3923 = vmatprep.subr.mxu0 0.0
      %3924 = vmatpush1.msra.mxu0 0.0
      %3925 = vmatprep.subr.mxu0 0.0
      %3926 = vmatpush1.msra.mxu0 0.0
      %3927 = vmatprep.subr.mxu0 0.0
      %3928 = vmatpush1.msra.mxu0 0.0
      %3929 = vmatprep.subr.mxu0 0.0
      %3930 = vmatpush1.msra.mxu0 0.0
      %3931 = vmatprep.subr.mxu0 0.0
      %3932 = vmatpush1.msra.mxu0 0.0
      %3933 = vmatprep.subr.mxu0 0.0
      %3934 = vmatpush1.msra.mxu0 0.0
      %3935 = vmatprep.subr.mxu0 0.0
      %3936 = vmatpush1.msra.mxu0 0.0
      %3937 = vmatprep.subr.mxu0 0.0
      %3938 = vmatpush1.msra.mxu0 0.0
      %3939 = vmatprep.subr.mxu0 0.0
      %3940 = vmatpush1.msra.mxu0 0.0
      %3941 = vmatprep.subr.mxu0 0.0
      %3942 = vmatpush1.msra.mxu0 0.0
      %3943 = vmatprep.subr.mxu0 0.0
      %3944 = vmatpush1.msra.mxu0 0.0
      %3945 = vmatprep.subr.mxu0 0.0
      %3946 = vmatpush1.msra.mxu0 0.0
      %3947 = vmatprep.subr.mxu0 0.0
      %3948 = vmatpush1.msra.mxu0 0.0
      %3949 = vmatprep.subr.mxu0 0.0
      %3950 = vmatpush1.msra.mxu0 0.0
      %3951 = vmatprep.subr.mxu0 0.0
      %3952 = vmatpush1.msra.mxu0 0.0
      %3953 = vmatprep.mubr.f32.mxu0 0.0
      %3954 = vmatmul.mubr.f32.gmra.mrb[0].mxu0 %v3884
      %v3955 = vpop.f32.mrb[0].mxu0
      %v3956 = vadd.f32 0.0, %v3955
      %v3957 = vpop.f32.mrb[0].mxu0
      %3958 = vmatprep.mubr.f32.mxu0 0.0
      %3959 = vmatmul.mubr.f32.gmra.mrb[0].mxu0 %v3887
      %v3960 = vpop.f32.mrb[0].mxu0
      %v3961 = vadd.f32 0.0, %v3960
      %v3962 = vpop.f32.mrb[0].mxu0
      %3963 = vdwg.mxu0
      %v3964 = vadd.f32 %v3872, %v3956
      %v3965 = vadd.f32 %v3877, %v3961
      %s3966 = scalar_lea.vmem %s11, 48
      %v3967 = vld [vmem:[%s3966] sm:$0xff]
      %v3968 = vld [vmem:[%s3966 + $0x8] sm:$0xff]
      %v3970 = vsel %vm638, %v3655, 0
      %v3973 = vsel %vm638, %v3660, 0
      %3975 = vmatprep.subr.mxu0 0.0
      %3976 = vmatpush1.msra.mxu0 %v3967
      %3977 = vmatprep.subr.mxu0 0.0
      %3978 = vmatpush1.msra.mxu0 %v3968
      %3979 = vmatprep.subr.mxu0 0.0
      %3980 = vmatpush1.msra.mxu0 0.0
      %3981 = vmatprep.subr.mxu0 0.0
      %3982 = vmatpush1.msra.mxu0 0.0
      %3983 = vmatprep.subr.mxu0 0.0
      %3984 = vmatpush1.msra.mxu0 0.0
      %3985 = vmatprep.subr.mxu0 0.0
      %3986 = vmatpush1.msra.mxu0 0.0
      %3987 = vmatprep.subr.mxu0 0.0
      %3988 = vmatpush1.msra.mxu0 0.0
      %3989 = vmatprep.subr.mxu0 0.0
      %3990 = vmatpush1.msra.mxu0 0.0
      %3991 = vmatprep.subr.mxu0 0.0
      %3992 = vmatpush1.msra.mxu0 0.0
      %3993 = vmatprep.subr.mxu0 0.0
      %3994 = vmatpush1.msra.mxu0 0.0
      %3995 = vmatprep.subr.mxu0 0.0
      %3996 = vmatpush1.msra.mxu0 0.0
      %3997 = vmatprep.subr.mxu0 0.0
      %3998 = vmatpush1.msra.mxu0 0.0
      %3999 = vmatprep.subr.mxu0 0.0
      %4000 = vmatpush1.msra.mxu0 0.0
      %4001 = vmatprep.subr.mxu0 0.0
      %4002 = vmatpush1.msra.mxu0 0.0
      %4003 = vmatprep.subr.mxu0 0.0
      %4004 = vmatpush1.msra.mxu0 0.0
      %4005 = vmatprep.subr.mxu0 0.0
      %4006 = vmatpush1.msra.mxu0 0.0
      %4007 = vmatprep.subr.mxu0 0.0
      %4008 = vmatpush1.msra.mxu0 0.0
      %4009 = vmatprep.subr.mxu0 0.0
      %4010 = vmatpush1.msra.mxu0 0.0
      %4011 = vmatprep.subr.mxu0 0.0
      %4012 = vmatpush1.msra.mxu0 0.0
      %4013 = vmatprep.subr.mxu0 0.0
      %4014 = vmatpush1.msra.mxu0 0.0
      %4015 = vmatprep.subr.mxu0 0.0
      %4016 = vmatpush1.msra.mxu0 0.0
      %4017 = vmatprep.subr.mxu0 0.0
      %4018 = vmatpush1.msra.mxu0 0.0
      %4019 = vmatprep.subr.mxu0 0.0
      %4020 = vmatpush1.msra.mxu0 0.0
      %4021 = vmatprep.subr.mxu0 0.0
      %4022 = vmatpush1.msra.mxu0 0.0
      %4023 = vmatprep.subr.mxu0 0.0
      %4024 = vmatpush1.msra.mxu0 0.0
      %4025 = vmatprep.subr.mxu0 0.0
      %4026 = vmatpush1.msra.mxu0 0.0
      %4027 = vmatprep.subr.mxu0 0.0
      %4028 = vmatpush1.msra.mxu0 0.0
      %4029 = vmatprep.subr.mxu0 0.0
      %4030 = vmatpush1.msra.mxu0 0.0
      %4031 = vmatprep.subr.mxu0 0.0
      %4032 = vmatpush1.msra.mxu0 0.0
      %4033 = vmatprep.subr.mxu0 0.0
      %4034 = vmatpush1.msra.mxu0 0.0
      %4035 = vmatprep.subr.mxu0 0.0
      %4036 = vmatpush1.msra.mxu0 0.0
      %4037 = vmatprep.subr.mxu0 0.0
      %4038 = vmatpush1.msra.mxu0 0.0
      %4039 = vmatprep.mubr.f32.mxu0 0.0
      %4040 = vmatmul.mubr.f32.gmra.mrb[0].mxu0 %v3970
      %v4041 = vpop.f32.mrb[0].mxu0
      %v4042 = vadd.f32 0.0, %v4041
      %v4043 = vpop.f32.mrb[0].mxu0
      %4044 = vmatprep.mubr.f32.mxu0 0.0
      %4045 = vmatmul.mubr.f32.gmra.mrb[0].mxu0 %v3973
      %v4046 = vpop.f32.mrb[0].mxu0
      %v4047 = vadd.f32 0.0, %v4046
      %v4048 = vpop.f32.mrb[0].mxu0
      %4049 = vdwg.mxu0
      %v4050 = vadd.f32 %v3964, %v4042
      %v4051 = vadd.f32 %v3965, %v4047
      %s4052 = scalar_lea.vmem %s11, 64
      %v4053 = vld [vmem:[%s4052] sm:$0xff]
      %v4054 = vld [vmem:[%s4052 + $0x8] sm:$0xff]
      %v4056 = vsel %vm638, %v3665, 0
      %v4059 = vsel %vm638, %v3670, 0
      %4061 = vmatprep.subr.mxu0 0.0
      %4062 = vmatpush1.msra.mxu0 %v4053
      %4063 = vmatprep.subr.mxu0 0.0
      %4064 = vmatpush1.msra.mxu0 %v4054
      %4065 = vmatprep.subr.mxu0 0.0
      %4066 = vmatpush1.msra.mxu0 0.0
      %4067 = vmatprep.subr.mxu0 0.0
      %4068 = vmatpush1.msra.mxu0 0.0
      %4069 = vmatprep.subr.mxu0 0.0
      %4070 = vmatpush1.msra.mxu0 0.0
      %4071 = vmatprep.subr.mxu0 0.0
      %4072 = vmatpush1.msra.mxu0 0.0
      %4073 = vmatprep.subr.mxu0 0.0
      %4074 = vmatpush1.msra.mxu0 0.0
      %4075 = vmatprep.subr.mxu0 0.0
      %4076 = vmatpush1.msra.mxu0 0.0
      %4077 = vmatprep.subr.mxu0 0.0
      %4078 = vmatpush1.msra.mxu0 0.0
      %4079 = vmatprep.subr.mxu0 0.0
      %4080 = vmatpush1.msra.mxu0 0.0
      %4081 = vmatprep.subr.mxu0 0.0
      %4082 = vmatpush1.msra.mxu0 0.0
      %4083 = vmatprep.subr.mxu0 0.0
      %4084 = vmatpush1.msra.mxu0 0.0
      %4085 = vmatprep.subr.mxu0 0.0
      %4086 = vmatpush1.msra.mxu0 0.0
      %4087 = vmatprep.subr.mxu0 0.0
      %4088 = vmatpush1.msra.mxu0 0.0
      %4089 = vmatprep.subr.mxu0 0.0
      %4090 = vmatpush1.msra.mxu0 0.0
      %4091 = vmatprep.subr.mxu0 0.0
      %4092 = vmatpush1.msra.mxu0 0.0
      %4093 = vmatprep.subr.mxu0 0.0
      %4094 = vmatpush1.msra.mxu0 0.0
      %4095 = vmatprep.subr.mxu0 0.0
      %4096 = vmatpush1.msra.mxu0 0.0
      %4097 = vmatprep.subr.mxu0 0.0
      %4098 = vmatpush1.msra.mxu0 0.0
      %4099 = vmatprep.subr.mxu0 0.0
      %4100 = vmatpush1.msra.mxu0 0.0
      %4101 = vmatprep.subr.mxu0 0.0
      %4102 = vmatpush1.msra.mxu0 0.0
      %4103 = vmatprep.subr.mxu0 0.0
      %4104 = vmatpush1.msra.mxu0 0.0
      %4105 = vmatprep.subr.mxu0 0.0
      %4106 = vmatpush1.msra.mxu0 0.0
      %4107 = vmatprep.subr.mxu0 0.0
      %4108 = vmatpush1.msra.mxu0 0.0
      %4109 = vmatprep.subr.mxu0 0.0
      %4110 = vmatpush1.msra.mxu0 0.0
      %4111 = vmatprep.subr.mxu0 0.0
      %4112 = vmatpush1.msra.mxu0 0.0
      %4113 = vmatprep.subr.mxu0 0.0
      %4114 = vmatpush1.msra.mxu0 0.0
      %4115 = vmatprep.subr.mxu0 0.0
      %4116 = vmatpush1.msra.mxu0 0.0
      %4117 = vmatprep.subr.mxu0 0.0
      %4118 = vmatpush1.msra.mxu0 0.0
      %4119 = vmatprep.subr.mxu0 0.0
      %4120 = vmatpush1.msra.mxu0 0.0
      %4121 = vmatprep.subr.mxu0 0.0
      %4122 = vmatpush1.msra.mxu0 0.0
      %4123 = vmatprep.subr.mxu0 0.0
      %4124 = vmatpush1.msra.mxu0 0.0
      %4125 = vmatprep.mubr.f32.mxu0 0.0
      %4126 = vmatmul.mubr.f32.gmra.mrb[0].mxu0 %v4056
      %v4127 = vpop.f32.mrb[0].mxu0
      %v4128 = vadd.f32 0.0, %v4127
      %v4129 = vpop.f32.mrb[0].mxu0
      %4130 = vmatprep.mubr.f32.mxu0 0.0
      %4131 = vmatmul.mubr.f32.gmra.mrb[0].mxu0 %v4059
      %v4132 = vpop.f32.mrb[0].mxu0
      %v4133 = vadd.f32 0.0, %v4132
      %v4134 = vpop.f32.mrb[0].mxu0
      %4135 = vdwg.mxu0
      %v4136 = vadd.f32 %v4050, %v4128
      %v4137 = vadd.f32 %v4051, %v4133
      %s4138 = scalar_lea.vmem %s11, 80
      %v4139 = vld [vmem:[%s4138] sm:$0xff]
      %v4140 = vld [vmem:[%s4138 + $0x8] sm:$0xff]
      %v4142 = vsel %vm638, %v3675, 0
      %v4145 = vsel %vm638, %v3680, 0
      %4147 = vmatprep.subr.mxu0 0.0
      %4148 = vmatpush1.msra.mxu0 %v4139
      %4149 = vmatprep.subr.mxu0 0.0
      %4150 = vmatpush1.msra.mxu0 %v4140
      %4151 = vmatprep.subr.mxu0 0.0
      %4152 = vmatpush1.msra.mxu0 0.0
      %4153 = vmatprep.subr.mxu0 0.0
      %4154 = vmatpush1.msra.mxu0 0.0
      %4155 = vmatprep.subr.mxu0 0.0
      %4156 = vmatpush1.msra.mxu0 0.0
      %4157 = vmatprep.subr.mxu0 0.0
      %4158 = vmatpush1.msra.mxu0 0.0
      %4159 = vmatprep.subr.mxu0 0.0
      %4160 = vmatpush1.msra.mxu0 0.0
      %4161 = vmatprep.subr.mxu0 0.0
      %4162 = vmatpush1.msra.mxu0 0.0
      %4163 = vmatprep.subr.mxu0 0.0
      %4164 = vmatpush1.msra.mxu0 0.0
      %4165 = vmatprep.subr.mxu0 0.0
      %4166 = vmatpush1.msra.mxu0 0.0
      %4167 = vmatprep.subr.mxu0 0.0
      %4168 = vmatpush1.msra.mxu0 0.0
      %4169 = vmatprep.subr.mxu0 0.0
      %4170 = vmatpush1.msra.mxu0 0.0
      %4171 = vmatprep.subr.mxu0 0.0
      %4172 = vmatpush1.msra.mxu0 0.0
      %4173 = vmatprep.subr.mxu0 0.0
      %4174 = vmatpush1.msra.mxu0 0.0
      %4175 = vmatprep.subr.mxu0 0.0
      %4176 = vmatpush1.msra.mxu0 0.0
      %4177 = vmatprep.subr.mxu0 0.0
      %4178 = vmatpush1.msra.mxu0 0.0
      %4179 = vmatprep.subr.mxu0 0.0
      %4180 = vmatpush1.msra.mxu0 0.0
      %4181 = vmatprep.subr.mxu0 0.0
      %4182 = vmatpush1.msra.mxu0 0.0
      %4183 = vmatprep.subr.mxu0 0.0
      %4184 = vmatpush1.msra.mxu0 0.0
      %4185 = vmatprep.subr.mxu0 0.0
      %4186 = vmatpush1.msra.mxu0 0.0
      %4187 = vmatprep.subr.mxu0 0.0
      %4188 = vmatpush1.msra.mxu0 0.0
      %4189 = vmatprep.subr.mxu0 0.0
      %4190 = vmatpush1.msra.mxu0 0.0
      %4191 = vmatprep.subr.mxu0 0.0
      %4192 = vmatpush1.msra.mxu0 0.0
      %4193 = vmatprep.subr.mxu0 0.0
      %4194 = vmatpush1.msra.mxu0 0.0
      %4195 = vmatprep.subr.mxu0 0.0
      %4196 = vmatpush1.msra.mxu0 0.0
      %4197 = vmatprep.subr.mxu0 0.0
      %4198 = vmatpush1.msra.mxu0 0.0
      %4199 = vmatprep.subr.mxu0 0.0
      %4200 = vmatpush1.msra.mxu0 0.0
      %4201 = vmatprep.subr.mxu0 0.0
      %4202 = vmatpush1.msra.mxu0 0.0
      %4203 = vmatprep.subr.mxu0 0.0
      %4204 = vmatpush1.msra.mxu0 0.0
      %4205 = vmatprep.subr.mxu0 0.0
      %4206 = vmatpush1.msra.mxu0 0.0
      %4207 = vmatprep.subr.mxu0 0.0
      %4208 = vmatpush1.msra.mxu0 0.0
      %4209 = vmatprep.subr.mxu0 0.0
      %4210 = vmatpush1.msra.mxu0 0.0
      %4211 = vmatprep.mubr.f32.mxu0 0.0
      %4212 = vmatmul.mubr.f32.gmra.mrb[0].mxu0 %v4142
      %v4213 = vpop.f32.mrb[0].mxu0
      %v4214 = vadd.f32 0.0, %v4213
      %v4215 = vpop.f32.mrb[0].mxu0
      %4216 = vmatprep.mubr.f32.mxu0 0.0
      %4217 = vmatmul.mubr.f32.gmra.mrb[0].mxu0 %v4145
      %v4218 = vpop.f32.mrb[0].mxu0
      %v4219 = vadd.f32 0.0, %v4218
      %v4220 = vpop.f32.mrb[0].mxu0
      %4221 = vdwg.mxu0
      %v4222 = vadd.f32 %v4136, %v4214
      %v4223 = vadd.f32 %v4137, %v4219
      %s4224 = scalar_lea.vmem %s11, 96
      %v4225 = vld [vmem:[%s4224] sm:$0xff]
      %v4226 = vld [vmem:[%s4224 + $0x8] sm:$0xff]
      %v4228 = vsel %vm638, %v3685, 0
      %v4231 = vsel %vm638, %v3690, 0
      %4233 = vmatprep.subr.mxu0 0.0
      %4234 = vmatpush1.msra.mxu0 %v4225
      %4235 = vmatprep.subr.mxu0 0.0
      %4236 = vmatpush1.msra.mxu0 %v4226
      %4237 = vmatprep.subr.mxu0 0.0
      %4238 = vmatpush1.msra.mxu0 0.0
      %4239 = vmatprep.subr.mxu0 0.0
      %4240 = vmatpush1.msra.mxu0 0.0
      %4241 = vmatprep.subr.mxu0 0.0
      %4242 = vmatpush1.msra.mxu0 0.0
      %4243 = vmatprep.subr.mxu0 0.0
      %4244 = vmatpush1.msra.mxu0 0.0
      %4245 = vmatprep.subr.mxu0 0.0
      %4246 = vmatpush1.msra.mxu0 0.0
      %4247 = vmatprep.subr.mxu0 0.0
      %4248 = vmatpush1.msra.mxu0 0.0
      %4249 = vmatprep.subr.mxu0 0.0
      %4250 = vmatpush1.msra.mxu0 0.0
      %4251 = vmatprep.subr.mxu0 0.0
      %4252 = vmatpush1.msra.mxu0 0.0
      %4253 = vmatprep.subr.mxu0 0.0
      %4254 = vmatpush1.msra.mxu0 0.0
      %4255 = vmatprep.subr.mxu0 0.0
      %4256 = vmatpush1.msra.mxu0 0.0
      %4257 = vmatprep.subr.mxu0 0.0
      %4258 = vmatpush1.msra.mxu0 0.0
      %4259 = vmatprep.subr.mxu0 0.0
      %4260 = vmatpush1.msra.mxu0 0.0
      %4261 = vmatprep.subr.mxu0 0.0
      %4262 = vmatpush1.msra.mxu0 0.0
      %4263 = vmatprep.subr.mxu0 0.0
      %4264 = vmatpush1.msra.mxu0 0.0
      %4265 = vmatprep.subr.mxu0 0.0
      %4266 = vmatpush1.msra.mxu0 0.0
      %4267 = vmatprep.subr.mxu0 0.0
      %4268 = vmatpush1.msra.mxu0 0.0
      %4269 = vmatprep.subr.mxu0 0.0
      %4270 = vmatpush1.msra.mxu0 0.0
      %4271 = vmatprep.subr.mxu0 0.0
      %4272 = vmatpush1.msra.mxu0 0.0
      %4273 = vmatprep.subr.mxu0 0.0
      %4274 = vmatpush1.msra.mxu0 0.0
      %4275 = vmatprep.subr.mxu0 0.0
      %4276 = vmatpush1.msra.mxu0 0.0
      %4277 = vmatprep.subr.mxu0 0.0
      %4278 = vmatpush1.msra.mxu0 0.0
      %4279 = vmatprep.subr.mxu0 0.0
      %4280 = vmatpush1.msra.mxu0 0.0
      %4281 = vmatprep.subr.mxu0 0.0
      %4282 = vmatpush1.msra.mxu0 0.0
      %4283 = vmatprep.subr.mxu0 0.0
      %4284 = vmatpush1.msra.mxu0 0.0
      %4285 = vmatprep.subr.mxu0 0.0
      %4286 = vmatpush1.msra.mxu0 0.0
      %4287 = vmatprep.subr.mxu0 0.0
      %4288 = vmatpush1.msra.mxu0 0.0
      %4289 = vmatprep.subr.mxu0 0.0
      %4290 = vmatpush1.msra.mxu0 0.0
      %4291 = vmatprep.subr.mxu0 0.0
      %4292 = vmatpush1.msra.mxu0 0.0
      %4293 = vmatprep.subr.mxu0 0.0
      %4294 = vmatpush1.msra.mxu0 0.0
      %4295 = vmatprep.subr.mxu0 0.0
      %4296 = vmatpush1.msra.mxu0 0.0
      %4297 = vmatprep.mubr.f32.mxu0 0.0
      %4298 = vmatmul.mubr.f32.gmra.mrb[0].mxu0 %v4228
      %v4299 = vpop.f32.mrb[0].mxu0
      %v4300 = vadd.f32 0.0, %v4299
      %v4301 = vpop.f32.mrb[0].mxu0
      %4302 = vmatprep.mubr.f32.mxu0 0.0
      %4303 = vmatmul.mubr.f32.gmra.mrb[0].mxu0 %v4231
      %v4304 = vpop.f32.mrb[0].mxu0
      %v4305 = vadd.f32 0.0, %v4304
      %v4306 = vpop.f32.mrb[0].mxu0
      %4307 = vdwg.mxu0
      %v4308 = vadd.f32 %v4222, %v4300
      %v4309 = vadd.f32 %v4223, %v4305
      %s4310 = scalar_lea.vmem %s11, 112
      %v4311 = vld [vmem:[%s4310] sm:$0xff]
      %v4312 = vld [vmem:[%s4310 + $0x8] sm:$0xff]
      %v4314 = vsel %vm638, %v3695, 0
      %v4317 = vsel %vm638, %v3700, 0
      %4319 = vmatprep.subr.mxu0 0.0
      %4320 = vmatpush1.msra.mxu0 %v4311
      %4321 = vmatprep.subr.mxu0 0.0
      %4322 = vmatpush1.msra.mxu0 %v4312
      %4323 = vmatprep.subr.mxu0 0.0
      %4324 = vmatpush1.msra.mxu0 0.0
      %4325 = vmatprep.subr.mxu0 0.0
      %4326 = vmatpush1.msra.mxu0 0.0
      %4327 = vmatprep.subr.mxu0 0.0
      %4328 = vmatpush1.msra.mxu0 0.0
      %4329 = vmatprep.subr.mxu0 0.0
      %4330 = vmatpush1.msra.mxu0 0.0
      %4331 = vmatprep.subr.mxu0 0.0
      %4332 = vmatpush1.msra.mxu0 0.0
      %4333 = vmatprep.subr.mxu0 0.0
      %4334 = vmatpush1.msra.mxu0 0.0
      %4335 = vmatprep.subr.mxu0 0.0
      %4336 = vmatpush1.msra.mxu0 0.0
      %4337 = vmatprep.subr.mxu0 0.0
      %4338 = vmatpush1.msra.mxu0 0.0
      %4339 = vmatprep.subr.mxu0 0.0
      %4340 = vmatpush1.msra.mxu0 0.0
      %4341 = vmatprep.subr.mxu0 0.0
      %4342 = vmatpush1.msra.mxu0 0.0
      %4343 = vmatprep.subr.mxu0 0.0
      %4344 = vmatpush1.msra.mxu0 0.0
      %4345 = vmatprep.subr.mxu0 0.0
      %4346 = vmatpush1.msra.mxu0 0.0
      %4347 = vmatprep.subr.mxu0 0.0
      %4348 = vmatpush1.msra.mxu0 0.0
      %4349 = vmatprep.subr.mxu0 0.0
      %4350 = vmatpush1.msra.mxu0 0.0
      %4351 = vmatprep.subr.mxu0 0.0
      %4352 = vmatpush1.msra.mxu0 0.0
      %4353 = vmatprep.subr.mxu0 0.0
      %4354 = vmatpush1.msra.mxu0 0.0
      %4355 = vmatprep.subr.mxu0 0.0
      %4356 = vmatpush1.msra.mxu0 0.0
      %4357 = vmatprep.subr.mxu0 0.0
      %4358 = vmatpush1.msra.mxu0 0.0
      %4359 = vmatprep.subr.mxu0 0.0
      %4360 = vmatpush1.msra.mxu0 0.0
      %4361 = vmatprep.subr.mxu0 0.0
      %4362 = vmatpush1.msra.mxu0 0.0
      %4363 = vmatprep.subr.mxu0 0.0
      %4364 = vmatpush1.msra.mxu0 0.0
      %4365 = vmatprep.subr.mxu0 0.0
      %4366 = vmatpush1.msra.mxu0 0.0
      %4367 = vmatprep.subr.mxu0 0.0
      %4368 = vmatpush1.msra.mxu0 0.0
      %4369 = vmatprep.subr.mxu0 0.0
      %4370 = vmatpush1.msra.mxu0 0.0
      %4371 = vmatprep.subr.mxu0 0.0
      %4372 = vmatpush1.msra.mxu0 0.0
      %4373 = vmatprep.subr.mxu0 0.0
      %4374 = vmatpush1.msra.mxu0 0.0
      %4375 = vmatprep.subr.mxu0 0.0
      %4376 = vmatpush1.msra.mxu0 0.0
      %4377 = vmatprep.subr.mxu0 0.0
      %4378 = vmatpush1.msra.mxu0 0.0
      %4379 = vmatprep.subr.mxu0 0.0
      %4380 = vmatpush1.msra.mxu0 0.0
      %4381 = vmatprep.subr.mxu0 0.0
      %4382 = vmatpush1.msra.mxu0 0.0
      %4383 = vmatprep.mubr.f32.mxu0 0.0
      %4384 = vmatmul.mubr.f32.gmra.mrb[0].mxu0 %v4314
      %v4385 = vpop.f32.mrb[0].mxu0
      %v4386 = vadd.f32 0.0, %v4385
      %v4387 = vpop.f32.mrb[0].mxu0
      %4388 = vmatprep.mubr.f32.mxu0 0.0
      %4389 = vmatmul.mubr.f32.gmra.mrb[0].mxu0 %v4317
      %v4390 = vpop.f32.mrb[0].mxu0
      %v4391 = vadd.f32 0.0, %v4390
      %v4392 = vpop.f32.mrb[0].mxu0
      %4393 = vdwg.mxu0
      %v4394 = vadd.f32 %v4308, %v4386
      %v4395 = vadd.f32 %v4309, %v4391
      %s4396 = scalar_lea.vmem %s11, 128
      %v4397 = vld [vmem:[%s4396] sm:$0xff]
      %v4398 = vld [vmem:[%s4396 + $0x8] sm:$0xff]
      %v4400 = vsel %vm638, %v3705, 0
      %v4403 = vsel %vm638, %v3710, 0
      %4405 = vmatprep.subr.mxu0 0.0
      %4406 = vmatpush1.msra.mxu0 %v4397
      %4407 = vmatprep.subr.mxu0 0.0
      %4408 = vmatpush1.msra.mxu0 %v4398
      %4409 = vmatprep.subr.mxu0 0.0
      %4410 = vmatpush1.msra.mxu0 0.0
      %4411 = vmatprep.subr.mxu0 0.0
      %4412 = vmatpush1.msra.mxu0 0.0
      %4413 = vmatprep.subr.mxu0 0.0
      %4414 = vmatpush1.msra.mxu0 0.0
      %4415 = vmatprep.subr.mxu0 0.0
      %4416 = vmatpush1.msra.mxu0 0.0
      %4417 = vmatprep.subr.mxu0 0.0
      %4418 = vmatpush1.msra.mxu0 0.0
      %4419 = vmatprep.subr.mxu0 0.0
      %4420 = vmatpush1.msra.mxu0 0.0
      %4421 = vmatprep.subr.mxu0 0.0
      %4422 = vmatpush1.msra.mxu0 0.0
      %4423 = vmatprep.subr.mxu0 0.0
      %4424 = vmatpush1.msra.mxu0 0.0
      %4425 = vmatprep.subr.mxu0 0.0
      %4426 = vmatpush1.msra.mxu0 0.0
      %4427 = vmatprep.subr.mxu0 0.0
      %4428 = vmatpush1.msra.mxu0 0.0
      %4429 = vmatprep.subr.mxu0 0.0
      %4430 = vmatpush1.msra.mxu0 0.0
      %4431 = vmatprep.subr.mxu0 0.0
      %4432 = vmatpush1.msra.mxu0 0.0
      %4433 = vmatprep.subr.mxu0 0.0
      %4434 = vmatpush1.msra.mxu0 0.0
      %4435 = vmatprep.subr.mxu0 0.0
      %4436 = vmatpush1.msra.mxu0 0.0
      %4437 = vmatprep.subr.mxu0 0.0
      %4438 = vmatpush1.msra.mxu0 0.0
      %4439 = vmatprep.subr.mxu0 0.0
      %4440 = vmatpush1.msra.mxu0 0.0
      %4441 = vmatprep.subr.mxu0 0.0
      %4442 = vmatpush1.msra.mxu0 0.0
      %4443 = vmatprep.subr.mxu0 0.0
      %4444 = vmatpush1.msra.mxu0 0.0
      %4445 = vmatprep.subr.mxu0 0.0
      %4446 = vmatpush1.msra.mxu0 0.0
      %4447 = vmatprep.subr.mxu0 0.0
      %4448 = vmatpush1.msra.mxu0 0.0
      %4449 = vmatprep.subr.mxu0 0.0
      %4450 = vmatpush1.msra.mxu0 0.0
      %4451 = vmatprep.subr.mxu0 0.0
      %4452 = vmatpush1.msra.mxu0 0.0
      %4453 = vmatprep.subr.mxu0 0.0
      %4454 = vmatpush1.msra.mxu0 0.0
      %4455 = vmatprep.subr.mxu0 0.0
      %4456 = vmatpush1.msra.mxu0 0.0
      %4457 = vmatprep.subr.mxu0 0.0
      %4458 = vmatpush1.msra.mxu0 0.0
      %4459 = vmatprep.subr.mxu0 0.0
      %4460 = vmatpush1.msra.mxu0 0.0
      %4461 = vmatprep.subr.mxu0 0.0
      %4462 = vmatpush1.msra.mxu0 0.0
      %4463 = vmatprep.subr.mxu0 0.0
      %4464 = vmatpush1.msra.mxu0 0.0
      %4465 = vmatprep.subr.mxu0 0.0
      %4466 = vmatpush1.msra.mxu0 0.0
      %4467 = vmatprep.subr.mxu0 0.0
      %4468 = vmatpush1.msra.mxu0 0.0
      %4469 = vmatprep.mubr.f32.mxu0 0.0
      %4470 = vmatmul.mubr.f32.gmra.mrb[0].mxu0 %v4400
      %v4471 = vpop.f32.mrb[0].mxu0
      %v4472 = vadd.f32 0.0, %v4471
      %v4473 = vpop.f32.mrb[0].mxu0
      %4474 = vmatprep.mubr.f32.mxu0 0.0
      %4475 = vmatmul.mubr.f32.gmra.mrb[0].mxu0 %v4403
      %v4476 = vpop.f32.mrb[0].mxu0
      %v4477 = vadd.f32 0.0, %v4476
      %v4478 = vpop.f32.mrb[0].mxu0
      %4479 = vdwg.mxu0
      %v4480 = vadd.f32 %v4394, %v4472
      %v4481 = vadd.f32 %v4395, %v4477
      %v4482 = vld [vmem:[%s12 + $0x2] sm:$0x1]
      %v4483 = vlaneseq
      %v4484 = vshrl.u32 %v4483, 7
      %v4485 = vsub.s32 0, %v4484
      %v4486 = vrot.slane %v4482, %v4485
      %v4487 = vadd.f32 %v4480, %v4486
      %v4488 = vadd.f32 %v4481, %v4486
      %v4489 = vadd.f32 %v2614, %v4487
      %v4490 = vadd.f32 %v2615, %v4488
      %v4491 = vld [vmem:[%s13] sm:$0xff]
      %v4492 = vld [vmem:[%s13 + $0x8] sm:$0xff]
      %s4493 = scalar_lea.vmem %s13, 16
      %v4494 = vld [vmem:[%s4493] sm:$0xff]
      %v4495 = vld [vmem:[%s4493 + $0x8] sm:$0xff]
      %v4497 = vrot.slane %v4489, 1
      %v4498 = vsel %vm638, %v4497, 0
      %4500 = vmatprep.subr.mxu0 0.0
      %4501 = vmatpush1.msra.mxu0 %v4494
      %4502 = vmatprep.subr.mxu0 0.0
      %4503 = vmatpush1.msra.mxu0 %v4495
      %4504 = vmatprep.subr.mxu0 0.0
      %4505 = vmatpush1.msra.mxu0 0.0
      %4506 = vmatprep.subr.mxu0 0.0
      %4507 = vmatpush1.msra.mxu0 0.0
      %4508 = vmatprep.subr.mxu0 0.0
      %4509 = vmatpush1.msra.mxu0 0.0
      %4510 = vmatprep.subr.mxu0 0.0
      %4511 = vmatpush1.msra.mxu0 0.0
      %4512 = vmatprep.subr.mxu0 0.0
      %4513 = vmatpush1.msra.mxu0 0.0
      %4514 = vmatprep.subr.mxu0 0.0
      %4515 = vmatpush1.msra.mxu0 0.0
      %4516 = vmatprep.subr.mxu0 0.0
      %4517 = vmatpush1.msra.mxu0 0.0
      %4518 = vmatprep.subr.mxu0 0.0
      %4519 = vmatpush1.msra.mxu0 0.0
      %4520 = vmatprep.subr.mxu0 0.0
      %4521 = vmatpush1.msra.mxu0 0.0
      %4522 = vmatprep.subr.mxu0 0.0
      %4523 = vmatpush1.msra.mxu0 0.0
      %4524 = vmatprep.subr.mxu0 0.0
      %4525 = vmatpush1.msra.mxu0 0.0
      %4526 = vmatprep.subr.mxu0 0.0
      %4527 = vmatpush1.msra.mxu0 0.0
      %4528 = vmatprep.subr.mxu0 0.0
      %4529 = vmatpush1.msra.mxu0 0.0
      %4530 = vmatprep.subr.mxu0 0.0
      %4531 = vmatpush1.msra.mxu0 0.0
      %4532 = vmatprep.subr.mxu0 0.0
      %4533 = vmatpush1.msra.mxu0 0.0
      %4534 = vmatprep.subr.mxu0 0.0
      %4535 = vmatpush1.msra.mxu0 0.0
      %4536 = vmatprep.subr.mxu0 0.0
      %4537 = vmatpush1.msra.mxu0 0.0
      %4538 = vmatprep.subr.mxu0 0.0
      %4539 = vmatpush1.msra.mxu0 0.0
      %4540 = vmatprep.subr.mxu0 0.0
      %4541 = vmatpush1.msra.mxu0 0.0
      %4542 = vmatprep.subr.mxu0 0.0
      %4543 = vmatpush1.msra.mxu0 0.0
      %4544 = vmatprep.subr.mxu0 0.0
      %4545 = vmatpush1.msra.mxu0 0.0
      %4546 = vmatprep.subr.mxu0 0.0
      %4547 = vmatpush1.msra.mxu0 0.0
      %4548 = vmatprep.subr.mxu0 0.0
      %4549 = vmatpush1.msra.mxu0 0.0
      %4550 = vmatprep.subr.mxu0 0.0
      %4551 = vmatpush1.msra.mxu0 0.0
      %4552 = vmatprep.subr.mxu0 0.0
      %4553 = vmatpush1.msra.mxu0 0.0
      %4554 = vmatprep.subr.mxu0 0.0
      %4555 = vmatpush1.msra.mxu0 0.0
      %4556 = vmatprep.subr.mxu0 0.0
      %4557 = vmatpush1.msra.mxu0 0.0
      %4558 = vmatprep.subr.mxu0 0.0
      %4559 = vmatpush1.msra.mxu0 0.0
      %4560 = vmatprep.subr.mxu0 0.0
      %4561 = vmatpush1.msra.mxu0 0.0
      %4562 = vmatprep.subr.mxu0 0.0
      %4563 = vmatpush1.msra.mxu0 0.0
      %4564 = vmatprep.mubr.f32.mxu0 0.0
      %4565 = vmatmul.mubr.f32.gmra.mrb[0].mxu0 %v4498
      %v4566 = vpop.f32.mrb[0].mxu0
      %v4567 = vadd.f32 0.0, %v4566
      %v4568 = vpop.f32.mrb[0].mxu0
      %4569 = vdwg.mxu0
      %v4570 = vsel %vm638, %v4489, 0
      %4572 = vmatprep.subr.mxu0 0.0
      %4573 = vmatpush1.msra.mxu0 %v4491
      %4574 = vmatprep.subr.mxu0 0.0
      %4575 = vmatpush1.msra.mxu0 %v4492
      %4576 = vmatprep.subr.mxu0 0.0
      %4577 = vmatpush1.msra.mxu0 0.0
      %4578 = vmatprep.subr.mxu0 0.0
      %4579 = vmatpush1.msra.mxu0 0.0
      %4580 = vmatprep.subr.mxu0 0.0
      %4581 = vmatpush1.msra.mxu0 0.0
      %4582 = vmatprep.subr.mxu0 0.0
      %4583 = vmatpush1.msra.mxu0 0.0
      %4584 = vmatprep.subr.mxu0 0.0
      %4585 = vmatpush1.msra.mxu0 0.0
      %4586 = vmatprep.subr.mxu0 0.0
      %4587 = vmatpush1.msra.mxu0 0.0
      %4588 = vmatprep.subr.mxu0 0.0
      %4589 = vmatpush1.msra.mxu0 0.0
      %4590 = vmatprep.subr.mxu0 0.0
      %4591 = vmatpush1.msra.mxu0 0.0
      %4592 = vmatprep.subr.mxu0 0.0
      %4593 = vmatpush1.msra.mxu0 0.0
      %4594 = vmatprep.subr.mxu0 0.0
      %4595 = vmatpush1.msra.mxu0 0.0
      %4596 = vmatprep.subr.mxu0 0.0
      %4597 = vmatpush1.msra.mxu0 0.0
      %4598 = vmatprep.subr.mxu0 0.0
      %4599 = vmatpush1.msra.mxu0 0.0
      %4600 = vmatprep.subr.mxu0 0.0
      %4601 = vmatpush1.msra.mxu0 0.0
      %4602 = vmatprep.subr.mxu0 0.0
      %4603 = vmatpush1.msra.mxu0 0.0
      %4604 = vmatprep.subr.mxu0 0.0
      %4605 = vmatpush1.msra.mxu0 0.0
      %4606 = vmatprep.subr.mxu0 0.0
      %4607 = vmatpush1.msra.mxu0 0.0
      %4608 = vmatprep.subr.mxu0 0.0
      %4609 = vmatpush1.msra.mxu0 0.0
      %4610 = vmatprep.subr.mxu0 0.0
      %4611 = vmatpush1.msra.mxu0 0.0
      %4612 = vmatprep.subr.mxu0 0.0
      %4613 = vmatpush1.msra.mxu0 0.0
      %4614 = vmatprep.subr.mxu0 0.0
      %4615 = vmatpush1.msra.mxu0 0.0
      %4616 = vmatprep.subr.mxu0 0.0
      %4617 = vmatpush1.msra.mxu0 0.0
      %4618 = vmatprep.subr.mxu0 0.0
      %4619 = vmatpush1.msra.mxu0 0.0
      %4620 = vmatprep.subr.mxu0 0.0
      %4621 = vmatpush1.msra.mxu0 0.0
      %4622 = vmatprep.subr.mxu0 0.0
      %4623 = vmatpush1.msra.mxu0 0.0
      %4624 = vmatprep.subr.mxu0 0.0
      %4625 = vmatpush1.msra.mxu0 0.0
      %4626 = vmatprep.subr.mxu0 0.0
      %4627 = vmatpush1.msra.mxu0 0.0
      %4628 = vmatprep.subr.mxu0 0.0
      %4629 = vmatpush1.msra.mxu0 0.0
      %4630 = vmatprep.subr.mxu0 0.0
      %4631 = vmatpush1.msra.mxu0 0.0
      %4632 = vmatprep.subr.mxu0 0.0
      %4633 = vmatpush1.msra.mxu0 0.0
      %4634 = vmatprep.subr.mxu0 0.0
      %4635 = vmatpush1.msra.mxu0 0.0
      %4636 = vmatprep.mubr.f32.mxu0 0.0
      %4637 = vmatmul.mubr.f32.gmra.mrb[0].mxu0 %v4570
      %v4638 = vpop.f32.mrb[0].mxu0
      %v4639 = vadd.f32 %v4567, %v4638
      %v4640 = vpop.f32.mrb[0].mxu0
      %4641 = vdwg.mxu0
      %s4642 = scalar_lea.vmem %s13, 32
      %v4643 = vld [vmem:[%s4642] sm:$0xff]
      %v4644 = vld [vmem:[%s4642 + $0x8] sm:$0xff]
      %v4645 = vrot.slane %v4489, 2
      %v4646 = vsel %vm638, %v4645, 0
      %4648 = vmatprep.subr.mxu0 0.0
      %4649 = vmatpush1.msra.mxu0 %v4643
      %4650 = vmatprep.subr.mxu0 0.0
      %4651 = vmatpush1.msra.mxu0 %v4644
      %4652 = vmatprep.subr.mxu0 0.0
      %4653 = vmatpush1.msra.mxu0 0.0
      %4654 = vmatprep.subr.mxu0 0.0
      %4655 = vmatpush1.msra.mxu0 0.0
      %4656 = vmatprep.subr.mxu0 0.0
      %4657 = vmatpush1.msra.mxu0 0.0
      %4658 = vmatprep.subr.mxu0 0.0
      %4659 = vmatpush1.msra.mxu0 0.0
      %4660 = vmatprep.subr.mxu0 0.0
      %4661 = vmatpush1.msra.mxu0 0.0
      %4662 = vmatprep.subr.mxu0 0.0
      %4663 = vmatpush1.msra.mxu0 0.0
      %4664 = vmatprep.subr.mxu0 0.0
      %4665 = vmatpush1.msra.mxu0 0.0
      %4666 = vmatprep.subr.mxu0 0.0
      %4667 = vmatpush1.msra.mxu0 0.0
      %4668 = vmatprep.subr.mxu0 0.0
      %4669 = vmatpush1.msra.mxu0 0.0
      %4670 = vmatprep.subr.mxu0 0.0
      %4671 = vmatpush1.msra.mxu0 0.0
      %4672 = vmatprep.subr.mxu0 0.0
      %4673 = vmatpush1.msra.mxu0 0.0
      %4674 = vmatprep.subr.mxu0 0.0
      %4675 = vmatpush1.msra.mxu0 0.0
      %4676 = vmatprep.subr.mxu0 0.0
      %4677 = vmatpush1.msra.mxu0 0.0
      %4678 = vmatprep.subr.mxu0 0.0
      %4679 = vmatpush1.msra.mxu0 0.0
      %4680 = vmatprep.subr.mxu0 0.0
      %4681 = vmatpush1.msra.mxu0 0.0
      %4682 = vmatprep.subr.mxu0 0.0
      %4683 = vmatpush1.msra.mxu0 0.0
      %4684 = vmatprep.subr.mxu0 0.0
      %4685 = vmatpush1.msra.mxu0 0.0
      %4686 = vmatprep.subr.mxu0 0.0
      %4687 = vmatpush1.msra.mxu0 0.0
      %4688 = vmatprep.subr.mxu0 0.0
      %4689 = vmatpush1.msra.mxu0 0.0
      %4690 = vmatprep.subr.mxu0 0.0
      %4691 = vmatpush1.msra.mxu0 0.0
      %4692 = vmatprep.subr.mxu0 0.0
      %4693 = vmatpush1.msra.mxu0 0.0
      %4694 = vmatprep.subr.mxu0 0.0
      %4695 = vmatpush1.msra.mxu0 0.0
      %4696 = vmatprep.subr.mxu0 0.0
      %4697 = vmatpush1.msra.mxu0 0.0
      %4698 = vmatprep.subr.mxu0 0.0
      %4699 = vmatpush1.msra.mxu0 0.0
      %4700 = vmatprep.subr.mxu0 0.0
      %4701 = vmatpush1.msra.mxu0 0.0
      %4702 = vmatprep.subr.mxu0 0.0
      %4703 = vmatpush1.msra.mxu0 0.0
      %4704 = vmatprep.subr.mxu0 0.0
      %4705 = vmatpush1.msra.mxu0 0.0
      %4706 = vmatprep.subr.mxu0 0.0
      %4707 = vmatpush1.msra.mxu0 0.0
      %4708 = vmatprep.subr.mxu0 0.0
      %4709 = vmatpush1.msra.mxu0 0.0
      %4710 = vmatprep.subr.mxu0 0.0
      %4711 = vmatpush1.msra.mxu0 0.0
      %4712 = vmatprep.mubr.f32.mxu0 0.0
      %4713 = vmatmul.mubr.f32.gmra.mrb[0].mxu0 %v4646
      %v4714 = vpop.f32.mrb[0].mxu0
      %v4715 = vadd.f32 0.0, %v4714
      %v4716 = vpop.f32.mrb[0].mxu0
      %4717 = vdwg.mxu0
      %v4718 = vadd.f32 %v4639, %v4715
      %s4719 = scalar_lea.vmem %s13, 48
      %v4720 = vld [vmem:[%s4719] sm:$0xff]
      %v4721 = vld [vmem:[%s4719 + $0x8] sm:$0xff]
      %v4722 = vrot.slane %v4489, 3
      %v4723 = vsel %vm638, %v4722, 0
      %4725 = vmatprep.subr.mxu0 0.0
      %4726 = vmatpush1.msra.mxu0 %v4720
      %4727 = vmatprep.subr.mxu0 0.0
      %4728 = vmatpush1.msra.mxu0 %v4721
      %4729 = vmatprep.subr.mxu0 0.0
      %4730 = vmatpush1.msra.mxu0 0.0
      %4731 = vmatprep.subr.mxu0 0.0
      %4732 = vmatpush1.msra.mxu0 0.0
      %4733 = vmatprep.subr.mxu0 0.0
      %4734 = vmatpush1.msra.mxu0 0.0
      %4735 = vmatprep.subr.mxu0 0.0
      %4736 = vmatpush1.msra.mxu0 0.0
      %4737 = vmatprep.subr.mxu0 0.0
      %4738 = vmatpush1.msra.mxu0 0.0
      %4739 = vmatprep.subr.mxu0 0.0
      %4740 = vmatpush1.msra.mxu0 0.0
      %4741 = vmatprep.subr.mxu0 0.0
      %4742 = vmatpush1.msra.mxu0 0.0
      %4743 = vmatprep.subr.mxu0 0.0
      %4744 = vmatpush1.msra.mxu0 0.0
      %4745 = vmatprep.subr.mxu0 0.0
      %4746 = vmatpush1.msra.mxu0 0.0
      %4747 = vmatprep.subr.mxu0 0.0
      %4748 = vmatpush1.msra.mxu0 0.0
      %4749 = vmatprep.subr.mxu0 0.0
      %4750 = vmatpush1.msra.mxu0 0.0
      %4751 = vmatprep.subr.mxu0 0.0
      %4752 = vmatpush1.msra.mxu0 0.0
      %4753 = vmatprep.subr.mxu0 0.0
      %4754 = vmatpush1.msra.mxu0 0.0
      %4755 = vmatprep.subr.mxu0 0.0
      %4756 = vmatpush1.msra.mxu0 0.0
      %4757 = vmatprep.subr.mxu0 0.0
      %4758 = vmatpush1.msra.mxu0 0.0
      %4759 = vmatprep.subr.mxu0 0.0
      %4760 = vmatpush1.msra.mxu0 0.0
      %4761 = vmatprep.subr.mxu0 0.0
      %4762 = vmatpush1.msra.mxu0 0.0
      %4763 = vmatprep.subr.mxu0 0.0
      %4764 = vmatpush1.msra.mxu0 0.0
      %4765 = vmatprep.subr.mxu0 0.0
      %4766 = vmatpush1.msra.mxu0 0.0
      %4767 = vmatprep.subr.mxu0 0.0
      %4768 = vmatpush1.msra.mxu0 0.0
      %4769 = vmatprep.subr.mxu0 0.0
      %4770 = vmatpush1.msra.mxu0 0.0
      %4771 = vmatprep.subr.mxu0 0.0
      %4772 = vmatpush1.msra.mxu0 0.0
      %4773 = vmatprep.subr.mxu0 0.0
      %4774 = vmatpush1.msra.mxu0 0.0
      %4775 = vmatprep.subr.mxu0 0.0
      %4776 = vmatpush1.msra.mxu0 0.0
      %4777 = vmatprep.subr.mxu0 0.0
      %4778 = vmatpush1.msra.mxu0 0.0
      %4779 = vmatprep.subr.mxu0 0.0
      %4780 = vmatpush1.msra.mxu0 0.0
      %4781 = vmatprep.subr.mxu0 0.0
      %4782 = vmatpush1.msra.mxu0 0.0
      %4783 = vmatprep.subr.mxu0 0.0
      %4784 = vmatpush1.msra.mxu0 0.0
      %4785 = vmatprep.subr.mxu0 0.0
      %4786 = vmatpush1.msra.mxu0 0.0
      %4787 = vmatprep.subr.mxu0 0.0
      %4788 = vmatpush1.msra.mxu0 0.0
      %4789 = vmatprep.mubr.f32.mxu0 0.0
      %4790 = vmatmul.mubr.f32.gmra.mrb[0].mxu0 %v4723
      %v4791 = vpop.f32.mrb[0].mxu0
      %v4792 = vadd.f32 0.0, %v4791
      %v4793 = vpop.f32.mrb[0].mxu0
      %4794 = vdwg.mxu0
      %v4795 = vadd.f32 %v4718, %v4792
      %s4796 = scalar_lea.vmem %s13, 64
      %v4797 = vld [vmem:[%s4796] sm:$0xff]
      %v4798 = vld [vmem:[%s4796 + $0x8] sm:$0xff]
      %v4799 = vrot.slane %v4489, 4
      %v4800 = vsel %vm638, %v4799, 0
      %4802 = vmatprep.subr.mxu0 0.0
      %4803 = vmatpush1.msra.mxu0 %v4797
      %4804 = vmatprep.subr.mxu0 0.0
      %4805 = vmatpush1.msra.mxu0 %v4798
      %4806 = vmatprep.subr.mxu0 0.0
      %4807 = vmatpush1.msra.mxu0 0.0
      %4808 = vmatprep.subr.mxu0 0.0
      %4809 = vmatpush1.msra.mxu0 0.0
      %4810 = vmatprep.subr.mxu0 0.0
      %4811 = vmatpush1.msra.mxu0 0.0
      %4812 = vmatprep.subr.mxu0 0.0
      %4813 = vmatpush1.msra.mxu0 0.0
      %4814 = vmatprep.subr.mxu0 0.0
      %4815 = vmatpush1.msra.mxu0 0.0
      %4816 = vmatprep.subr.mxu0 0.0
      %4817 = vmatpush1.msra.mxu0 0.0
      %4818 = vmatprep.subr.mxu0 0.0
      %4819 = vmatpush1.msra.mxu0 0.0
      %4820 = vmatprep.subr.mxu0 0.0
      %4821 = vmatpush1.msra.mxu0 0.0
      %4822 = vmatprep.subr.mxu0 0.0
      %4823 = vmatpush1.msra.mxu0 0.0
      %4824 = vmatprep.subr.mxu0 0.0
      %4825 = vmatpush1.msra.mxu0 0.0
      %4826 = vmatprep.subr.mxu0 0.0
      %4827 = vmatpush1.msra.mxu0 0.0
      %4828 = vmatprep.subr.mxu0 0.0
      %4829 = vmatpush1.msra.mxu0 0.0
      %4830 = vmatprep.subr.mxu0 0.0
      %4831 = vmatpush1.msra.mxu0 0.0
      %4832 = vmatprep.subr.mxu0 0.0
      %4833 = vmatpush1.msra.mxu0 0.0
      %4834 = vmatprep.subr.mxu0 0.0
      %4835 = vmatpush1.msra.mxu0 0.0
      %4836 = vmatprep.subr.mxu0 0.0
      %4837 = vmatpush1.msra.mxu0 0.0
      %4838 = vmatprep.subr.mxu0 0.0
      %4839 = vmatpush1.msra.mxu0 0.0
      %4840 = vmatprep.subr.mxu0 0.0
      %4841 = vmatpush1.msra.mxu0 0.0
      %4842 = vmatprep.subr.mxu0 0.0
      %4843 = vmatpush1.msra.mxu0 0.0
      %4844 = vmatprep.subr.mxu0 0.0
      %4845 = vmatpush1.msra.mxu0 0.0
      %4846 = vmatprep.subr.mxu0 0.0
      %4847 = vmatpush1.msra.mxu0 0.0
      %4848 = vmatprep.subr.mxu0 0.0
      %4849 = vmatpush1.msra.mxu0 0.0
      %4850 = vmatprep.subr.mxu0 0.0
      %4851 = vmatpush1.msra.mxu0 0.0
      %4852 = vmatprep.subr.mxu0 0.0
      %4853 = vmatpush1.msra.mxu0 0.0
      %4854 = vmatprep.subr.mxu0 0.0
      %4855 = vmatpush1.msra.mxu0 0.0
      %4856 = vmatprep.subr.mxu0 0.0
      %4857 = vmatpush1.msra.mxu0 0.0
      %4858 = vmatprep.subr.mxu0 0.0
      %4859 = vmatpush1.msra.mxu0 0.0
      %4860 = vmatprep.subr.mxu0 0.0
      %4861 = vmatpush1.msra.mxu0 0.0
      %4862 = vmatprep.subr.mxu0 0.0
      %4863 = vmatpush1.msra.mxu0 0.0
      %4864 = vmatprep.subr.mxu0 0.0
      %4865 = vmatpush1.msra.mxu0 0.0
      %4866 = vmatprep.mubr.f32.mxu0 0.0
      %4867 = vmatmul.mubr.f32.gmra.mrb[0].mxu0 %v4800
      %v4868 = vpop.f32.mrb[0].mxu0
      %v4869 = vadd.f32 0.0, %v4868
      %v4870 = vpop.f32.mrb[0].mxu0
      %4871 = vdwg.mxu0
      %v4872 = vadd.f32 %v4795, %v4869
      %s4873 = scalar_lea.vmem %s13, 80
      %v4874 = vld [vmem:[%s4873] sm:$0xff]
      %v4875 = vld [vmem:[%s4873 + $0x8] sm:$0xff]
      %v4876 = vrot.slane %v4489, 5
      %v4877 = vsel %vm638, %v4876, 0
      %4879 = vmatprep.subr.mxu0 0.0
      %4880 = vmatpush1.msra.mxu0 %v4874
      %4881 = vmatprep.subr.mxu0 0.0
      %4882 = vmatpush1.msra.mxu0 %v4875
      %4883 = vmatprep.subr.mxu0 0.0
      %4884 = vmatpush1.msra.mxu0 0.0
      %4885 = vmatprep.subr.mxu0 0.0
      %4886 = vmatpush1.msra.mxu0 0.0
      %4887 = vmatprep.subr.mxu0 0.0
      %4888 = vmatpush1.msra.mxu0 0.0
      %4889 = vmatprep.subr.mxu0 0.0
      %4890 = vmatpush1.msra.mxu0 0.0
      %4891 = vmatprep.subr.mxu0 0.0
      %4892 = vmatpush1.msra.mxu0 0.0
      %4893 = vmatprep.subr.mxu0 0.0
      %4894 = vmatpush1.msra.mxu0 0.0
      %4895 = vmatprep.subr.mxu0 0.0
      %4896 = vmatpush1.msra.mxu0 0.0
      %4897 = vmatprep.subr.mxu0 0.0
      %4898 = vmatpush1.msra.mxu0 0.0
      %4899 = vmatprep.subr.mxu0 0.0
      %4900 = vmatpush1.msra.mxu0 0.0
      %4901 = vmatprep.subr.mxu0 0.0
      %4902 = vmatpush1.msra.mxu0 0.0
      %4903 = vmatprep.subr.mxu0 0.0
      %4904 = vmatpush1.msra.mxu0 0.0
      %4905 = vmatprep.subr.mxu0 0.0
      %4906 = vmatpush1.msra.mxu0 0.0
      %4907 = vmatprep.subr.mxu0 0.0
      %4908 = vmatpush1.msra.mxu0 0.0
      %4909 = vmatprep.subr.mxu0 0.0
      %4910 = vmatpush1.msra.mxu0 0.0
      %4911 = vmatprep.subr.mxu0 0.0
      %4912 = vmatpush1.msra.mxu0 0.0
      %4913 = vmatprep.subr.mxu0 0.0
      %4914 = vmatpush1.msra.mxu0 0.0
      %4915 = vmatprep.subr.mxu0 0.0
      %4916 = vmatpush1.msra.mxu0 0.0
      %4917 = vmatprep.subr.mxu0 0.0
      %4918 = vmatpush1.msra.mxu0 0.0
      %4919 = vmatprep.subr.mxu0 0.0
      %4920 = vmatpush1.msra.mxu0 0.0
      %4921 = vmatprep.subr.mxu0 0.0
      %4922 = vmatpush1.msra.mxu0 0.0
      %4923 = vmatprep.subr.mxu0 0.0
      %4924 = vmatpush1.msra.mxu0 0.0
      %4925 = vmatprep.subr.mxu0 0.0
      %4926 = vmatpush1.msra.mxu0 0.0
      %4927 = vmatprep.subr.mxu0 0.0
      %4928 = vmatpush1.msra.mxu0 0.0
      %4929 = vmatprep.subr.mxu0 0.0
      %4930 = vmatpush1.msra.mxu0 0.0
      %4931 = vmatprep.subr.mxu0 0.0
      %4932 = vmatpush1.msra.mxu0 0.0
      %4933 = vmatprep.subr.mxu0 0.0
      %4934 = vmatpush1.msra.mxu0 0.0
      %4935 = vmatprep.subr.mxu0 0.0
      %4936 = vmatpush1.msra.mxu0 0.0
      %4937 = vmatprep.subr.mxu0 0.0
      %4938 = vmatpush1.msra.mxu0 0.0
      %4939 = vmatprep.subr.mxu0 0.0
      %4940 = vmatpush1.msra.mxu0 0.0
      %4941 = vmatprep.subr.mxu0 0.0
      %4942 = vmatpush1.msra.mxu0 0.0
      %4943 = vmatprep.mubr.f32.mxu0 0.0
      %4944 = vmatmul.mubr.f32.gmra.mrb[0].mxu0 %v4877
      %v4945 = vpop.f32.mrb[0].mxu0
      %v4946 = vadd.f32 0.0, %v4945
      %v4947 = vpop.f32.mrb[0].mxu0
      %4948 = vdwg.mxu0
      %v4949 = vadd.f32 %v4872, %v4946
      %s4950 = scalar_lea.vmem %s13, 96
      %v4951 = vld [vmem:[%s4950] sm:$0xff]
      %v4952 = vld [vmem:[%s4950 + $0x8] sm:$0xff]
      %v4953 = vrot.slane %v4489, 6
      %v4954 = vsel %vm638, %v4953, 0
      %4956 = vmatprep.subr.mxu0 0.0
      %4957 = vmatpush1.msra.mxu0 %v4951
      %4958 = vmatprep.subr.mxu0 0.0
      %4959 = vmatpush1.msra.mxu0 %v4952
      %4960 = vmatprep.subr.mxu0 0.0
      %4961 = vmatpush1.msra.mxu0 0.0
      %4962 = vmatprep.subr.mxu0 0.0
      %4963 = vmatpush1.msra.mxu0 0.0
      %4964 = vmatprep.subr.mxu0 0.0
      %4965 = vmatpush1.msra.mxu0 0.0
      %4966 = vmatprep.subr.mxu0 0.0
      %4967 = vmatpush1.msra.mxu0 0.0
      %4968 = vmatprep.subr.mxu0 0.0
      %4969 = vmatpush1.msra.mxu0 0.0
      %4970 = vmatprep.subr.mxu0 0.0
      %4971 = vmatpush1.msra.mxu0 0.0
      %4972 = vmatprep.subr.mxu0 0.0
      %4973 = vmatpush1.msra.mxu0 0.0
      %4974 = vmatprep.subr.mxu0 0.0
      %4975 = vmatpush1.msra.mxu0 0.0
      %4976 = vmatprep.subr.mxu0 0.0
      %4977 = vmatpush1.msra.mxu0 0.0
      %4978 = vmatprep.subr.mxu0 0.0
      %4979 = vmatpush1.msra.mxu0 0.0
      %4980 = vmatprep.subr.mxu0 0.0
      %4981 = vmatpush1.msra.mxu0 0.0
      %4982 = vmatprep.subr.mxu0 0.0
      %4983 = vmatpush1.msra.mxu0 0.0
      %4984 = vmatprep.subr.mxu0 0.0
      %4985 = vmatpush1.msra.mxu0 0.0
      %4986 = vmatprep.subr.mxu0 0.0
      %4987 = vmatpush1.msra.mxu0 0.0
      %4988 = vmatprep.subr.mxu0 0.0
      %4989 = vmatpush1.msra.mxu0 0.0
      %4990 = vmatprep.subr.mxu0 0.0
      %4991 = vmatpush1.msra.mxu0 0.0
      %4992 = vmatprep.subr.mxu0 0.0
      %4993 = vmatpush1.msra.mxu0 0.0
      %4994 = vmatprep.subr.mxu0 0.0
      %4995 = vmatpush1.msra.mxu0 0.0
      %4996 = vmatprep.subr.mxu0 0.0
      %4997 = vmatpush1.msra.mxu0 0.0
      %4998 = vmatprep.subr.mxu0 0.0
      %4999 = vmatpush1.msra.mxu0 0.0
      %5000 = vmatprep.subr.mxu0 0.0
      %5001 = vmatpush1.msra.mxu0 0.0
      %5002 = vmatprep.subr.mxu0 0.0
      %5003 = vmatpush1.msra.mxu0 0.0
      %5004 = vmatprep.subr.mxu0 0.0
      %5005 = vmatpush1.msra.mxu0 0.0
      %5006 = vmatprep.subr.mxu0 0.0
      %5007 = vmatpush1.msra.mxu0 0.0
      %5008 = vmatprep.subr.mxu0 0.0
      %5009 = vmatpush1.msra.mxu0 0.0
      %5010 = vmatprep.subr.mxu0 0.0
      %5011 = vmatpush1.msra.mxu0 0.0
      %5012 = vmatprep.subr.mxu0 0.0
      %5013 = vmatpush1.msra.mxu0 0.0
      %5014 = vmatprep.subr.mxu0 0.0
      %5015 = vmatpush1.msra.mxu0 0.0
      %5016 = vmatprep.subr.mxu0 0.0
      %5017 = vmatpush1.msra.mxu0 0.0
      %5018 = vmatprep.subr.mxu0 0.0
      %5019 = vmatpush1.msra.mxu0 0.0
      %5020 = vmatprep.mubr.f32.mxu0 0.0
      %5021 = vmatmul.mubr.f32.gmra.mrb[0].mxu0 %v4954
      %v5022 = vpop.f32.mrb[0].mxu0
      %v5023 = vadd.f32 0.0, %v5022
      %v5024 = vpop.f32.mrb[0].mxu0
      %5025 = vdwg.mxu0
      %v5026 = vadd.f32 %v4949, %v5023
      %s5027 = scalar_lea.vmem %s13, 112
      %v5028 = vld [vmem:[%s5027] sm:$0xff]
      %v5029 = vld [vmem:[%s5027 + $0x8] sm:$0xff]
      %v5030 = vrot.slane %v4489, 7
      %v5031 = vsel %vm638, %v5030, 0
      %5033 = vmatprep.subr.mxu0 0.0
      %5034 = vmatpush1.msra.mxu0 %v5028
      %5035 = vmatprep.subr.mxu0 0.0
      %5036 = vmatpush1.msra.mxu0 %v5029
      %5037 = vmatprep.subr.mxu0 0.0
      %5038 = vmatpush1.msra.mxu0 0.0
      %5039 = vmatprep.subr.mxu0 0.0
      %5040 = vmatpush1.msra.mxu0 0.0
      %5041 = vmatprep.subr.mxu0 0.0
      %5042 = vmatpush1.msra.mxu0 0.0
      %5043 = vmatprep.subr.mxu0 0.0
      %5044 = vmatpush1.msra.mxu0 0.0
      %5045 = vmatprep.subr.mxu0 0.0
      %5046 = vmatpush1.msra.mxu0 0.0
      %5047 = vmatprep.subr.mxu0 0.0
      %5048 = vmatpush1.msra.mxu0 0.0
      %5049 = vmatprep.subr.mxu0 0.0
      %5050 = vmatpush1.msra.mxu0 0.0
      %5051 = vmatprep.subr.mxu0 0.0
      %5052 = vmatpush1.msra.mxu0 0.0
      %5053 = vmatprep.subr.mxu0 0.0
      %5054 = vmatpush1.msra.mxu0 0.0
      %5055 = vmatprep.subr.mxu0 0.0
      %5056 = vmatpush1.msra.mxu0 0.0
      %5057 = vmatprep.subr.mxu0 0.0
      %5058 = vmatpush1.msra.mxu0 0.0
      %5059 = vmatprep.subr.mxu0 0.0
      %5060 = vmatpush1.msra.mxu0 0.0
      %5061 = vmatprep.subr.mxu0 0.0
      %5062 = vmatpush1.msra.mxu0 0.0
      %5063 = vmatprep.subr.mxu0 0.0
      %5064 = vmatpush1.msra.mxu0 0.0
      %5065 = vmatprep.subr.mxu0 0.0
      %5066 = vmatpush1.msra.mxu0 0.0
      %5067 = vmatprep.subr.mxu0 0.0
      %5068 = vmatpush1.msra.mxu0 0.0
      %5069 = vmatprep.subr.mxu0 0.0
      %5070 = vmatpush1.msra.mxu0 0.0
      %5071 = vmatprep.subr.mxu0 0.0
      %5072 = vmatpush1.msra.mxu0 0.0
      %5073 = vmatprep.subr.mxu0 0.0
      %5074 = vmatpush1.msra.mxu0 0.0
      %5075 = vmatprep.subr.mxu0 0.0
      %5076 = vmatpush1.msra.mxu0 0.0
      %5077 = vmatprep.subr.mxu0 0.0
      %5078 = vmatpush1.msra.mxu0 0.0
      %5079 = vmatprep.subr.mxu0 0.0
      %5080 = vmatpush1.msra.mxu0 0.0
      %5081 = vmatprep.subr.mxu0 0.0
      %5082 = vmatpush1.msra.mxu0 0.0
      %5083 = vmatprep.subr.mxu0 0.0
      %5084 = vmatpush1.msra.mxu0 0.0
      %5085 = vmatprep.subr.mxu0 0.0
      %5086 = vmatpush1.msra.mxu0 0.0
      %5087 = vmatprep.subr.mxu0 0.0
      %5088 = vmatpush1.msra.mxu0 0.0
      %5089 = vmatprep.subr.mxu0 0.0
      %5090 = vmatpush1.msra.mxu0 0.0
      %5091 = vmatprep.subr.mxu0 0.0
      %5092 = vmatpush1.msra.mxu0 0.0
      %5093 = vmatprep.subr.mxu0 0.0
      %5094 = vmatpush1.msra.mxu0 0.0
      %5095 = vmatprep.subr.mxu0 0.0
      %5096 = vmatpush1.msra.mxu0 0.0
      %5097 = vmatprep.mubr.f32.mxu0 0.0
      %5098 = vmatmul.mubr.f32.gmra.mrb[0].mxu0 %v5031
      %v5099 = vpop.f32.mrb[0].mxu0
      %v5100 = vadd.f32 0.0, %v5099
      %v5101 = vpop.f32.mrb[0].mxu0
      %5102 = vdwg.mxu0
      %v5103 = vadd.f32 %v5026, %v5100
      %s5104 = scalar_lea.vmem %s13, 128
      %v5105 = vld [vmem:[%s5104] sm:$0xff]
      %v5106 = vld [vmem:[%s5104 + $0x8] sm:$0xff]
      %v5108 = vsel %vm638, %v4490, 0
      %5110 = vmatprep.subr.mxu0 0.0
      %5111 = vmatpush1.msra.mxu0 %v5105
      %5112 = vmatprep.subr.mxu0 0.0
      %5113 = vmatpush1.msra.mxu0 %v5106
      %5114 = vmatprep.subr.mxu0 0.0
      %5115 = vmatpush1.msra.mxu0 0.0
      %5116 = vmatprep.subr.mxu0 0.0
      %5117 = vmatpush1.msra.mxu0 0.0
      %5118 = vmatprep.subr.mxu0 0.0
      %5119 = vmatpush1.msra.mxu0 0.0
      %5120 = vmatprep.subr.mxu0 0.0
      %5121 = vmatpush1.msra.mxu0 0.0
      %5122 = vmatprep.subr.mxu0 0.0
      %5123 = vmatpush1.msra.mxu0 0.0
      %5124 = vmatprep.subr.mxu0 0.0
      %5125 = vmatpush1.msra.mxu0 0.0
      %5126 = vmatprep.subr.mxu0 0.0
      %5127 = vmatpush1.msra.mxu0 0.0
      %5128 = vmatprep.subr.mxu0 0.0
      %5129 = vmatpush1.msra.mxu0 0.0
      %5130 = vmatprep.subr.mxu0 0.0
      %5131 = vmatpush1.msra.mxu0 0.0
      %5132 = vmatprep.subr.mxu0 0.0
      %5133 = vmatpush1.msra.mxu0 0.0
      %5134 = vmatprep.subr.mxu0 0.0
      %5135 = vmatpush1.msra.mxu0 0.0
      %5136 = vmatprep.subr.mxu0 0.0
      %5137 = vmatpush1.msra.mxu0 0.0
      %5138 = vmatprep.subr.mxu0 0.0
      %5139 = vmatpush1.msra.mxu0 0.0
      %5140 = vmatprep.subr.mxu0 0.0
      %5141 = vmatpush1.msra.mxu0 0.0
      %5142 = vmatprep.subr.mxu0 0.0
      %5143 = vmatpush1.msra.mxu0 0.0
      %5144 = vmatprep.subr.mxu0 0.0
      %5145 = vmatpush1.msra.mxu0 0.0
      %5146 = vmatprep.subr.mxu0 0.0
      %5147 = vmatpush1.msra.mxu0 0.0
      %5148 = vmatprep.subr.mxu0 0.0
      %5149 = vmatpush1.msra.mxu0 0.0
      %5150 = vmatprep.subr.mxu0 0.0
      %5151 = vmatpush1.msra.mxu0 0.0
      %5152 = vmatprep.subr.mxu0 0.0
      %5153 = vmatpush1.msra.mxu0 0.0
      %5154 = vmatprep.subr.mxu0 0.0
      %5155 = vmatpush1.msra.mxu0 0.0
      %5156 = vmatprep.subr.mxu0 0.0
      %5157 = vmatpush1.msra.mxu0 0.0
      %5158 = vmatprep.subr.mxu0 0.0
      %5159 = vmatpush1.msra.mxu0 0.0
      %5160 = vmatprep.subr.mxu0 0.0
      %5161 = vmatpush1.msra.mxu0 0.0
      %5162 = vmatprep.subr.mxu0 0.0
      %5163 = vmatpush1.msra.mxu0 0.0
      %5164 = vmatprep.subr.mxu0 0.0
      %5165 = vmatpush1.msra.mxu0 0.0
      %5166 = vmatprep.subr.mxu0 0.0
      %5167 = vmatpush1.msra.mxu0 0.0
      %5168 = vmatprep.subr.mxu0 0.0
      %5169 = vmatpush1.msra.mxu0 0.0
      %5170 = vmatprep.subr.mxu0 0.0
      %5171 = vmatpush1.msra.mxu0 0.0
      %5172 = vmatprep.subr.mxu0 0.0
      %5173 = vmatpush1.msra.mxu0 0.0
      %5174 = vmatprep.mubr.f32.mxu0 0.0
      %5175 = vmatmul.mubr.f32.gmra.mrb[0].mxu0 %v5108
      %v5176 = vpop.f32.mrb[0].mxu0
      %v5177 = vadd.f32 0.0, %v5176
      %v5178 = vpop.f32.mrb[0].mxu0
      %5179 = vdwg.mxu0
      %v5180 = vadd.f32 %v5103, %v5177
      %s5181 = scalar_lea.vmem %s13, 144
      %v5182 = vld [vmem:[%s5181] sm:$0xff]
      %v5183 = vld [vmem:[%s5181 + $0x8] sm:$0xff]
      %v5184 = vrot.slane %v4490, 1
      %v5185 = vsel %vm638, %v5184, 0
      %5187 = vmatprep.subr.mxu0 0.0
      %5188 = vmatpush1.msra.mxu0 %v5182
      %5189 = vmatprep.subr.mxu0 0.0
      %5190 = vmatpush1.msra.mxu0 %v5183
      %5191 = vmatprep.subr.mxu0 0.0
      %5192 = vmatpush1.msra.mxu0 0.0
      %5193 = vmatprep.subr.mxu0 0.0
      %5194 = vmatpush1.msra.mxu0 0.0
      %5195 = vmatprep.subr.mxu0 0.0
      %5196 = vmatpush1.msra.mxu0 0.0
      %5197 = vmatprep.subr.mxu0 0.0
      %5198 = vmatpush1.msra.mxu0 0.0
      %5199 = vmatprep.subr.mxu0 0.0
      %5200 = vmatpush1.msra.mxu0 0.0
      %5201 = vmatprep.subr.mxu0 0.0
      %5202 = vmatpush1.msra.mxu0 0.0
      %5203 = vmatprep.subr.mxu0 0.0
      %5204 = vmatpush1.msra.mxu0 0.0
      %5205 = vmatprep.subr.mxu0 0.0
      %5206 = vmatpush1.msra.mxu0 0.0
      %5207 = vmatprep.subr.mxu0 0.0
      %5208 = vmatpush1.msra.mxu0 0.0
      %5209 = vmatprep.subr.mxu0 0.0
      %5210 = vmatpush1.msra.mxu0 0.0
      %5211 = vmatprep.subr.mxu0 0.0
      %5212 = vmatpush1.msra.mxu0 0.0
      %5213 = vmatprep.subr.mxu0 0.0
      %5214 = vmatpush1.msra.mxu0 0.0
      %5215 = vmatprep.subr.mxu0 0.0
      %5216 = vmatpush1.msra.mxu0 0.0
      %5217 = vmatprep.subr.mxu0 0.0
      %5218 = vmatpush1.msra.mxu0 0.0
      %5219 = vmatprep.subr.mxu0 0.0
      %5220 = vmatpush1.msra.mxu0 0.0
      %5221 = vmatprep.subr.mxu0 0.0
      %5222 = vmatpush1.msra.mxu0 0.0
      %5223 = vmatprep.subr.mxu0 0.0
      %5224 = vmatpush1.msra.mxu0 0.0
      %5225 = vmatprep.subr.mxu0 0.0
      %5226 = vmatpush1.msra.mxu0 0.0
      %5227 = vmatprep.subr.mxu0 0.0
      %5228 = vmatpush1.msra.mxu0 0.0
      %5229 = vmatprep.subr.mxu0 0.0
      %5230 = vmatpush1.msra.mxu0 0.0
      %5231 = vmatprep.subr.mxu0 0.0
      %5232 = vmatpush1.msra.mxu0 0.0
      %5233 = vmatprep.subr.mxu0 0.0
      %5234 = vmatpush1.msra.mxu0 0.0
      %5235 = vmatprep.subr.mxu0 0.0
      %5236 = vmatpush1.msra.mxu0 0.0
      %5237 = vmatprep.subr.mxu0 0.0
      %5238 = vmatpush1.msra.mxu0 0.0
      %5239 = vmatprep.subr.mxu0 0.0
      %5240 = vmatpush1.msra.mxu0 0.0
      %5241 = vmatprep.subr.mxu0 0.0
      %5242 = vmatpush1.msra.mxu0 0.0
      %5243 = vmatprep.subr.mxu0 0.0
      %5244 = vmatpush1.msra.mxu0 0.0
      %5245 = vmatprep.subr.mxu0 0.0
      %5246 = vmatpush1.msra.mxu0 0.0
      %5247 = vmatprep.subr.mxu0 0.0
      %5248 = vmatpush1.msra.mxu0 0.0
      %5249 = vmatprep.subr.mxu0 0.0
      %5250 = vmatpush1.msra.mxu0 0.0
      %5251 = vmatprep.mubr.f32.mxu0 0.0
      %5252 = vmatmul.mubr.f32.gmra.mrb[0].mxu0 %v5185
      %v5253 = vpop.f32.mrb[0].mxu0
      %v5254 = vadd.f32 0.0, %v5253
      %v5255 = vpop.f32.mrb[0].mxu0
      %5256 = vdwg.mxu0
      %v5257 = vadd.f32 %v5180, %v5254
      %s5258 = scalar_lea.vmem %s13, 160
      %v5259 = vld [vmem:[%s5258] sm:$0xff]
      %v5260 = vld [vmem:[%s5258 + $0x8] sm:$0xff]
      %v5261 = vrot.slane %v4490, 2
      %v5262 = vsel %vm638, %v5261, 0
      %5264 = vmatprep.subr.mxu0 0.0
      %5265 = vmatpush1.msra.mxu0 %v5259
      %5266 = vmatprep.subr.mxu0 0.0
      %5267 = vmatpush1.msra.mxu0 %v5260
      %5268 = vmatprep.subr.mxu0 0.0
      %5269 = vmatpush1.msra.mxu0 0.0
      %5270 = vmatprep.subr.mxu0 0.0
      %5271 = vmatpush1.msra.mxu0 0.0
      %5272 = vmatprep.subr.mxu0 0.0
      %5273 = vmatpush1.msra.mxu0 0.0
      %5274 = vmatprep.subr.mxu0 0.0
      %5275 = vmatpush1.msra.mxu0 0.0
      %5276 = vmatprep.subr.mxu0 0.0
      %5277 = vmatpush1.msra.mxu0 0.0
      %5278 = vmatprep.subr.mxu0 0.0
      %5279 = vmatpush1.msra.mxu0 0.0
      %5280 = vmatprep.subr.mxu0 0.0
      %5281 = vmatpush1.msra.mxu0 0.0
      %5282 = vmatprep.subr.mxu0 0.0
      %5283 = vmatpush1.msra.mxu0 0.0
      %5284 = vmatprep.subr.mxu0 0.0
      %5285 = vmatpush1.msra.mxu0 0.0
      %5286 = vmatprep.subr.mxu0 0.0
      %5287 = vmatpush1.msra.mxu0 0.0
      %5288 = vmatprep.subr.mxu0 0.0
      %5289 = vmatpush1.msra.mxu0 0.0
      %5290 = vmatprep.subr.mxu0 0.0
      %5291 = vmatpush1.msra.mxu0 0.0
      %5292 = vmatprep.subr.mxu0 0.0
      %5293 = vmatpush1.msra.mxu0 0.0
      %5294 = vmatprep.subr.mxu0 0.0
      %5295 = vmatpush1.msra.mxu0 0.0
      %5296 = vmatprep.subr.mxu0 0.0
      %5297 = vmatpush1.msra.mxu0 0.0
      %5298 = vmatprep.subr.mxu0 0.0
      %5299 = vmatpush1.msra.mxu0 0.0
      %5300 = vmatprep.subr.mxu0 0.0
      %5301 = vmatpush1.msra.mxu0 0.0
      %5302 = vmatprep.subr.mxu0 0.0
      %5303 = vmatpush1.msra.mxu0 0.0
      %5304 = vmatprep.subr.mxu0 0.0
      %5305 = vmatpush1.msra.mxu0 0.0
      %5306 = vmatprep.subr.mxu0 0.0
      %5307 = vmatpush1.msra.mxu0 0.0
      %5308 = vmatprep.subr.mxu0 0.0
      %5309 = vmatpush1.msra.mxu0 0.0
      %5310 = vmatprep.subr.mxu0 0.0
      %5311 = vmatpush1.msra.mxu0 0.0
      %5312 = vmatprep.subr.mxu0 0.0
      %5313 = vmatpush1.msra.mxu0 0.0
      %5314 = vmatprep.subr.mxu0 0.0
      %5315 = vmatpush1.msra.mxu0 0.0
      %5316 = vmatprep.subr.mxu0 0.0
      %5317 = vmatpush1.msra.mxu0 0.0
      %5318 = vmatprep.subr.mxu0 0.0
      %5319 = vmatpush1.msra.mxu0 0.0
      %5320 = vmatprep.subr.mxu0 0.0
      %5321 = vmatpush1.msra.mxu0 0.0
      %5322 = vmatprep.subr.mxu0 0.0
      %5323 = vmatpush1.msra.mxu0 0.0
      %5324 = vmatprep.subr.mxu0 0.0
      %5325 = vmatpush1.msra.mxu0 0.0
      %5326 = vmatprep.subr.mxu0 0.0
      %5327 = vmatpush1.msra.mxu0 0.0
      %5328 = vmatprep.mubr.f32.mxu0 0.0
      %5329 = vmatmul.mubr.f32.gmra.mrb[0].mxu0 %v5262
      %v5330 = vpop.f32.mrb[0].mxu0
      %v5331 = vadd.f32 0.0, %v5330
      %v5332 = vpop.f32.mrb[0].mxu0
      %5333 = vdwg.mxu0
      %v5334 = vadd.f32 %v5257, %v5331
      %s5335 = scalar_lea.vmem %s13, 176
      %v5336 = vld [vmem:[%s5335] sm:$0xff]
      %v5337 = vld [vmem:[%s5335 + $0x8] sm:$0xff]
      %v5338 = vrot.slane %v4490, 3
      %v5339 = vsel %vm638, %v5338, 0
      %5341 = vmatprep.subr.mxu0 0.0
      %5342 = vmatpush1.msra.mxu0 %v5336
      %5343 = vmatprep.subr.mxu0 0.0
      %5344 = vmatpush1.msra.mxu0 %v5337
      %5345 = vmatprep.subr.mxu0 0.0
      %5346 = vmatpush1.msra.mxu0 0.0
      %5347 = vmatprep.subr.mxu0 0.0
      %5348 = vmatpush1.msra.mxu0 0.0
      %5349 = vmatprep.subr.mxu0 0.0
      %5350 = vmatpush1.msra.mxu0 0.0
      %5351 = vmatprep.subr.mxu0 0.0
      %5352 = vmatpush1.msra.mxu0 0.0
      %5353 = vmatprep.subr.mxu0 0.0
      %5354 = vmatpush1.msra.mxu0 0.0
      %5355 = vmatprep.subr.mxu0 0.0
      %5356 = vmatpush1.msra.mxu0 0.0
      %5357 = vmatprep.subr.mxu0 0.0
      %5358 = vmatpush1.msra.mxu0 0.0
      %5359 = vmatprep.subr.mxu0 0.0
      %5360 = vmatpush1.msra.mxu0 0.0
      %5361 = vmatprep.subr.mxu0 0.0
      %5362 = vmatpush1.msra.mxu0 0.0
      %5363 = vmatprep.subr.mxu0 0.0
      %5364 = vmatpush1.msra.mxu0 0.0
      %5365 = vmatprep.subr.mxu0 0.0
      %5366 = vmatpush1.msra.mxu0 0.0
      %5367 = vmatprep.subr.mxu0 0.0
      %5368 = vmatpush1.msra.mxu0 0.0
      %5369 = vmatprep.subr.mxu0 0.0
      %5370 = vmatpush1.msra.mxu0 0.0
      %5371 = vmatprep.subr.mxu0 0.0
      %5372 = vmatpush1.msra.mxu0 0.0
      %5373 = vmatprep.subr.mxu0 0.0
      %5374 = vmatpush1.msra.mxu0 0.0
      %5375 = vmatprep.subr.mxu0 0.0
      %5376 = vmatpush1.msra.mxu0 0.0
      %5377 = vmatprep.subr.mxu0 0.0
      %5378 = vmatpush1.msra.mxu0 0.0
      %5379 = vmatprep.subr.mxu0 0.0
      %5380 = vmatpush1.msra.mxu0 0.0
      %5381 = vmatprep.subr.mxu0 0.0
      %5382 = vmatpush1.msra.mxu0 0.0
      %5383 = vmatprep.subr.mxu0 0.0
      %5384 = vmatpush1.msra.mxu0 0.0
      %5385 = vmatprep.subr.mxu0 0.0
      %5386 = vmatpush1.msra.mxu0 0.0
      %5387 = vmatprep.subr.mxu0 0.0
      %5388 = vmatpush1.msra.mxu0 0.0
      %5389 = vmatprep.subr.mxu0 0.0
      %5390 = vmatpush1.msra.mxu0 0.0
      %5391 = vmatprep.subr.mxu0 0.0
      %5392 = vmatpush1.msra.mxu0 0.0
      %5393 = vmatprep.subr.mxu0 0.0
      %5394 = vmatpush1.msra.mxu0 0.0
      %5395 = vmatprep.subr.mxu0 0.0
      %5396 = vmatpush1.msra.mxu0 0.0
      %5397 = vmatprep.subr.mxu0 0.0
      %5398 = vmatpush1.msra.mxu0 0.0
      %5399 = vmatprep.subr.mxu0 0.0
      %5400 = vmatpush1.msra.mxu0 0.0
      %5401 = vmatprep.subr.mxu0 0.0
      %5402 = vmatpush1.msra.mxu0 0.0
      %5403 = vmatprep.subr.mxu0 0.0
      %5404 = vmatpush1.msra.mxu0 0.0
      %5405 = vmatprep.mubr.f32.mxu0 0.0
      %5406 = vmatmul.mubr.f32.gmra.mrb[0].mxu0 %v5339
      %v5407 = vpop.f32.mrb[0].mxu0
      %v5408 = vadd.f32 0.0, %v5407
      %v5409 = vpop.f32.mrb[0].mxu0
      %5410 = vdwg.mxu0
      %v5411 = vadd.f32 %v5334, %v5408
      %s5412 = scalar_lea.vmem %s13, 192
      %v5413 = vld [vmem:[%s5412] sm:$0xff]
      %v5414 = vld [vmem:[%s5412 + $0x8] sm:$0xff]
      %v5415 = vrot.slane %v4490, 4
      %v5416 = vsel %vm638, %v5415, 0
      %5418 = vmatprep.subr.mxu0 0.0
      %5419 = vmatpush1.msra.mxu0 %v5413
      %5420 = vmatprep.subr.mxu0 0.0
      %5421 = vmatpush1.msra.mxu0 %v5414
      %5422 = vmatprep.subr.mxu0 0.0
      %5423 = vmatpush1.msra.mxu0 0.0
      %5424 = vmatprep.subr.mxu0 0.0
      %5425 = vmatpush1.msra.mxu0 0.0
      %5426 = vmatprep.subr.mxu0 0.0
      %5427 = vmatpush1.msra.mxu0 0.0
      %5428 = vmatprep.subr.mxu0 0.0
      %5429 = vmatpush1.msra.mxu0 0.0
      %5430 = vmatprep.subr.mxu0 0.0
      %5431 = vmatpush1.msra.mxu0 0.0
      %5432 = vmatprep.subr.mxu0 0.0
      %5433 = vmatpush1.msra.mxu0 0.0
      %5434 = vmatprep.subr.mxu0 0.0
      %5435 = vmatpush1.msra.mxu0 0.0
      %5436 = vmatprep.subr.mxu0 0.0
      %5437 = vmatpush1.msra.mxu0 0.0
      %5438 = vmatprep.subr.mxu0 0.0
      %5439 = vmatpush1.msra.mxu0 0.0
      %5440 = vmatprep.subr.mxu0 0.0
      %5441 = vmatpush1.msra.mxu0 0.0
      %5442 = vmatprep.subr.mxu0 0.0
      %5443 = vmatpush1.msra.mxu0 0.0
      %5444 = vmatprep.subr.mxu0 0.0
      %5445 = vmatpush1.msra.mxu0 0.0
      %5446 = vmatprep.subr.mxu0 0.0
      %5447 = vmatpush1.msra.mxu0 0.0
      %5448 = vmatprep.subr.mxu0 0.0
      %5449 = vmatpush1.msra.mxu0 0.0
      %5450 = vmatprep.subr.mxu0 0.0
      %5451 = vmatpush1.msra.mxu0 0.0
      %5452 = vmatprep.subr.mxu0 0.0
      %5453 = vmatpush1.msra.mxu0 0.0
      %5454 = vmatprep.subr.mxu0 0.0
      %5455 = vmatpush1.msra.mxu0 0.0
      %5456 = vmatprep.subr.mxu0 0.0
      %5457 = vmatpush1.msra.mxu0 0.0
      %5458 = vmatprep.subr.mxu0 0.0
      %5459 = vmatpush1.msra.mxu0 0.0
      %5460 = vmatprep.subr.mxu0 0.0
      %5461 = vmatpush1.msra.mxu0 0.0
      %5462 = vmatprep.subr.mxu0 0.0
      %5463 = vmatpush1.msra.mxu0 0.0
      %5464 = vmatprep.subr.mxu0 0.0
      %5465 = vmatpush1.msra.mxu0 0.0
      %5466 = vmatprep.subr.mxu0 0.0
      %5467 = vmatpush1.msra.mxu0 0.0
      %5468 = vmatprep.subr.mxu0 0.0
      %5469 = vmatpush1.msra.mxu0 0.0
      %5470 = vmatprep.subr.mxu0 0.0
      %5471 = vmatpush1.msra.mxu0 0.0
      %5472 = vmatprep.subr.mxu0 0.0
      %5473 = vmatpush1.msra.mxu0 0.0
      %5474 = vmatprep.subr.mxu0 0.0
      %5475 = vmatpush1.msra.mxu0 0.0
      %5476 = vmatprep.subr.mxu0 0.0
      %5477 = vmatpush1.msra.mxu0 0.0
      %5478 = vmatprep.subr.mxu0 0.0
      %5479 = vmatpush1.msra.mxu0 0.0
      %5480 = vmatprep.subr.mxu0 0.0
      %5481 = vmatpush1.msra.mxu0 0.0
      %5482 = vmatprep.mubr.f32.mxu0 0.0
      %5483 = vmatmul.mubr.f32.gmra.mrb[0].mxu0 %v5416
      %v5484 = vpop.f32.mrb[0].mxu0
      %v5485 = vadd.f32 0.0, %v5484
      %v5486 = vpop.f32.mrb[0].mxu0
      %5487 = vdwg.mxu0
      %v5488 = vadd.f32 %v5411, %v5485
      %s5489 = scalar_lea.vmem %s13, 208
      %v5490 = vld [vmem:[%s5489] sm:$0xff]
      %v5491 = vld [vmem:[%s5489 + $0x8] sm:$0xff]
      %v5492 = vrot.slane %v4490, 5
      %v5493 = vsel %vm638, %v5492, 0
      %5495 = vmatprep.subr.mxu0 0.0
      %5496 = vmatpush1.msra.mxu0 %v5490
      %5497 = vmatprep.subr.mxu0 0.0
      %5498 = vmatpush1.msra.mxu0 %v5491
      %5499 = vmatprep.subr.mxu0 0.0
      %5500 = vmatpush1.msra.mxu0 0.0
      %5501 = vmatprep.subr.mxu0 0.0
      %5502 = vmatpush1.msra.mxu0 0.0
      %5503 = vmatprep.subr.mxu0 0.0
      %5504 = vmatpush1.msra.mxu0 0.0
      %5505 = vmatprep.subr.mxu0 0.0
      %5506 = vmatpush1.msra.mxu0 0.0
      %5507 = vmatprep.subr.mxu0 0.0
      %5508 = vmatpush1.msra.mxu0 0.0
      %5509 = vmatprep.subr.mxu0 0.0
      %5510 = vmatpush1.msra.mxu0 0.0
      %5511 = vmatprep.subr.mxu0 0.0
      %5512 = vmatpush1.msra.mxu0 0.0
      %5513 = vmatprep.subr.mxu0 0.0
      %5514 = vmatpush1.msra.mxu0 0.0
      %5515 = vmatprep.subr.mxu0 0.0
      %5516 = vmatpush1.msra.mxu0 0.0
      %5517 = vmatprep.subr.mxu0 0.0
      %5518 = vmatpush1.msra.mxu0 0.0
      %5519 = vmatprep.subr.mxu0 0.0
      %5520 = vmatpush1.msra.mxu0 0.0
      %5521 = vmatprep.subr.mxu0 0.0
      %5522 = vmatpush1.msra.mxu0 0.0
      %5523 = vmatprep.subr.mxu0 0.0
      %5524 = vmatpush1.msra.mxu0 0.0
      %5525 = vmatprep.subr.mxu0 0.0
      %5526 = vmatpush1.msra.mxu0 0.0
      %5527 = vmatprep.subr.mxu0 0.0
      %5528 = vmatpush1.msra.mxu0 0.0
      %5529 = vmatprep.subr.mxu0 0.0
      %5530 = vmatpush1.msra.mxu0 0.0
      %5531 = vmatprep.subr.mxu0 0.0
      %5532 = vmatpush1.msra.mxu0 0.0
      %5533 = vmatprep.subr.mxu0 0.0
      %5534 = vmatpush1.msra.mxu0 0.0
      %5535 = vmatprep.subr.mxu0 0.0
      %5536 = vmatpush1.msra.mxu0 0.0
      %5537 = vmatprep.subr.mxu0 0.0
      %5538 = vmatpush1.msra.mxu0 0.0
      %5539 = vmatprep.subr.mxu0 0.0
      %5540 = vmatpush1.msra.mxu0 0.0
      %5541 = vmatprep.subr.mxu0 0.0
      %5542 = vmatpush1.msra.mxu0 0.0
      %5543 = vmatprep.subr.mxu0 0.0
      %5544 = vmatpush1.msra.mxu0 0.0
      %5545 = vmatprep.subr.mxu0 0.0
      %5546 = vmatpush1.msra.mxu0 0.0
      %5547 = vmatprep.subr.mxu0 0.0
      %5548 = vmatpush1.msra.mxu0 0.0
      %5549 = vmatprep.subr.mxu0 0.0
      %5550 = vmatpush1.msra.mxu0 0.0
      %5551 = vmatprep.subr.mxu0 0.0
      %5552 = vmatpush1.msra.mxu0 0.0
      %5553 = vmatprep.subr.mxu0 0.0
      %5554 = vmatpush1.msra.mxu0 0.0
      %5555 = vmatprep.subr.mxu0 0.0
      %5556 = vmatpush1.msra.mxu0 0.0
      %5557 = vmatprep.subr.mxu0 0.0
      %5558 = vmatpush1.msra.mxu0 0.0
      %5559 = vmatprep.mubr.f32.mxu0 0.0
      %5560 = vmatmul.mubr.f32.gmra.mrb[0].mxu0 %v5493
      %v5561 = vpop.f32.mrb[0].mxu0
      %v5562 = vadd.f32 0.0, %v5561
      %v5563 = vpop.f32.mrb[0].mxu0
      %5564 = vdwg.mxu0
      %v5565 = vadd.f32 %v5488, %v5562
      %s5566 = scalar_lea.vmem %s13, 224
      %v5567 = vld [vmem:[%s5566] sm:$0xff]
      %v5568 = vld [vmem:[%s5566 + $0x8] sm:$0xff]
      %v5569 = vrot.slane %v4490, 6
      %v5570 = vsel %vm638, %v5569, 0
      %5572 = vmatprep.subr.mxu0 0.0
      %5573 = vmatpush1.msra.mxu0 %v5567
      %5574 = vmatprep.subr.mxu0 0.0
      %5575 = vmatpush1.msra.mxu0 %v5568
      %5576 = vmatprep.subr.mxu0 0.0
      %5577 = vmatpush1.msra.mxu0 0.0
      %5578 = vmatprep.subr.mxu0 0.0
      %5579 = vmatpush1.msra.mxu0 0.0
      %5580 = vmatprep.subr.mxu0 0.0
      %5581 = vmatpush1.msra.mxu0 0.0
      %5582 = vmatprep.subr.mxu0 0.0
      %5583 = vmatpush1.msra.mxu0 0.0
      %5584 = vmatprep.subr.mxu0 0.0
      %5585 = vmatpush1.msra.mxu0 0.0
      %5586 = vmatprep.subr.mxu0 0.0
      %5587 = vmatpush1.msra.mxu0 0.0
      %5588 = vmatprep.subr.mxu0 0.0
      %5589 = vmatpush1.msra.mxu0 0.0
      %5590 = vmatprep.subr.mxu0 0.0
      %5591 = vmatpush1.msra.mxu0 0.0
      %5592 = vmatprep.subr.mxu0 0.0
      %5593 = vmatpush1.msra.mxu0 0.0
      %5594 = vmatprep.subr.mxu0 0.0
      %5595 = vmatpush1.msra.mxu0 0.0
      %5596 = vmatprep.subr.mxu0 0.0
      %5597 = vmatpush1.msra.mxu0 0.0
      %5598 = vmatprep.subr.mxu0 0.0
      %5599 = vmatpush1.msra.mxu0 0.0
      %5600 = vmatprep.subr.mxu0 0.0
      %5601 = vmatpush1.msra.mxu0 0.0
      %5602 = vmatprep.subr.mxu0 0.0
      %5603 = vmatpush1.msra.mxu0 0.0
      %5604 = vmatprep.subr.mxu0 0.0
      %5605 = vmatpush1.msra.mxu0 0.0
      %5606 = vmatprep.subr.mxu0 0.0
      %5607 = vmatpush1.msra.mxu0 0.0
      %5608 = vmatprep.subr.mxu0 0.0
      %5609 = vmatpush1.msra.mxu0 0.0
      %5610 = vmatprep.subr.mxu0 0.0
      %5611 = vmatpush1.msra.mxu0 0.0
      %5612 = vmatprep.subr.mxu0 0.0
      %5613 = vmatpush1.msra.mxu0 0.0
      %5614 = vmatprep.subr.mxu0 0.0
      %5615 = vmatpush1.msra.mxu0 0.0
      %5616 = vmatprep.subr.mxu0 0.0
      %5617 = vmatpush1.msra.mxu0 0.0
      %5618 = vmatprep.subr.mxu0 0.0
      %5619 = vmatpush1.msra.mxu0 0.0
      %5620 = vmatprep.subr.mxu0 0.0
      %5621 = vmatpush1.msra.mxu0 0.0
      %5622 = vmatprep.subr.mxu0 0.0
      %5623 = vmatpush1.msra.mxu0 0.0
      %5624 = vmatprep.subr.mxu0 0.0
      %5625 = vmatpush1.msra.mxu0 0.0
      %5626 = vmatprep.subr.mxu0 0.0
      %5627 = vmatpush1.msra.mxu0 0.0
      %5628 = vmatprep.subr.mxu0 0.0
      %5629 = vmatpush1.msra.mxu0 0.0
      %5630 = vmatprep.subr.mxu0 0.0
      %5631 = vmatpush1.msra.mxu0 0.0
      %5632 = vmatprep.subr.mxu0 0.0
      %5633 = vmatpush1.msra.mxu0 0.0
      %5634 = vmatprep.subr.mxu0 0.0
      %5635 = vmatpush1.msra.mxu0 0.0
      %5636 = vmatprep.mubr.f32.mxu0 0.0
      %5637 = vmatmul.mubr.f32.gmra.mrb[0].mxu0 %v5570
      %v5638 = vpop.f32.mrb[0].mxu0
      %v5639 = vadd.f32 0.0, %v5638
      %v5640 = vpop.f32.mrb[0].mxu0
      %5641 = vdwg.mxu0
      %v5642 = vadd.f32 %v5565, %v5639
      %s5643 = scalar_lea.vmem %s13, 240
      %v5644 = vld [vmem:[%s5643] sm:$0xff]
      %v5645 = vld [vmem:[%s5643 + $0x8] sm:$0xff]
      %v5646 = vrot.slane %v4490, 7
      %v5647 = vsel %vm638, %v5646, 0
      %5649 = vmatprep.subr.mxu0 0.0
      %5650 = vmatpush1.msra.mxu0 %v5644
      %5651 = vmatprep.subr.mxu0 0.0
      %5652 = vmatpush1.msra.mxu0 %v5645
      %5653 = vmatprep.subr.mxu0 0.0
      %5654 = vmatpush1.msra.mxu0 0.0
      %5655 = vmatprep.subr.mxu0 0.0
      %5656 = vmatpush1.msra.mxu0 0.0
      %5657 = vmatprep.subr.mxu0 0.0
      %5658 = vmatpush1.msra.mxu0 0.0
      %5659 = vmatprep.subr.mxu0 0.0
      %5660 = vmatpush1.msra.mxu0 0.0
      %5661 = vmatprep.subr.mxu0 0.0
      %5662 = vmatpush1.msra.mxu0 0.0
      %5663 = vmatprep.subr.mxu0 0.0
      %5664 = vmatpush1.msra.mxu0 0.0
      %5665 = vmatprep.subr.mxu0 0.0
      %5666 = vmatpush1.msra.mxu0 0.0
      %5667 = vmatprep.subr.mxu0 0.0
      %5668 = vmatpush1.msra.mxu0 0.0
      %5669 = vmatprep.subr.mxu0 0.0
      %5670 = vmatpush1.msra.mxu0 0.0
      %5671 = vmatprep.subr.mxu0 0.0
      %5672 = vmatpush1.msra.mxu0 0.0
      %5673 = vmatprep.subr.mxu0 0.0
      %5674 = vmatpush1.msra.mxu0 0.0
      %5675 = vmatprep.subr.mxu0 0.0
      %5676 = vmatpush1.msra.mxu0 0.0
      %5677 = vmatprep.subr.mxu0 0.0
      %5678 = vmatpush1.msra.mxu0 0.0
      %5679 = vmatprep.subr.mxu0 0.0
      %5680 = vmatpush1.msra.mxu0 0.0
      %5681 = vmatprep.subr.mxu0 0.0
      %5682 = vmatpush1.msra.mxu0 0.0
      %5683 = vmatprep.subr.mxu0 0.0
      %5684 = vmatpush1.msra.mxu0 0.0
      %5685 = vmatprep.subr.mxu0 0.0
      %5686 = vmatpush1.msra.mxu0 0.0
      %5687 = vmatprep.subr.mxu0 0.0
      %5688 = vmatpush1.msra.mxu0 0.0
      %5689 = vmatprep.subr.mxu0 0.0
      %5690 = vmatpush1.msra.mxu0 0.0
      %5691 = vmatprep.subr.mxu0 0.0
      %5692 = vmatpush1.msra.mxu0 0.0
      %5693 = vmatprep.subr.mxu0 0.0
      %5694 = vmatpush1.msra.mxu0 0.0
      %5695 = vmatprep.subr.mxu0 0.0
      %5696 = vmatpush1.msra.mxu0 0.0
      %5697 = vmatprep.subr.mxu0 0.0
      %5698 = vmatpush1.msra.mxu0 0.0
      %5699 = vmatprep.subr.mxu0 0.0
      %5700 = vmatpush1.msra.mxu0 0.0
      %5701 = vmatprep.subr.mxu0 0.0
      %5702 = vmatpush1.msra.mxu0 0.0
      %5703 = vmatprep.subr.mxu0 0.0
      %5704 = vmatpush1.msra.mxu0 0.0
      %5705 = vmatprep.subr.mxu0 0.0
      %5706 = vmatpush1.msra.mxu0 0.0
      %5707 = vmatprep.subr.mxu0 0.0
      %5708 = vmatpush1.msra.mxu0 0.0
      %5709 = vmatprep.subr.mxu0 0.0
      %5710 = vmatpush1.msra.mxu0 0.0
      %5711 = vmatprep.subr.mxu0 0.0
      %5712 = vmatpush1.msra.mxu0 0.0
      %5713 = vmatprep.mubr.f32.mxu0 0.0
      %5714 = vmatmul.mubr.f32.gmra.mrb[0].mxu0 %v5647
      %v5715 = vpop.f32.mrb[0].mxu0
      %v5716 = vadd.f32 0.0, %v5715
      %v5717 = vpop.f32.mrb[0].mxu0
      %5718 = vdwg.mxu0
      %v5719 = vadd.f32 %v5642, %v5716
      %v5720 = vld [vmem:[%s14] sm:$0x1]
      %v5721 = vadd.f32 %v5719, %v5720
      %v5722 = vld [vmem:[%s14 + $0x1] sm:$0x1]
      %vm5723 = vcmp.gt.f32.partialorder %v5721, 0.0
      %v5724 = vmul.f32 %v5722, %v5721
      %v5725 = vsel %vm5723, %v5721, %v5724
      %v5726 = vld [vmem:[%s15] sm:$0xff]
      %v5727 = vld [vmem:[%s15 + $0x8] sm:$0xff]
      %v5728 = vld [vmem:[%s15 + $0x10] sm:$0xff]
      %v5729 = vld [vmem:[%s15 + $0x18] sm:$0xff]
      %v5730 = vld [vmem:[%s14 + $0x2] sm:$0x1]
      %vm5731 = vcmask 261120
      %v5733 = vsel %vm5731, %v5725, 0
      %5735 = vmatprep.subr.mxu0 0.0
      %5736 = vmatpush1.msra.mxu0 %v5726
      %5737 = vmatprep.subr.mxu0 0.0
      %5738 = vmatpush1.msra.mxu0 %v5727
      %5739 = vmatprep.subr.mxu0 0.0
      %5740 = vmatpush1.msra.mxu0 %v5728
      %5741 = vmatprep.subr.mxu0 0.0
      %5742 = vmatpush1.msra.mxu0 %v5729
      %5743 = vmatprep.subr.mxu0 0.0
      %5744 = vmatpush1.msra.mxu0 0.0
      %5745 = vmatprep.subr.mxu0 0.0
      %5746 = vmatpush1.msra.mxu0 0.0
      %5747 = vmatprep.subr.mxu0 0.0
      %5748 = vmatpush1.msra.mxu0 0.0
      %5749 = vmatprep.subr.mxu0 0.0
      %5750 = vmatpush1.msra.mxu0 0.0
      %5751 = vmatprep.subr.mxu0 0.0
      %5752 = vmatpush1.msra.mxu0 0.0
      %5753 = vmatprep.subr.mxu0 0.0
      %5754 = vmatpush1.msra.mxu0 0.0
      %5755 = vmatprep.subr.mxu0 0.0
      %5756 = vmatpush1.msra.mxu0 0.0
      %5757 = vmatprep.subr.mxu0 0.0
      %5758 = vmatpush1.msra.mxu0 0.0
      %5759 = vmatprep.subr.mxu0 0.0
      %5760 = vmatpush1.msra.mxu0 0.0
      %5761 = vmatprep.subr.mxu0 0.0
      %5762 = vmatpush1.msra.mxu0 0.0
      %5763 = vmatprep.subr.mxu0 0.0
      %5764 = vmatpush1.msra.mxu0 0.0
      %5765 = vmatprep.subr.mxu0 0.0
      %5766 = vmatpush1.msra.mxu0 0.0
      %5767 = vmatprep.subr.mxu0 0.0
      %5768 = vmatpush1.msra.mxu0 0.0
      %5769 = vmatprep.subr.mxu0 0.0
      %5770 = vmatpush1.msra.mxu0 0.0
      %5771 = vmatprep.subr.mxu0 0.0
      %5772 = vmatpush1.msra.mxu0 0.0
      %5773 = vmatprep.subr.mxu0 0.0
      %5774 = vmatpush1.msra.mxu0 0.0
      %5775 = vmatprep.subr.mxu0 0.0
      %5776 = vmatpush1.msra.mxu0 0.0
      %5777 = vmatprep.subr.mxu0 0.0
      %5778 = vmatpush1.msra.mxu0 0.0
      %5779 = vmatprep.subr.mxu0 0.0
      %5780 = vmatpush1.msra.mxu0 0.0
      %5781 = vmatprep.subr.mxu0 0.0
      %5782 = vmatpush1.msra.mxu0 0.0
      %5783 = vmatprep.subr.mxu0 0.0
      %5784 = vmatpush1.msra.mxu0 0.0
      %5785 = vmatprep.subr.mxu0 0.0
      %5786 = vmatpush1.msra.mxu0 0.0
      %5787 = vmatprep.subr.mxu0 0.0
      %5788 = vmatpush1.msra.mxu0 0.0
      %5789 = vmatprep.subr.mxu0 0.0
      %5790 = vmatpush1.msra.mxu0 0.0
      %5791 = vmatprep.subr.mxu0 0.0
      %5792 = vmatpush1.msra.mxu0 0.0
      %5793 = vmatprep.subr.mxu0 0.0
      %5794 = vmatpush1.msra.mxu0 0.0
      %5795 = vmatprep.subr.mxu0 0.0
      %5796 = vmatpush1.msra.mxu0 0.0
      %5797 = vmatprep.subr.mxu0 0.0
      %5798 = vmatpush1.msra.mxu0 0.0
      %5799 = vmatprep.mubr.f32.mxu0 0.0
      %5800 = vmatmul.mubr.f32.gmra.mrb[0].mxu0 %v5733
      %v5801 = vpop.f32.mrb[0].mxu0
      %v5802 = vadd.f32 %v5730, %v5801
      %v5803 = vpop.f32.mrb[0].mxu0
      %5804 = vdwg.mxu0
      %v5805 = vld [vmem:[%s14 + $0x3] sm:$0x1]
      %vm5806 = vcmp.gt.f32.partialorder %v5802, 0.0
      %v5807 = vmul.f32 %v5805, %v5802
      %v5808 = vsel %vm5806, %v5802, %v5807
      %v5809 = vld [vmem:[%s16] sm:$0xff]
      %v5810 = vld [vmem:[%s16 + $0x8] sm:$0xff]
      %v5811 = vld [vmem:[%s16 + $0x10] sm:$0xff]
      %v5812 = vld [vmem:[%s16 + $0x18] sm:$0xff]
      %v5813 = vld [vmem:[%s14 + $0x4] sm:$0x1]
      %v5815 = vsel %vm5731, %v5808, 0
      %5817 = vmatprep.subr.mxu0 0.0
      %5818 = vmatpush1.msra.mxu0 %v5809
      %5819 = vmatprep.subr.mxu0 0.0
      %5820 = vmatpush1.msra.mxu0 %v5810
      %5821 = vmatprep.subr.mxu0 0.0
      %5822 = vmatpush1.msra.mxu0 %v5811
      %5823 = vmatprep.subr.mxu0 0.0
      %5824 = vmatpush1.msra.mxu0 %v5812
      %5825 = vmatprep.subr.mxu0 0.0
      %5826 = vmatpush1.msra.mxu0 0.0
      %5827 = vmatprep.subr.mxu0 0.0
      %5828 = vmatpush1.msra.mxu0 0.0
      %5829 = vmatprep.subr.mxu0 0.0
      %5830 = vmatpush1.msra.mxu0 0.0
      %5831 = vmatprep.subr.mxu0 0.0
      %5832 = vmatpush1.msra.mxu0 0.0
      %5833 = vmatprep.subr.mxu0 0.0
      %5834 = vmatpush1.msra.mxu0 0.0
      %5835 = vmatprep.subr.mxu0 0.0
      %5836 = vmatpush1.msra.mxu0 0.0
      %5837 = vmatprep.subr.mxu0 0.0
      %5838 = vmatpush1.msra.mxu0 0.0
      %5839 = vmatprep.subr.mxu0 0.0
      %5840 = vmatpush1.msra.mxu0 0.0
      %5841 = vmatprep.subr.mxu0 0.0
      %5842 = vmatpush1.msra.mxu0 0.0
      %5843 = vmatprep.subr.mxu0 0.0
      %5844 = vmatpush1.msra.mxu0 0.0
      %5845 = vmatprep.subr.mxu0 0.0
      %5846 = vmatpush1.msra.mxu0 0.0
      %5847 = vmatprep.subr.mxu0 0.0
      %5848 = vmatpush1.msra.mxu0 0.0
      %5849 = vmatprep.subr.mxu0 0.0
      %5850 = vmatpush1.msra.mxu0 0.0
      %5851 = vmatprep.subr.mxu0 0.0
      %5852 = vmatpush1.msra.mxu0 0.0
      %5853 = vmatprep.subr.mxu0 0.0
      %5854 = vmatpush1.msra.mxu0 0.0
      %5855 = vmatprep.subr.mxu0 0.0
      %5856 = vmatpush1.msra.mxu0 0.0
      %5857 = vmatprep.subr.mxu0 0.0
      %5858 = vmatpush1.msra.mxu0 0.0
      %5859 = vmatprep.subr.mxu0 0.0
      %5860 = vmatpush1.msra.mxu0 0.0
      %5861 = vmatprep.subr.mxu0 0.0
      %5862 = vmatpush1.msra.mxu0 0.0
      %5863 = vmatprep.subr.mxu0 0.0
      %5864 = vmatpush1.msra.mxu0 0.0
      %5865 = vmatprep.subr.mxu0 0.0
      %5866 = vmatpush1.msra.mxu0 0.0
      %5867 = vmatprep.subr.mxu0 0.0
      %5868 = vmatpush1.msra.mxu0 0.0
      %5869 = vmatprep.subr.mxu0 0.0
      %5870 = vmatpush1.msra.mxu0 0.0
      %5871 = vmatprep.subr.mxu0 0.0
      %5872 = vmatpush1.msra.mxu0 0.0
      %5873 = vmatprep.subr.mxu0 0.0
      %5874 = vmatpush1.msra.mxu0 0.0
      %5875 = vmatprep.subr.mxu0 0.0
      %5876 = vmatpush1.msra.mxu0 0.0
      %5877 = vmatprep.subr.mxu0 0.0
      %5878 = vmatpush1.msra.mxu0 0.0
      %5879 = vmatprep.subr.mxu0 0.0
      %5880 = vmatpush1.msra.mxu0 0.0
      %5881 = vmatprep.mubr.f32.mxu0 0.0
      %5882 = vmatmul.mubr.f32.gmra.mrb[0].mxu0 %v5815
      %v5883 = vpop.f32.mrb[0].mxu0
      %v5884 = vadd.f32 %v5813, %v5883
      %v5885 = vpop.f32.mrb[0].mxu0
      %5886 = vdwg.mxu0
      %v5887 = vadd.f32 %v5725, %v5884
      %v5888 = vld [vmem:[%s17] sm:$0xff]
      %v5889 = vld [vmem:[%s17 + $0x8] sm:$0xff]
      %v5890 = vld [vmem:[%s17 + $0x10] sm:$0xff]
      %v5891 = vld [vmem:[%s17 + $0x18] sm:$0xff]
      %v5892 = vld [vmem:[%s18] sm:$0x1]
      %v5894 = vsel %vm5731, %v5887, 0
      %5896 = vmatprep.subr.mxu0 0.0
      %5897 = vmatpush1.msra.mxu0 %v5888
      %5898 = vmatprep.subr.mxu0 0.0
      %5899 = vmatpush1.msra.mxu0 %v5889
      %5900 = vmatprep.subr.mxu0 0.0
      %5901 = vmatpush1.msra.mxu0 %v5890
      %5902 = vmatprep.subr.mxu0 0.0
      %5903 = vmatpush1.msra.mxu0 %v5891
      %5904 = vmatprep.subr.mxu0 0.0
      %5905 = vmatpush1.msra.mxu0 0.0
      %5906 = vmatprep.subr.mxu0 0.0
      %5907 = vmatpush1.msra.mxu0 0.0
      %5908 = vmatprep.subr.mxu0 0.0
      %5909 = vmatpush1.msra.mxu0 0.0
      %5910 = vmatprep.subr.mxu0 0.0
      %5911 = vmatpush1.msra.mxu0 0.0
      %5912 = vmatprep.subr.mxu0 0.0
      %5913 = vmatpush1.msra.mxu0 0.0
      %5914 = vmatprep.subr.mxu0 0.0
      %5915 = vmatpush1.msra.mxu0 0.0
      %5916 = vmatprep.subr.mxu0 0.0
      %5917 = vmatpush1.msra.mxu0 0.0
      %5918 = vmatprep.subr.mxu0 0.0
      %5919 = vmatpush1.msra.mxu0 0.0
      %5920 = vmatprep.subr.mxu0 0.0
      %5921 = vmatpush1.msra.mxu0 0.0
      %5922 = vmatprep.subr.mxu0 0.0
      %5923 = vmatpush1.msra.mxu0 0.0
      %5924 = vmatprep.subr.mxu0 0.0
      %5925 = vmatpush1.msra.mxu0 0.0
      %5926 = vmatprep.subr.mxu0 0.0
      %5927 = vmatpush1.msra.mxu0 0.0
      %5928 = vmatprep.subr.mxu0 0.0
      %5929 = vmatpush1.msra.mxu0 0.0
      %5930 = vmatprep.subr.mxu0 0.0
      %5931 = vmatpush1.msra.mxu0 0.0
      %5932 = vmatprep.subr.mxu0 0.0
      %5933 = vmatpush1.msra.mxu0 0.0
      %5934 = vmatprep.subr.mxu0 0.0
      %5935 = vmatpush1.msra.mxu0 0.0
      %5936 = vmatprep.subr.mxu0 0.0
      %5937 = vmatpush1.msra.mxu0 0.0
      %5938 = vmatprep.subr.mxu0 0.0
      %5939 = vmatpush1.msra.mxu0 0.0
      %5940 = vmatprep.subr.mxu0 0.0
      %5941 = vmatpush1.msra.mxu0 0.0
      %5942 = vmatprep.subr.mxu0 0.0
      %5943 = vmatpush1.msra.mxu0 0.0
      %5944 = vmatprep.subr.mxu0 0.0
      %5945 = vmatpush1.msra.mxu0 0.0
      %5946 = vmatprep.subr.mxu0 0.0
      %5947 = vmatpush1.msra.mxu0 0.0
      %5948 = vmatprep.subr.mxu0 0.0
      %5949 = vmatpush1.msra.mxu0 0.0
      %5950 = vmatprep.subr.mxu0 0.0
      %5951 = vmatpush1.msra.mxu0 0.0
      %5952 = vmatprep.subr.mxu0 0.0
      %5953 = vmatpush1.msra.mxu0 0.0
      %5954 = vmatprep.subr.mxu0 0.0
      %5955 = vmatpush1.msra.mxu0 0.0
      %5956 = vmatprep.subr.mxu0 0.0
      %5957 = vmatpush1.msra.mxu0 0.0
      %5958 = vmatprep.subr.mxu0 0.0
      %5959 = vmatpush1.msra.mxu0 0.0
      %5960 = vmatprep.mubr.f32.mxu0 0.0
      %5961 = vmatmul.mubr.f32.gmra.mrb[0].mxu0 %v5894
      %v5962 = vpop.f32.mrb[0].mxu0
      %v5963 = vadd.f32 %v5892, %v5962
      %v5964 = vpop.f32.mrb[0].mxu0
      %5965 = vdwg.mxu0
      %vm5966 = vcmask 57344
      %5967 = vst.msk [vmem:[%s598] sm:$0x1] %vm5966, %v5963
      %p5968 = scmp.lt.s32.totalorder %s30, 1
      %s5969 = scalar_select %p5968, %s30, 1
      %s5970 = scalar_lea.vmem %s19, %s5969
      // Predicated region
      $region97: #{classifier_forward.1} parent=95 // pred_check
        %p5971 = pneg %p452
      $region98: #{classifier_forward.1} parent=95 // pred_check_branch
        %5973 = sbr.rel (%p5971) target = $region100
      $region99: #{classifier_forward.1} parent=95 // pred_region
        _
      $region100: #{classifier_forward.1} parent=95 // pred_fallthru
        _
    $region96: #{classifier_forward.1} parent=5 // pred_fallthru
      _
    %p5974 = scmp.le.s32.totalorder 2, %s25
    // Predicated region
    $region101: #{classifier_forward.1} parent=5 // pred_check
      %p5975 = pneg %p5974
    $region102: #{classifier_forward.1} parent=5 // pred_check_branch
      %5977 = sbr.rel (%p5975) target = $region104
    $region103: #{classifier_forward.1} parent=5 // pred_region
      %s5978 = ssub.s32 %s25, 2
      // Predicated region
      $region105: #{classifier_forward.1} parent=103 // pred_check
        %p5979 = pneg %p458
      $region106: #{classifier_forward.1} parent=103 // pred_check_branch
        %5981 = sbr.rel (%p5979) target = $region108
      $region107: #{classifier_forward.1} parent=103 // pred_region
        %p5982 = scmp.lt.s32.totalorder %s31, 1
        %s5983 = scalar_select %p5982, %s31, 1
        %s5984 = scalar_lea.vmem %s19, %s5983
      $region108: #{classifier_forward.1} parent=103 // pred_fallthru
        _
    $region104: #{classifier_forward.1} parent=5 // pred_fallthru
      _
  $region6: #{classifier_forward.1} parent=0 // loop_footer
    %s29 = sadd.s32 1, %s25
  $region7: #{classifier_forward.1} parent=0 // loop_footer_branch
    %24 = sbr.rel target = $region3
  $region8: #{classifier_forward.1} parent=0 // loop_exit
    _

</llo_original>
